<compile_context>
chip_gen: v5e
topology: v5e:2x2
jax: 0.10.0
libtpu: 0.0.40
codegen_flags: <defaults>
</compile_context>

<pallas_src>
import numpy as np
import jax
import jax.numpy as jnp
from jax import lax
from jax.experimental import pallas as pl
from jax.experimental.pallas import tpu as pltpu

# Stand-in backbone hyperparameters (ConvMixer-style).
DIM = 256
DEPTH = 8
KSIZE = 5
PAD = KSIZE // 2

# Decision-tree structure fixed by SequentialDecisionTree.__init__ (judge lists per node).
JUDGES = [
    [[0, 1, 8, 9], [2, 3, 4, 5, 6, 7]],
    [[0, 8], [1, 9]],
    [[0], [8]],
    [[1], [9]],
    [[2, 6], [3, 5], [4, 7]],
    [[2], [6]],
    [[3], [5]],
    [[4], [7]],
]
NMODELS = len(JUDGES)      # 8 decision nodes
NHEAD = 4                  # per-node head width, padded (max group count is 3); extras unused
NFINAL = 10                # tree output classes


def _gelu(x):
    # tanh-approx GELU: the transcendental goes to the EUP slot instead of a long erf
    # polynomial on the VALU.
    c = jnp.float32(0.7978845608028654)   # sqrt(2/pi)
    return 0.5 * x * (1.0 + jnp.tanh(c * (x + 0.044715 * (x * x * x))))


def convmixer_node_kernel(x_ref, pw_emb_ref, pb_emb_ref, bn0s_ref, bn0b_ref,
                          dww_ref, dwb_ref, bn1s_ref, bn1b_ref,
                          pww_ref, pwb_ref, bn2s_ref, bn2b_ref,
                          hw_ref, hb_ref, out_ref, xs_ref):
    d = pl.program_id(1)
    _, B, Hp, W, C = xs_ref.shape
    H = Hp - 2 * PAD

    def store_shifted(h_val):
        # Store the 5 W-rolled copies of h into the H-padded scratch (interior rows only).
        # The W-border mask is built in-kernel from an iota (no captured host constants) and
        # folded into the rolled copy, so every tap in the conv loop is an aligned load + FMA.
        col = lax.broadcasted_iota(jnp.int32, (W, 1), 0)          # (W, 1) column index
        for dj in range(KSIZE):
            shift = (PAD - dj) % W
            rolled = h_val if shift == 0 else pltpu.roll(h_val, shift, axis=2)
            if dj != PAD:
                src = col + (dj - PAD)
                m = ((src >= 0) & (src < W)).astype(h_val.dtype)  # valid source column?
                rolled = rolled * m
            xs_ref[dj, :, PAD:PAD + H, :, :] = rolled

    # ---- patch embedding Conv2d(3, C, 1) + GELU + BN : first depth step of each node ----
    @pl.when(d == 0)
    def _():
        xs_ref[...] = jnp.zeros(xs_ref.shape, xs_ref.dtype)   # zero H-pad borders once per node
        x = x_ref[...]                                        # (B, H, W, 3)
        xf = x.reshape(B * H * W, x.shape[-1])
        h0 = jnp.dot(xf, pw_emb_ref[0], preferred_element_type=jnp.float32)
        h0 = _gelu(h0 + pb_emb_ref[0])
        h0 = h0 * bn0s_ref[0] + bn0b_ref[0]
        store_shifted(h0.reshape(B, H, W, C))

    # ---- one ConvMixer block: residual(depthwise 5x5 + GELU + BN), then pointwise + GELU + BN --
    acc = None
    for di in range(KSIZE):
        for dj in range(KSIZE):
            w_tap = dww_ref[0, 0, di, dj]                     # (C,) depthwise tap weight
            term = xs_ref[dj, :, di:di + H, :, :] * w_tap     # aligned load + FMA (no relayout)
            acc = term if acc is None else acc + term
    acc = acc + dwb_ref[0, 0, 0]                              # bias added once at the end
    hdw = _gelu(acc)
    hdw = hdw * bn1s_ref[0, 0, 0] + bn1b_ref[0, 0, 0]
    h = xs_ref[PAD, :, PAD:PAD + H, :, :] + hdw               # residual add (unshifted copy = h)

    hf = h.reshape(B * H * W, C).astype(jnp.bfloat16)         # bf16 MXU operand
    hp = jnp.dot(hf, pww_ref[0, 0], preferred_element_type=jnp.float32)
    hp = _gelu(hp + pwb_ref[0, 0, 0])
    hp = hp * bn2s_ref[0, 0, 0] + bn2b_ref[0, 0, 0]
    h_new = hp.reshape(B, H, W, C)

    @pl.when(d + 1 < DEPTH)
    def _():
        store_shifted(h_new)                                  # pre-shift for the next block

    # ---- AdaptiveAvgPool2d + Flatten + Linear + sigmoid (DecisionNode) : last depth step ----
    @pl.when(d == DEPTH - 1)
    def _():
        pooled = jnp.mean(h_new, axis=(1, 2))                 # (B, C)
        logits = jnp.dot(pooled.astype(jnp.bfloat16), hw_ref[0],
                         preferred_element_type=jnp.float32) + hb_ref[0]
        out_ref[0] = jax.nn.sigmoid(logits)                   # (B, NHEAD) sigmoid probs


def build_params(key):
    """Deterministically build the 8 per-node backbone parameter sets, stacked on a model axis."""
    M, C, D, K = NMODELS, DIM, DEPTH, KSIZE
    keys = jax.random.split(key, 20)

    def nrm(k, shape, scale=0.05):
        return scale * jax.random.normal(k, shape, dtype=jnp.float32)

    patch_w = nrm(keys[0], (M, C, 3))                # Conv2d(3, C, 1): (C_out, C_in)
    patch_b = nrm(keys[1], (M, C))
    dw_w = nrm(keys[2], (M, D, C, K, K))             # Conv2d(C, C, 5, groups=C)
    dw_b = nrm(keys[3], (M, D, C))
    pw_w = nrm(keys[4], (M, D, C, C))                # Conv2d(C, C, 1): (C_out, C_in)
    pw_b = nrm(keys[5], (M, D, C))
    head_w = nrm(keys[6], (M, NHEAD, C))             # Linear(C, n_cls) padded to NHEAD
    head_b = nrm(keys[7], (M, NHEAD))

    def bn(kg, kb, km, kv, shape):                   # eval-mode BN folded to scale/shift
        gamma = 1.0 + nrm(kg, shape)
        beta = nrm(kb, shape)
        rmean = nrm(km, shape)
        rvar = 1.0 + jnp.abs(nrm(kv, shape))
        scale = gamma / jnp.sqrt(rvar + 1e-5)
        shift = beta - rmean * scale
        return scale, shift

    bn0_s, bn0_b = bn(keys[8], keys[9], keys[10], keys[11], (M, C))
    bn1_s, bn1_b = bn(keys[12], keys[13], keys[14], keys[15], (M, D, C))
    bn2_s, bn2_b = bn(keys[16], keys[17], keys[18], keys[19], (M, D, C))

    return dict(
        patch_w=jnp.transpose(patch_w, (0, 2, 1)),                     # (M, 3, C) f32
        patch_b=patch_b[:, None, :],                                   # (M, 1, C)
        bn0_s=bn0_s[:, None, :], bn0_b=bn0_b[:, None, :],
        dw_w=jnp.transpose(dw_w, (0, 1, 3, 4, 2)),                     # (M, D, 5, 5, C) f32
        dw_b=dw_b[:, :, None, :],                                      # (M, D, 1, C)
        bn1_s=bn1_s[:, :, None, :], bn1_b=bn1_b[:, :, None, :],
        pw_w=jnp.transpose(pw_w, (0, 1, 3, 2)).astype(jnp.bfloat16),   # (M, D, C_in, C_out) bf16
        pw_b=pw_b[:, :, None, :],
        bn2_s=bn2_s[:, :, None, :], bn2_b=bn2_b[:, :, None, :],
        head_w=jnp.transpose(head_w, (0, 2, 1)).astype(jnp.bfloat16),  # (M, C, NHEAD) bf16
        head_b=head_b[:, None, :],                                     # (M, 1, NHEAD)
    )


def _judge_matrices():
    """sel[m, i, c] = 1 if class c is in node m's group i; uncovered[m, c] = 1 if untouched."""
    sel = np.zeros((NMODELS, NHEAD, NFINAL), dtype=np.float32)
    for m, judge in enumerate(JUDGES):
        for i, cls in enumerate(judge):
            for c in cls:
                sel[m, i, c] = 1.0
    uncovered = 1.0 - sel.sum(axis=1)                 # (M, NFINAL)
    return jnp.asarray(sel), jnp.asarray(uncovered)


def sequential_decision_tree_forward(x_nchw, params):
    B = x_nchw.shape[0]
    H, W = x_nchw.shape[2], x_nchw.shape[3]
    x = jnp.transpose(x_nchw, (0, 2, 3, 1)).astype(jnp.float32)   # NCHW -> NHWC (B, H, W, 3)

    names = ["patch_w", "patch_b", "bn0_s", "bn0_b", "dw_w", "dw_b",
             "bn1_s", "bn1_b", "pw_w", "pw_b", "bn2_s", "bn2_b",
             "head_w", "head_b"]
    per_model = {"patch_w", "patch_b", "bn0_s", "bn0_b", "head_w", "head_b"}

    def model_spec(arr):      # constant across the depth axis -> fetched once per node
        nd = arr.ndim
        return pl.BlockSpec((1,) + arr.shape[1:],
                            lambda m, d, _nd=nd: (m,) + (0,) * (_nd - 1))

    def layer_spec(arr):      # streamed per (node, layer) grid step
        nd = arr.ndim
        return pl.BlockSpec((1, 1) + arr.shape[2:],
                            lambda m, d, _nd=nd: (m, d) + (0,) * (_nd - 2))

    in_specs = [pl.BlockSpec((B, H, W, 3), lambda m, d: (0, 0, 0, 0))]
    args = []
    for n in names:
        a = params[n]
        args.append(a)
        in_specs.append(model_spec(a) if n in per_model else layer_spec(a))

    probs = pl.pallas_call(
        convmixer_node_kernel,
        out_shape=jax.ShapeDtypeStruct((NMODELS, B, NHEAD), jnp.float32),
        grid_spec=pltpu.PrefetchScalarGridSpec(
            num_scalar_prefetch=0,
            grid=(NMODELS, DEPTH),
            in_specs=in_specs,
            out_specs=pl.BlockSpec((1, B, NHEAD), lambda m, d: (m, 0, 0)),
            scratch_shapes=[pltpu.VMEM((KSIZE, B, H + 2 * PAD, W, DIM), jnp.float32)],
        ),
        compiler_params=pltpu.CompilerParams(
            dimension_semantics=("parallel", "arbitrary"),
            vmem_limit_bytes=32 * 1024 * 1024,
        ),
    )(x, *args)                                        # (NMODELS, B, NHEAD) sigmoid probs

    # Judge-based multiplicative combination (exactly the PyTorch loop, order-independent):
    #   final = ones(B, 10); for node m, group i: final[:, judge[m][i]] *= probs[m][:, i]
    sel, uncovered = _judge_matrices()
    factors = jnp.einsum('mbk,mkc->mbc', probs, sel) + uncovered[:, None, :]   # (M, B, 10)
    return jnp.prod(factors, axis=0)                                           # (B, 10)


if __name__ == "__main__":
    key = jax.random.PRNGKey(0)
    kx, kp = jax.random.split(key)
    B, H, W = 2, 8, 8                                   # small CIFAR-like input
    x = jax.random.normal(kx, (B, 3, H, W), dtype=jnp.float32)   # NCHW like PyTorch
    params = build_params(kp)

    out = jax.jit(sequential_decision_tree_forward)(x, params)
    out = jax.block_until_ready(out)
    assert out.shape == (B, NFINAL) and out.dtype == jnp.float32
    assert bool(jnp.all(jnp.isfinite(out)))
    print("KERNEL_OK")
</pallas_src>

<mosaic_0001>
module attributes {stable_mosaic.version = 11 : i64} {
  func.func @convmixer_node_kernel(%arg0: i32, %arg1: i32, %arg2: memref<2x8x8x3xf32, #tpu.memory_space<vmem>>, %arg3: memref<1x3x256xf32, #tpu.memory_space<vmem>>, %arg4: memref<1x1x256xf32, #tpu.memory_space<vmem>>, %arg5: memref<1x1x256xf32, #tpu.memory_space<vmem>>, %arg6: memref<1x1x256xf32, #tpu.memory_space<vmem>>, %arg7: memref<1x1x5x5x256xf32, #tpu.memory_space<vmem>>, %arg8: memref<1x1x1x256xf32, #tpu.memory_space<vmem>>, %arg9: memref<1x1x1x256xf32, #tpu.memory_space<vmem>>, %arg10: memref<1x1x1x256xf32, #tpu.memory_space<vmem>>, %arg11: memref<1x1x256x256xbf16, #tpu.memory_space<vmem>>, %arg12: memref<1x1x1x256xf32, #tpu.memory_space<vmem>>, %arg13: memref<1x1x1x256xf32, #tpu.memory_space<vmem>>, %arg14: memref<1x1x1x256xf32, #tpu.memory_space<vmem>>, %arg15: memref<1x256x4xbf16, #tpu.memory_space<vmem>>, %arg16: memref<1x1x4xf32, #tpu.memory_space<vmem>>, %arg17: memref<1x2x4xf32, #tpu.memory_space<vmem>>, %arg18: memref<5x2x12x8x256xf32, #tpu.memory_space<vmem>>) attributes {dimension_semantics = [#tpu.dimension_semantics<parallel>, #tpu.dimension_semantics<arbitrary>], iteration_bounds = array<i64: 8, 8>, scalar_prefetch = 0 : i64, scratch_operands = 1 : i64, tpu.core_type = #tpu.core_type<tc>, window_params = [{pipeline_mode = #tpu.pipeline_mode<synchronous>, transform_indices = @transform_0, window_bounds = array<i64: 2, 8, 8, 3>}, {transform_indices = @transform_1, window_bounds = array<i64: 1, 3, 256>}, {transform_indices = @transform_2, window_bounds = array<i64: 1, 1, 256>}, {transform_indices = @transform_3, window_bounds = array<i64: 1, 1, 256>}, {transform_indices = @transform_4, window_bounds = array<i64: 1, 1, 256>}, {transform_indices = @transform_5, window_bounds = array<i64: 1, 1, 5, 5, 256>}, {transform_indices = @transform_6, window_bounds = array<i64: 1, 1, 1, 256>}, {transform_indices = @transform_7, window_bounds = array<i64: 1, 1, 1, 256>}, {transform_indices = @transform_8, window_bounds = array<i64: 1, 1, 1, 256>}, {transform_indices = @transform_9, window_bounds = array<i64: 1, 1, 256, 256>}, {transform_indices = @transform_10, window_bounds = array<i64: 1, 1, 1, 256>}, {transform_indices = @transform_11, window_bounds = array<i64: 1, 1, 1, 256>}, {transform_indices = @transform_12, window_bounds = array<i64: 1, 1, 1, 256>}, {transform_indices = @transform_13, window_bounds = array<i64: 1, 256, 4>}, {transform_indices = @transform_14, window_bounds = array<i64: 1, 1, 4>}, {transform_indices = @transform_15, window_bounds = array<i64: 1, 2, 4>}]} {
    %c0_i32 = arith.constant 0 : i32
    %0 = arith.cmpi eq, %arg1, %c0_i32 : i32
    %1 = arith.extui %0 : i1 to i32
    %c0_i32_0 = arith.constant 0 : i32
    %2 = arith.cmpi ne, %1, %c0_i32_0 : i32
    scf.if %2 {
      %cst_289 = arith.constant 0.000000e+00 : f32
      %274 = vector.broadcast %cst_289 : f32 to vector<5x2x12x8x256xf32>
      %c0_290 = arith.constant 0 : index
      %c0_291 = arith.constant 0 : index
      %c0_292 = arith.constant 0 : index
      %c0_293 = arith.constant 0 : index
      %c0_294 = arith.constant 0 : index
      %275 = vector.load %arg18[%c0_290, %c0_291, %c0_292, %c0_293, %c0_294] : memref<5x2x12x8x256xf32, #tpu.memory_space<vmem>>, vector<5x2x12x8x256xf32>
      tpu.vector_store %arg18[%c0_290, %c0_291, %c0_292, %c0_293, %c0_294], %274 {strides = array<i32>} : memref<5x2x12x8x256xf32, #tpu.memory_space<vmem>>, vector<5x2x12x8x256xf32>,
      %c0_295 = arith.constant 0 : index
      %c0_296 = arith.constant 0 : index
      %c0_297 = arith.constant 0 : index
      %c0_298 = arith.constant 0 : index
      %276 = vector.load %arg2[%c0_295, %c0_296, %c0_297, %c0_298] : memref<2x8x8x3xf32, #tpu.memory_space<vmem>>, vector<2x8x8x3xf32>
      %277 = vector.shape_cast %276 : vector<2x8x8x3xf32> to vector<128x3xf32>
      %c0_299 = arith.constant 0 : index
      %c0_300 = arith.constant 0 : index
      %c0_301 = arith.constant 0 : index
      %278 = vector.load %arg3[%c0_299, %c0_300, %c0_301] : memref<1x3x256xf32, #tpu.memory_space<vmem>>, vector<1x3x256xf32>
      %279 = vector.shape_cast %278 : vector<1x3x256xf32> to vector<3x256xf32>
      %cst_302 = arith.constant dense<0.000000e+00> : vector<128x256xf32>
      %280 = tpu.matmul %277, %279, %cst_302 {dimension_numbers = #tpu.dot_dimension_numbers<[1], [0], [0], [1], [0, 0, 1, 1], [], []>} : vector<128x3xf32>, vector<3x256xf32>, vector<128x256xf32> -> vector<128x256xf32>
      %c0_303 = arith.constant 0 : index
      %c0_304 = arith.constant 0 : index
      %c0_305 = arith.constant 0 : index
      %281 = vector.load %arg4[%c0_303, %c0_304, %c0_305] : memref<1x1x256xf32, #tpu.memory_space<vmem>>, vector<1x1x256xf32>
      %282 = vector.shape_cast %281 : vector<1x1x256xf32> to vector<1x256xf32>
      %283 = vector.broadcast %282 : vector<1x256xf32> to vector<128x256xf32>
      %284 = arith.addf %280, %283 : vector<128x256xf32>
      %cst_306 = arith.constant 5.000000e-01 : f32
      %285 = vector.broadcast %cst_306 : f32 to vector<128x256xf32>
      %286 = arith.mulf %285, %284 : vector<128x256xf32>
      %287 = arith.mulf %284, %284 : vector<128x256xf32>
      %288 = arith.mulf %287, %284 : vector<128x256xf32>
      %cst_307 = arith.constant 4.471500e-02 : f32
      %289 = vector.broadcast %cst_307 : f32 to vector<128x256xf32>
      %290 = arith.mulf %289, %288 : vector<128x256xf32>
      %291 = arith.addf %284, %290 : vector<128x256xf32>
      %cst_308 = arith.constant 0.797884583 : f32
      %292 = vector.broadcast %cst_308 : f32 to vector<128x256xf32>
      %293 = arith.mulf %292, %291 : vector<128x256xf32>
      %294 = math.tanh %293 : vector<128x256xf32>
      %cst_309 = arith.constant 1.000000e+00 : f32
      %295 = vector.broadcast %cst_309 : f32 to vector<128x256xf32>
      %296 = arith.addf %295, %294 : vector<128x256xf32>
      %297 = arith.mulf %286, %296 : vector<128x256xf32>
      %c0_310 = arith.constant 0 : index
      %c0_311 = arith.constant 0 : index
      %c0_312 = arith.constant 0 : index
      %298 = vector.load %arg5[%c0_310, %c0_311, %c0_312] : memref<1x1x256xf32, #tpu.memory_space<vmem>>, vector<1x1x256xf32>
      %299 = vector.shape_cast %298 : vector<1x1x256xf32> to vector<1x256xf32>
      %300 = vector.broadcast %299 : vector<1x256xf32> to vector<128x256xf32>
      %301 = arith.mulf %297, %300 : vector<128x256xf32>
      %c0_313 = arith.constant 0 : index
      %c0_314 = arith.constant 0 : index
      %c0_315 = arith.constant 0 : index
      %302 = vector.load %arg6[%c0_313, %c0_314, %c0_315] : memref<1x1x256xf32, #tpu.memory_space<vmem>>, vector<1x1x256xf32>
      %303 = vector.shape_cast %302 : vector<1x1x256xf32> to vector<1x256xf32>
      %304 = vector.broadcast %303 : vector<1x256xf32> to vector<128x256xf32>
      %305 = arith.addf %301, %304 : vector<128x256xf32>
      %306 = vector.shape_cast %305 : vector<128x256xf32> to vector<2x8x8x256xf32>
      %307 = tpu.iota {dimensions = array<i32: 0>} : vector<8x1xi32>
      %c2_i32 = arith.constant 2 : i32
      %308 = tpu.dynamic_rotate %306 by %c2_i32 dim 2 : vector<2x8x8x256xf32>, i32 -> vector<2x8x8x256xf32>
      %c-2_i32 = arith.constant -2 : i32
      %309 = vector.broadcast %c-2_i32 : i32 to vector<8x1xi32>
      %310 = arith.addi %307, %309 : vector<8x1xi32>
      %c0_i32_316 = arith.constant 0 : i32
      %311 = vector.broadcast %c0_i32_316 : i32 to vector<8x1xi32>
      %312 = arith.cmpi sge, %310, %311 : vector<8x1xi32>
      %c8_i32_317 = arith.constant 8 : i32
      %313 = vector.broadcast %c8_i32_317 : i32 to vector<8x1xi32>
      %314 = arith.cmpi slt, %310, %313 : vector<8x1xi32>
      %315 = arith.andi %312, %314 : vector<8x1xi1>
      %316 = arith.extui %315 : vector<8x1xi1> to vector<8x1xi32>
      %317 = arith.sitofp %316 : vector<8x1xi32> to vector<8x1xf32>
      %318 = vector.shape_cast %317 : vector<8x1xf32> to vector<1x1x8x1xf32>
      %319 = vector.broadcast %318 : vector<1x1x8x1xf32> to vector<2x8x8x256xf32>
      %320 = arith.mulf %308, %319 : vector<2x8x8x256xf32>
      %c0_318 = arith.constant 0 : index
      %c0_319 = arith.constant 0 : index
      %c2_320 = arith.constant 2 : index
      %c0_321 = arith.constant 0 : index
      %c0_322 = arith.constant 0 : index
      %321 = vector.load %arg18[%c0_318, %c0_319, %c2_320, %c0_321, %c0_322] : memref<5x2x12x8x256xf32, #tpu.memory_space<vmem>>, vector<1x2x8x8x256xf32>
      %322 = vector.shape_cast %321 : vector<1x2x8x8x256xf32> to vector<2x8x8x256xf32>
      %323 = vector.shape_cast %320 : vector<2x8x8x256xf32> to vector<1x2x8x8x256xf32>
      tpu.vector_store %arg18[%c0_318, %c0_319, %c2_320, %c0_321, %c0_322], %323 {strides = array<i32>} : memref<5x2x12x8x256xf32, #tpu.memory_space<vmem>>, vector<1x2x8x8x256xf32>,
      %c1_i32_323 = arith.constant 1 : i32
      %324 = tpu.dynamic_rotate %306 by %c1_i32_323 dim 2 : vector<2x8x8x256xf32>, i32 -> vector<2x8x8x256xf32>
      %c-1_i32 = arith.constant -1 : i32
      %325 = vector.broadcast %c-1_i32 : i32 to vector<8x1xi32>
      %326 = arith.addi %307, %325 : vector<8x1xi32>
      %c0_i32_324 = arith.constant 0 : i32
      %327 = vector.broadcast %c0_i32_324 : i32 to vector<8x1xi32>
      %328 = arith.cmpi sge, %326, %327 : vector<8x1xi32>
      %c8_i32_325 = arith.constant 8 : i32
      %329 = vector.broadcast %c8_i32_325 : i32 to vector<8x1xi32>
      %330 = arith.cmpi slt, %326, %329 : vector<8x1xi32>
      %331 = arith.andi %328, %330 : vector<8x1xi1>
      %332 = arith.extui %331 : vector<8x1xi1> to vector<8x1xi32>
      %333 = arith.sitofp %332 : vector<8x1xi32> to vector<8x1xf32>
      %334 = vector.shape_cast %333 : vector<8x1xf32> to vector<1x1x8x1xf32>
      %335 = vector.broadcast %334 : vector<1x1x8x1xf32> to vector<2x8x8x256xf32>
      %336 = arith.mulf %324, %335 : vector<2x8x8x256xf32>
      %c1_326 = arith.constant 1 : index
      %c0_327 = arith.constant 0 : index
      %c2_328 = arith.constant 2 : index
      %c0_329 = arith.constant 0 : index
      %c0_330 = arith.constant 0 : index
      %337 = vector.load %arg18[%c1_326, %c0_327, %c2_328, %c0_329, %c0_330] : memref<5x2x12x8x256xf32, #tpu.memory_space<vmem>>, vector<1x2x8x8x256xf32>
      %338 = vector.shape_cast %337 : vector<1x2x8x8x256xf32> to vector<2x8x8x256xf32>
      %339 = vector.shape_cast %336 : vector<2x8x8x256xf32> to vector<1x2x8x8x256xf32>
      tpu.vector_store %arg18[%c1_326, %c0_327, %c2_328, %c0_329, %c0_330], %339 {strides = array<i32>} : memref<5x2x12x8x256xf32, #tpu.memory_space<vmem>>, vector<1x2x8x8x256xf32>,
      %c2_331 = arith.constant 2 : index
      %c0_332 = arith.constant 0 : index
      %c2_333 = arith.constant 2 : index
      %c0_334 = arith.constant 0 : index
      %c0_335 = arith.constant 0 : index
      %340 = vector.load %arg18[%c2_331, %c0_332, %c2_333, %c0_334, %c0_335] : memref<5x2x12x8x256xf32, #tpu.memory_space<vmem>>, vector<1x2x8x8x256xf32>
      %341 = vector.shape_cast %340 : vector<1x2x8x8x256xf32> to vector<2x8x8x256xf32>
      %342 = vector.shape_cast %306 : vector<2x8x8x256xf32> to vector<1x2x8x8x256xf32>
      tpu.vector_store %arg18[%c2_331, %c0_332, %c2_333, %c0_334, %c0_335], %342 {strides = array<i32>} : memref<5x2x12x8x256xf32, #tpu.memory_space<vmem>>, vector<1x2x8x8x256xf32>,
      %c7_i32_336 = arith.constant 7 : i32
      %343 = tpu.dynamic_rotate %306 by %c7_i32_336 dim 2 : vector<2x8x8x256xf32>, i32 -> vector<2x8x8x256xf32>
      %c1_i32_337 = arith.constant 1 : i32
      %344 = vector.broadcast %c1_i32_337 : i32 to vector<8x1xi32>
      %345 = arith.addi %307, %344 : vector<8x1xi32>
      %c0_i32_338 = arith.constant 0 : i32
      %346 = vector.broadcast %c0_i32_338 : i32 to vector<8x1xi32>
      %347 = arith.cmpi sge, %345, %346 : vector<8x1xi32>
      %c8_i32_339 = arith.constant 8 : i32
      %348 = vector.broadcast %c8_i32_339 : i32 to vector<8x1xi32>
      %349 = arith.cmpi slt, %345, %348 : vector<8x1xi32>
      %350 = arith.andi %347, %349 : vector<8x1xi1>
      %351 = arith.extui %350 : vector<8x1xi1> to vector<8x1xi32>
      %352 = arith.sitofp %351 : vector<8x1xi32> to vector<8x1xf32>
      %353 = vector.shape_cast %352 : vector<8x1xf32> to vector<1x1x8x1xf32>
      %354 = vector.broadcast %353 : vector<1x1x8x1xf32> to vector<2x8x8x256xf32>
      %355 = arith.mulf %343, %354 : vector<2x8x8x256xf32>
      %c3_340 = arith.constant 3 : index
      %c0_341 = arith.constant 0 : index
      %c2_342 = arith.constant 2 : index
      %c0_343 = arith.constant 0 : index
      %c0_344 = arith.constant 0 : index
      %356 = vector.load %arg18[%c3_340, %c0_341, %c2_342, %c0_343, %c0_344] : memref<5x2x12x8x256xf32, #tpu.memory_space<vmem>>, vector<1x2x8x8x256xf32>
      %357 = vector.shape_cast %356 : vector<1x2x8x8x256xf32> to vector<2x8x8x256xf32>
      %358 = vector.shape_cast %355 : vector<2x8x8x256xf32> to vector<1x2x8x8x256xf32>
      tpu.vector_store %arg18[%c3_340, %c0_341, %c2_342, %c0_343, %c0_344], %358 {strides = array<i32>} : memref<5x2x12x8x256xf32, #tpu.memory_space<vmem>>, vector<1x2x8x8x256xf32>,
      %c6_i32 = arith.constant 6 : i32
      %359 = tpu.dynamic_rotate %306 by %c6_i32 dim 2 : vector<2x8x8x256xf32>, i32 -> vector<2x8x8x256xf32>
      %c2_i32_345 = arith.constant 2 : i32
      %360 = vector.broadcast %c2_i32_345 : i32 to vector<8x1xi32>
      %361 = arith.addi %307, %360 : vector<8x1xi32>
      %c0_i32_346 = arith.constant 0 : i32
      %362 = vector.broadcast %c0_i32_346 : i32 to vector<8x1xi32>
      %363 = arith.cmpi sge, %361, %362 : vector<8x1xi32>
      %c8_i32_347 = arith.constant 8 : i32
      %364 = vector.broadcast %c8_i32_347 : i32 to vector<8x1xi32>
      %365 = arith.cmpi slt, %361, %364 : vector<8x1xi32>
      %366 = arith.andi %363, %365 : vector<8x1xi1>
      %367 = arith.extui %366 : vector<8x1xi1> to vector<8x1xi32>
      %368 = arith.sitofp %367 : vector<8x1xi32> to vector<8x1xf32>
      %369 = vector.shape_cast %368 : vector<8x1xf32> to vector<1x1x8x1xf32>
      %370 = vector.broadcast %369 : vector<1x1x8x1xf32> to vector<2x8x8x256xf32>
      %371 = arith.mulf %359, %370 : vector<2x8x8x256xf32>
      %c4_348 = arith.constant 4 : index
      %c0_349 = arith.constant 0 : index
      %c2_350 = arith.constant 2 : index
      %c0_351 = arith.constant 0 : index
      %c0_352 = arith.constant 0 : index
      %372 = vector.load %arg18[%c4_348, %c0_349, %c2_350, %c0_351, %c0_352] : memref<5x2x12x8x256xf32, #tpu.memory_space<vmem>>, vector<1x2x8x8x256xf32>
      %373 = vector.shape_cast %372 : vector<1x2x8x8x256xf32> to vector<2x8x8x256xf32>
      %374 = vector.shape_cast %371 : vector<2x8x8x256xf32> to vector<1x2x8x8x256xf32>
      tpu.vector_store %arg18[%c4_348, %c0_349, %c2_350, %c0_351, %c0_352], %374 {strides = array<i32>} : memref<5x2x12x8x256xf32, #tpu.memory_space<vmem>>, vector<1x2x8x8x256xf32>,
    } else {
    }
    %c0 = arith.constant 0 : index
    %c0_1 = arith.constant 0 : index
    %c0_2 = arith.constant 0 : index
    %c0_3 = arith.constant 0 : index
    %c0_4 = arith.constant 0 : index
    %3 = vector.load %arg7[%c0, %c0_1, %c0_2, %c0_3, %c0_4] : memref<1x1x5x5x256xf32, #tpu.memory_space<vmem>>, vector<1x1x1x1x256xf32>
    %4 = vector.shape_cast %3 : vector<1x1x1x1x256xf32> to vector<256xf32>
    %c0_5 = arith.constant 0 : index
    %c0_6 = arith.constant 0 : index
    %c0_7 = arith.constant 0 : index
    %c0_8 = arith.constant 0 : index
    %c0_9 = arith.constant 0 : index
    %5 = vector.load %arg18[%c0_5, %c0_6, %c0_7, %c0_8, %c0_9] : memref<5x2x12x8x256xf32, #tpu.memory_space<vmem>>, vector<1x2x8x8x256xf32>
    %6 = vector.shape_cast %5 : vector<1x2x8x8x256xf32> to vector<2x8x8x256xf32>
    %7 = vector.shape_cast %4 : vector<256xf32> to vector<1x1x1x256xf32>
    %8 = vector.broadcast %7 : vector<1x1x1x256xf32> to vector<2x8x8x256xf32>
    %9 = arith.mulf %6, %8 : vector<2x8x8x256xf32>
    %c0_10 = arith.constant 0 : index
    %c0_11 = arith.constant 0 : index
    %c0_12 = arith.constant 0 : index
    %c1 = arith.constant 1 : index
    %c0_13 = arith.constant 0 : index
    %10 = vector.load %arg7[%c0_10, %c0_11, %c0_12, %c1, %c0_13] : memref<1x1x5x5x256xf32, #tpu.memory_space<vmem>>, vector<1x1x1x1x256xf32>
    %11 = vector.shape_cast %10 : vector<1x1x1x1x256xf32> to vector<256xf32>
    %c1_14 = arith.constant 1 : index
    %c0_15 = arith.constant 0 : index
    %c0_16 = arith.constant 0 : index
    %c0_17 = arith.constant 0 : index
    %c0_18 = arith.constant 0 : index
    %12 = vector.load %arg18[%c1_14, %c0_15, %c0_16, %c0_17, %c0_18] : memref<5x2x12x8x256xf32, #tpu.memory_space<vmem>>, vector<1x2x8x8x256xf32>
    %13 = vector.shape_cast %12 : vector<1x2x8x8x256xf32> to vector<2x8x8x256xf32>
    %14 = vector.shape_cast %11 : vector<256xf32> to vector<1x1x1x256xf32>
    %15 = vector.broadcast %14 : vector<1x1x1x256xf32> to vector<2x8x8x256xf32>
    %16 = arith.mulf %13, %15 : vector<2x8x8x256xf32>
    %17 = arith.addf %9, %16 : vector<2x8x8x256xf32>
    %c0_19 = arith.constant 0 : index
    %c0_20 = arith.constant 0 : index
    %c0_21 = arith.constant 0 : index
    %c2 = arith.constant 2 : index
    %c0_22 = arith.constant 0 : index
    %18 = vector.load %arg7[%c0_19, %c0_20, %c0_21, %c2, %c0_22] : memref<1x1x5x5x256xf32, #tpu.memory_space<vmem>>, vector<1x1x1x1x256xf32>
    %19 = vector.shape_cast %18 : vector<1x1x1x1x256xf32> to vector<256xf32>
    %c2_23 = arith.constant 2 : index
    %c0_24 = arith.constant 0 : index
    %c0_25 = arith.constant 0 : index
    %c0_26 = arith.constant 0 : index
    %c0_27 = arith.constant 0 : index
    %20 = vector.load %arg18[%c2_23, %c0_24, %c0_25, %c0_26, %c0_27] : memref<5x2x12x8x256xf32, #tpu.memory_space<vmem>>, vector<1x2x8x8x256xf32>
    %21 = vector.shape_cast %20 : vector<1x2x8x8x256xf32> to vector<2x8x8x256xf32>
    %22 = vector.shape_cast %19 : vector<256xf32> to vector<1x1x1x256xf32>
    %23 = vector.broadcast %22 : vector<1x1x1x256xf32> to vector<2x8x8x256xf32>
    %24 = arith.mulf %21, %23 : vector<2x8x8x256xf32>
    %25 = arith.addf %17, %24 : vector<2x8x8x256xf32>
    %c0_28 = arith.constant 0 : index
    %c0_29 = arith.constant 0 : index
    %c0_30 = arith.constant 0 : index
    %c3 = arith.constant 3 : index
    %c0_31 = arith.constant 0 : index
    %26 = vector.load %arg7[%c0_28, %c0_29, %c0_30, %c3, %c0_31] : memref<1x1x5x5x256xf32, #tpu.memory_space<vmem>>, vector<1x1x1x1x256xf32>
    %27 = vector.shape_cast %26 : vector<1x1x1x1x256xf32> to vector<256xf32>
    %c3_32 = arith.constant 3 : index
    %c0_33 = arith.constant 0 : index
    %c0_34 = arith.constant 0 : index
    %c0_35 = arith.constant 0 : index
    %c0_36 = arith.constant 0 : index
    %28 = vector.load %arg18[%c3_32, %c0_33, %c0_34, %c0_35, %c0_36] : memref<5x2x12x8x256xf32, #tpu.memory_space<vmem>>, vector<1x2x8x8x256xf32>
    %29 = vector.shape_cast %28 : vector<1x2x8x8x256xf32> to vector<2x8x8x256xf32>
    %30 = vector.shape_cast %27 : vector<256xf32> to vector<1x1x1x256xf32>
    %31 = vector.broadcast %30 : vector<1x1x1x256xf32> to vector<2x8x8x256xf32>
    %32 = arith.mulf %29, %31 : vector<2x8x8x256xf32>
    %33 = arith.addf %25, %32 : vector<2x8x8x256xf32>
    %c0_37 = arith.constant 0 : index
    %c0_38 = arith.constant 0 : index
    %c0_39 = arith.constant 0 : index
    %c4 = arith.constant 4 : index
    %c0_40 = arith.constant 0 : index
    %34 = vector.load %arg7[%c0_37, %c0_38, %c0_39, %c4, %c0_40] : memref<1x1x5x5x256xf32, #tpu.memory_space<vmem>>, vector<1x1x1x1x256xf32>
    %35 = vector.shape_cast %34 : vector<1x1x1x1x256xf32> to vector<256xf32>
    %c4_41 = arith.constant 4 : index
    %c0_42 = arith.constant 0 : index
    %c0_43 = arith.constant 0 : index
    %c0_44 = arith.constant 0 : index
    %c0_45 = arith.constant 0 : index
    %36 = vector.load %arg18[%c4_41, %c0_42, %c0_43, %c0_44, %c0_45] : memref<5x2x12x8x256xf32, #tpu.memory_space<vmem>>, vector<1x2x8x8x256xf32>
    %37 = vector.shape_cast %36 : vector<1x2x8x8x256xf32> to vector<2x8x8x256xf32>
    %38 = vector.shape_cast %35 : vector<256xf32> to vector<1x1x1x256xf32>
    %39 = vector.broadcast %38 : vector<1x1x1x256xf32> to vector<2x8x8x256xf32>
    %40 = arith.mulf %37, %39 : vector<2x8x8x256xf32>
    %41 = arith.addf %33, %40 : vector<2x8x8x256xf32>
    %c0_46 = arith.constant 0 : index
    %c0_47 = arith.constant 0 : index
    %c1_48 = arith.constant 1 : index
    %c0_49 = arith.constant 0 : index
    %c0_50 = arith.constant 0 : index
    %42 = vector.load %arg7[%c0_46, %c0_47, %c1_48, %c0_49, %c0_50] : memref<1x1x5x5x256xf32, #tpu.memory_space<vmem>>, vector<1x1x1x1x256xf32>
    %43 = vector.shape_cast %42 : vector<1x1x1x1x256xf32> to vector<256xf32>
    %c0_51 = arith.constant 0 : index
    %c0_52 = arith.constant 0 : index
    %c1_53 = arith.constant 1 : index
    %c0_54 = arith.constant 0 : index
    %c0_55 = arith.constant 0 : index
    %44 = vector.load %arg18[%c0_51, %c0_52, %c1_53, %c0_54, %c0_55] : memref<5x2x12x8x256xf32, #tpu.memory_space<vmem>>, vector<1x2x8x8x256xf32>
    %45 = vector.shape_cast %44 : vector<1x2x8x8x256xf32> to vector<2x8x8x256xf32>
    %46 = vector.shape_cast %43 : vector<256xf32> to vector<1x1x1x256xf32>
    %47 = vector.broadcast %46 : vector<1x1x1x256xf32> to vector<2x8x8x256xf32>
    %48 = arith.mulf %45, %47 : vector<2x8x8x256xf32>
    %49 = arith.addf %41, %48 : vector<2x8x8x256xf32>
    %c0_56 = arith.constant 0 : index
    %c0_57 = arith.constant 0 : index
    %c1_58 = arith.constant 1 : index
    %c1_59 = arith.constant 1 : index
    %c0_60 = arith.constant 0 : index
    %50 = vector.load %arg7[%c0_56, %c0_57, %c1_58, %c1_59, %c0_60] : memref<1x1x5x5x256xf32, #tpu.memory_space<vmem>>, vector<1x1x1x1x256xf32>
    %51 = vector.shape_cast %50 : vector<1x1x1x1x256xf32> to vector<256xf32>
    %c1_61 = arith.constant 1 : index
    %c0_62 = arith.constant 0 : index
    %c1_63 = arith.constant 1 : index
    %c0_64 = arith.constant 0 : index
    %c0_65 = arith.constant 0 : index
    %52 = vector.load %arg18[%c1_61, %c0_62, %c1_63, %c0_64, %c0_65] : memref<5x2x12x8x256xf32, #tpu.memory_space<vmem>>, vector<1x2x8x8x256xf32>
    %53 = vector.shape_cast %52 : vector<1x2x8x8x256xf32> to vector<2x8x8x256xf32>
    %54 = vector.shape_cast %51 : vector<256xf32> to vector<1x1x1x256xf32>
    %55 = vector.broadcast %54 : vector<1x1x1x256xf32> to vector<2x8x8x256xf32>
    %56 = arith.mulf %53, %55 : vector<2x8x8x256xf32>
    %57 = arith.addf %49, %56 : vector<2x8x8x256xf32>
    %c0_66 = arith.constant 0 : index
    %c0_67 = arith.constant 0 : index
    %c1_68 = arith.constant 1 : index
    %c2_69 = arith.constant 2 : index
    %c0_70 = arith.constant 0 : index
    %58 = vector.load %arg7[%c0_66, %c0_67, %c1_68, %c2_69, %c0_70] : memref<1x1x5x5x256xf32, #tpu.memory_space<vmem>>, vector<1x1x1x1x256xf32>
    %59 = vector.shape_cast %58 : vector<1x1x1x1x256xf32> to vector<256xf32>
    %c2_71 = arith.constant 2 : index
    %c0_72 = arith.constant 0 : index
    %c1_73 = arith.constant 1 : index
    %c0_74 = arith.constant 0 : index
    %c0_75 = arith.constant 0 : index
    %60 = vector.load %arg18[%c2_71, %c0_72, %c1_73, %c0_74, %c0_75] : memref<5x2x12x8x256xf32, #tpu.memory_space<vmem>>, vector<1x2x8x8x256xf32>
    %61 = vector.shape_cast %60 : vector<1x2x8x8x256xf32> to vector<2x8x8x256xf32>
    %62 = vector.shape_cast %59 : vector<256xf32> to vector<1x1x1x256xf32>
    %63 = vector.broadcast %62 : vector<1x1x1x256xf32> to vector<2x8x8x256xf32>
    %64 = arith.mulf %61, %63 : vector<2x8x8x256xf32>
    %65 = arith.addf %57, %64 : vector<2x8x8x256xf32>
    %c0_76 = arith.constant 0 : index
    %c0_77 = arith.constant 0 : index
    %c1_78 = arith.constant 1 : index
    %c3_79 = arith.constant 3 : index
    %c0_80 = arith.constant 0 : index
    %66 = vector.load %arg7[%c0_76, %c0_77, %c1_78, %c3_79, %c0_80] : memref<1x1x5x5x256xf32, #tpu.memory_space<vmem>>, vector<1x1x1x1x256xf32>
    %67 = vector.shape_cast %66 : vector<1x1x1x1x256xf32> to vector<256xf32>
    %c3_81 = arith.constant 3 : index
    %c0_82 = arith.constant 0 : index
    %c1_83 = arith.constant 1 : index
    %c0_84 = arith.constant 0 : index
    %c0_85 = arith.constant 0 : index
    %68 = vector.load %arg18[%c3_81, %c0_82, %c1_83, %c0_84, %c0_85] : memref<5x2x12x8x256xf32, #tpu.memory_space<vmem>>, vector<1x2x8x8x256xf32>
    %69 = vector.shape_cast %68 : vector<1x2x8x8x256xf32> to vector<2x8x8x256xf32>
    %70 = vector.shape_cast %67 : vector<256xf32> to vector<1x1x1x256xf32>
    %71 = vector.broadcast %70 : vector<1x1x1x256xf32> to vector<2x8x8x256xf32>
    %72 = arith.mulf %69, %71 : vector<2x8x8x256xf32>
    %73 = arith.addf %65, %72 : vector<2x8x8x256xf32>
    %c0_86 = arith.constant 0 : index
    %c0_87 = arith.constant 0 : index
    %c1_88 = arith.constant 1 : index
    %c4_89 = arith.constant 4 : index
    %c0_90 = arith.constant 0 : index
    %74 = vector.load %arg7[%c0_86, %c0_87, %c1_88, %c4_89, %c0_90] : memref<1x1x5x5x256xf32, #tpu.memory_space<vmem>>, vector<1x1x1x1x256xf32>
    %75 = vector.shape_cast %74 : vector<1x1x1x1x256xf32> to vector<256xf32>
    %c4_91 = arith.constant 4 : index
    %c0_92 = arith.constant 0 : index
    %c1_93 = arith.constant 1 : index
    %c0_94 = arith.constant 0 : index
    %c0_95 = arith.constant 0 : index
    %76 = vector.load %arg18[%c4_91, %c0_92, %c1_93, %c0_94, %c0_95] : memref<5x2x12x8x256xf32, #tpu.memory_space<vmem>>, vector<1x2x8x8x256xf32>
    %77 = vector.shape_cast %76 : vector<1x2x8x8x256xf32> to vector<2x8x8x256xf32>
    %78 = vector.shape_cast %75 : vector<256xf32> to vector<1x1x1x256xf32>
    %79 = vector.broadcast %78 : vector<1x1x1x256xf32> to vector<2x8x8x256xf32>
    %80 = arith.mulf %77, %79 : vector<2x8x8x256xf32>
    %81 = arith.addf %73, %80 : vector<2x8x8x256xf32>
    %c0_96 = arith.constant 0 : index
    %c0_97 = arith.constant 0 : index
    %c2_98 = arith.constant 2 : index
    %c0_99 = arith.constant 0 : index
    %c0_100 = arith.constant 0 : index
    %82 = vector.load %arg7[%c0_96, %c0_97, %c2_98, %c0_99, %c0_100] : memref<1x1x5x5x256xf32, #tpu.memory_space<vmem>>, vector<1x1x1x1x256xf32>
    %83 = vector.shape_cast %82 : vector<1x1x1x1x256xf32> to vector<256xf32>
    %c0_101 = arith.constant 0 : index
    %c0_102 = arith.constant 0 : index
    %c2_103 = arith.constant 2 : index
    %c0_104 = arith.constant 0 : index
    %c0_105 = arith.constant 0 : index
    %84 = vector.load %arg18[%c0_101, %c0_102, %c2_103, %c0_104, %c0_105] : memref<5x2x12x8x256xf32, #tpu.memory_space<vmem>>, vector<1x2x8x8x256xf32>
    %85 = vector.shape_cast %84 : vector<1x2x8x8x256xf32> to vector<2x8x8x256xf32>
    %86 = vector.shape_cast %83 : vector<256xf32> to vector<1x1x1x256xf32>
    %87 = vector.broadcast %86 : vector<1x1x1x256xf32> to vector<2x8x8x256xf32>
    %88 = arith.mulf %85, %87 : vector<2x8x8x256xf32>
    %89 = arith.addf %81, %88 : vector<2x8x8x256xf32>
    %c0_106 = arith.constant 0 : index
    %c0_107 = arith.constant 0 : index
    %c2_108 = arith.constant 2 : index
    %c1_109 = arith.constant 1 : index
    %c0_110 = arith.constant 0 : index
    %90 = vector.load %arg7[%c0_106, %c0_107, %c2_108, %c1_109, %c0_110] : memref<1x1x5x5x256xf32, #tpu.memory_space<vmem>>, vector<1x1x1x1x256xf32>
    %91 = vector.shape_cast %90 : vector<1x1x1x1x256xf32> to vector<256xf32>
    %c1_111 = arith.constant 1 : index
    %c0_112 = arith.constant 0 : index
    %c2_113 = arith.constant 2 : index
    %c0_114 = arith.constant 0 : index
    %c0_115 = arith.constant 0 : index
    %92 = vector.load %arg18[%c1_111, %c0_112, %c2_113, %c0_114, %c0_115] : memref<5x2x12x8x256xf32, #tpu.memory_space<vmem>>, vector<1x2x8x8x256xf32>
    %93 = vector.shape_cast %92 : vector<1x2x8x8x256xf32> to vector<2x8x8x256xf32>
    %94 = vector.shape_cast %91 : vector<256xf32> to vector<1x1x1x256xf32>
    %95 = vector.broadcast %94 : vector<1x1x1x256xf32> to vector<2x8x8x256xf32>
    %96 = arith.mulf %93, %95 : vector<2x8x8x256xf32>
    %97 = arith.addf %89, %96 : vector<2x8x8x256xf32>
    %c0_116 = arith.constant 0 : index
    %c0_117 = arith.constant 0 : index
    %c2_118 = arith.constant 2 : index
    %c2_119 = arith.constant 2 : index
    %c0_120 = arith.constant 0 : index
    %98 = vector.load %arg7[%c0_116, %c0_117, %c2_118, %c2_119, %c0_120] : memref<1x1x5x5x256xf32, #tpu.memory_space<vmem>>, vector<1x1x1x1x256xf32>
    %99 = vector.shape_cast %98 : vector<1x1x1x1x256xf32> to vector<256xf32>
    %c2_121 = arith.constant 2 : index
    %c0_122 = arith.constant 0 : index
    %c2_123 = arith.constant 2 : index
    %c0_124 = arith.constant 0 : index
    %c0_125 = arith.constant 0 : index
    %100 = vector.load %arg18[%c2_121, %c0_122, %c2_123, %c0_124, %c0_125] : memref<5x2x12x8x256xf32, #tpu.memory_space<vmem>>, vector<1x2x8x8x256xf32>
    %101 = vector.shape_cast %100 : vector<1x2x8x8x256xf32> to vector<2x8x8x256xf32>
    %102 = vector.shape_cast %99 : vector<256xf32> to vector<1x1x1x256xf32>
    %103 = vector.broadcast %102 : vector<1x1x1x256xf32> to vector<2x8x8x256xf32>
    %104 = arith.mulf %101, %103 : vector<2x8x8x256xf32>
    %105 = arith.addf %97, %104 : vector<2x8x8x256xf32>
    %c0_126 = arith.constant 0 : index
    %c0_127 = arith.constant 0 : index
    %c2_128 = arith.constant 2 : index
    %c3_129 = arith.constant 3 : index
    %c0_130 = arith.constant 0 : index
    %106 = vector.load %arg7[%c0_126, %c0_127, %c2_128, %c3_129, %c0_130] : memref<1x1x5x5x256xf32, #tpu.memory_space<vmem>>, vector<1x1x1x1x256xf32>
    %107 = vector.shape_cast %106 : vector<1x1x1x1x256xf32> to vector<256xf32>
    %c3_131 = arith.constant 3 : index
    %c0_132 = arith.constant 0 : index
    %c2_133 = arith.constant 2 : index
    %c0_134 = arith.constant 0 : index
    %c0_135 = arith.constant 0 : index
    %108 = vector.load %arg18[%c3_131, %c0_132, %c2_133, %c0_134, %c0_135] : memref<5x2x12x8x256xf32, #tpu.memory_space<vmem>>, vector<1x2x8x8x256xf32>
    %109 = vector.shape_cast %108 : vector<1x2x8x8x256xf32> to vector<2x8x8x256xf32>
    %110 = vector.shape_cast %107 : vector<256xf32> to vector<1x1x1x256xf32>
    %111 = vector.broadcast %110 : vector<1x1x1x256xf32> to vector<2x8x8x256xf32>
    %112 = arith.mulf %109, %111 : vector<2x8x8x256xf32>
    %113 = arith.addf %105, %112 : vector<2x8x8x256xf32>
    %c0_136 = arith.constant 0 : index
    %c0_137 = arith.constant 0 : index
    %c2_138 = arith.constant 2 : index
    %c4_139 = arith.constant 4 : index
    %c0_140 = arith.constant 0 : index
    %114 = vector.load %arg7[%c0_136, %c0_137, %c2_138, %c4_139, %c0_140] : memref<1x1x5x5x256xf32, #tpu.memory_space<vmem>>, vector<1x1x1x1x256xf32>
    %115 = vector.shape_cast %114 : vector<1x1x1x1x256xf32> to vector<256xf32>
    %c4_141 = arith.constant 4 : index
    %c0_142 = arith.constant 0 : index
    %c2_143 = arith.constant 2 : index
    %c0_144 = arith.constant 0 : index
    %c0_145 = arith.constant 0 : index
    %116 = vector.load %arg18[%c4_141, %c0_142, %c2_143, %c0_144, %c0_145] : memref<5x2x12x8x256xf32, #tpu.memory_space<vmem>>, vector<1x2x8x8x256xf32>
    %117 = vector.shape_cast %116 : vector<1x2x8x8x256xf32> to vector<2x8x8x256xf32>
    %118 = vector.shape_cast %115 : vector<256xf32> to vector<1x1x1x256xf32>
    %119 = vector.broadcast %118 : vector<1x1x1x256xf32> to vector<2x8x8x256xf32>
    %120 = arith.mulf %117, %119 : vector<2x8x8x256xf32>
    %121 = arith.addf %113, %120 : vector<2x8x8x256xf32>
    %c0_146 = arith.constant 0 : index
    %c0_147 = arith.constant 0 : index
    %c3_148 = arith.constant 3 : index
    %c0_149 = arith.constant 0 : index
    %c0_150 = arith.constant 0 : index
    %122 = vector.load %arg7[%c0_146, %c0_147, %c3_148, %c0_149, %c0_150] : memref<1x1x5x5x256xf32, #tpu.memory_space<vmem>>, vector<1x1x1x1x256xf32>
    %123 = vector.shape_cast %122 : vector<1x1x1x1x256xf32> to vector<256xf32>
    %c0_151 = arith.constant 0 : index
    %c0_152 = arith.constant 0 : index
    %c3_153 = arith.constant 3 : index
    %c0_154 = arith.constant 0 : index
    %c0_155 = arith.constant 0 : index
    %124 = vector.load %arg18[%c0_151, %c0_152, %c3_153, %c0_154, %c0_155] : memref<5x2x12x8x256xf32, #tpu.memory_space<vmem>>, vector<1x2x8x8x256xf32>
    %125 = vector.shape_cast %124 : vector<1x2x8x8x256xf32> to vector<2x8x8x256xf32>
    %126 = vector.shape_cast %123 : vector<256xf32> to vector<1x1x1x256xf32>
    %127 = vector.broadcast %126 : vector<1x1x1x256xf32> to vector<2x8x8x256xf32>
    %128 = arith.mulf %125, %127 : vector<2x8x8x256xf32>
    %129 = arith.addf %121, %128 : vector<2x8x8x256xf32>
    %c0_156 = arith.constant 0 : index
    %c0_157 = arith.constant 0 : index
    %c3_158 = arith.constant 3 : index
    %c1_159 = arith.constant 1 : index
    %c0_160 = arith.constant 0 : index
    %130 = vector.load %arg7[%c0_156, %c0_157, %c3_158, %c1_159, %c0_160] : memref<1x1x5x5x256xf32, #tpu.memory_space<vmem>>, vector<1x1x1x1x256xf32>
    %131 = vector.shape_cast %130 : vector<1x1x1x1x256xf32> to vector<256xf32>
    %c1_161 = arith.constant 1 : index
    %c0_162 = arith.constant 0 : index
    %c3_163 = arith.constant 3 : index
    %c0_164 = arith.constant 0 : index
    %c0_165 = arith.constant 0 : index
    %132 = vector.load %arg18[%c1_161, %c0_162, %c3_163, %c0_164, %c0_165] : memref<5x2x12x8x256xf32, #tpu.memory_space<vmem>>, vector<1x2x8x8x256xf32>
    %133 = vector.shape_cast %132 : vector<1x2x8x8x256xf32> to vector<2x8x8x256xf32>
    %134 = vector.shape_cast %131 : vector<256xf32> to vector<1x1x1x256xf32>
    %135 = vector.broadcast %134 : vector<1x1x1x256xf32> to vector<2x8x8x256xf32>
    %136 = arith.mulf %133, %135 : vector<2x8x8x256xf32>
    %137 = arith.addf %129, %136 : vector<2x8x8x256xf32>
    %c0_166 = arith.constant 0 : index
    %c0_167 = arith.constant 0 : index
    %c3_168 = arith.constant 3 : index
    %c2_169 = arith.constant 2 : index
    %c0_170 = arith.constant 0 : index
    %138 = vector.load %arg7[%c0_166, %c0_167, %c3_168, %c2_169, %c0_170] : memref<1x1x5x5x256xf32, #tpu.memory_space<vmem>>, vector<1x1x1x1x256xf32>
    %139 = vector.shape_cast %138 : vector<1x1x1x1x256xf32> to vector<256xf32>
    %c2_171 = arith.constant 2 : index
    %c0_172 = arith.constant 0 : index
    %c3_173 = arith.constant 3 : index
    %c0_174 = arith.constant 0 : index
    %c0_175 = arith.constant 0 : index
    %140 = vector.load %arg18[%c2_171, %c0_172, %c3_173, %c0_174, %c0_175] : memref<5x2x12x8x256xf32, #tpu.memory_space<vmem>>, vector<1x2x8x8x256xf32>
    %141 = vector.shape_cast %140 : vector<1x2x8x8x256xf32> to vector<2x8x8x256xf32>
    %142 = vector.shape_cast %139 : vector<256xf32> to vector<1x1x1x256xf32>
    %143 = vector.broadcast %142 : vector<1x1x1x256xf32> to vector<2x8x8x256xf32>
    %144 = arith.mulf %141, %143 : vector<2x8x8x256xf32>
    %145 = arith.addf %137, %144 : vector<2x8x8x256xf32>
    %c0_176 = arith.constant 0 : index
    %c0_177 = arith.constant 0 : index
    %c3_178 = arith.constant 3 : index
    %c3_179 = arith.constant 3 : index
    %c0_180 = arith.constant 0 : index
    %146 = vector.load %arg7[%c0_176, %c0_177, %c3_178, %c3_179, %c0_180] : memref<1x1x5x5x256xf32, #tpu.memory_space<vmem>>, vector<1x1x1x1x256xf32>
    %147 = vector.shape_cast %146 : vector<1x1x1x1x256xf32> to vector<256xf32>
    %c3_181 = arith.constant 3 : index
    %c0_182 = arith.constant 0 : index
    %c3_183 = arith.constant 3 : index
    %c0_184 = arith.constant 0 : index
    %c0_185 = arith.constant 0 : index
    %148 = vector.load %arg18[%c3_181, %c0_182, %c3_183, %c0_184, %c0_185] : memref<5x2x12x8x256xf32, #tpu.memory_space<vmem>>, vector<1x2x8x8x256xf32>
    %149 = vector.shape_cast %148 : vector<1x2x8x8x256xf32> to vector<2x8x8x256xf32>
    %150 = vector.shape_cast %147 : vector<256xf32> to vector<1x1x1x256xf32>
    %151 = vector.broadcast %150 : vector<1x1x1x256xf32> to vector<2x8x8x256xf32>
    %152 = arith.mulf %149, %151 : vector<2x8x8x256xf32>
    %153 = arith.addf %145, %152 : vector<2x8x8x256xf32>
    %c0_186 = arith.constant 0 : index
    %c0_187 = arith.constant 0 : index
    %c3_188 = arith.constant 3 : index
    %c4_189 = arith.constant 4 : index
    %c0_190 = arith.constant 0 : index
    %154 = vector.load %arg7[%c0_186, %c0_187, %c3_188, %c4_189, %c0_190] : memref<1x1x5x5x256xf32, #tpu.memory_space<vmem>>, vector<1x1x1x1x256xf32>
    %155 = vector.shape_cast %154 : vector<1x1x1x1x256xf32> to vector<256xf32>
    %c4_191 = arith.constant 4 : index
    %c0_192 = arith.constant 0 : index
    %c3_193 = arith.constant 3 : index
    %c0_194 = arith.constant 0 : index
    %c0_195 = arith.constant 0 : index
    %156 = vector.load %arg18[%c4_191, %c0_192, %c3_193, %c0_194, %c0_195] : memref<5x2x12x8x256xf32, #tpu.memory_space<vmem>>, vector<1x2x8x8x256xf32>
    %157 = vector.shape_cast %156 : vector<1x2x8x8x256xf32> to vector<2x8x8x256xf32>
    %158 = vector.shape_cast %155 : vector<256xf32> to vector<1x1x1x256xf32>
    %159 = vector.broadcast %158 : vector<1x1x1x256xf32> to vector<2x8x8x256xf32>
    %160 = arith.mulf %157, %159 : vector<2x8x8x256xf32>
    %161 = arith.addf %153, %160 : vector<2x8x8x256xf32>
    %c0_196 = arith.constant 0 : index
    %c0_197 = arith.constant 0 : index
    %c4_198 = arith.constant 4 : index
    %c0_199 = arith.constant 0 : index
    %c0_200 = arith.constant 0 : index
    %162 = vector.load %arg7[%c0_196, %c0_197, %c4_198, %c0_199, %c0_200] : memref<1x1x5x5x256xf32, #tpu.memory_space<vmem>>, vector<1x1x1x1x256xf32>
    %163 = vector.shape_cast %162 : vector<1x1x1x1x256xf32> to vector<256xf32>
    %c0_201 = arith.constant 0 : index
    %c0_202 = arith.constant 0 : index
    %c4_203 = arith.constant 4 : index
    %c0_204 = arith.constant 0 : index
    %c0_205 = arith.constant 0 : index
    %164 = vector.load %arg18[%c0_201, %c0_202, %c4_203, %c0_204, %c0_205] : memref<5x2x12x8x256xf32, #tpu.memory_space<vmem>>, vector<1x2x8x8x256xf32>
    %165 = vector.shape_cast %164 : vector<1x2x8x8x256xf32> to vector<2x8x8x256xf32>
    %166 = vector.shape_cast %163 : vector<256xf32> to vector<1x1x1x256xf32>
    %167 = vector.broadcast %166 : vector<1x1x1x256xf32> to vector<2x8x8x256xf32>
    %168 = arith.mulf %165, %167 : vector<2x8x8x256xf32>
    %169 = arith.addf %161, %168 : vector<2x8x8x256xf32>
    %c0_206 = arith.constant 0 : index
    %c0_207 = arith.constant 0 : index
    %c4_208 = arith.constant 4 : index
    %c1_209 = arith.constant 1 : index
    %c0_210 = arith.constant 0 : index
    %170 = vector.load %arg7[%c0_206, %c0_207, %c4_208, %c1_209, %c0_210] : memref<1x1x5x5x256xf32, #tpu.memory_space<vmem>>, vector<1x1x1x1x256xf32>
    %171 = vector.shape_cast %170 : vector<1x1x1x1x256xf32> to vector<256xf32>
    %c1_211 = arith.constant 1 : index
    %c0_212 = arith.constant 0 : index
    %c4_213 = arith.constant 4 : index
    %c0_214 = arith.constant 0 : index
    %c0_215 = arith.constant 0 : index
    %172 = vector.load %arg18[%c1_211, %c0_212, %c4_213, %c0_214, %c0_215] : memref<5x2x12x8x256xf32, #tpu.memory_space<vmem>>, vector<1x2x8x8x256xf32>
    %173 = vector.shape_cast %172 : vector<1x2x8x8x256xf32> to vector<2x8x8x256xf32>
    %174 = vector.shape_cast %171 : vector<256xf32> to vector<1x1x1x256xf32>
    %175 = vector.broadcast %174 : vector<1x1x1x256xf32> to vector<2x8x8x256xf32>
    %176 = arith.mulf %173, %175 : vector<2x8x8x256xf32>
    %177 = arith.addf %169, %176 : vector<2x8x8x256xf32>
    %c0_216 = arith.constant 0 : index
    %c0_217 = arith.constant 0 : index
    %c4_218 = arith.constant 4 : index
    %c2_219 = arith.constant 2 : index
    %c0_220 = arith.constant 0 : index
    %178 = vector.load %arg7[%c0_216, %c0_217, %c4_218, %c2_219, %c0_220] : memref<1x1x5x5x256xf32, #tpu.memory_space<vmem>>, vector<1x1x1x1x256xf32>
    %179 = vector.shape_cast %178 : vector<1x1x1x1x256xf32> to vector<256xf32>
    %c2_221 = arith.constant 2 : index
    %c0_222 = arith.constant 0 : index
    %c4_223 = arith.constant 4 : index
    %c0_224 = arith.constant 0 : index
    %c0_225 = arith.constant 0 : index
    %180 = vector.load %arg18[%c2_221, %c0_222, %c4_223, %c0_224, %c0_225] : memref<5x2x12x8x256xf32, #tpu.memory_space<vmem>>, vector<1x2x8x8x256xf32>
    %181 = vector.shape_cast %180 : vector<1x2x8x8x256xf32> to vector<2x8x8x256xf32>
    %182 = vector.shape_cast %179 : vector<256xf32> to vector<1x1x1x256xf32>
    %183 = vector.broadcast %182 : vector<1x1x1x256xf32> to vector<2x8x8x256xf32>
    %184 = arith.mulf %181, %183 : vector<2x8x8x256xf32>
    %185 = arith.addf %177, %184 : vector<2x8x8x256xf32>
    %c0_226 = arith.constant 0 : index
    %c0_227 = arith.constant 0 : index
    %c4_228 = arith.constant 4 : index
    %c3_229 = arith.constant 3 : index
    %c0_230 = arith.constant 0 : index
    %186 = vector.load %arg7[%c0_226, %c0_227, %c4_228, %c3_229, %c0_230] : memref<1x1x5x5x256xf32, #tpu.memory_space<vmem>>, vector<1x1x1x1x256xf32>
    %187 = vector.shape_cast %186 : vector<1x1x1x1x256xf32> to vector<256xf32>
    %c3_231 = arith.constant 3 : index
    %c0_232 = arith.constant 0 : index
    %c4_233 = arith.constant 4 : index
    %c0_234 = arith.constant 0 : index
    %c0_235 = arith.constant 0 : index
    %188 = vector.load %arg18[%c3_231, %c0_232, %c4_233, %c0_234, %c0_235] : memref<5x2x12x8x256xf32, #tpu.memory_space<vmem>>, vector<1x2x8x8x256xf32>
    %189 = vector.shape_cast %188 : vector<1x2x8x8x256xf32> to vector<2x8x8x256xf32>
    %190 = vector.shape_cast %187 : vector<256xf32> to vector<1x1x1x256xf32>
    %191 = vector.broadcast %190 : vector<1x1x1x256xf32> to vector<2x8x8x256xf32>
    %192 = arith.mulf %189, %191 : vector<2x8x8x256xf32>
    %193 = arith.addf %185, %192 : vector<2x8x8x256xf32>
    %c0_236 = arith.constant 0 : index
    %c0_237 = arith.constant 0 : index
    %c4_238 = arith.constant 4 : index
    %c4_239 = arith.constant 4 : index
    %c0_240 = arith.constant 0 : index
    %194 = vector.load %arg7[%c0_236, %c0_237, %c4_238, %c4_239, %c0_240] : memref<1x1x5x5x256xf32, #tpu.memory_space<vmem>>, vector<1x1x1x1x256xf32>
    %195 = vector.shape_cast %194 : vector<1x1x1x1x256xf32> to vector<256xf32>
    %c4_241 = arith.constant 4 : index
    %c0_242 = arith.constant 0 : index
    %c4_243 = arith.constant 4 : index
    %c0_244 = arith.constant 0 : index
    %c0_245 = arith.constant 0 : index
    %196 = vector.load %arg18[%c4_241, %c0_242, %c4_243, %c0_244, %c0_245] : memref<5x2x12x8x256xf32, #tpu.memory_space<vmem>>, vector<1x2x8x8x256xf32>
    %197 = vector.shape_cast %196 : vector<1x2x8x8x256xf32> to vector<2x8x8x256xf32>
    %198 = vector.shape_cast %195 : vector<256xf32> to vector<1x1x1x256xf32>
    %199 = vector.broadcast %198 : vector<1x1x1x256xf32> to vector<2x8x8x256xf32>
    %200 = arith.mulf %197, %199 : vector<2x8x8x256xf32>
    %201 = arith.addf %193, %200 : vector<2x8x8x256xf32>
    %c0_246 = arith.constant 0 : index
    %c0_247 = arith.constant 0 : index
    %c0_248 = arith.constant 0 : index
    %c0_249 = arith.constant 0 : index
    %202 = vector.load %arg8[%c0_246, %c0_247, %c0_248, %c0_249] : memref<1x1x1x256xf32, #tpu.memory_space<vmem>>, vector<1x1x1x256xf32>
    %203 = vector.shape_cast %202 : vector<1x1x1x256xf32> to vector<256xf32>
    %204 = vector.shape_cast %203 : vector<256xf32> to vector<1x1x1x256xf32>
    %205 = vector.broadcast %204 : vector<1x1x1x256xf32> to vector<2x8x8x256xf32>
    %206 = arith.addf %201, %205 : vector<2x8x8x256xf32>
    %cst = arith.constant 5.000000e-01 : f32
    %207 = vector.broadcast %cst : f32 to vector<2x8x8x256xf32>
    %208 = arith.mulf %207, %206 : vector<2x8x8x256xf32>
    %209 = arith.mulf %206, %206 : vector<2x8x8x256xf32>
    %210 = arith.mulf %209, %206 : vector<2x8x8x256xf32>
    %cst_250 = arith.constant 4.471500e-02 : f32
    %211 = vector.broadcast %cst_250 : f32 to vector<2x8x8x256xf32>
    %212 = arith.mulf %211, %210 : vector<2x8x8x256xf32>
    %213 = arith.addf %206, %212 : vector<2x8x8x256xf32>
    %cst_251 = arith.constant 0.797884583 : f32
    %214 = vector.broadcast %cst_251 : f32 to vector<2x8x8x256xf32>
    %215 = arith.mulf %214, %213 : vector<2x8x8x256xf32>
    %216 = math.tanh %215 : vector<2x8x8x256xf32>
    %cst_252 = arith.constant 1.000000e+00 : f32
    %217 = vector.broadcast %cst_252 : f32 to vector<2x8x8x256xf32>
    %218 = arith.addf %217, %216 : vector<2x8x8x256xf32>
    %219 = arith.mulf %208, %218 : vector<2x8x8x256xf32>
    %c0_253 = arith.constant 0 : index
    %c0_254 = arith.constant 0 : index
    %c0_255 = arith.constant 0 : index
    %c0_256 = arith.constant 0 : index
    %220 = vector.load %arg9[%c0_253, %c0_254, %c0_255, %c0_256] : memref<1x1x1x256xf32, #tpu.memory_space<vmem>>, vector<1x1x1x256xf32>
    %221 = vector.shape_cast %220 : vector<1x1x1x256xf32> to vector<256xf32>
    %222 = vector.shape_cast %221 : vector<256xf32> to vector<1x1x1x256xf32>
    %223 = vector.broadcast %222 : vector<1x1x1x256xf32> to vector<2x8x8x256xf32>
    %224 = arith.mulf %219, %223 : vector<2x8x8x256xf32>
    %c0_257 = arith.constant 0 : index
    %c0_258 = arith.constant 0 : index
    %c0_259 = arith.constant 0 : index
    %c0_260 = arith.constant 0 : index
    %225 = vector.load %arg10[%c0_257, %c0_258, %c0_259, %c0_260] : memref<1x1x1x256xf32, #tpu.memory_space<vmem>>, vector<1x1x1x256xf32>
    %226 = vector.shape_cast %225 : vector<1x1x1x256xf32> to vector<256xf32>
    %227 = vector.shape_cast %226 : vector<256xf32> to vector<1x1x1x256xf32>
    %228 = vector.broadcast %227 : vector<1x1x1x256xf32> to vector<2x8x8x256xf32>
    %229 = arith.addf %224, %228 : vector<2x8x8x256xf32>
    %c2_261 = arith.constant 2 : index
    %c0_262 = arith.constant 0 : index
    %c2_263 = arith.constant 2 : index
    %c0_264 = arith.constant 0 : index
    %c0_265 = arith.constant 0 : index
    %230 = vector.load %arg18[%c2_261, %c0_262, %c2_263, %c0_264, %c0_265] : memref<5x2x12x8x256xf32, #tpu.memory_space<vmem>>, vector<1x2x8x8x256xf32>
    %231 = vector.shape_cast %230 : vector<1x2x8x8x256xf32> to vector<2x8x8x256xf32>
    %232 = arith.addf %231, %229 : vector<2x8x8x256xf32>
    %233 = vector.shape_cast %232 : vector<2x8x8x256xf32> to vector<128x256xf32>
    %234 = arith.truncf %233 : vector<128x256xf32> to vector<128x256xbf16>
    %c0_266 = arith.constant 0 : index
    %c0_267 = arith.constant 0 : index
    %c0_268 = arith.constant 0 : index
    %c0_269 = arith.constant 0 : index
    %235 = vector.load %arg11[%c0_266, %c0_267, %c0_268, %c0_269] : memref<1x1x256x256xbf16, #tpu.memory_space<vmem>>, vector<1x1x256x256xbf16>
    %236 = vector.shape_cast %235 : vector<1x1x256x256xbf16> to vector<256x256xbf16>
    %cst_270 = arith.constant dense<0.000000e+00> : vector<128x256xf32>
    %237 = tpu.matmul %234, %236, %cst_270 {dimension_numbers = #tpu.dot_dimension_numbers<[1], [0], [0], [1], [0, 0, 1, 1], [], []>} : vector<128x256xbf16>, vector<256x256xbf16>, vector<128x256xf32> -> vector<128x256xf32>
    %c0_271 = arith.constant 0 : index
    %c0_272 = arith.constant 0 : index
    %c0_273 = arith.constant 0 : index
    %c0_274 = arith.constant 0 : index
    %238 = vector.load %arg12[%c0_271, %c0_272, %c0_273, %c0_274] : memref<1x1x1x256xf32, #tpu.memory_space<vmem>>, vector<1x1x1x256xf32>
    %239 = vector.shape_cast %238 : vector<1x1x1x256xf32> to vector<256xf32>
    %240 = vector.shape_cast %239 : vector<256xf32> to vector<1x256xf32>
    %241 = vector.broadcast %240 : vector<1x256xf32> to vector<128x256xf32>
    %242 = arith.addf %237, %241 : vector<128x256xf32>
    %cst_275 = arith.constant 5.000000e-01 : f32
    %243 = vector.broadcast %cst_275 : f32 to vector<128x256xf32>
    %244 = arith.mulf %243, %242 : vector<128x256xf32>
    %245 = arith.mulf %242, %242 : vector<128x256xf32>
    %246 = arith.mulf %245, %242 : vector<128x256xf32>
    %cst_276 = arith.constant 4.471500e-02 : f32
    %247 = vector.broadcast %cst_276 : f32 to vector<128x256xf32>
    %248 = arith.mulf %247, %246 : vector<128x256xf32>
    %249 = arith.addf %242, %248 : vector<128x256xf32>
    %cst_277 = arith.constant 0.797884583 : f32
    %250 = vector.broadcast %cst_277 : f32 to vector<128x256xf32>
    %251 = arith.mulf %250, %249 : vector<128x256xf32>
    %252 = math.tanh %251 : vector<128x256xf32>
    %cst_278 = arith.constant 1.000000e+00 : f32
    %253 = vector.broadcast %cst_278 : f32 to vector<128x256xf32>
    %254 = arith.addf %253, %252 : vector<128x256xf32>
    %255 = arith.mulf %244, %254 : vector<128x256xf32>
    %c0_279 = arith.constant 0 : index
    %c0_280 = arith.constant 0 : index
    %c0_281 = arith.constant 0 : index
    %c0_282 = arith.constant 0 : index
    %256 = vector.load %arg13[%c0_279, %c0_280, %c0_281, %c0_282] : memref<1x1x1x256xf32, #tpu.memory_space<vmem>>, vector<1x1x1x256xf32>
    %257 = vector.shape_cast %256 : vector<1x1x1x256xf32> to vector<256xf32>
    %258 = vector.shape_cast %257 : vector<256xf32> to vector<1x256xf32>
    %259 = vector.broadcast %258 : vector<1x256xf32> to vector<128x256xf32>
    %260 = arith.mulf %255, %259 : vector<128x256xf32>
    %c0_283 = arith.constant 0 : index
    %c0_284 = arith.constant 0 : index
    %c0_285 = arith.constant 0 : index
    %c0_286 = arith.constant 0 : index
    %261 = vector.load %arg14[%c0_283, %c0_284, %c0_285, %c0_286] : memref<1x1x1x256xf32, #tpu.memory_space<vmem>>, vector<1x1x1x256xf32>
    %262 = vector.shape_cast %261 : vector<1x1x1x256xf32> to vector<256xf32>
    %263 = vector.shape_cast %262 : vector<256xf32> to vector<1x256xf32>
    %264 = vector.broadcast %263 : vector<1x256xf32> to vector<128x256xf32>
    %265 = arith.addf %260, %264 : vector<128x256xf32>
    %266 = vector.shape_cast %265 : vector<128x256xf32> to vector<2x8x8x256xf32>
    %c1_i32 = arith.constant 1 : i32
    %267 = arith.addi %arg1, %c1_i32 : i32
    %c8_i32 = arith.constant 8 : i32
    %268 = arith.cmpi slt, %267, %c8_i32 : i32
    %269 = arith.extui %268 : i1 to i32
    %c0_i32_287 = arith.constant 0 : i32
    %270 = arith.cmpi ne, %269, %c0_i32_287 : i32
    scf.if %270 {
      %274 = tpu.iota {dimensions = array<i32: 0>} : vector<8x1xi32>
      %c2_i32 = arith.constant 2 : i32
      %275 = tpu.dynamic_rotate %266 by %c2_i32 dim 2 : vector<2x8x8x256xf32>, i32 -> vector<2x8x8x256xf32>
      %c-2_i32 = arith.constant -2 : i32
      %276 = vector.broadcast %c-2_i32 : i32 to vector<8x1xi32>
      %277 = arith.addi %274, %276 : vector<8x1xi32>
      %c0_i32_289 = arith.constant 0 : i32
      %278 = vector.broadcast %c0_i32_289 : i32 to vector<8x1xi32>
      %279 = arith.cmpi sge, %277, %278 : vector<8x1xi32>
      %c8_i32_290 = arith.constant 8 : i32
      %280 = vector.broadcast %c8_i32_290 : i32 to vector<8x1xi32>
      %281 = arith.cmpi slt, %277, %280 : vector<8x1xi32>
      %282 = arith.andi %279, %281 : vector<8x1xi1>
      %283 = arith.extui %282 : vector<8x1xi1> to vector<8x1xi32>
      %284 = arith.sitofp %283 : vector<8x1xi32> to vector<8x1xf32>
      %285 = vector.shape_cast %284 : vector<8x1xf32> to vector<1x1x8x1xf32>
      %286 = vector.broadcast %285 : vector<1x1x8x1xf32> to vector<2x8x8x256xf32>
      %287 = arith.mulf %275, %286 : vector<2x8x8x256xf32>
      %c0_291 = arith.constant 0 : index
      %c0_292 = arith.constant 0 : index
      %c2_293 = arith.constant 2 : index
      %c0_294 = arith.constant 0 : index
      %c0_295 = arith.constant 0 : index
      %288 = vector.load %arg18[%c0_291, %c0_292, %c2_293, %c0_294, %c0_295] : memref<5x2x12x8x256xf32, #tpu.memory_space<vmem>>, vector<1x2x8x8x256xf32>
      %289 = vector.shape_cast %288 : vector<1x2x8x8x256xf32> to vector<2x8x8x256xf32>
      %290 = vector.shape_cast %287 : vector<2x8x8x256xf32> to vector<1x2x8x8x256xf32>
      tpu.vector_store %arg18[%c0_291, %c0_292, %c2_293, %c0_294, %c0_295], %290 {strides = array<i32>} : memref<5x2x12x8x256xf32, #tpu.memory_space<vmem>>, vector<1x2x8x8x256xf32>,
      %c1_i32_296 = arith.constant 1 : i32
      %291 = tpu.dynamic_rotate %266 by %c1_i32_296 dim 2 : vector<2x8x8x256xf32>, i32 -> vector<2x8x8x256xf32>
      %c-1_i32 = arith.constant -1 : i32
      %292 = vector.broadcast %c-1_i32 : i32 to vector<8x1xi32>
      %293 = arith.addi %274, %292 : vector<8x1xi32>
      %c0_i32_297 = arith.constant 0 : i32
      %294 = vector.broadcast %c0_i32_297 : i32 to vector<8x1xi32>
      %295 = arith.cmpi sge, %293, %294 : vector<8x1xi32>
      %c8_i32_298 = arith.constant 8 : i32
      %296 = vector.broadcast %c8_i32_298 : i32 to vector<8x1xi32>
      %297 = arith.cmpi slt, %293, %296 : vector<8x1xi32>
      %298 = arith.andi %295, %297 : vector<8x1xi1>
      %299 = arith.extui %298 : vector<8x1xi1> to vector<8x1xi32>
      %300 = arith.sitofp %299 : vector<8x1xi32> to vector<8x1xf32>
      %301 = vector.shape_cast %300 : vector<8x1xf32> to vector<1x1x8x1xf32>
      %302 = vector.broadcast %301 : vector<1x1x8x1xf32> to vector<2x8x8x256xf32>
      %303 = arith.mulf %291, %302 : vector<2x8x8x256xf32>
      %c1_299 = arith.constant 1 : index
      %c0_300 = arith.constant 0 : index
      %c2_301 = arith.constant 2 : index
      %c0_302 = arith.constant 0 : index
      %c0_303 = arith.constant 0 : index
      %304 = vector.load %arg18[%c1_299, %c0_300, %c2_301, %c0_302, %c0_303] : memref<5x2x12x8x256xf32, #tpu.memory_space<vmem>>, vector<1x2x8x8x256xf32>
      %305 = vector.shape_cast %304 : vector<1x2x8x8x256xf32> to vector<2x8x8x256xf32>
      %306 = vector.shape_cast %303 : vector<2x8x8x256xf32> to vector<1x2x8x8x256xf32>
      tpu.vector_store %arg18[%c1_299, %c0_300, %c2_301, %c0_302, %c0_303], %306 {strides = array<i32>} : memref<5x2x12x8x256xf32, #tpu.memory_space<vmem>>, vector<1x2x8x8x256xf32>,
      %c2_304 = arith.constant 2 : index
      %c0_305 = arith.constant 0 : index
      %c2_306 = arith.constant 2 : index
      %c0_307 = arith.constant 0 : index
      %c0_308 = arith.constant 0 : index
      %307 = vector.load %arg18[%c2_304, %c0_305, %c2_306, %c0_307, %c0_308] : memref<5x2x12x8x256xf32, #tpu.memory_space<vmem>>, vector<1x2x8x8x256xf32>
      %308 = vector.shape_cast %307 : vector<1x2x8x8x256xf32> to vector<2x8x8x256xf32>
      %309 = vector.shape_cast %266 : vector<2x8x8x256xf32> to vector<1x2x8x8x256xf32>
      tpu.vector_store %arg18[%c2_304, %c0_305, %c2_306, %c0_307, %c0_308], %309 {strides = array<i32>} : memref<5x2x12x8x256xf32, #tpu.memory_space<vmem>>, vector<1x2x8x8x256xf32>,
      %c7_i32_309 = arith.constant 7 : i32
      %310 = tpu.dynamic_rotate %266 by %c7_i32_309 dim 2 : vector<2x8x8x256xf32>, i32 -> vector<2x8x8x256xf32>
      %c1_i32_310 = arith.constant 1 : i32
      %311 = vector.broadcast %c1_i32_310 : i32 to vector<8x1xi32>
      %312 = arith.addi %274, %311 : vector<8x1xi32>
      %c0_i32_311 = arith.constant 0 : i32
      %313 = vector.broadcast %c0_i32_311 : i32 to vector<8x1xi32>
      %314 = arith.cmpi sge, %312, %313 : vector<8x1xi32>
      %c8_i32_312 = arith.constant 8 : i32
      %315 = vector.broadcast %c8_i32_312 : i32 to vector<8x1xi32>
      %316 = arith.cmpi slt, %312, %315 : vector<8x1xi32>
      %317 = arith.andi %314, %316 : vector<8x1xi1>
      %318 = arith.extui %317 : vector<8x1xi1> to vector<8x1xi32>
      %319 = arith.sitofp %318 : vector<8x1xi32> to vector<8x1xf32>
      %320 = vector.shape_cast %319 : vector<8x1xf32> to vector<1x1x8x1xf32>
      %321 = vector.broadcast %320 : vector<1x1x8x1xf32> to vector<2x8x8x256xf32>
      %322 = arith.mulf %310, %321 : vector<2x8x8x256xf32>
      %c3_313 = arith.constant 3 : index
      %c0_314 = arith.constant 0 : index
      %c2_315 = arith.constant 2 : index
      %c0_316 = arith.constant 0 : index
      %c0_317 = arith.constant 0 : index
      %323 = vector.load %arg18[%c3_313, %c0_314, %c2_315, %c0_316, %c0_317] : memref<5x2x12x8x256xf32, #tpu.memory_space<vmem>>, vector<1x2x8x8x256xf32>
      %324 = vector.shape_cast %323 : vector<1x2x8x8x256xf32> to vector<2x8x8x256xf32>
      %325 = vector.shape_cast %322 : vector<2x8x8x256xf32> to vector<1x2x8x8x256xf32>
      tpu.vector_store %arg18[%c3_313, %c0_314, %c2_315, %c0_316, %c0_317], %325 {strides = array<i32>} : memref<5x2x12x8x256xf32, #tpu.memory_space<vmem>>, vector<1x2x8x8x256xf32>,
      %c6_i32 = arith.constant 6 : i32
      %326 = tpu.dynamic_rotate %266 by %c6_i32 dim 2 : vector<2x8x8x256xf32>, i32 -> vector<2x8x8x256xf32>
      %c2_i32_318 = arith.constant 2 : i32
      %327 = vector.broadcast %c2_i32_318 : i32 to vector<8x1xi32>
      %328 = arith.addi %274, %327 : vector<8x1xi32>
      %c0_i32_319 = arith.constant 0 : i32
      %329 = vector.broadcast %c0_i32_319 : i32 to vector<8x1xi32>
      %330 = arith.cmpi sge, %328, %329 : vector<8x1xi32>
      %c8_i32_320 = arith.constant 8 : i32
      %331 = vector.broadcast %c8_i32_320 : i32 to vector<8x1xi32>
      %332 = arith.cmpi slt, %328, %331 : vector<8x1xi32>
      %333 = arith.andi %330, %332 : vector<8x1xi1>
      %334 = arith.extui %333 : vector<8x1xi1> to vector<8x1xi32>
      %335 = arith.sitofp %334 : vector<8x1xi32> to vector<8x1xf32>
      %336 = vector.shape_cast %335 : vector<8x1xf32> to vector<1x1x8x1xf32>
      %337 = vector.broadcast %336 : vector<1x1x8x1xf32> to vector<2x8x8x256xf32>
      %338 = arith.mulf %326, %337 : vector<2x8x8x256xf32>
      %c4_321 = arith.constant 4 : index
      %c0_322 = arith.constant 0 : index
      %c2_323 = arith.constant 2 : index
      %c0_324 = arith.constant 0 : index
      %c0_325 = arith.constant 0 : index
      %339 = vector.load %arg18[%c4_321, %c0_322, %c2_323, %c0_324, %c0_325] : memref<5x2x12x8x256xf32, #tpu.memory_space<vmem>>, vector<1x2x8x8x256xf32>
      %340 = vector.shape_cast %339 : vector<1x2x8x8x256xf32> to vector<2x8x8x256xf32>
      %341 = vector.shape_cast %338 : vector<2x8x8x256xf32> to vector<1x2x8x8x256xf32>
      tpu.vector_store %arg18[%c4_321, %c0_322, %c2_323, %c0_324, %c0_325], %341 {strides = array<i32>} : memref<5x2x12x8x256xf32, #tpu.memory_space<vmem>>, vector<1x2x8x8x256xf32>,
    } else {
    }
    %c7_i32 = arith.constant 7 : i32
    %271 = arith.cmpi eq, %arg1, %c7_i32 : i32
    %272 = arith.extui %271 : i1 to i32
    %c0_i32_288 = arith.constant 0 : i32
    %273 = arith.cmpi ne, %272, %c0_i32_288 : i32
    scf.if %273 {
      %cst_289 = arith.constant dense<0.000000e+00> : vector<2x256xf32>
      %274 = vector.multi_reduction <add>, %266, %cst_289 [1, 2] : vector<2x8x8x256xf32> to vector<2x256xf32>
      %cst_290 = arith.constant 6.400000e+01 : f32
      %275 = vector.broadcast %cst_290 : f32 to vector<2x256xf32>
      %276 = arith.divf %274, %275 : vector<2x256xf32>
      %277 = arith.truncf %276 : vector<2x256xf32> to vector<2x256xbf16>
      %c0_291 = arith.constant 0 : index
      %c0_292 = arith.constant 0 : index
      %c0_293 = arith.constant 0 : index
      %278 = vector.load %arg15[%c0_291, %c0_292, %c0_293] : memref<1x256x4xbf16, #tpu.memory_space<vmem>>, vector<1x256x4xbf16>
      %279 = vector.shape_cast %278 : vector<1x256x4xbf16> to vector<256x4xbf16>
      %cst_294 = arith.constant dense<0.000000e+00> : vector<2x4xf32>
      %280 = tpu.matmul %277, %279, %cst_294 {dimension_numbers = #tpu.dot_dimension_numbers<[1], [0], [0], [1], [0, 0, 1, 1], [], []>} : vector<2x256xbf16>, vector<256x4xbf16>, vector<2x4xf32> -> vector<2x4xf32>
      %c0_295 = arith.constant 0 : index
      %c0_296 = arith.constant 0 : index
      %c0_297 = arith.constant 0 : index
      %281 = vector.load %arg16[%c0_295, %c0_296, %c0_297] : memref<1x1x4xf32, #tpu.memory_space<vmem>>, vector<1x1x4xf32>
      %282 = vector.shape_cast %281 : vector<1x1x4xf32> to vector<1x4xf32>
      %283 = vector.broadcast %282 : vector<1x4xf32> to vector<2x4xf32>
      %284 = arith.addf %280, %283 : vector<2x4xf32>
      %285 = arith.negf %284 : vector<2x4xf32>
      %286 = math.exp %285 : vector<2x4xf32>
      %cst_298 = arith.constant 1.000000e+00 : f32
      %287 = vector.broadcast %cst_298 : f32 to vector<2x4xf32>
      %288 = arith.addf %287, %286 : vector<2x4xf32>
      %289 = arith.divf %287, %288 : vector<2x4xf32>
      %c0_299 = arith.constant 0 : index
      %c0_300 = arith.constant 0 : index
      %c0_301 = arith.constant 0 : index
      %290 = vector.load %arg17[%c0_299, %c0_300, %c0_301] : memref<1x2x4xf32, #tpu.memory_space<vmem>>, vector<1x2x4xf32>
      %291 = vector.shape_cast %290 : vector<1x2x4xf32> to vector<2x4xf32>
      %292 = vector.shape_cast %289 : vector<2x4xf32> to vector<1x2x4xf32>
      tpu.vector_store %arg17[%c0_299, %c0_300, %c0_301], %292 {strides = array<i32>} : memref<1x2x4xf32, #tpu.memory_space<vmem>>, vector<1x2x4xf32>,
    } else {
    }
    return
  }
  func.func @transform_0(%arg0: i32, %arg1: i32) -> (i32, i32, i32, i32) {
    %c0_i32 = arith.constant 0 : i32
    %c0_i32_0 = arith.constant 0 : i32
    %c0_i32_1 = arith.constant 0 : i32
    %c0_i32_2 = arith.constant 0 : i32
    %c0_i32_3 = arith.constant 0 : i32
    return %c0_i32, %c0_i32_0, %c0_i32_1, %c0_i32_2 : i32, i32, i32, i32
  }
  func.func @transform_1(%arg0: i32, %arg1: i32) -> (i32, i32, i32) {
    %c0_i32 = arith.constant 0 : i32
    %c0_i32_0 = arith.constant 0 : i32
    %c0_i32_1 = arith.constant 0 : i32
    return %arg0, %c0_i32, %c0_i32_0 : i32, i32, i32
  }
  func.func @transform_2(%arg0: i32, %arg1: i32) -> (i32, i32, i32) {
    %c0_i32 = arith.constant 0 : i32
    %c0_i32_0 = arith.constant 0 : i32
    %c0_i32_1 = arith.constant 0 : i32
    return %arg0, %c0_i32, %c0_i32_0 : i32, i32, i32
  }
  func.func @transform_3(%arg0: i32, %arg1: i32) -> (i32, i32, i32) {
    %c0_i32 = arith.constant 0 : i32
    %c0_i32_0 = arith.constant 0 : i32
    %c0_i32_1 = arith.constant 0 : i32
    return %arg0, %c0_i32, %c0_i32_0 : i32, i32, i32
  }
  func.func @transform_4(%arg0: i32, %arg1: i32) -> (i32, i32, i32) {
    %c0_i32 = arith.constant 0 : i32
    %c0_i32_0 = arith.constant 0 : i32
    %c0_i32_1 = arith.constant 0 : i32
    return %arg0, %c0_i32, %c0_i32_0 : i32, i32, i32
  }
  func.func @transform_5(%arg0: i32, %arg1: i32) -> (i32, i32, i32, i32, i32) {
    %c0_i32 = arith.constant 0 : i32
    %c0_i32_0 = arith.constant 0 : i32
    %c0_i32_1 = arith.constant 0 : i32
    %c0_i32_2 = arith.constant 0 : i32
    return %arg0, %arg1, %c0_i32, %c0_i32_0, %c0_i32_1 : i32, i32, i32, i32, i32
  }
  func.func @transform_6(%arg0: i32, %arg1: i32) -> (i32, i32, i32, i32) {
    %c0_i32 = arith.constant 0 : i32
    %c0_i32_0 = arith.constant 0 : i32
    %c0_i32_1 = arith.constant 0 : i32
    return %arg0, %arg1, %c0_i32, %c0_i32_0 : i32, i32, i32, i32
  }
  func.func @transform_7(%arg0: i32, %arg1: i32) -> (i32, i32, i32, i32) {
    %c0_i32 = arith.constant 0 : i32
    %c0_i32_0 = arith.constant 0 : i32
    %c0_i32_1 = arith.constant 0 : i32
    return %arg0, %arg1, %c0_i32, %c0_i32_0 : i32, i32, i32, i32
  }
  func.func @transform_8(%arg0: i32, %arg1: i32) -> (i32, i32, i32, i32) {
    %c0_i32 = arith.constant 0 : i32
    %c0_i32_0 = arith.constant 0 : i32
    %c0_i32_1 = arith.constant 0 : i32
    return %arg0, %arg1, %c0_i32, %c0_i32_0 : i32, i32, i32, i32
  }
  func.func @transform_9(%arg0: i32, %arg1: i32) -> (i32, i32, i32, i32) {
    %c0_i32 = arith.constant 0 : i32
    %c0_i32_0 = arith.constant 0 : i32
    %c0_i32_1 = arith.constant 0 : i32
    return %arg0, %arg1, %c0_i32, %c0_i32_0 : i32, i32, i32, i32
  }
  func.func @transform_10(%arg0: i32, %arg1: i32) -> (i32, i32, i32, i32) {
    %c0_i32 = arith.constant 0 : i32
    %c0_i32_0 = arith.constant 0 : i32
    %c0_i32_1 = arith.constant 0 : i32
    return %arg0, %arg1, %c0_i32, %c0_i32_0 : i32, i32, i32, i32
  }
  func.func @transform_11(%arg0: i32, %arg1: i32) -> (i32, i32, i32, i32) {
    %c0_i32 = arith.constant 0 : i32
    %c0_i32_0 = arith.constant 0 : i32
    %c0_i32_1 = arith.constant 0 : i32
    return %arg0, %arg1, %c0_i32, %c0_i32_0 : i32, i32, i32, i32
  }
  func.func @transform_12(%arg0: i32, %arg1: i32) -> (i32, i32, i32, i32) {
    %c0_i32 = arith.constant 0 : i32
    %c0_i32_0 = arith.constant 0 : i32
    %c0_i32_1 = arith.constant 0 : i32
    return %arg0, %arg1, %c0_i32, %c0_i32_0 : i32, i32, i32, i32
  }
  func.func @transform_13(%arg0: i32, %arg1: i32) -> (i32, i32, i32) {
    %c0_i32 = arith.constant 0 : i32
    %c0_i32_0 = arith.constant 0 : i32
    %c0_i32_1 = arith.constant 0 : i32
    return %arg0, %c0_i32, %c0_i32_0 : i32, i32, i32
  }
  func.func @transform_14(%arg0: i32, %arg1: i32) -> (i32, i32, i32) {
    %c0_i32 = arith.constant 0 : i32
    %c0_i32_0 = arith.constant 0 : i32
    %c0_i32_1 = arith.constant 0 : i32
    return %arg0, %c0_i32, %c0_i32_0 : i32, i32, i32
  }
  func.func @transform_15(%arg0: i32, %arg1: i32) -> (i32, i32, i32) {
    %c0_i32 = arith.constant 0 : i32
    %c0_i32_0 = arith.constant 0 : i32
    %c0_i32_1 = arith.constant 0 : i32
    return %arg0, %c0_i32, %c0_i32_0 : i32, i32, i32
  }
}

</mosaic_0001>

<llo_original>
// kernel: sequential_decision_tree_forward.1
$region0: #{sequential_decision_tree_forward.1}
  #allocation0 [shape = 'u32[]', space=smem, size = 0x4, offset = 0x4, fixed_abs, tag = 'smem constant byte address 0x4 - core index']
  #allocation1 [shape = 'u32[72,128]{1,0:T(1,128)}', space=vmem, size = 0x9000, scoped, tag = 'internal scratch']
  #allocation2 [shape = 'f32[5,2,12,8,256]{4,3,2,1,0:T(8,128)}', space=vmem, size = 0xf0000, scoped, tag = 'scratch operand']
  %s0 = inlined_call_operand.vmem [shape: f32[2,8,8,3], index: 0, kind: input, shape index: {}]
  %s1 = inlined_call_operand.vmem [shape: f32[8,3,256], index: 1, kind: input, shape index: {}]
  %s2 = inlined_call_operand.vmem [shape: f32[8,1,256], index: 2, kind: input, shape index: {}]
  %s3 = inlined_call_operand.vmem [shape: f32[8,1,256], index: 3, kind: input, shape index: {}]
  %s4 = inlined_call_operand.vmem [shape: f32[8,1,256], index: 4, kind: input, shape index: {}]
  %s5 = inlined_call_operand.vmem [shape: f32[8,8,5,5,256], index: 5, kind: input, shape index: {}]
  %s6 = inlined_call_operand.vmem [shape: f32[8,8,1,256], index: 6, kind: input, shape index: {}]
  %s7 = inlined_call_operand.vmem [shape: f32[8,8,1,256], index: 7, kind: input, shape index: {}]
  %s8 = inlined_call_operand.vmem [shape: f32[8,8,1,256], index: 8, kind: input, shape index: {}]
  %s9 = inlined_call_operand.hbm [shape: bf16[8,8,256,256], index: 9, kind: input, shape index: {}]
  %s10 = inlined_call_operand.vmem [shape: f32[8,8,1,256], index: 10, kind: input, shape index: {}]
  %s11 = inlined_call_operand.vmem [shape: f32[8,8,1,256], index: 11, kind: input, shape index: {}]
  %s12 = inlined_call_operand.vmem [shape: f32[8,8,1,256], index: 12, kind: input, shape index: {}]
  %s13 = inlined_call_operand.vmem [shape: bf16[8,256,4], index: 13, kind: input, shape index: {}]
  %s14 = inlined_call_operand.vmem [shape: f32[8,1,4], index: 14, kind: input, shape index: {}]
  %s15 = inlined_call_operand.vmem [shape: f32[8,2,4], index: 15, kind: output, shape index: {}]
  %s16 = sld [smem:[#allocation0]]
  $region109: #{sequential_decision_tree_forward.1} parent=0
    _
  %s18 = ssub.s32 1, %s16
  %s19 = scalar_select 0, %s18, %s16
  $region1: #{sequential_decision_tree_forward.1} parent=0
    #allocation3 [shape = 'u8[262144]{0}', space=vmem, size = 0x40000, scoped, tag = 'input window, operand 9']
    #allocation4 [shape = 's32[2]{0}', space=sflag, size = 0x8, scoped, tag = 'scoped memory for sequential_decision_tree_forward.1']
    %20 = vsyncpa [#allocation4], 0
    %s21 = scalar_lea.sflag [#allocation4], 1
    %22 = vsyncpa %s21, 0
    loop: start=0, step=1, limit=66
    $region2: #{sequential_decision_tree_forward.1} parent=1 // loop_pre_header
      _
    $region3: #{sequential_decision_tree_forward.1} parent=1 // loop_header
      %s24 = sphi 0, %s28
      %p25 = scmp.ge.s32.totalorder %s24, 66
      %s31 = sphi 0, %s43
      %s32 = sphi 0, %s39
      %s33 = sphi 0, %s31
      %s34 = sphi 0, %s32
      %s35 = sphi 0, %s33
      %s36 = sphi 0, %s34
      %s44 = sphi 0, %s44
      %s46 = sphi 0, %s44
      %s47 = sphi 0, %s46
      %s61 = sphi 0, %s47
      %s67 = sphi 0, %s69
      %s70 = sphi 0, %s67
      %s71 = sphi 0, %s70
      %s87 = sphi 0, %s71
      %s93 = sphi 0, %s95
      %s96 = sphi 0, %s93
      %s97 = sphi 0, %s96
      %s113 = sphi 0, %s97
      %s119 = sphi 0, %s121
      %s122 = sphi 0, %s119
      %s123 = sphi 0, %s122
      %s139 = sphi 0, %s123
      %s145 = sphi 0, %s147
      %s148 = sphi 0, %s145
      %s149 = sphi 0, %s148
      %s165 = sphi 0, %s149
      %s173 = sphi 0, %s175
      %s176 = sphi 0, %s173
      %s177 = sphi 0, %s176
      %s193 = sphi 0, %s177
      %s201 = sphi 0, %s203
      %s204 = sphi 0, %s201
      %s205 = sphi 0, %s204
      %s221 = sphi 0, %s205
      %s229 = sphi 0, %s231
      %s232 = sphi 0, %s229
      %s233 = sphi 0, %s232
      %s249 = sphi 0, %s233
      %s257 = sphi 0, %s259
      %s260 = sphi 0, %s257
      %s261 = sphi 0, %s260
      %s277 = sphi 0, %s261
      %s285 = sphi 0, %s287
      %s288 = sphi 0, %s285
      %s289 = sphi 0, %s288
      %s305 = sphi 0, %s289
      %s313 = sphi 0, %s315
      %s316 = sphi 0, %s313
      %s317 = sphi 0, %s316
      %s333 = sphi 0, %s317
      %s341 = sphi 0, %s343
      %s344 = sphi 0, %s341
      %s345 = sphi 0, %s344
      %s361 = sphi 0, %s345
      %s369 = sphi 0, %s371
      %s372 = sphi 0, %s369
      %s373 = sphi 0, %s372
      %s389 = sphi 0, %s373
      %s395 = sphi 0, %s397
      %s398 = sphi 0, %s395
      %s399 = sphi 0, %s398
      %s415 = sphi 0, %s399
      %s421 = sphi 0, %s423
      %s424 = sphi 0, %s421
      %s425 = sphi 0, %s424
      %s441 = sphi 0, %s425
      %s447 = sphi 0, %s449
      %s450 = sphi 0, %s447
      %s451 = sphi 0, %s450
      %s467 = sphi 0, %s451
    $region4: #{sequential_decision_tree_forward.1} parent=1 // loop_header_branch
      %27 = sbr.rel (%p25) target = $region8
    $region5: #{sequential_decision_tree_forward.1} parent=1 // loop_body
      %s29 = ssub.s32 %s24, 1
      %s30 = ssub.s32 %s24, 2
      %s37 = sadd.s32 1, %s32
      %p38 = scmp.ge.s32.totalorder %s37, 8
      %s39 = scalar_select %p38, 0, %s37
      %s40 = sadd.s32 1, %s31
      %s41 = scalar_select %p38, %s40, %s31
      %p42 = scmp.ge.s32.totalorder %s41, 8
      %s43 = scalar_select %p42, 0, %s41
      %s45 = sadd.s32 %s44, 1
      %p48 = scmp.eq.s32.totalorder %s24, 63
      %p49 = scmp.ne.s32.totalorder %s44, %s46
      %p50 = scmp.eq.s32.totalorder %s24, 0
      %p51 = por %p49, %p50
      %p52 = scmp.ne.s32.totalorder %s44, %s46
      %p53 = scmp.eq.s32.totalorder %s29, 63
      %p54 = por %p52, %p53
      %p55 = scmp.ne.s32.totalorder %s46, %s47
      %p56 = scmp.eq.s32.totalorder %s29, 0
      %p57 = por %p55, %p56
      %p58 = scmp.ne.s32.totalorder %s46, %s47
      %p59 = scmp.eq.s32.totalorder %s30, 63
      %p60 = por %p58, %p59
      %p62 = scmp.ne.s32.totalorder %s47, %s61
      %p63 = scmp.eq.s32.totalorder %s30, 0
      %p64 = por %p62, %p63
      %s65 = ssub.s32 %s31, %s43
      %p66 = scmp.eq.s32.totalorder %s65, 0
      %s68 = sadd.s32 %s67, 1
      %s69 = scalar_select %p66, %s67, %s68
      %p72 = pneg %p66
      %p73 = scmp.eq.s32.totalorder %s24, 63
      %p74 = por %p72, %p73
      %p75 = scmp.ne.s32.totalorder %s67, %s70
      %p76 = scmp.eq.s32.totalorder %s24, 0
      %p77 = por %p75, %p76
      %p78 = scmp.ne.s32.totalorder %s67, %s70
      %p79 = scmp.eq.s32.totalorder %s29, 63
      %p80 = por %p78, %p79
      %p81 = scmp.ne.s32.totalorder %s70, %s71
      %p82 = scmp.eq.s32.totalorder %s29, 0
      %p83 = por %p81, %p82
      %p84 = scmp.ne.s32.totalorder %s70, %s71
      %p85 = scmp.eq.s32.totalorder %s30, 63
      %p86 = por %p84, %p85
      %p88 = scmp.ne.s32.totalorder %s71, %s87
      %p89 = scmp.eq.s32.totalorder %s30, 0
      %p90 = por %p88, %p89
      %s91 = ssub.s32 %s31, %s43
      %p92 = scmp.eq.s32.totalorder %s91, 0
      %s94 = sadd.s32 %s93, 1
      %s95 = scalar_select %p92, %s93, %s94
      %p98 = pneg %p92
      %p99 = scmp.eq.s32.totalorder %s24, 63
      %p100 = por %p98, %p99
      %p101 = scmp.ne.s32.totalorder %s93, %s96
      %p102 = scmp.eq.s32.totalorder %s24, 0
      %p103 = por %p101, %p102
      %p104 = scmp.ne.s32.totalorder %s93, %s96
      %p105 = scmp.eq.s32.totalorder %s29, 63
      %p106 = por %p104, %p105
      %p107 = scmp.ne.s32.totalorder %s96, %s97
      %p108 = scmp.eq.s32.totalorder %s29, 0
      %p109 = por %p107, %p108
      %p110 = scmp.ne.s32.totalorder %s96, %s97
      %p111 = scmp.eq.s32.totalorder %s30, 63
      %p112 = por %p110, %p111
      %p114 = scmp.ne.s32.totalorder %s97, %s113
      %p115 = scmp.eq.s32.totalorder %s30, 0
      %p116 = por %p114, %p115
      %s117 = ssub.s32 %s31, %s43
      %p118 = scmp.eq.s32.totalorder %s117, 0
      %s120 = sadd.s32 %s119, 1
      %s121 = scalar_select %p118, %s119, %s120
      %p124 = pneg %p118
      %p125 = scmp.eq.s32.totalorder %s24, 63
      %p126 = por %p124, %p125
      %p127 = scmp.ne.s32.totalorder %s119, %s122
      %p128 = scmp.eq.s32.totalorder %s24, 0
      %p129 = por %p127, %p128
      %p130 = scmp.ne.s32.totalorder %s119, %s122
      %p131 = scmp.eq.s32.totalorder %s29, 63
      %p132 = por %p130, %p131
      %p133 = scmp.ne.s32.totalorder %s122, %s123
      %p134 = scmp.eq.s32.totalorder %s29, 0
      %p135 = por %p133, %p134
      %p136 = scmp.ne.s32.totalorder %s122, %s123
      %p137 = scmp.eq.s32.totalorder %s30, 63
      %p138 = por %p136, %p137
      %p140 = scmp.ne.s32.totalorder %s123, %s139
      %p141 = scmp.eq.s32.totalorder %s30, 0
      %p142 = por %p140, %p141
      %s143 = ssub.s32 %s31, %s43
      %p144 = scmp.eq.s32.totalorder %s143, 0
      %s146 = sadd.s32 %s145, 1
      %s147 = scalar_select %p144, %s145, %s146
      %p150 = pneg %p144
      %p151 = scmp.eq.s32.totalorder %s24, 63
      %p152 = por %p150, %p151
      %p153 = scmp.ne.s32.totalorder %s145, %s148
      %p154 = scmp.eq.s32.totalorder %s24, 0
      %p155 = por %p153, %p154
      %p156 = scmp.ne.s32.totalorder %s145, %s148
      %p157 = scmp.eq.s32.totalorder %s29, 63
      %p158 = por %p156, %p157
      %p159 = scmp.ne.s32.totalorder %s148, %s149
      %p160 = scmp.eq.s32.totalorder %s29, 0
      %p161 = por %p159, %p160
      %p162 = scmp.ne.s32.totalorder %s148, %s149
      %p163 = scmp.eq.s32.totalorder %s30, 63
      %p164 = por %p162, %p163
      %p166 = scmp.ne.s32.totalorder %s149, %s165
      %p167 = scmp.eq.s32.totalorder %s30, 0
      %p168 = por %p166, %p167
      %s169 = ssub.s32 %s31, %s43
      %s170 = ssub.s32 %s32, %s39
      %s171 = sor.u32 %s169, %s170
      %p172 = scmp.eq.s32.totalorder %s171, 0
      %s174 = sadd.s32 %s173, 1
      %s175 = scalar_select %p172, %s173, %s174
      %p178 = pneg %p172
      %p179 = scmp.eq.s32.totalorder %s24, 63
      %p180 = por %p178, %p179
      %p181 = scmp.ne.s32.totalorder %s173, %s176
      %p182 = scmp.eq.s32.totalorder %s24, 0
      %p183 = por %p181, %p182
      %p184 = scmp.ne.s32.totalorder %s173, %s176
      %p185 = scmp.eq.s32.totalorder %s29, 63
      %p186 = por %p184, %p185
      %p187 = scmp.ne.s32.totalorder %s176, %s177
      %p188 = scmp.eq.s32.totalorder %s29, 0
      %p189 = por %p187, %p188
      %p190 = scmp.ne.s32.totalorder %s176, %s177
      %p191 = scmp.eq.s32.totalorder %s30, 63
      %p192 = por %p190, %p191
      %p194 = scmp.ne.s32.totalorder %s177, %s193
      %p195 = scmp.eq.s32.totalorder %s30, 0
      %p196 = por %p194, %p195
      %s197 = ssub.s32 %s31, %s43
      %s198 = ssub.s32 %s32, %s39
      %s199 = sor.u32 %s197, %s198
      %p200 = scmp.eq.s32.totalorder %s199, 0
      %s202 = sadd.s32 %s201, 1
      %s203 = scalar_select %p200, %s201, %s202
      %p206 = pneg %p200
      %p207 = scmp.eq.s32.totalorder %s24, 63
      %p208 = por %p206, %p207
      %p209 = scmp.ne.s32.totalorder %s201, %s204
      %p210 = scmp.eq.s32.totalorder %s24, 0
      %p211 = por %p209, %p210
      %p212 = scmp.ne.s32.totalorder %s201, %s204
      %p213 = scmp.eq.s32.totalorder %s29, 63
      %p214 = por %p212, %p213
      %p215 = scmp.ne.s32.totalorder %s204, %s205
      %p216 = scmp.eq.s32.totalorder %s29, 0
      %p217 = por %p215, %p216
      %p218 = scmp.ne.s32.totalorder %s204, %s205
      %p219 = scmp.eq.s32.totalorder %s30, 63
      %p220 = por %p218, %p219
      %p222 = scmp.ne.s32.totalorder %s205, %s221
      %p223 = scmp.eq.s32.totalorder %s30, 0
      %p224 = por %p222, %p223
      %s225 = ssub.s32 %s31, %s43
      %s226 = ssub.s32 %s32, %s39
      %s227 = sor.u32 %s225, %s226
      %p228 = scmp.eq.s32.totalorder %s227, 0
      %s230 = sadd.s32 %s229, 1
      %s231 = scalar_select %p228, %s229, %s230
      %p234 = pneg %p228
      %p235 = scmp.eq.s32.totalorder %s24, 63
      %p236 = por %p234, %p235
      %p237 = scmp.ne.s32.totalorder %s229, %s232
      %p238 = scmp.eq.s32.totalorder %s24, 0
      %p239 = por %p237, %p238
      %p240 = scmp.ne.s32.totalorder %s229, %s232
      %p241 = scmp.eq.s32.totalorder %s29, 63
      %p242 = por %p240, %p241
      %p243 = scmp.ne.s32.totalorder %s232, %s233
      %p244 = scmp.eq.s32.totalorder %s29, 0
      %p245 = por %p243, %p244
      %p246 = scmp.ne.s32.totalorder %s232, %s233
      %p247 = scmp.eq.s32.totalorder %s30, 63
      %p248 = por %p246, %p247
      %p250 = scmp.ne.s32.totalorder %s233, %s249
      %p251 = scmp.eq.s32.totalorder %s30, 0
      %p252 = por %p250, %p251
      %s253 = ssub.s32 %s31, %s43
      %s254 = ssub.s32 %s32, %s39
      %s255 = sor.u32 %s253, %s254
      %p256 = scmp.eq.s32.totalorder %s255, 0
      %s258 = sadd.s32 %s257, 1
      %s259 = scalar_select %p256, %s257, %s258
      %p262 = pneg %p256
      %p263 = scmp.eq.s32.totalorder %s24, 63
      %p264 = por %p262, %p263
      %p265 = scmp.ne.s32.totalorder %s257, %s260
      %p266 = scmp.eq.s32.totalorder %s24, 0
      %p267 = por %p265, %p266
      %p268 = scmp.ne.s32.totalorder %s257, %s260
      %p269 = scmp.eq.s32.totalorder %s29, 63
      %p270 = por %p268, %p269
      %p271 = scmp.ne.s32.totalorder %s260, %s261
      %p272 = scmp.eq.s32.totalorder %s29, 0
      %p273 = por %p271, %p272
      %p274 = scmp.ne.s32.totalorder %s260, %s261
      %p275 = scmp.eq.s32.totalorder %s30, 63
      %p276 = por %p274, %p275
      %p278 = scmp.ne.s32.totalorder %s261, %s277
      %p279 = scmp.eq.s32.totalorder %s30, 0
      %p280 = por %p278, %p279
      %s281 = ssub.s32 %s31, %s43
      %s282 = ssub.s32 %s32, %s39
      %s283 = sor.u32 %s281, %s282
      %p284 = scmp.eq.s32.totalorder %s283, 0
      %s286 = sadd.s32 %s285, 1
      %s287 = scalar_select %p284, %s285, %s286
      %p290 = pneg %p284
      %p291 = scmp.eq.s32.totalorder %s24, 63
      %p292 = por %p290, %p291
      %p293 = scmp.ne.s32.totalorder %s285, %s288
      %p294 = scmp.eq.s32.totalorder %s24, 0
      %p295 = por %p293, %p294
      %p296 = scmp.ne.s32.totalorder %s285, %s288
      %p297 = scmp.eq.s32.totalorder %s29, 63
      %p298 = por %p296, %p297
      %p299 = scmp.ne.s32.totalorder %s288, %s289
      %p300 = scmp.eq.s32.totalorder %s29, 0
      %p301 = por %p299, %p300
      %p302 = scmp.ne.s32.totalorder %s288, %s289
      %p303 = scmp.eq.s32.totalorder %s30, 63
      %p304 = por %p302, %p303
      %p306 = scmp.ne.s32.totalorder %s289, %s305
      %p307 = scmp.eq.s32.totalorder %s30, 0
      %p308 = por %p306, %p307
      %s309 = ssub.s32 %s31, %s43
      %s310 = ssub.s32 %s32, %s39
      %s311 = sor.u32 %s309, %s310
      %p312 = scmp.eq.s32.totalorder %s311, 0
      %s314 = sadd.s32 %s313, 1
      %s315 = scalar_select %p312, %s313, %s314
      %p318 = pneg %p312
      %p319 = scmp.eq.s32.totalorder %s24, 63
      %p320 = por %p318, %p319
      %p321 = scmp.ne.s32.totalorder %s313, %s316
      %p322 = scmp.eq.s32.totalorder %s24, 0
      %p323 = por %p321, %p322
      %p324 = scmp.ne.s32.totalorder %s313, %s316
      %p325 = scmp.eq.s32.totalorder %s29, 63
      %p326 = por %p324, %p325
      %p327 = scmp.ne.s32.totalorder %s316, %s317
      %p328 = scmp.eq.s32.totalorder %s29, 0
      %p329 = por %p327, %p328
      %p330 = scmp.ne.s32.totalorder %s316, %s317
      %p331 = scmp.eq.s32.totalorder %s30, 63
      %p332 = por %p330, %p331
      %p334 = scmp.ne.s32.totalorder %s317, %s333
      %p335 = scmp.eq.s32.totalorder %s30, 0
      %p336 = por %p334, %p335
      %s337 = ssub.s32 %s31, %s43
      %s338 = ssub.s32 %s32, %s39
      %s339 = sor.u32 %s337, %s338
      %p340 = scmp.eq.s32.totalorder %s339, 0
      %s342 = sadd.s32 %s341, 1
      %s343 = scalar_select %p340, %s341, %s342
      %p346 = pneg %p340
      %p347 = scmp.eq.s32.totalorder %s24, 63
      %p348 = por %p346, %p347
      %p349 = scmp.ne.s32.totalorder %s341, %s344
      %p350 = scmp.eq.s32.totalorder %s24, 0
      %p351 = por %p349, %p350
      %p352 = scmp.ne.s32.totalorder %s341, %s344
      %p353 = scmp.eq.s32.totalorder %s29, 63
      %p354 = por %p352, %p353
      %p355 = scmp.ne.s32.totalorder %s344, %s345
      %p356 = scmp.eq.s32.totalorder %s29, 0
      %p357 = por %p355, %p356
      %p358 = scmp.ne.s32.totalorder %s344, %s345
      %p359 = scmp.eq.s32.totalorder %s30, 63
      %p360 = por %p358, %p359
      %p362 = scmp.ne.s32.totalorder %s345, %s361
      %p363 = scmp.eq.s32.totalorder %s30, 0
      %p364 = por %p362, %p363
      %s365 = ssub.s32 %s31, %s43
      %s366 = ssub.s32 %s32, %s39
      %s367 = sor.u32 %s365, %s366
      %p368 = scmp.eq.s32.totalorder %s367, 0
      %s370 = sadd.s32 %s369, 1
      %s371 = scalar_select %p368, %s369, %s370
      %p374 = pneg %p368
      %p375 = scmp.eq.s32.totalorder %s24, 63
      %p376 = por %p374, %p375
      %p377 = scmp.ne.s32.totalorder %s369, %s372
      %p378 = scmp.eq.s32.totalorder %s24, 0
      %p379 = por %p377, %p378
      %p380 = scmp.ne.s32.totalorder %s369, %s372
      %p381 = scmp.eq.s32.totalorder %s29, 63
      %p382 = por %p380, %p381
      %p383 = scmp.ne.s32.totalorder %s372, %s373
      %p384 = scmp.eq.s32.totalorder %s29, 0
      %p385 = por %p383, %p384
      %p386 = scmp.ne.s32.totalorder %s372, %s373
      %p387 = scmp.eq.s32.totalorder %s30, 63
      %p388 = por %p386, %p387
      %p390 = scmp.ne.s32.totalorder %s373, %s389
      %p391 = scmp.eq.s32.totalorder %s30, 0
      %p392 = por %p390, %p391
      %s393 = ssub.s32 %s31, %s43
      %p394 = scmp.eq.s32.totalorder %s393, 0
      %s396 = sadd.s32 %s395, 1
      %s397 = scalar_select %p394, %s395, %s396
      %p400 = pneg %p394
      %p401 = scmp.eq.s32.totalorder %s24, 63
      %p402 = por %p400, %p401
      %p403 = scmp.ne.s32.totalorder %s395, %s398
      %p404 = scmp.eq.s32.totalorder %s24, 0
      %p405 = por %p403, %p404
      %p406 = scmp.ne.s32.totalorder %s395, %s398
      %p407 = scmp.eq.s32.totalorder %s29, 63
      %p408 = por %p406, %p407
      %p409 = scmp.ne.s32.totalorder %s398, %s399
      %p410 = scmp.eq.s32.totalorder %s29, 0
      %p411 = por %p409, %p410
      %p412 = scmp.ne.s32.totalorder %s398, %s399
      %p413 = scmp.eq.s32.totalorder %s30, 63
      %p414 = por %p412, %p413
      %p416 = scmp.ne.s32.totalorder %s399, %s415
      %p417 = scmp.eq.s32.totalorder %s30, 0
      %p418 = por %p416, %p417
      %s419 = ssub.s32 %s31, %s43
      %p420 = scmp.eq.s32.totalorder %s419, 0
      %s422 = sadd.s32 %s421, 1
      %s423 = scalar_select %p420, %s421, %s422
      %p426 = pneg %p420
      %p427 = scmp.eq.s32.totalorder %s24, 63
      %p428 = por %p426, %p427
      %p429 = scmp.ne.s32.totalorder %s421, %s424
      %p430 = scmp.eq.s32.totalorder %s24, 0
      %p431 = por %p429, %p430
      %p432 = scmp.ne.s32.totalorder %s421, %s424
      %p433 = scmp.eq.s32.totalorder %s29, 63
      %p434 = por %p432, %p433
      %p435 = scmp.ne.s32.totalorder %s424, %s425
      %p436 = scmp.eq.s32.totalorder %s29, 0
      %p437 = por %p435, %p436
      %p438 = scmp.ne.s32.totalorder %s424, %s425
      %p439 = scmp.eq.s32.totalorder %s30, 63
      %p440 = por %p438, %p439
      %p442 = scmp.ne.s32.totalorder %s425, %s441
      %p443 = scmp.eq.s32.totalorder %s30, 0
      %p444 = por %p442, %p443
      %s445 = ssub.s32 %s31, %s43
      %p446 = scmp.eq.s32.totalorder %s445, 0
      %s448 = sadd.s32 %s447, 1
      %s449 = scalar_select %p446, %s447, %s448
      %p452 = pneg %p446
      %p453 = scmp.eq.s32.totalorder %s24, 63
      %p454 = por %p452, %p453
      %p455 = scmp.ne.s32.totalorder %s447, %s450
      %p456 = scmp.eq.s32.totalorder %s24, 0
      %p457 = por %p455, %p456
      %p458 = scmp.ne.s32.totalorder %s447, %s450
      %p459 = scmp.eq.s32.totalorder %s29, 63
      %p460 = por %p458, %p459
      %p461 = scmp.ne.s32.totalorder %s450, %s451
      %p462 = scmp.eq.s32.totalorder %s29, 0
      %p463 = por %p461, %p462
      %p464 = scmp.ne.s32.totalorder %s450, %s451
      %p465 = scmp.eq.s32.totalorder %s30, 63
      %p466 = por %p464, %p465
      %p468 = scmp.ne.s32.totalorder %s451, %s467
      %p469 = scmp.eq.s32.totalorder %s30, 0
      %p470 = por %p468, %p469
      %p471 = scmp.le.s32.totalorder 1, %s24
      %p472 = scmp.lt.s32.totalorder %s24, 65
      %p473 = pnand %p471, %p472
      %p474 = pneg %p473
      // Predicated region
      $region9: #{sequential_decision_tree_forward.1} parent=5 // pred_check
        _
      $region10: #{sequential_decision_tree_forward.1} parent=5 // pred_check_branch
        %476 = sbr.rel (%p473) target = $region12
      $region11: #{sequential_decision_tree_forward.1} parent=5 // pred_region
        %s477 = ssub.s32 %s24, 1
        // Predicated region
        $region13: #{sequential_decision_tree_forward.1} parent=11 // pred_check
          %p478 = pneg %p57
        $region14: #{sequential_decision_tree_forward.1} parent=11 // pred_check_branch
          %480 = sbr.rel (%p478) target = $region16
        $region15: #{sequential_decision_tree_forward.1} parent=11 // pred_region
          _
        $region16: #{sequential_decision_tree_forward.1} parent=11 // pred_fallthru
          _
      $region12: #{sequential_decision_tree_forward.1} parent=5 // pred_fallthru
        _
      %p481 = scmp.lt.s32.totalorder %s24, 64
      // Predicated region
      $region17: #{sequential_decision_tree_forward.1} parent=5 // pred_check
        %p482 = pneg %p481
      $region18: #{sequential_decision_tree_forward.1} parent=5 // pred_check_branch
        %484 = sbr.rel (%p482) target = $region20
      $region19: #{sequential_decision_tree_forward.1} parent=5 // pred_region
        // Predicated region
        $region21: #{sequential_decision_tree_forward.1} parent=19 // pred_check
          %p485 = pneg %p77
        $region22: #{sequential_decision_tree_forward.1} parent=19 // pred_check_branch
          %487 = sbr.rel (%p485) target = $region24
        $region23: #{sequential_decision_tree_forward.1} parent=19 // pred_region
          %p488 = scmp.lt.s32.totalorder %s31, 7
          %s489 = scalar_select %p488, %s31, 7
          %s490 = smul.addr %s489, 2
          %s491 = smul.addr %s490, 4
          %s492 = scalar_lea.vmem %s1, %s491
        $region24: #{sequential_decision_tree_forward.1} parent=19 // pred_fallthru
          _
        // Predicated region
        $region25: #{sequential_decision_tree_forward.1} parent=19 // pred_check
          %p493 = pneg %p103
        $region26: #{sequential_decision_tree_forward.1} parent=19 // pred_check_branch
          %495 = sbr.rel (%p493) target = $region28
        $region27: #{sequential_decision_tree_forward.1} parent=19 // pred_region
          %p496 = scmp.lt.s32.totalorder %s31, 7
          %s497 = scalar_select %p496, %s31, 7
          %s498 = smul.addr %s497, 2
          %s499 = scalar_lea.vmem %s2, %s498
        $region28: #{sequential_decision_tree_forward.1} parent=19 // pred_fallthru
          _
        // Predicated region
        $region29: #{sequential_decision_tree_forward.1} parent=19 // pred_check
          %p500 = pneg %p129
        $region30: #{sequential_decision_tree_forward.1} parent=19 // pred_check_branch
          %502 = sbr.rel (%p500) target = $region32
        $region31: #{sequential_decision_tree_forward.1} parent=19 // pred_region
          %p503 = scmp.lt.s32.totalorder %s31, 7
          %s504 = scalar_select %p503, %s31, 7
          %s505 = smul.addr %s504, 2
          %s506 = scalar_lea.vmem %s3, %s505
        $region32: #{sequential_decision_tree_forward.1} parent=19 // pred_fallthru
          _
        // Predicated region
        $region33: #{sequential_decision_tree_forward.1} parent=19 // pred_check
          %p507 = pneg %p155
        $region34: #{sequential_decision_tree_forward.1} parent=19 // pred_check_branch
          %509 = sbr.rel (%p507) target = $region36
        $region35: #{sequential_decision_tree_forward.1} parent=19 // pred_region
          %p510 = scmp.lt.s32.totalorder %s31, 7
          %s511 = scalar_select %p510, %s31, 7
          %s512 = smul.addr %s511, 2
          %s513 = scalar_lea.vmem %s4, %s512
        $region36: #{sequential_decision_tree_forward.1} parent=19 // pred_fallthru
          _
        // Predicated region
        $region37: #{sequential_decision_tree_forward.1} parent=19 // pred_check
          %p514 = pneg %p183
        $region38: #{sequential_decision_tree_forward.1} parent=19 // pred_check_branch
          %516 = sbr.rel (%p514) target = $region40
        $region39: #{sequential_decision_tree_forward.1} parent=19 // pred_region
          %p517 = scmp.lt.s32.totalorder %s31, 7
          %s518 = scalar_select %p517, %s31, 7
          %p519 = scmp.lt.s32.totalorder %s32, 7
          %s520 = scalar_select %p519, %s32, 7
          %s521 = smul.addr %s520, 10
          %s522 = smul.addr %s518, 80
          %s523 = sadd.s32 %s521, %s522
          %s524 = smul.addr %s523, 8
          %s525 = scalar_lea.vmem %s5, %s524
        $region40: #{sequential_decision_tree_forward.1} parent=19 // pred_fallthru
          _
        // Predicated region
        $region41: #{sequential_decision_tree_forward.1} parent=19 // pred_check
          %p526 = pneg %p211
        $region42: #{sequential_decision_tree_forward.1} parent=19 // pred_check_branch
          %528 = sbr.rel (%p526) target = $region44
        $region43: #{sequential_decision_tree_forward.1} parent=19 // pred_region
          %p529 = scmp.lt.s32.totalorder %s31, 7
          %s530 = scalar_select %p529, %s31, 7
          %p531 = scmp.lt.s32.totalorder %s32, 7
          %s532 = scalar_select %p531, %s32, 7
          %s533 = smul.addr %s532, 2
          %s534 = smul.addr %s530, 16
          %s535 = sadd.s32 %s533, %s534
          %s536 = scalar_lea.vmem %s6, %s535
        $region44: #{sequential_decision_tree_forward.1} parent=19 // pred_fallthru
          _
        // Predicated region
        $region45: #{sequential_decision_tree_forward.1} parent=19 // pred_check
          %p537 = pneg %p239
        $region46: #{sequential_decision_tree_forward.1} parent=19 // pred_check_branch
          %539 = sbr.rel (%p537) target = $region48
        $region47: #{sequential_decision_tree_forward.1} parent=19 // pred_region
          %p540 = scmp.lt.s32.totalorder %s31, 7
          %s541 = scalar_select %p540, %s31, 7
          %p542 = scmp.lt.s32.totalorder %s32, 7
          %s543 = scalar_select %p542, %s32, 7
          %s544 = smul.addr %s543, 2
          %s545 = smul.addr %s541, 16
          %s546 = sadd.s32 %s544, %s545
          %s547 = scalar_lea.vmem %s7, %s546
        $region48: #{sequential_decision_tree_forward.1} parent=19 // pred_fallthru
          _
        // Predicated region
        $region49: #{sequential_decision_tree_forward.1} parent=19 // pred_check
          %p548 = pneg %p267
        $region50: #{sequential_decision_tree_forward.1} parent=19 // pred_check_branch
          %550 = sbr.rel (%p548) target = $region52
        $region51: #{sequential_decision_tree_forward.1} parent=19 // pred_region
          %p551 = scmp.lt.s32.totalorder %s31, 7
          %s552 = scalar_select %p551, %s31, 7
          %p553 = scmp.lt.s32.totalorder %s32, 7
          %s554 = scalar_select %p553, %s32, 7
          %s555 = smul.addr %s554, 2
          %s556 = smul.addr %s552, 16
          %s557 = sadd.s32 %s555, %s556
          %s558 = scalar_lea.vmem %s8, %s557
        $region52: #{sequential_decision_tree_forward.1} parent=19 // pred_fallthru
          _
        // Predicated region
        $region53: #{sequential_decision_tree_forward.1} parent=19 // pred_check
          %p559 = pneg %p295
        $region54: #{sequential_decision_tree_forward.1} parent=19 // pred_check_branch
          %561 = sbr.rel (%p559) target = $region56
        $region55: #{sequential_decision_tree_forward.1} parent=19 // pred_region
          %s562 = sand.u32 %s285, 1
          %s563 = scalar_lea.sflag [#allocation4], %s562
          %s564 = sand.u32 %s285, 1
          %s565 = smul.addr %s564, 256
          %s566 = scalar_lea.vmem [#allocation3], %s565
          %568 = vsyncadd %s563, 0
          %s569 = smul.addr %s32, 64
          %s570 = smul.addr %s31, 512
          %s571 = sadd.s32 %s569, %s570
          %s572 = smul.addr %s571, 4
          %s573 = scalar_lea.hbm %s9, %s572
          %s574 = sshll.u32 %s573, 4
          %s575 = int_to_ptr.hbm [resolvable:$true] %s574
          %s576 = sshll.u32 %s566, 4
          %s577 = int_to_ptr.vmem [resolvable:$true] %s576
          %582 = dma.hbm_to_vmem [thread:$0]  %s575, 4096, %s577, %s563, 128, 128, 8
        $region56: #{sequential_decision_tree_forward.1} parent=19 // pred_fallthru
          _
        // Predicated region
        $region57: #{sequential_decision_tree_forward.1} parent=19 // pred_check
          %p583 = pneg %p323
        $region58: #{sequential_decision_tree_forward.1} parent=19 // pred_check_branch
          %585 = sbr.rel (%p583) target = $region60
        $region59: #{sequential_decision_tree_forward.1} parent=19 // pred_region
          %p586 = scmp.lt.s32.totalorder %s31, 7
          %s587 = scalar_select %p586, %s31, 7
          %p588 = scmp.lt.s32.totalorder %s32, 7
          %s589 = scalar_select %p588, %s32, 7
          %s590 = smul.addr %s589, 2
          %s591 = smul.addr %s587, 16
          %s592 = sadd.s32 %s590, %s591
          %s593 = scalar_lea.vmem %s10, %s592
        $region60: #{sequential_decision_tree_forward.1} parent=19 // pred_fallthru
          _
        // Predicated region
        $region61: #{sequential_decision_tree_forward.1} parent=19 // pred_check
          %p594 = pneg %p351
        $region62: #{sequential_decision_tree_forward.1} parent=19 // pred_check_branch
          %596 = sbr.rel (%p594) target = $region64
        $region63: #{sequential_decision_tree_forward.1} parent=19 // pred_region
          %p597 = scmp.lt.s32.totalorder %s31, 7
          %s598 = scalar_select %p597, %s31, 7
          %p599 = scmp.lt.s32.totalorder %s32, 7
          %s600 = scalar_select %p599, %s32, 7
          %s601 = smul.addr %s600, 2
          %s602 = smul.addr %s598, 16
          %s603 = sadd.s32 %s601, %s602
          %s604 = scalar_lea.vmem %s11, %s603
        $region64: #{sequential_decision_tree_forward.1} parent=19 // pred_fallthru
          _
        // Predicated region
        $region65: #{sequential_decision_tree_forward.1} parent=19 // pred_check
          %p605 = pneg %p379
        $region66: #{sequential_decision_tree_forward.1} parent=19 // pred_check_branch
          %607 = sbr.rel (%p605) target = $region68
        $region67: #{sequential_decision_tree_forward.1} parent=19 // pred_region
          %p608 = scmp.lt.s32.totalorder %s31, 7
          %s609 = scalar_select %p608, %s31, 7
          %p610 = scmp.lt.s32.totalorder %s32, 7
          %s611 = scalar_select %p610, %s32, 7
          %s612 = smul.addr %s611, 2
          %s613 = smul.addr %s609, 16
          %s614 = sadd.s32 %s612, %s613
          %s615 = scalar_lea.vmem %s12, %s614
        $region68: #{sequential_decision_tree_forward.1} parent=19 // pred_fallthru
          _
        // Predicated region
        $region69: #{sequential_decision_tree_forward.1} parent=19 // pred_check
          %p616 = pneg %p405
        $region70: #{sequential_decision_tree_forward.1} parent=19 // pred_check_branch
          %618 = sbr.rel (%p616) target = $region72
        $region71: #{sequential_decision_tree_forward.1} parent=19 // pred_region
          %p619 = scmp.lt.s32.totalorder %s31, 7
          %s620 = scalar_select %p619, %s31, 7
          %s621 = smul.addr %s620, 32
          %s622 = smul.addr %s621, 4
          %s623 = scalar_lea.vmem %s13, %s622
        $region72: #{sequential_decision_tree_forward.1} parent=19 // pred_fallthru
          _
        // Predicated region
        $region73: #{sequential_decision_tree_forward.1} parent=19 // pred_check
          %p624 = pneg %p431
        $region74: #{sequential_decision_tree_forward.1} parent=19 // pred_check_branch
          %626 = sbr.rel (%p624) target = $region76
        $region75: #{sequential_decision_tree_forward.1} parent=19 // pred_region
          %p627 = scmp.lt.s32.totalorder %s31, 7
          %s628 = scalar_select %p627, %s31, 7
          %s629 = scalar_lea.vmem %s14, %s628
        $region76: #{sequential_decision_tree_forward.1} parent=19 // pred_fallthru
          _
      $region20: #{sequential_decision_tree_forward.1} parent=5 // pred_fallthru
        _
      %p630 = scmp.le.s32.totalorder 1, %s24
      %p631 = scmp.lt.s32.totalorder %s24, 65
      %p632 = pnand %p630, %p631
      %p633 = pneg %p632
      // Predicated region
      $region77: #{sequential_decision_tree_forward.1} parent=5 // pred_check
        _
      $region78: #{sequential_decision_tree_forward.1} parent=5 // pred_check_branch
        %635 = sbr.rel (%p632) target = $region80
      $region79: #{sequential_decision_tree_forward.1} parent=5 // pred_region
        %s636 = ssub.s32 %s24, 1
        %s637 = sand.u32 %s288, 1
        %s638 = scalar_lea.sflag [#allocation4], %s637
        %s639 = sand.u32 %s288, 1
        %s640 = smul.addr %s639, 256
        %s641 = scalar_lea.vmem [#allocation3], %s640
        // Predicated region
        $region81: #{sequential_decision_tree_forward.1} parent=79 // pred_check
          %p642 = pneg %p301
        $region82: #{sequential_decision_tree_forward.1} parent=79 // pred_check_branch
          %644 = sbr.rel (%p642) target = $region84
        $region83: #{sequential_decision_tree_forward.1} parent=79 // pred_region
          %646 = dma.done %s638, 4096
        $region84: #{sequential_decision_tree_forward.1} parent=79 // pred_fallthru
          _
        %p647 = pneg %p57
        %p648 = pneg %p54
        %p649 = scmp.lt.s32.totalorder %s33, 7
        %s650 = scalar_select %p649, %s33, 7
        %s651 = smul.addr %s650, 2
        %s652 = smul.addr %s651, 4
        %s653 = scalar_lea.vmem %s1, %s652
        %p654 = pneg %p83
        %p655 = pneg %p80
        %p656 = scmp.lt.s32.totalorder %s33, 7
        %s657 = scalar_select %p656, %s33, 7
        %s658 = smul.addr %s657, 2
        %s659 = scalar_lea.vmem %s2, %s658
        %p660 = pneg %p109
        %p661 = pneg %p106
        %p662 = scmp.lt.s32.totalorder %s33, 7
        %s663 = scalar_select %p662, %s33, 7
        %s664 = smul.addr %s663, 2
        %s665 = scalar_lea.vmem %s3, %s664
        %p666 = pneg %p135
        %p667 = pneg %p132
        %p668 = scmp.lt.s32.totalorder %s33, 7
        %s669 = scalar_select %p668, %s33, 7
        %s670 = smul.addr %s669, 2
        %s671 = scalar_lea.vmem %s4, %s670
        %p672 = pneg %p161
        %p673 = pneg %p158
        %p674 = scmp.lt.s32.totalorder %s33, 7
        %s675 = scalar_select %p674, %s33, 7
        %p676 = scmp.lt.s32.totalorder %s34, 7
        %s677 = scalar_select %p676, %s34, 7
        %s678 = smul.addr %s677, 10
        %s679 = smul.addr %s675, 80
        %s680 = sadd.s32 %s678, %s679
        %s681 = smul.addr %s680, 8
        %s682 = scalar_lea.vmem %s5, %s681
        %p683 = pneg %p189
        %p684 = pneg %p186
        %p685 = scmp.lt.s32.totalorder %s33, 7
        %s686 = scalar_select %p685, %s33, 7
        %p687 = scmp.lt.s32.totalorder %s34, 7
        %s688 = scalar_select %p687, %s34, 7
        %s689 = smul.addr %s688, 2
        %s690 = smul.addr %s686, 16
        %s691 = sadd.s32 %s689, %s690
        %s692 = scalar_lea.vmem %s6, %s691
        %p693 = pneg %p217
        %p694 = pneg %p214
        %p695 = scmp.lt.s32.totalorder %s33, 7
        %s696 = scalar_select %p695, %s33, 7
        %p697 = scmp.lt.s32.totalorder %s34, 7
        %s698 = scalar_select %p697, %s34, 7
        %s699 = smul.addr %s698, 2
        %s700 = smul.addr %s696, 16
        %s701 = sadd.s32 %s699, %s700
        %s702 = scalar_lea.vmem %s7, %s701
        %p703 = pneg %p245
        %p704 = pneg %p242
        %p705 = scmp.lt.s32.totalorder %s33, 7
        %s706 = scalar_select %p705, %s33, 7
        %p707 = scmp.lt.s32.totalorder %s34, 7
        %s708 = scalar_select %p707, %s34, 7
        %s709 = smul.addr %s708, 2
        %s710 = smul.addr %s706, 16
        %s711 = sadd.s32 %s709, %s710
        %s712 = scalar_lea.vmem %s8, %s711
        %p713 = pneg %p273
        %p714 = pneg %p270
        %s715 = sand.u32 %s288, 1
        %s716 = scalar_lea.sflag [#allocation4], %s715
        %s717 = sand.u32 %s288, 1
        %s718 = smul.addr %s717, 256
        %s719 = scalar_lea.vmem [#allocation3], %s718
        %p720 = pneg %p301
        %p721 = pneg %p298
        %p722 = scmp.lt.s32.totalorder %s33, 7
        %s723 = scalar_select %p722, %s33, 7
        %p724 = scmp.lt.s32.totalorder %s34, 7
        %s725 = scalar_select %p724, %s34, 7
        %s726 = smul.addr %s725, 2
        %s727 = smul.addr %s723, 16
        %s728 = sadd.s32 %s726, %s727
        %s729 = scalar_lea.vmem %s10, %s728
        %p730 = pneg %p329
        %p731 = pneg %p326
        %p732 = scmp.lt.s32.totalorder %s33, 7
        %s733 = scalar_select %p732, %s33, 7
        %p734 = scmp.lt.s32.totalorder %s34, 7
        %s735 = scalar_select %p734, %s34, 7
        %s736 = smul.addr %s735, 2
        %s737 = smul.addr %s733, 16
        %s738 = sadd.s32 %s736, %s737
        %s739 = scalar_lea.vmem %s11, %s738
        %p740 = pneg %p357
        %p741 = pneg %p354
        %p742 = scmp.lt.s32.totalorder %s33, 7
        %s743 = scalar_select %p742, %s33, 7
        %p744 = scmp.lt.s32.totalorder %s34, 7
        %s745 = scalar_select %p744, %s34, 7
        %s746 = smul.addr %s745, 2
        %s747 = smul.addr %s743, 16
        %s748 = sadd.s32 %s746, %s747
        %s749 = scalar_lea.vmem %s12, %s748
        %p750 = pneg %p385
        %p751 = pneg %p382
        %p752 = scmp.lt.s32.totalorder %s33, 7
        %s753 = scalar_select %p752, %s33, 7
        %s754 = smul.addr %s753, 32
        %s755 = smul.addr %s754, 4
        %s756 = scalar_lea.vmem %s13, %s755
        %p757 = pneg %p411
        %p758 = pneg %p408
        %p759 = scmp.lt.s32.totalorder %s33, 7
        %s760 = scalar_select %p759, %s33, 7
        %s761 = scalar_lea.vmem %s14, %s760
        %p762 = pneg %p437
        %p763 = pneg %p434
        %p764 = pneg %p463
        %p765 = pneg %p460
        %p766 = scmp.lt.s32.totalorder %s33, 7
        %s767 = scalar_select %p766, %s33, 7
        %s768 = smul.addr %s767, 2
        %s769 = scalar_lea.vmem %s15, %s768
        %p770 = scmp.lt.s32.totalorder %s33, 7
        %s771 = scalar_select %p770, %s33, 7
        %s772 = smul.addr %s771, 2
        %s773 = smul.addr %s772, 4
        %s774 = scalar_lea.vmem %s1, %s773
        %p775 = scmp.lt.s32.totalorder %s33, 7
        %s776 = scalar_select %p775, %s33, 7
        %s777 = smul.addr %s776, 2
        %s778 = scalar_lea.vmem %s2, %s777
        %p779 = scmp.lt.s32.totalorder %s33, 7
        %s780 = scalar_select %p779, %s33, 7
        %s781 = smul.addr %s780, 2
        %s782 = scalar_lea.vmem %s3, %s781
        %p783 = scmp.lt.s32.totalorder %s33, 7
        %s784 = scalar_select %p783, %s33, 7
        %s785 = smul.addr %s784, 2
        %s786 = scalar_lea.vmem %s4, %s785
        %p787 = scmp.lt.s32.totalorder %s33, 7
        %s788 = scalar_select %p787, %s33, 7
        %p789 = scmp.lt.s32.totalorder %s34, 7
        %s790 = scalar_select %p789, %s34, 7
        %s791 = smul.addr %s790, 10
        %s792 = smul.addr %s788, 80
        %s793 = sadd.s32 %s791, %s792
        %s794 = smul.addr %s793, 8
        %s795 = scalar_lea.vmem %s5, %s794
        %p796 = scmp.lt.s32.totalorder %s33, 7
        %s797 = scalar_select %p796, %s33, 7
        %p798 = scmp.lt.s32.totalorder %s34, 7
        %s799 = scalar_select %p798, %s34, 7
        %s800 = smul.addr %s799, 2
        %s801 = smul.addr %s797, 16
        %s802 = sadd.s32 %s800, %s801
        %s803 = scalar_lea.vmem %s6, %s802
        %p804 = scmp.lt.s32.totalorder %s33, 7
        %s805 = scalar_select %p804, %s33, 7
        %p806 = scmp.lt.s32.totalorder %s34, 7
        %s807 = scalar_select %p806, %s34, 7
        %s808 = smul.addr %s807, 2
        %s809 = smul.addr %s805, 16
        %s810 = sadd.s32 %s808, %s809
        %s811 = scalar_lea.vmem %s7, %s810
        %p812 = scmp.lt.s32.totalorder %s33, 7
        %s813 = scalar_select %p812, %s33, 7
        %p814 = scmp.lt.s32.totalorder %s34, 7
        %s815 = scalar_select %p814, %s34, 7
        %s816 = smul.addr %s815, 2
        %s817 = smul.addr %s813, 16
        %s818 = sadd.s32 %s816, %s817
        %s819 = scalar_lea.vmem %s8, %s818
        %p820 = scmp.lt.s32.totalorder %s33, 7
        %s821 = scalar_select %p820, %s33, 7
        %p822 = scmp.lt.s32.totalorder %s34, 7
        %s823 = scalar_select %p822, %s34, 7
        %s824 = smul.addr %s823, 2
        %s825 = smul.addr %s821, 16
        %s826 = sadd.s32 %s824, %s825
        %s827 = scalar_lea.vmem %s10, %s826
        %p828 = scmp.lt.s32.totalorder %s33, 7
        %s829 = scalar_select %p828, %s33, 7
        %p830 = scmp.lt.s32.totalorder %s34, 7
        %s831 = scalar_select %p830, %s34, 7
        %s832 = smul.addr %s831, 2
        %s833 = smul.addr %s829, 16
        %s834 = sadd.s32 %s832, %s833
        %s835 = scalar_lea.vmem %s11, %s834
        %p836 = scmp.lt.s32.totalorder %s33, 7
        %s837 = scalar_select %p836, %s33, 7
        %p838 = scmp.lt.s32.totalorder %s34, 7
        %s839 = scalar_select %p838, %s34, 7
        %s840 = smul.addr %s839, 2
        %s841 = smul.addr %s837, 16
        %s842 = sadd.s32 %s840, %s841
        %s843 = scalar_lea.vmem %s12, %s842
        %p844 = scmp.lt.s32.totalorder %s33, 7
        %s845 = scalar_select %p844, %s33, 7
        %s846 = smul.addr %s845, 32
        %s847 = smul.addr %s846, 4
        %s848 = scalar_lea.vmem %s13, %s847
        %p849 = scmp.lt.s32.totalorder %s33, 7
        %s850 = scalar_select %p849, %s33, 7
        %s851 = scalar_lea.vmem %s14, %s850
        %p852 = scmp.lt.s32.totalorder %s33, 7
        %s853 = scalar_select %p852, %s33, 7
        %s854 = smul.addr %s853, 2
        %s855 = scalar_lea.vmem %s15, %s854
        %p856 = scmp.eq.s32.totalorder %s34, 0
        // Predicated region
        $region85: #{sequential_decision_tree_forward.1} parent=79 // pred_check
          %p857 = pneg %p856
        $region86: #{sequential_decision_tree_forward.1} parent=79 // pred_check_branch
          %859 = sbr.rel (%p857) target = $region88
        $region87: #{sequential_decision_tree_forward.1} parent=79 // pred_region
          %860 = vst [vmem:[#allocation2] sm:$0xff] 0.0
          %861 = vst [vmem:[#allocation2 + $0x8] sm:$0xff] 0.0
          %862 = vst [vmem:[#allocation2 + $0x10] sm:$0xff] 0.0
          %863 = vst [vmem:[#allocation2 + $0x18] sm:$0xff] 0.0
          %864 = vst [vmem:[#allocation2 + $0x20] sm:$0xff] 0.0
          %865 = vst [vmem:[#allocation2 + $0x28] sm:$0xff] 0.0
          %866 = vst [vmem:[#allocation2 + $0x30] sm:$0xff] 0.0
          %867 = vst [vmem:[#allocation2 + $0x38] sm:$0xff] 0.0
          %868 = vst [vmem:[#allocation2 + $0x40] sm:$0xff] 0.0
          %869 = vst [vmem:[#allocation2 + $0x48] sm:$0xff] 0.0
          %870 = vst [vmem:[#allocation2 + $0x50] sm:$0xff] 0.0
          %871 = vst [vmem:[#allocation2 + $0x58] sm:$0xff] 0.0
          %872 = vst [vmem:[#allocation2 + $0x60] sm:$0xff] 0.0
          %873 = vst [vmem:[#allocation2 + $0x68] sm:$0xff] 0.0
          %874 = vst [vmem:[#allocation2 + $0x70] sm:$0xff] 0.0
          %875 = vst [vmem:[#allocation2 + $0x78] sm:$0xff] 0.0
          %876 = vst [vmem:[#allocation2 + $0x80] sm:$0xff] 0.0
          %877 = vst [vmem:[#allocation2 + $0x88] sm:$0xff] 0.0
          %878 = vst [vmem:[#allocation2 + $0x90] sm:$0xff] 0.0
          %879 = vst [vmem:[#allocation2 + $0x98] sm:$0xff] 0.0
          %880 = vst [vmem:[#allocation2 + $0xa0] sm:$0xff] 0.0
          %881 = vst [vmem:[#allocation2 + $0xa8] sm:$0xff] 0.0
          %882 = vst [vmem:[#allocation2 + $0xb0] sm:$0xff] 0.0
          %883 = vst [vmem:[#allocation2 + $0xb8] sm:$0xff] 0.0
          %884 = vst [vmem:[#allocation2 + $0xc0] sm:$0xff] 0.0
          %885 = vst [vmem:[#allocation2 + $0xc8] sm:$0xff] 0.0
          %886 = vst [vmem:[#allocation2 + $0xd0] sm:$0xff] 0.0
          %887 = vst [vmem:[#allocation2 + $0xd8] sm:$0xff] 0.0
          %888 = vst [vmem:[#allocation2 + $0xe0] sm:$0xff] 0.0
          %889 = vst [vmem:[#allocation2 + $0xe8] sm:$0xff] 0.0
          %890 = vst [vmem:[#allocation2 + $0xf0] sm:$0xff] 0.0
          %891 = vst [vmem:[#allocation2 + $0xf8] sm:$0xff] 0.0
          %892 = vst [vmem:[#allocation2 + $0x100] sm:$0xff] 0.0
          %893 = vst [vmem:[#allocation2 + $0x108] sm:$0xff] 0.0
          %894 = vst [vmem:[#allocation2 + $0x110] sm:$0xff] 0.0
          %895 = vst [vmem:[#allocation2 + $0x118] sm:$0xff] 0.0
          %896 = vst [vmem:[#allocation2 + $0x120] sm:$0xff] 0.0
          %897 = vst [vmem:[#allocation2 + $0x128] sm:$0xff] 0.0
          %898 = vst [vmem:[#allocation2 + $0x130] sm:$0xff] 0.0
          %899 = vst [vmem:[#allocation2 + $0x138] sm:$0xff] 0.0
          %900 = vst [vmem:[#allocation2 + $0x140] sm:$0xff] 0.0
          %901 = vst [vmem:[#allocation2 + $0x148] sm:$0xff] 0.0
          %902 = vst [vmem:[#allocation2 + $0x150] sm:$0xff] 0.0
          %903 = vst [vmem:[#allocation2 + $0x158] sm:$0xff] 0.0
          %904 = vst [vmem:[#allocation2 + $0x160] sm:$0xff] 0.0
          %905 = vst [vmem:[#allocation2 + $0x168] sm:$0xff] 0.0
          %906 = vst [vmem:[#allocation2 + $0x170] sm:$0xff] 0.0
          %907 = vst [vmem:[#allocation2 + $0x178] sm:$0xff] 0.0
          %908 = vst [vmem:[#allocation2 + $0x180] sm:$0xff] 0.0
          %909 = vst [vmem:[#allocation2 + $0x188] sm:$0xff] 0.0
          %910 = vst [vmem:[#allocation2 + $0x190] sm:$0xff] 0.0
          %911 = vst [vmem:[#allocation2 + $0x198] sm:$0xff] 0.0
          %912 = vst [vmem:[#allocation2 + $0x1a0] sm:$0xff] 0.0
          %913 = vst [vmem:[#allocation2 + $0x1a8] sm:$0xff] 0.0
          %914 = vst [vmem:[#allocation2 + $0x1b0] sm:$0xff] 0.0
          %915 = vst [vmem:[#allocation2 + $0x1b8] sm:$0xff] 0.0
          %916 = vst [vmem:[#allocation2 + $0x1c0] sm:$0xff] 0.0
          %917 = vst [vmem:[#allocation2 + $0x1c8] sm:$0xff] 0.0
          %918 = vst [vmem:[#allocation2 + $0x1d0] sm:$0xff] 0.0
          %919 = vst [vmem:[#allocation2 + $0x1d8] sm:$0xff] 0.0
          %920 = vst [vmem:[#allocation2 + $0x1e0] sm:$0xff] 0.0
          %921 = vst [vmem:[#allocation2 + $0x1e8] sm:$0xff] 0.0
          %922 = vst [vmem:[#allocation2 + $0x1f0] sm:$0xff] 0.0
          %923 = vst [vmem:[#allocation2 + $0x1f8] sm:$0xff] 0.0
          %924 = vst [vmem:[#allocation2 + $0x200] sm:$0xff] 0.0
          %925 = vst [vmem:[#allocation2 + $0x208] sm:$0xff] 0.0
          %926 = vst [vmem:[#allocation2 + $0x210] sm:$0xff] 0.0
          %927 = vst [vmem:[#allocation2 + $0x218] sm:$0xff] 0.0
          %928 = vst [vmem:[#allocation2 + $0x220] sm:$0xff] 0.0
          %929 = vst [vmem:[#allocation2 + $0x228] sm:$0xff] 0.0
          %930 = vst [vmem:[#allocation2 + $0x230] sm:$0xff] 0.0
          %931 = vst [vmem:[#allocation2 + $0x238] sm:$0xff] 0.0
          %932 = vst [vmem:[#allocation2 + $0x240] sm:$0xff] 0.0
          %933 = vst [vmem:[#allocation2 + $0x248] sm:$0xff] 0.0
          %934 = vst [vmem:[#allocation2 + $0x250] sm:$0xff] 0.0
          %935 = vst [vmem:[#allocation2 + $0x258] sm:$0xff] 0.0
          %936 = vst [vmem:[#allocation2 + $0x260] sm:$0xff] 0.0
          %937 = vst [vmem:[#allocation2 + $0x268] sm:$0xff] 0.0
          %938 = vst [vmem:[#allocation2 + $0x270] sm:$0xff] 0.0
          %939 = vst [vmem:[#allocation2 + $0x278] sm:$0xff] 0.0
          %940 = vst [vmem:[#allocation2 + $0x280] sm:$0xff] 0.0
          %941 = vst [vmem:[#allocation2 + $0x288] sm:$0xff] 0.0
          %942 = vst [vmem:[#allocation2 + $0x290] sm:$0xff] 0.0
          %943 = vst [vmem:[#allocation2 + $0x298] sm:$0xff] 0.0
          %944 = vst [vmem:[#allocation2 + $0x2a0] sm:$0xff] 0.0
          %945 = vst [vmem:[#allocation2 + $0x2a8] sm:$0xff] 0.0
          %946 = vst [vmem:[#allocation2 + $0x2b0] sm:$0xff] 0.0
          %947 = vst [vmem:[#allocation2 + $0x2b8] sm:$0xff] 0.0
          %948 = vst [vmem:[#allocation2 + $0x2c0] sm:$0xff] 0.0
          %949 = vst [vmem:[#allocation2 + $0x2c8] sm:$0xff] 0.0
          %950 = vst [vmem:[#allocation2 + $0x2d0] sm:$0xff] 0.0
          %951 = vst [vmem:[#allocation2 + $0x2d8] sm:$0xff] 0.0
          %952 = vst [vmem:[#allocation2 + $0x2e0] sm:$0xff] 0.0
          %953 = vst [vmem:[#allocation2 + $0x2e8] sm:$0xff] 0.0
          %954 = vst [vmem:[#allocation2 + $0x2f0] sm:$0xff] 0.0
          %955 = vst [vmem:[#allocation2 + $0x2f8] sm:$0xff] 0.0
          %956 = vst [vmem:[#allocation2 + $0x300] sm:$0xff] 0.0
          %957 = vst [vmem:[#allocation2 + $0x308] sm:$0xff] 0.0
          %958 = vst [vmem:[#allocation2 + $0x310] sm:$0xff] 0.0
          %959 = vst [vmem:[#allocation2 + $0x318] sm:$0xff] 0.0
          %960 = vst [vmem:[#allocation2 + $0x320] sm:$0xff] 0.0
          %961 = vst [vmem:[#allocation2 + $0x328] sm:$0xff] 0.0
          %962 = vst [vmem:[#allocation2 + $0x330] sm:$0xff] 0.0
          %963 = vst [vmem:[#allocation2 + $0x338] sm:$0xff] 0.0
          %964 = vst [vmem:[#allocation2 + $0x340] sm:$0xff] 0.0
          %965 = vst [vmem:[#allocation2 + $0x348] sm:$0xff] 0.0
          %966 = vst [vmem:[#allocation2 + $0x350] sm:$0xff] 0.0
          %967 = vst [vmem:[#allocation2 + $0x358] sm:$0xff] 0.0
          %968 = vst [vmem:[#allocation2 + $0x360] sm:$0xff] 0.0
          %969 = vst [vmem:[#allocation2 + $0x368] sm:$0xff] 0.0
          %970 = vst [vmem:[#allocation2 + $0x370] sm:$0xff] 0.0
          %971 = vst [vmem:[#allocation2 + $0x378] sm:$0xff] 0.0
          %972 = vst [vmem:[#allocation2 + $0x380] sm:$0xff] 0.0
          %973 = vst [vmem:[#allocation2 + $0x388] sm:$0xff] 0.0
          %974 = vst [vmem:[#allocation2 + $0x390] sm:$0xff] 0.0
          %975 = vst [vmem:[#allocation2 + $0x398] sm:$0xff] 0.0
          %976 = vst [vmem:[#allocation2 + $0x3a0] sm:$0xff] 0.0
          %977 = vst [vmem:[#allocation2 + $0x3a8] sm:$0xff] 0.0
          %978 = vst [vmem:[#allocation2 + $0x3b0] sm:$0xff] 0.0
          %979 = vst [vmem:[#allocation2 + $0x3b8] sm:$0xff] 0.0
          %980 = vst [vmem:[#allocation2 + $0x3c0] sm:$0xff] 0.0
          %981 = vst [vmem:[#allocation2 + $0x3c8] sm:$0xff] 0.0
          %982 = vst [vmem:[#allocation2 + $0x3d0] sm:$0xff] 0.0
          %983 = vst [vmem:[#allocation2 + $0x3d8] sm:$0xff] 0.0
          %984 = vst [vmem:[#allocation2 + $0x3e0] sm:$0xff] 0.0
          %985 = vst [vmem:[#allocation2 + $0x3e8] sm:$0xff] 0.0
          %986 = vst [vmem:[#allocation2 + $0x3f0] sm:$0xff] 0.0
          %987 = vst [vmem:[#allocation2 + $0x3f8] sm:$0xff] 0.0
          %988 = vst [vmem:[#allocation2 + $0x400] sm:$0xff] 0.0
          %989 = vst [vmem:[#allocation2 + $0x408] sm:$0xff] 0.0
          %990 = vst [vmem:[#allocation2 + $0x410] sm:$0xff] 0.0
          %991 = vst [vmem:[#allocation2 + $0x418] sm:$0xff] 0.0
          %992 = vst [vmem:[#allocation2 + $0x420] sm:$0xff] 0.0
          %993 = vst [vmem:[#allocation2 + $0x428] sm:$0xff] 0.0
          %994 = vst [vmem:[#allocation2 + $0x430] sm:$0xff] 0.0
          %995 = vst [vmem:[#allocation2 + $0x438] sm:$0xff] 0.0
          %996 = vst [vmem:[#allocation2 + $0x440] sm:$0xff] 0.0
          %997 = vst [vmem:[#allocation2 + $0x448] sm:$0xff] 0.0
          %998 = vst [vmem:[#allocation2 + $0x450] sm:$0xff] 0.0
          %999 = vst [vmem:[#allocation2 + $0x458] sm:$0xff] 0.0
          %1000 = vst [vmem:[#allocation2 + $0x460] sm:$0xff] 0.0
          %1001 = vst [vmem:[#allocation2 + $0x468] sm:$0xff] 0.0
          %1002 = vst [vmem:[#allocation2 + $0x470] sm:$0xff] 0.0
          %1003 = vst [vmem:[#allocation2 + $0x478] sm:$0xff] 0.0
          %1004 = vst [vmem:[#allocation2 + $0x480] sm:$0xff] 0.0
          %1005 = vst [vmem:[#allocation2 + $0x488] sm:$0xff] 0.0
          %1006 = vst [vmem:[#allocation2 + $0x490] sm:$0xff] 0.0
          %1007 = vst [vmem:[#allocation2 + $0x498] sm:$0xff] 0.0
          %1008 = vst [vmem:[#allocation2 + $0x4a0] sm:$0xff] 0.0
          %1009 = vst [vmem:[#allocation2 + $0x4a8] sm:$0xff] 0.0
          %1010 = vst [vmem:[#allocation2 + $0x4b0] sm:$0xff] 0.0
          %1011 = vst [vmem:[#allocation2 + $0x4b8] sm:$0xff] 0.0
          %1012 = vst [vmem:[#allocation2 + $0x4c0] sm:$0xff] 0.0
          %1013 = vst [vmem:[#allocation2 + $0x4c8] sm:$0xff] 0.0
          %1014 = vst [vmem:[#allocation2 + $0x4d0] sm:$0xff] 0.0
          %1015 = vst [vmem:[#allocation2 + $0x4d8] sm:$0xff] 0.0
          %1016 = vst [vmem:[#allocation2 + $0x4e0] sm:$0xff] 0.0
          %1017 = vst [vmem:[#allocation2 + $0x4e8] sm:$0xff] 0.0
          %1018 = vst [vmem:[#allocation2 + $0x4f0] sm:$0xff] 0.0
          %1019 = vst [vmem:[#allocation2 + $0x4f8] sm:$0xff] 0.0
          %1020 = vst [vmem:[#allocation2 + $0x500] sm:$0xff] 0.0
          %1021 = vst [vmem:[#allocation2 + $0x508] sm:$0xff] 0.0
          %1022 = vst [vmem:[#allocation2 + $0x510] sm:$0xff] 0.0
          %1023 = vst [vmem:[#allocation2 + $0x518] sm:$0xff] 0.0
          %1024 = vst [vmem:[#allocation2 + $0x520] sm:$0xff] 0.0
          %1025 = vst [vmem:[#allocation2 + $0x528] sm:$0xff] 0.0
          %1026 = vst [vmem:[#allocation2 + $0x530] sm:$0xff] 0.0
          %1027 = vst [vmem:[#allocation2 + $0x538] sm:$0xff] 0.0
          %1028 = vst [vmem:[#allocation2 + $0x540] sm:$0xff] 0.0
          %1029 = vst [vmem:[#allocation2 + $0x548] sm:$0xff] 0.0
          %1030 = vst [vmem:[#allocation2 + $0x550] sm:$0xff] 0.0
          %1031 = vst [vmem:[#allocation2 + $0x558] sm:$0xff] 0.0
          %1032 = vst [vmem:[#allocation2 + $0x560] sm:$0xff] 0.0
          %1033 = vst [vmem:[#allocation2 + $0x568] sm:$0xff] 0.0
          %1034 = vst [vmem:[#allocation2 + $0x570] sm:$0xff] 0.0
          %1035 = vst [vmem:[#allocation2 + $0x578] sm:$0xff] 0.0
          %1036 = vst [vmem:[#allocation2 + $0x580] sm:$0xff] 0.0
          %1037 = vst [vmem:[#allocation2 + $0x588] sm:$0xff] 0.0
          %1038 = vst [vmem:[#allocation2 + $0x590] sm:$0xff] 0.0
          %1039 = vst [vmem:[#allocation2 + $0x598] sm:$0xff] 0.0
          %1040 = vst [vmem:[#allocation2 + $0x5a0] sm:$0xff] 0.0
          %1041 = vst [vmem:[#allocation2 + $0x5a8] sm:$0xff] 0.0
          %1042 = vst [vmem:[#allocation2 + $0x5b0] sm:$0xff] 0.0
          %1043 = vst [vmem:[#allocation2 + $0x5b8] sm:$0xff] 0.0
          %1044 = vst [vmem:[#allocation2 + $0x5c0] sm:$0xff] 0.0
          %1045 = vst [vmem:[#allocation2 + $0x5c8] sm:$0xff] 0.0
          %1046 = vst [vmem:[#allocation2 + $0x5d0] sm:$0xff] 0.0
          %1047 = vst [vmem:[#allocation2 + $0x5d8] sm:$0xff] 0.0
          %1048 = vst [vmem:[#allocation2 + $0x5e0] sm:$0xff] 0.0
          %1049 = vst [vmem:[#allocation2 + $0x5e8] sm:$0xff] 0.0
          %1050 = vst [vmem:[#allocation2 + $0x5f0] sm:$0xff] 0.0
          %1051 = vst [vmem:[#allocation2 + $0x5f8] sm:$0xff] 0.0
          %1052 = vst [vmem:[#allocation2 + $0x600] sm:$0xff] 0.0
          %1053 = vst [vmem:[#allocation2 + $0x608] sm:$0xff] 0.0
          %1054 = vst [vmem:[#allocation2 + $0x610] sm:$0xff] 0.0
          %1055 = vst [vmem:[#allocation2 + $0x618] sm:$0xff] 0.0
          %1056 = vst [vmem:[#allocation2 + $0x620] sm:$0xff] 0.0
          %1057 = vst [vmem:[#allocation2 + $0x628] sm:$0xff] 0.0
          %1058 = vst [vmem:[#allocation2 + $0x630] sm:$0xff] 0.0
          %1059 = vst [vmem:[#allocation2 + $0x638] sm:$0xff] 0.0
          %1060 = vst [vmem:[#allocation2 + $0x640] sm:$0xff] 0.0
          %1061 = vst [vmem:[#allocation2 + $0x648] sm:$0xff] 0.0
          %1062 = vst [vmem:[#allocation2 + $0x650] sm:$0xff] 0.0
          %1063 = vst [vmem:[#allocation2 + $0x658] sm:$0xff] 0.0
          %1064 = vst [vmem:[#allocation2 + $0x660] sm:$0xff] 0.0
          %1065 = vst [vmem:[#allocation2 + $0x668] sm:$0xff] 0.0
          %1066 = vst [vmem:[#allocation2 + $0x670] sm:$0xff] 0.0
          %1067 = vst [vmem:[#allocation2 + $0x678] sm:$0xff] 0.0
          %1068 = vst [vmem:[#allocation2 + $0x680] sm:$0xff] 0.0
          %1069 = vst [vmem:[#allocation2 + $0x688] sm:$0xff] 0.0
          %1070 = vst [vmem:[#allocation2 + $0x690] sm:$0xff] 0.0
          %1071 = vst [vmem:[#allocation2 + $0x698] sm:$0xff] 0.0
          %1072 = vst [vmem:[#allocation2 + $0x6a0] sm:$0xff] 0.0
          %1073 = vst [vmem:[#allocation2 + $0x6a8] sm:$0xff] 0.0
          %1074 = vst [vmem:[#allocation2 + $0x6b0] sm:$0xff] 0.0
          %1075 = vst [vmem:[#allocation2 + $0x6b8] sm:$0xff] 0.0
          %1076 = vst [vmem:[#allocation2 + $0x6c0] sm:$0xff] 0.0
          %1077 = vst [vmem:[#allocation2 + $0x6c8] sm:$0xff] 0.0
          %1078 = vst [vmem:[#allocation2 + $0x6d0] sm:$0xff] 0.0
          %1079 = vst [vmem:[#allocation2 + $0x6d8] sm:$0xff] 0.0
          %1080 = vst [vmem:[#allocation2 + $0x6e0] sm:$0xff] 0.0
          %1081 = vst [vmem:[#allocation2 + $0x6e8] sm:$0xff] 0.0
          %1082 = vst [vmem:[#allocation2 + $0x6f0] sm:$0xff] 0.0
          %1083 = vst [vmem:[#allocation2 + $0x6f8] sm:$0xff] 0.0
          %1084 = vst [vmem:[#allocation2 + $0x700] sm:$0xff] 0.0
          %1085 = vst [vmem:[#allocation2 + $0x708] sm:$0xff] 0.0
          %1086 = vst [vmem:[#allocation2 + $0x710] sm:$0xff] 0.0
          %1087 = vst [vmem:[#allocation2 + $0x718] sm:$0xff] 0.0
          %1088 = vst [vmem:[#allocation2 + $0x720] sm:$0xff] 0.0
          %1089 = vst [vmem:[#allocation2 + $0x728] sm:$0xff] 0.0
          %1090 = vst [vmem:[#allocation2 + $0x730] sm:$0xff] 0.0
          %1091 = vst [vmem:[#allocation2 + $0x738] sm:$0xff] 0.0
          %1092 = vst [vmem:[#allocation2 + $0x740] sm:$0xff] 0.0
          %1093 = vst [vmem:[#allocation2 + $0x748] sm:$0xff] 0.0
          %1094 = vst [vmem:[#allocation2 + $0x750] sm:$0xff] 0.0
          %1095 = vst [vmem:[#allocation2 + $0x758] sm:$0xff] 0.0
          %1096 = vst [vmem:[#allocation2 + $0x760] sm:$0xff] 0.0
          %1097 = vst [vmem:[#allocation2 + $0x768] sm:$0xff] 0.0
          %1098 = vst [vmem:[#allocation2 + $0x770] sm:$0xff] 0.0
          %1099 = vst [vmem:[#allocation2 + $0x778] sm:$0xff] 0.0
          %v1100 = vld [vmem:[%s0] sm:$0xff]
          %v1101 = vld [vmem:[%s0 + $0x8] sm:$0xff]
          %v1102 = vld [vmem:[%s0 + $0x10] sm:$0xff]
          %v1103 = vld [vmem:[%s0 + $0x18] sm:$0xff]
          %v1104 = vld [vmem:[%s0 + $0x20] sm:$0xff]
          %v1105 = vld [vmem:[%s0 + $0x28] sm:$0xff]
          %v1106 = vld [vmem:[%s0 + $0x30] sm:$0xff]
          %v1107 = vld [vmem:[%s0 + $0x38] sm:$0xff]
          %v1108 = vld [vmem:[%s0 + $0x40] sm:$0xff]
          %v1109 = vld [vmem:[%s0 + $0x48] sm:$0xff]
          %v1110 = vld [vmem:[%s0 + $0x50] sm:$0xff]
          %v1111 = vld [vmem:[%s0 + $0x58] sm:$0xff]
          %v1112 = vld [vmem:[%s0 + $0x60] sm:$0xff]
          %v1113 = vld [vmem:[%s0 + $0x68] sm:$0xff]
          %v1114 = vld [vmem:[%s0 + $0x70] sm:$0xff]
          %v1115 = vld [vmem:[%s0 + $0x78] sm:$0xff]
          %v1116 = vld [vmem:[%s774] sm:$0x77]
          %v1117 = vld [vmem:[%s778] sm:$0x3]
          %v1119 = vperm.slane %v1117, 0
          %v1120 = vperm.slane %v1117, 1
          %1124 = vst [vmem:[#allocation1] ss:$2 sm:$0xff] %v1116
          %v1125 = vld.sshfl [vmem:[#allocation1] sm:$0xff pattern:$0x75316420]
          %v1126 = vld.sshfl [vmem:[#allocation1 + $0x8] sm:$0xff pattern:$0x75316420]
          %vm1127 = vcmask 23552
          %v1129 = vsel %vm1127, %v1100, 0
          %v1132 = vsel %vm1127, %v1101, 0
          %v1135 = vsel %vm1127, %v1102, 0
          %v1138 = vsel %vm1127, %v1103, 0
          %v1141 = vsel %vm1127, %v1104, 0
          %v1144 = vsel %vm1127, %v1105, 0
          %v1147 = vsel %vm1127, %v1106, 0
          %v1150 = vsel %vm1127, %v1107, 0
          %v1153 = vsel %vm1127, %v1108, 0
          %v1156 = vsel %vm1127, %v1109, 0
          %v1159 = vsel %vm1127, %v1110, 0
          %v1162 = vsel %vm1127, %v1111, 0
          %v1165 = vsel %vm1127, %v1112, 0
          %v1168 = vsel %vm1127, %v1113, 0
          %v1171 = vsel %vm1127, %v1114, 0
          %v1174 = vsel %vm1127, %v1115, 0
          %vm1176 = vcmask 1042432
          %v1177 = vsel %vm1176, %v1125, 0
          %v1179 = vsel %vm1176, %v1126, 0
          %1181 = vmatpush.msra.mxu0 0.0
          %1182 = vmatpush.msra.mxu0 0.0
          %1183 = vmatpush.msra.mxu0 0.0
          %1184 = vmatpush.msra.mxu0 0.0
          %1185 = vmatpush.msra.mxu0 0.0
          %1186 = vmatpush.msra.mxu0 0.0
          %1187 = vmatpush.msra.mxu0 0.0
          %1188 = vmatpush.msra.mxu0 0.0
          %1189 = vmatpush.msra.mxu0 0.0
          %1190 = vmatpush.msra.mxu0 0.0
          %1191 = vmatpush.msra.mxu0 0.0
          %1192 = vmatpush.msra.mxu0 0.0
          %1193 = vmatpush.msra.mxu0 0.0
          %1194 = vmatpush.msra.mxu0 0.0
          %1195 = vmatpush.msra.mxu0 0.0
          %1196 = vmatpush.msra.mxu0 %v1177
          %1197 = vmatmul.f32.gmra.mxu0 %v1129
          %v1198 = vpop.f32.mrf.mxu0
          %v1199 = vadd.f32 %v1119, %v1198
          %1200 = vmatmul.f32.gmra.mxu0 %v1132
          %v1201 = vpop.f32.mrf.mxu0
          %v1202 = vadd.f32 %v1119, %v1201
          %1203 = vmatmul.f32.gmra.mxu0 %v1135
          %v1204 = vpop.f32.mrf.mxu0
          %v1205 = vadd.f32 %v1119, %v1204
          %1206 = vmatmul.f32.gmra.mxu0 %v1138
          %v1207 = vpop.f32.mrf.mxu0
          %v1208 = vadd.f32 %v1119, %v1207
          %1209 = vmatmul.f32.gmra.mxu0 %v1141
          %v1210 = vpop.f32.mrf.mxu0
          %v1211 = vadd.f32 %v1119, %v1210
          %1212 = vmatmul.f32.gmra.mxu0 %v1144
          %v1213 = vpop.f32.mrf.mxu0
          %v1214 = vadd.f32 %v1119, %v1213
          %1215 = vmatmul.f32.gmra.mxu0 %v1147
          %v1216 = vpop.f32.mrf.mxu0
          %v1217 = vadd.f32 %v1119, %v1216
          %1218 = vmatmul.f32.gmra.mxu0 %v1150
          %v1219 = vpop.f32.mrf.mxu0
          %v1220 = vadd.f32 %v1119, %v1219
          %1221 = vmatmul.f32.gmra.mxu0 %v1153
          %v1222 = vpop.f32.mrf.mxu0
          %v1223 = vadd.f32 %v1119, %v1222
          %1224 = vmatmul.f32.gmra.mxu0 %v1156
          %v1225 = vpop.f32.mrf.mxu0
          %v1226 = vadd.f32 %v1119, %v1225
          %1227 = vmatmul.f32.gmra.mxu0 %v1159
          %v1228 = vpop.f32.mrf.mxu0
          %v1229 = vadd.f32 %v1119, %v1228
          %1230 = vmatmul.f32.gmra.mxu0 %v1162
          %v1231 = vpop.f32.mrf.mxu0
          %v1232 = vadd.f32 %v1119, %v1231
          %1233 = vmatmul.f32.gmra.mxu0 %v1165
          %v1234 = vpop.f32.mrf.mxu0
          %v1235 = vadd.f32 %v1119, %v1234
          %1236 = vmatmul.f32.gmra.mxu0 %v1168
          %v1237 = vpop.f32.mrf.mxu0
          %v1238 = vadd.f32 %v1119, %v1237
          %1239 = vmatmul.f32.gmra.mxu0 %v1171
          %v1240 = vpop.f32.mrf.mxu0
          %v1241 = vadd.f32 %v1119, %v1240
          %1242 = vmatmul.f32.gmra.mxu0 %v1174
          %v1243 = vpop.f32.mrf.mxu0
          %v1244 = vadd.f32 %v1119, %v1243
          %1245 = vdwg.mxu0
          %1246 = vmatpush.msra.mxu0 0.0
          %1247 = vmatpush.msra.mxu0 0.0
          %1248 = vmatpush.msra.mxu0 0.0
          %1249 = vmatpush.msra.mxu0 0.0
          %1250 = vmatpush.msra.mxu0 0.0
          %1251 = vmatpush.msra.mxu0 0.0
          %1252 = vmatpush.msra.mxu0 0.0
          %1253 = vmatpush.msra.mxu0 0.0
          %1254 = vmatpush.msra.mxu0 0.0
          %1255 = vmatpush.msra.mxu0 0.0
          %1256 = vmatpush.msra.mxu0 0.0
          %1257 = vmatpush.msra.mxu0 0.0
          %1258 = vmatpush.msra.mxu0 0.0
          %1259 = vmatpush.msra.mxu0 0.0
          %1260 = vmatpush.msra.mxu0 0.0
          %1261 = vmatpush.msra.mxu0 %v1179
          %1262 = vmatmul.f32.gmra.mxu0 %v1129
          %v1263 = vpop.f32.mrf.mxu0
          %v1264 = vadd.f32 %v1120, %v1263
          %1265 = vmatmul.f32.gmra.mxu0 %v1132
          %v1266 = vpop.f32.mrf.mxu0
          %v1267 = vadd.f32 %v1120, %v1266
          %1268 = vmatmul.f32.gmra.mxu0 %v1135
          %v1269 = vpop.f32.mrf.mxu0
          %v1270 = vadd.f32 %v1120, %v1269
          %1271 = vmatmul.f32.gmra.mxu0 %v1138
          %v1272 = vpop.f32.mrf.mxu0
          %v1273 = vadd.f32 %v1120, %v1272
          %1274 = vmatmul.f32.gmra.mxu0 %v1141
          %v1275 = vpop.f32.mrf.mxu0
          %v1276 = vadd.f32 %v1120, %v1275
          %1277 = vmatmul.f32.gmra.mxu0 %v1144
          %v1278 = vpop.f32.mrf.mxu0
          %v1279 = vadd.f32 %v1120, %v1278
          %1280 = vmatmul.f32.gmra.mxu0 %v1147
          %v1281 = vpop.f32.mrf.mxu0
          %v1282 = vadd.f32 %v1120, %v1281
          %1283 = vmatmul.f32.gmra.mxu0 %v1150
          %v1284 = vpop.f32.mrf.mxu0
          %v1285 = vadd.f32 %v1120, %v1284
          %1286 = vmatmul.f32.gmra.mxu0 %v1153
          %v1287 = vpop.f32.mrf.mxu0
          %v1288 = vadd.f32 %v1120, %v1287
          %1289 = vmatmul.f32.gmra.mxu0 %v1156
          %v1290 = vpop.f32.mrf.mxu0
          %v1291 = vadd.f32 %v1120, %v1290
          %1292 = vmatmul.f32.gmra.mxu0 %v1159
          %v1293 = vpop.f32.mrf.mxu0
          %v1294 = vadd.f32 %v1120, %v1293
          %1295 = vmatmul.f32.gmra.mxu0 %v1162
          %v1296 = vpop.f32.mrf.mxu0
          %v1297 = vadd.f32 %v1120, %v1296
          %1298 = vmatmul.f32.gmra.mxu0 %v1165
          %v1299 = vpop.f32.mrf.mxu0
          %v1300 = vadd.f32 %v1120, %v1299
          %1301 = vmatmul.f32.gmra.mxu0 %v1168
          %v1302 = vpop.f32.mrf.mxu0
          %v1303 = vadd.f32 %v1120, %v1302
          %1304 = vmatmul.f32.gmra.mxu0 %v1171
          %v1305 = vpop.f32.mrf.mxu0
          %v1306 = vadd.f32 %v1120, %v1305
          %1307 = vmatmul.f32.gmra.mxu0 %v1174
          %v1308 = vpop.f32.mrf.mxu0
          %v1309 = vadd.f32 %v1120, %v1308
          %1310 = vdwg.mxu0
          %v1311 = vmul.f32 %v1199, 0.5
          %v1312 = vmul.f32 %v1264, 0.5
          %v1313 = vmul.f32 %v1202, 0.5
          %v1314 = vmul.f32 %v1267, 0.5
          %v1315 = vmul.f32 %v1205, 0.5
          %v1316 = vmul.f32 %v1270, 0.5
          %v1317 = vmul.f32 %v1208, 0.5
          %v1318 = vmul.f32 %v1273, 0.5
          %v1319 = vmul.f32 %v1211, 0.5
          %v1320 = vmul.f32 %v1276, 0.5
          %v1321 = vmul.f32 %v1214, 0.5
          %v1322 = vmul.f32 %v1279, 0.5
          %v1323 = vmul.f32 %v1217, 0.5
          %v1324 = vmul.f32 %v1282, 0.5
          %v1325 = vmul.f32 %v1220, 0.5
          %v1326 = vmul.f32 %v1285, 0.5
          %v1327 = vmul.f32 %v1223, 0.5
          %v1328 = vmul.f32 %v1288, 0.5
          %v1329 = vmul.f32 %v1226, 0.5
          %v1330 = vmul.f32 %v1291, 0.5
          %v1331 = vmul.f32 %v1229, 0.5
          %v1332 = vmul.f32 %v1294, 0.5
          %v1333 = vmul.f32 %v1232, 0.5
          %v1334 = vmul.f32 %v1297, 0.5
          %v1335 = vmul.f32 %v1235, 0.5
          %v1336 = vmul.f32 %v1300, 0.5
          %v1337 = vmul.f32 %v1238, 0.5
          %v1338 = vmul.f32 %v1303, 0.5
          %v1339 = vmul.f32 %v1241, 0.5
          %v1340 = vmul.f32 %v1306, 0.5
          %v1341 = vmul.f32 %v1244, 0.5
          %v1342 = vmul.f32 %v1309, 0.5
          %v1343 = vmul.f32 %v1199, %v1199
          %v1344 = vmul.f32 %v1264, %v1264
          %v1345 = vmul.f32 %v1202, %v1202
          %v1346 = vmul.f32 %v1267, %v1267
          %v1347 = vmul.f32 %v1205, %v1205
          %v1348 = vmul.f32 %v1270, %v1270
          %v1349 = vmul.f32 %v1208, %v1208
          %v1350 = vmul.f32 %v1273, %v1273
          %v1351 = vmul.f32 %v1211, %v1211
          %v1352 = vmul.f32 %v1276, %v1276
          %v1353 = vmul.f32 %v1214, %v1214
          %v1354 = vmul.f32 %v1279, %v1279
          %v1355 = vmul.f32 %v1217, %v1217
          %v1356 = vmul.f32 %v1282, %v1282
          %v1357 = vmul.f32 %v1220, %v1220
          %v1358 = vmul.f32 %v1285, %v1285
          %v1359 = vmul.f32 %v1223, %v1223
          %v1360 = vmul.f32 %v1288, %v1288
          %v1361 = vmul.f32 %v1226, %v1226
          %v1362 = vmul.f32 %v1291, %v1291
          %v1363 = vmul.f32 %v1229, %v1229
          %v1364 = vmul.f32 %v1294, %v1294
          %v1365 = vmul.f32 %v1232, %v1232
          %v1366 = vmul.f32 %v1297, %v1297
          %v1367 = vmul.f32 %v1235, %v1235
          %v1368 = vmul.f32 %v1300, %v1300
          %v1369 = vmul.f32 %v1238, %v1238
          %v1370 = vmul.f32 %v1303, %v1303
          %v1371 = vmul.f32 %v1241, %v1241
          %v1372 = vmul.f32 %v1306, %v1306
          %v1373 = vmul.f32 %v1244, %v1244
          %v1374 = vmul.f32 %v1309, %v1309
          %v1375 = vmul.f32 %v1343, %v1199
          %v1376 = vmul.f32 %v1344, %v1264
          %v1377 = vmul.f32 %v1345, %v1202
          %v1378 = vmul.f32 %v1346, %v1267
          %v1379 = vmul.f32 %v1347, %v1205
          %v1380 = vmul.f32 %v1348, %v1270
          %v1381 = vmul.f32 %v1349, %v1208
          %v1382 = vmul.f32 %v1350, %v1273
          %v1383 = vmul.f32 %v1351, %v1211
          %v1384 = vmul.f32 %v1352, %v1276
          %v1385 = vmul.f32 %v1353, %v1214
          %v1386 = vmul.f32 %v1354, %v1279
          %v1387 = vmul.f32 %v1355, %v1217
          %v1388 = vmul.f32 %v1356, %v1282
          %v1389 = vmul.f32 %v1357, %v1220
          %v1390 = vmul.f32 %v1358, %v1285
          %v1391 = vmul.f32 %v1359, %v1223
          %v1392 = vmul.f32 %v1360, %v1288
          %v1393 = vmul.f32 %v1361, %v1226
          %v1394 = vmul.f32 %v1362, %v1291
          %v1395 = vmul.f32 %v1363, %v1229
          %v1396 = vmul.f32 %v1364, %v1294
          %v1397 = vmul.f32 %v1365, %v1232
          %v1398 = vmul.f32 %v1366, %v1297
          %v1399 = vmul.f32 %v1367, %v1235
          %v1400 = vmul.f32 %v1368, %v1300
          %v1401 = vmul.f32 %v1369, %v1238
          %v1402 = vmul.f32 %v1370, %v1303
          %v1403 = vmul.f32 %v1371, %v1241
          %v1404 = vmul.f32 %v1372, %v1306
          %v1405 = vmul.f32 %v1373, %v1244
          %v1406 = vmul.f32 %v1374, %v1309
          %v1407 = vmul.f32 %v1375, 0.044715
          %v1408 = vmul.f32 %v1376, 0.044715
          %v1409 = vmul.f32 %v1377, 0.044715
          %v1410 = vmul.f32 %v1378, 0.044715
          %v1411 = vmul.f32 %v1379, 0.044715
          %v1412 = vmul.f32 %v1380, 0.044715
          %v1413 = vmul.f32 %v1381, 0.044715
          %v1414 = vmul.f32 %v1382, 0.044715
          %v1415 = vmul.f32 %v1383, 0.044715
          %v1416 = vmul.f32 %v1384, 0.044715
          %v1417 = vmul.f32 %v1385, 0.044715
          %v1418 = vmul.f32 %v1386, 0.044715
          %v1419 = vmul.f32 %v1387, 0.044715
          %v1420 = vmul.f32 %v1388, 0.044715
          %v1421 = vmul.f32 %v1389, 0.044715
          %v1422 = vmul.f32 %v1390, 0.044715
          %v1423 = vmul.f32 %v1391, 0.044715
          %v1424 = vmul.f32 %v1392, 0.044715
          %v1425 = vmul.f32 %v1393, 0.044715
          %v1426 = vmul.f32 %v1394, 0.044715
          %v1427 = vmul.f32 %v1395, 0.044715
          %v1428 = vmul.f32 %v1396, 0.044715
          %v1429 = vmul.f32 %v1397, 0.044715
          %v1430 = vmul.f32 %v1398, 0.044715
          %v1431 = vmul.f32 %v1399, 0.044715
          %v1432 = vmul.f32 %v1400, 0.044715
          %v1433 = vmul.f32 %v1401, 0.044715
          %v1434 = vmul.f32 %v1402, 0.044715
          %v1435 = vmul.f32 %v1403, 0.044715
          %v1436 = vmul.f32 %v1404, 0.044715
          %v1437 = vmul.f32 %v1405, 0.044715
          %v1438 = vmul.f32 %v1406, 0.044715
          %v1439 = vadd.f32 %v1199, %v1407
          %v1440 = vadd.f32 %v1264, %v1408
          %v1441 = vadd.f32 %v1202, %v1409
          %v1442 = vadd.f32 %v1267, %v1410
          %v1443 = vadd.f32 %v1205, %v1411
          %v1444 = vadd.f32 %v1270, %v1412
          %v1445 = vadd.f32 %v1208, %v1413
          %v1446 = vadd.f32 %v1273, %v1414
          %v1447 = vadd.f32 %v1211, %v1415
          %v1448 = vadd.f32 %v1276, %v1416
          %v1449 = vadd.f32 %v1214, %v1417
          %v1450 = vadd.f32 %v1279, %v1418
          %v1451 = vadd.f32 %v1217, %v1419
          %v1452 = vadd.f32 %v1282, %v1420
          %v1453 = vadd.f32 %v1220, %v1421
          %v1454 = vadd.f32 %v1285, %v1422
          %v1455 = vadd.f32 %v1223, %v1423
          %v1456 = vadd.f32 %v1288, %v1424
          %v1457 = vadd.f32 %v1226, %v1425
          %v1458 = vadd.f32 %v1291, %v1426
          %v1459 = vadd.f32 %v1229, %v1427
          %v1460 = vadd.f32 %v1294, %v1428
          %v1461 = vadd.f32 %v1232, %v1429
          %v1462 = vadd.f32 %v1297, %v1430
          %v1463 = vadd.f32 %v1235, %v1431
          %v1464 = vadd.f32 %v1300, %v1432
          %v1465 = vadd.f32 %v1238, %v1433
          %v1466 = vadd.f32 %v1303, %v1434
          %v1467 = vadd.f32 %v1241, %v1435
          %v1468 = vadd.f32 %v1306, %v1436
          %v1469 = vadd.f32 %v1244, %v1437
          %v1470 = vadd.f32 %v1309, %v1438
          %v1471 = vmul.f32 %v1439, 0.7978846
          %v1472 = vmul.f32 %v1440, 0.7978846
          %v1473 = vmul.f32 %v1441, 0.7978846
          %v1474 = vmul.f32 %v1442, 0.7978846
          %v1475 = vmul.f32 %v1443, 0.7978846
          %v1476 = vmul.f32 %v1444, 0.7978846
          %v1477 = vmul.f32 %v1445, 0.7978846
          %v1478 = vmul.f32 %v1446, 0.7978846
          %v1479 = vmul.f32 %v1447, 0.7978846
          %v1480 = vmul.f32 %v1448, 0.7978846
          %v1481 = vmul.f32 %v1449, 0.7978846
          %v1482 = vmul.f32 %v1450, 0.7978846
          %v1483 = vmul.f32 %v1451, 0.7978846
          %v1484 = vmul.f32 %v1452, 0.7978846
          %v1485 = vmul.f32 %v1453, 0.7978846
          %v1486 = vmul.f32 %v1454, 0.7978846
          %v1487 = vmul.f32 %v1455, 0.7978846
          %v1488 = vmul.f32 %v1456, 0.7978846
          %v1489 = vmul.f32 %v1457, 0.7978846
          %v1490 = vmul.f32 %v1458, 0.7978846
          %v1491 = vmul.f32 %v1459, 0.7978846
          %v1492 = vmul.f32 %v1460, 0.7978846
          %v1493 = vmul.f32 %v1461, 0.7978846
          %v1494 = vmul.f32 %v1462, 0.7978846
          %v1495 = vmul.f32 %v1463, 0.7978846
          %v1496 = vmul.f32 %v1464, 0.7978846
          %v1497 = vmul.f32 %v1465, 0.7978846
          %v1498 = vmul.f32 %v1466, 0.7978846
          %v1499 = vmul.f32 %v1467, 0.7978846
          %v1500 = vmul.f32 %v1468, 0.7978846
          %v1501 = vmul.f32 %v1469, 0.7978846
          %v1502 = vmul.f32 %v1470, 0.7978846
          %v1503 = vtanh.pop %v1471
          %v1504 = vtanh.pop %v1472
          %v1505 = vtanh.pop %v1473
          %v1506 = vtanh.pop %v1474
          %v1507 = vtanh.pop %v1475
          %v1508 = vtanh.pop %v1476
          %v1509 = vtanh.pop %v1477
          %v1510 = vtanh.pop %v1478
          %v1511 = vtanh.pop %v1479
          %v1512 = vtanh.pop %v1480
          %v1513 = vtanh.pop %v1481
          %v1514 = vtanh.pop %v1482
          %v1515 = vtanh.pop %v1483
          %v1516 = vtanh.pop %v1484
          %v1517 = vtanh.pop %v1485
          %v1518 = vtanh.pop %v1486
          %v1519 = vtanh.pop %v1487
          %v1520 = vtanh.pop %v1488
          %v1521 = vtanh.pop %v1489
          %v1522 = vtanh.pop %v1490
          %v1523 = vtanh.pop %v1491
          %v1524 = vtanh.pop %v1492
          %v1525 = vtanh.pop %v1493
          %v1526 = vtanh.pop %v1494
          %v1527 = vtanh.pop %v1495
          %v1528 = vtanh.pop %v1496
          %v1529 = vtanh.pop %v1497
          %v1530 = vtanh.pop %v1498
          %v1531 = vtanh.pop %v1499
          %v1532 = vtanh.pop %v1500
          %v1533 = vtanh.pop %v1501
          %v1534 = vtanh.pop %v1502
          %v1535 = vadd.f32 %v1503, 1.0
          %v1536 = vadd.f32 %v1504, 1.0
          %v1537 = vadd.f32 %v1505, 1.0
          %v1538 = vadd.f32 %v1506, 1.0
          %v1539 = vadd.f32 %v1507, 1.0
          %v1540 = vadd.f32 %v1508, 1.0
          %v1541 = vadd.f32 %v1509, 1.0
          %v1542 = vadd.f32 %v1510, 1.0
          %v1543 = vadd.f32 %v1511, 1.0
          %v1544 = vadd.f32 %v1512, 1.0
          %v1545 = vadd.f32 %v1513, 1.0
          %v1546 = vadd.f32 %v1514, 1.0
          %v1547 = vadd.f32 %v1515, 1.0
          %v1548 = vadd.f32 %v1516, 1.0
          %v1549 = vadd.f32 %v1517, 1.0
          %v1550 = vadd.f32 %v1518, 1.0
          %v1551 = vadd.f32 %v1519, 1.0
          %v1552 = vadd.f32 %v1520, 1.0
          %v1553 = vadd.f32 %v1521, 1.0
          %v1554 = vadd.f32 %v1522, 1.0
          %v1555 = vadd.f32 %v1523, 1.0
          %v1556 = vadd.f32 %v1524, 1.0
          %v1557 = vadd.f32 %v1525, 1.0
          %v1558 = vadd.f32 %v1526, 1.0
          %v1559 = vadd.f32 %v1527, 1.0
          %v1560 = vadd.f32 %v1528, 1.0
          %v1561 = vadd.f32 %v1529, 1.0
          %v1562 = vadd.f32 %v1530, 1.0
          %v1563 = vadd.f32 %v1531, 1.0
          %v1564 = vadd.f32 %v1532, 1.0
          %v1565 = vadd.f32 %v1533, 1.0
          %v1566 = vadd.f32 %v1534, 1.0
          %v1567 = vmul.f32 %v1311, %v1535
          %v1568 = vmul.f32 %v1312, %v1536
          %v1569 = vmul.f32 %v1313, %v1537
          %v1570 = vmul.f32 %v1314, %v1538
          %v1571 = vmul.f32 %v1315, %v1539
          %v1572 = vmul.f32 %v1316, %v1540
          %v1573 = vmul.f32 %v1317, %v1541
          %v1574 = vmul.f32 %v1318, %v1542
          %v1575 = vmul.f32 %v1319, %v1543
          %v1576 = vmul.f32 %v1320, %v1544
          %v1577 = vmul.f32 %v1321, %v1545
          %v1578 = vmul.f32 %v1322, %v1546
          %v1579 = vmul.f32 %v1323, %v1547
          %v1580 = vmul.f32 %v1324, %v1548
          %v1581 = vmul.f32 %v1325, %v1549
          %v1582 = vmul.f32 %v1326, %v1550
          %v1583 = vmul.f32 %v1327, %v1551
          %v1584 = vmul.f32 %v1328, %v1552
          %v1585 = vmul.f32 %v1329, %v1553
          %v1586 = vmul.f32 %v1330, %v1554
          %v1587 = vmul.f32 %v1331, %v1555
          %v1588 = vmul.f32 %v1332, %v1556
          %v1589 = vmul.f32 %v1333, %v1557
          %v1590 = vmul.f32 %v1334, %v1558
          %v1591 = vmul.f32 %v1335, %v1559
          %v1592 = vmul.f32 %v1336, %v1560
          %v1593 = vmul.f32 %v1337, %v1561
          %v1594 = vmul.f32 %v1338, %v1562
          %v1595 = vmul.f32 %v1339, %v1563
          %v1596 = vmul.f32 %v1340, %v1564
          %v1597 = vmul.f32 %v1341, %v1565
          %v1598 = vmul.f32 %v1342, %v1566
          %v1599 = vld [vmem:[%s782] sm:$0x3]
          %v1601 = vperm.slane %v1599, 0
          %v1602 = vperm.slane %v1599, 1
          %v1605 = vmul.f32 %v1567, %v1601
          %v1606 = vmul.f32 %v1568, %v1602
          %v1607 = vmul.f32 %v1569, %v1601
          %v1608 = vmul.f32 %v1570, %v1602
          %v1609 = vmul.f32 %v1571, %v1601
          %v1610 = vmul.f32 %v1572, %v1602
          %v1611 = vmul.f32 %v1573, %v1601
          %v1612 = vmul.f32 %v1574, %v1602
          %v1613 = vmul.f32 %v1575, %v1601
          %v1614 = vmul.f32 %v1576, %v1602
          %v1615 = vmul.f32 %v1577, %v1601
          %v1616 = vmul.f32 %v1578, %v1602
          %v1617 = vmul.f32 %v1579, %v1601
          %v1618 = vmul.f32 %v1580, %v1602
          %v1619 = vmul.f32 %v1581, %v1601
          %v1620 = vmul.f32 %v1582, %v1602
          %v1621 = vmul.f32 %v1583, %v1601
          %v1622 = vmul.f32 %v1584, %v1602
          %v1623 = vmul.f32 %v1585, %v1601
          %v1624 = vmul.f32 %v1586, %v1602
          %v1625 = vmul.f32 %v1587, %v1601
          %v1626 = vmul.f32 %v1588, %v1602
          %v1627 = vmul.f32 %v1589, %v1601
          %v1628 = vmul.f32 %v1590, %v1602
          %v1629 = vmul.f32 %v1591, %v1601
          %v1630 = vmul.f32 %v1592, %v1602
          %v1631 = vmul.f32 %v1593, %v1601
          %v1632 = vmul.f32 %v1594, %v1602
          %v1633 = vmul.f32 %v1595, %v1601
          %v1634 = vmul.f32 %v1596, %v1602
          %v1635 = vmul.f32 %v1597, %v1601
          %v1636 = vmul.f32 %v1598, %v1602
          %v1637 = vld [vmem:[%s786] sm:$0x3]
          %v1639 = vperm.slane %v1637, 0
          %v1640 = vperm.slane %v1637, 1
          %v1643 = vadd.f32 %v1605, %v1639
          %v1644 = vadd.f32 %v1606, %v1640
          %v1645 = vadd.f32 %v1607, %v1639
          %v1646 = vadd.f32 %v1608, %v1640
          %v1647 = vadd.f32 %v1609, %v1639
          %v1648 = vadd.f32 %v1610, %v1640
          %v1649 = vadd.f32 %v1611, %v1639
          %v1650 = vadd.f32 %v1612, %v1640
          %v1651 = vadd.f32 %v1613, %v1639
          %v1652 = vadd.f32 %v1614, %v1640
          %v1653 = vadd.f32 %v1615, %v1639
          %v1654 = vadd.f32 %v1616, %v1640
          %v1655 = vadd.f32 %v1617, %v1639
          %v1656 = vadd.f32 %v1618, %v1640
          %v1657 = vadd.f32 %v1619, %v1639
          %v1658 = vadd.f32 %v1620, %v1640
          %v1659 = vadd.f32 %v1621, %v1639
          %v1660 = vadd.f32 %v1622, %v1640
          %v1661 = vadd.f32 %v1623, %v1639
          %v1662 = vadd.f32 %v1624, %v1640
          %v1663 = vadd.f32 %v1625, %v1639
          %v1664 = vadd.f32 %v1626, %v1640
          %v1665 = vadd.f32 %v1627, %v1639
          %v1666 = vadd.f32 %v1628, %v1640
          %v1667 = vadd.f32 %v1629, %v1639
          %v1668 = vadd.f32 %v1630, %v1640
          %v1669 = vadd.f32 %v1631, %v1639
          %v1670 = vadd.f32 %v1632, %v1640
          %v1671 = vadd.f32 %v1633, %v1639
          %v1672 = vadd.f32 %v1634, %v1640
          %v1673 = vadd.f32 %v1635, %v1639
          %v1674 = vadd.f32 %v1636, %v1640
          %v1675 = vlaneseq
          %v1676 = vshrl.u32 %v1675, 7
          %v1677 = vrot.slane %v1643, 6
          %v1678 = vrot.slane %v1644, 6
          %v1679 = vrot.slane %v1645, 6
          %v1680 = vrot.slane %v1646, 6
          %v1681 = vrot.slane %v1647, 6
          %v1682 = vrot.slane %v1648, 6
          %v1683 = vrot.slane %v1649, 6
          %v1684 = vrot.slane %v1650, 6
          %v1685 = vrot.slane %v1651, 6
          %v1686 = vrot.slane %v1652, 6
          %v1687 = vrot.slane %v1653, 6
          %v1688 = vrot.slane %v1654, 6
          %v1689 = vrot.slane %v1655, 6
          %v1690 = vrot.slane %v1656, 6
          %v1691 = vrot.slane %v1657, 6
          %v1692 = vrot.slane %v1658, 6
          %v1693 = vrot.slane %v1659, 6
          %v1694 = vrot.slane %v1660, 6
          %v1695 = vrot.slane %v1661, 6
          %v1696 = vrot.slane %v1662, 6
          %v1697 = vrot.slane %v1663, 6
          %v1698 = vrot.slane %v1664, 6
          %v1699 = vrot.slane %v1665, 6
          %v1700 = vrot.slane %v1666, 6
          %v1701 = vrot.slane %v1667, 6
          %v1702 = vrot.slane %v1668, 6
          %v1703 = vrot.slane %v1669, 6
          %v1704 = vrot.slane %v1670, 6
          %v1705 = vrot.slane %v1671, 6
          %v1706 = vrot.slane %v1672, 6
          %v1707 = vrot.slane %v1673, 6
          %v1708 = vrot.slane %v1674, 6
          %v1709 = vadd.s32 %v1676, 4294967294
          %vm1710 = vcmp.ge.s32.totalorder %v1709, 0
          %vm1711 = vcmp.lt.s32.totalorder %v1709, 8
          %vm1712 = vmand %vm1710, %vm1711
          %v1713 = vsel %vm1712, 1, 0
          %v1714 = vcvt.s32.f32 %v1713
          %v1715 = vmul.f32 %v1677, %v1714
          %v1716 = vmul.f32 %v1678, %v1714
          %v1717 = vmul.f32 %v1679, %v1714
          %v1718 = vmul.f32 %v1680, %v1714
          %v1719 = vmul.f32 %v1681, %v1714
          %v1720 = vmul.f32 %v1682, %v1714
          %v1721 = vmul.f32 %v1683, %v1714
          %v1722 = vmul.f32 %v1684, %v1714
          %v1723 = vmul.f32 %v1685, %v1714
          %v1724 = vmul.f32 %v1686, %v1714
          %v1725 = vmul.f32 %v1687, %v1714
          %v1726 = vmul.f32 %v1688, %v1714
          %v1727 = vmul.f32 %v1689, %v1714
          %v1728 = vmul.f32 %v1690, %v1714
          %v1729 = vmul.f32 %v1691, %v1714
          %v1730 = vmul.f32 %v1692, %v1714
          %v1731 = vmul.f32 %v1693, %v1714
          %v1732 = vmul.f32 %v1694, %v1714
          %v1733 = vmul.f32 %v1695, %v1714
          %v1734 = vmul.f32 %v1696, %v1714
          %v1735 = vmul.f32 %v1697, %v1714
          %v1736 = vmul.f32 %v1698, %v1714
          %v1737 = vmul.f32 %v1699, %v1714
          %v1738 = vmul.f32 %v1700, %v1714
          %v1739 = vmul.f32 %v1701, %v1714
          %v1740 = vmul.f32 %v1702, %v1714
          %v1741 = vmul.f32 %v1703, %v1714
          %v1742 = vmul.f32 %v1704, %v1714
          %v1743 = vmul.f32 %v1705, %v1714
          %v1744 = vmul.f32 %v1706, %v1714
          %v1745 = vmul.f32 %v1707, %v1714
          %v1746 = vmul.f32 %v1708, %v1714
          %s1747 = scalar_lea.vmem [#allocation2], 32
          %1748 = vst [vmem:[%s1747] sm:$0xff] %v1715
          %1749 = vst [vmem:[%s1747 + $0x8] sm:$0xff] %v1716
          %1750 = vst [vmem:[%s1747 + $0x10] sm:$0xff] %v1717
          %1751 = vst [vmem:[%s1747 + $0x18] sm:$0xff] %v1718
          %1752 = vst [vmem:[%s1747 + $0x20] sm:$0xff] %v1719
          %1753 = vst [vmem:[%s1747 + $0x28] sm:$0xff] %v1720
          %1754 = vst [vmem:[%s1747 + $0x30] sm:$0xff] %v1721
          %1755 = vst [vmem:[%s1747 + $0x38] sm:$0xff] %v1722
          %1756 = vst [vmem:[%s1747 + $0x40] sm:$0xff] %v1723
          %1757 = vst [vmem:[%s1747 + $0x48] sm:$0xff] %v1724
          %1758 = vst [vmem:[%s1747 + $0x50] sm:$0xff] %v1725
          %1759 = vst [vmem:[%s1747 + $0x58] sm:$0xff] %v1726
          %1760 = vst [vmem:[%s1747 + $0x60] sm:$0xff] %v1727
          %1761 = vst [vmem:[%s1747 + $0x68] sm:$0xff] %v1728
          %1762 = vst [vmem:[%s1747 + $0x70] sm:$0xff] %v1729
          %1763 = vst [vmem:[%s1747 + $0x78] sm:$0xff] %v1730
          %1764 = vst [vmem:[%s1747 + $0xc0] sm:$0xff] %v1731
          %1765 = vst [vmem:[%s1747 + $0xc8] sm:$0xff] %v1732
          %1766 = vst [vmem:[%s1747 + $0xd0] sm:$0xff] %v1733
          %1767 = vst [vmem:[%s1747 + $0xd8] sm:$0xff] %v1734
          %1768 = vst [vmem:[%s1747 + $0xe0] sm:$0xff] %v1735
          %1769 = vst [vmem:[%s1747 + $0xe8] sm:$0xff] %v1736
          %1770 = vst [vmem:[%s1747 + $0xf0] sm:$0xff] %v1737
          %1771 = vst [vmem:[%s1747 + $0xf8] sm:$0xff] %v1738
          %1772 = vst [vmem:[%s1747 + $0x100] sm:$0xff] %v1739
          %1773 = vst [vmem:[%s1747 + $0x108] sm:$0xff] %v1740
          %1774 = vst [vmem:[%s1747 + $0x110] sm:$0xff] %v1741
          %1775 = vst [vmem:[%s1747 + $0x118] sm:$0xff] %v1742
          %1776 = vst [vmem:[%s1747 + $0x120] sm:$0xff] %v1743
          %1777 = vst [vmem:[%s1747 + $0x128] sm:$0xff] %v1744
          %1778 = vst [vmem:[%s1747 + $0x130] sm:$0xff] %v1745
          %1779 = vst [vmem:[%s1747 + $0x138] sm:$0xff] %v1746
          %v1780 = vrot.slane %v1643, 7
          %v1781 = vrot.slane %v1644, 7
          %v1782 = vrot.slane %v1645, 7
          %v1783 = vrot.slane %v1646, 7
          %v1784 = vrot.slane %v1647, 7
          %v1785 = vrot.slane %v1648, 7
          %v1786 = vrot.slane %v1649, 7
          %v1787 = vrot.slane %v1650, 7
          %v1788 = vrot.slane %v1651, 7
          %v1789 = vrot.slane %v1652, 7
          %v1790 = vrot.slane %v1653, 7
          %v1791 = vrot.slane %v1654, 7
          %v1792 = vrot.slane %v1655, 7
          %v1793 = vrot.slane %v1656, 7
          %v1794 = vrot.slane %v1657, 7
          %v1795 = vrot.slane %v1658, 7
          %v1796 = vrot.slane %v1659, 7
          %v1797 = vrot.slane %v1660, 7
          %v1798 = vrot.slane %v1661, 7
          %v1799 = vrot.slane %v1662, 7
          %v1800 = vrot.slane %v1663, 7
          %v1801 = vrot.slane %v1664, 7
          %v1802 = vrot.slane %v1665, 7
          %v1803 = vrot.slane %v1666, 7
          %v1804 = vrot.slane %v1667, 7
          %v1805 = vrot.slane %v1668, 7
          %v1806 = vrot.slane %v1669, 7
          %v1807 = vrot.slane %v1670, 7
          %v1808 = vrot.slane %v1671, 7
          %v1809 = vrot.slane %v1672, 7
          %v1810 = vrot.slane %v1673, 7
          %v1811 = vrot.slane %v1674, 7
          %v1812 = vadd.s32 %v1676, 4294967295
          %vm1813 = vcmp.ge.s32.totalorder %v1812, 0
          %vm1814 = vcmp.lt.s32.totalorder %v1812, 8
          %vm1815 = vmand %vm1813, %vm1814
          %v1816 = vsel %vm1815, 1, 0
          %v1817 = vcvt.s32.f32 %v1816
          %v1818 = vmul.f32 %v1780, %v1817
          %v1819 = vmul.f32 %v1781, %v1817
          %v1820 = vmul.f32 %v1782, %v1817
          %v1821 = vmul.f32 %v1783, %v1817
          %v1822 = vmul.f32 %v1784, %v1817
          %v1823 = vmul.f32 %v1785, %v1817
          %v1824 = vmul.f32 %v1786, %v1817
          %v1825 = vmul.f32 %v1787, %v1817
          %v1826 = vmul.f32 %v1788, %v1817
          %v1827 = vmul.f32 %v1789, %v1817
          %v1828 = vmul.f32 %v1790, %v1817
          %v1829 = vmul.f32 %v1791, %v1817
          %v1830 = vmul.f32 %v1792, %v1817
          %v1831 = vmul.f32 %v1793, %v1817
          %v1832 = vmul.f32 %v1794, %v1817
          %v1833 = vmul.f32 %v1795, %v1817
          %v1834 = vmul.f32 %v1796, %v1817
          %v1835 = vmul.f32 %v1797, %v1817
          %v1836 = vmul.f32 %v1798, %v1817
          %v1837 = vmul.f32 %v1799, %v1817
          %v1838 = vmul.f32 %v1800, %v1817
          %v1839 = vmul.f32 %v1801, %v1817
          %v1840 = vmul.f32 %v1802, %v1817
          %v1841 = vmul.f32 %v1803, %v1817
          %v1842 = vmul.f32 %v1804, %v1817
          %v1843 = vmul.f32 %v1805, %v1817
          %v1844 = vmul.f32 %v1806, %v1817
          %v1845 = vmul.f32 %v1807, %v1817
          %v1846 = vmul.f32 %v1808, %v1817
          %v1847 = vmul.f32 %v1809, %v1817
          %v1848 = vmul.f32 %v1810, %v1817
          %v1849 = vmul.f32 %v1811, %v1817
          %s1850 = scalar_lea.vmem [#allocation2], 416
          %1851 = vst [vmem:[%s1850] sm:$0xff] %v1818
          %1852 = vst [vmem:[%s1850 + $0x8] sm:$0xff] %v1819
          %1853 = vst [vmem:[%s1850 + $0x10] sm:$0xff] %v1820
          %1854 = vst [vmem:[%s1850 + $0x18] sm:$0xff] %v1821
          %1855 = vst [vmem:[%s1850 + $0x20] sm:$0xff] %v1822
          %1856 = vst [vmem:[%s1850 + $0x28] sm:$0xff] %v1823
          %1857 = vst [vmem:[%s1850 + $0x30] sm:$0xff] %v1824
          %1858 = vst [vmem:[%s1850 + $0x38] sm:$0xff] %v1825
          %1859 = vst [vmem:[%s1850 + $0x40] sm:$0xff] %v1826
          %1860 = vst [vmem:[%s1850 + $0x48] sm:$0xff] %v1827
          %1861 = vst [vmem:[%s1850 + $0x50] sm:$0xff] %v1828
          %1862 = vst [vmem:[%s1850 + $0x58] sm:$0xff] %v1829
          %1863 = vst [vmem:[%s1850 + $0x60] sm:$0xff] %v1830
          %1864 = vst [vmem:[%s1850 + $0x68] sm:$0xff] %v1831
          %1865 = vst [vmem:[%s1850 + $0x70] sm:$0xff] %v1832
          %1866 = vst [vmem:[%s1850 + $0x78] sm:$0xff] %v1833
          %1867 = vst [vmem:[%s1850 + $0xc0] sm:$0xff] %v1834
          %1868 = vst [vmem:[%s1850 + $0xc8] sm:$0xff] %v1835
          %1869 = vst [vmem:[%s1850 + $0xd0] sm:$0xff] %v1836
          %1870 = vst [vmem:[%s1850 + $0xd8] sm:$0xff] %v1837
          %1871 = vst [vmem:[%s1850 + $0xe0] sm:$0xff] %v1838
          %1872 = vst [vmem:[%s1850 + $0xe8] sm:$0xff] %v1839
          %1873 = vst [vmem:[%s1850 + $0xf0] sm:$0xff] %v1840
          %1874 = vst [vmem:[%s1850 + $0xf8] sm:$0xff] %v1841
          %1875 = vst [vmem:[%s1850 + $0x100] sm:$0xff] %v1842
          %1876 = vst [vmem:[%s1850 + $0x108] sm:$0xff] %v1843
          %1877 = vst [vmem:[%s1850 + $0x110] sm:$0xff] %v1844
          %1878 = vst [vmem:[%s1850 + $0x118] sm:$0xff] %v1845
          %1879 = vst [vmem:[%s1850 + $0x120] sm:$0xff] %v1846
          %1880 = vst [vmem:[%s1850 + $0x128] sm:$0xff] %v1847
          %1881 = vst [vmem:[%s1850 + $0x130] sm:$0xff] %v1848
          %1882 = vst [vmem:[%s1850 + $0x138] sm:$0xff] %v1849
          %s1883 = scalar_lea.vmem [#allocation2], 800
          %1884 = vst [vmem:[%s1883] sm:$0xff] %v1643
          %1885 = vst [vmem:[%s1883 + $0x8] sm:$0xff] %v1644
          %1886 = vst [vmem:[%s1883 + $0x10] sm:$0xff] %v1645
          %1887 = vst [vmem:[%s1883 + $0x18] sm:$0xff] %v1646
          %1888 = vst [vmem:[%s1883 + $0x20] sm:$0xff] %v1647
          %1889 = vst [vmem:[%s1883 + $0x28] sm:$0xff] %v1648
          %1890 = vst [vmem:[%s1883 + $0x30] sm:$0xff] %v1649
          %1891 = vst [vmem:[%s1883 + $0x38] sm:$0xff] %v1650
          %1892 = vst [vmem:[%s1883 + $0x40] sm:$0xff] %v1651
          %1893 = vst [vmem:[%s1883 + $0x48] sm:$0xff] %v1652
          %1894 = vst [vmem:[%s1883 + $0x50] sm:$0xff] %v1653
          %1895 = vst [vmem:[%s1883 + $0x58] sm:$0xff] %v1654
          %1896 = vst [vmem:[%s1883 + $0x60] sm:$0xff] %v1655
          %1897 = vst [vmem:[%s1883 + $0x68] sm:$0xff] %v1656
          %1898 = vst [vmem:[%s1883 + $0x70] sm:$0xff] %v1657
          %1899 = vst [vmem:[%s1883 + $0x78] sm:$0xff] %v1658
          %1900 = vst [vmem:[%s1883 + $0xc0] sm:$0xff] %v1659
          %1901 = vst [vmem:[%s1883 + $0xc8] sm:$0xff] %v1660
          %1902 = vst [vmem:[%s1883 + $0xd0] sm:$0xff] %v1661
          %1903 = vst [vmem:[%s1883 + $0xd8] sm:$0xff] %v1662
          %1904 = vst [vmem:[%s1883 + $0xe0] sm:$0xff] %v1663
          %1905 = vst [vmem:[%s1883 + $0xe8] sm:$0xff] %v1664
          %1906 = vst [vmem:[%s1883 + $0xf0] sm:$0xff] %v1665
          %1907 = vst [vmem:[%s1883 + $0xf8] sm:$0xff] %v1666
          %1908 = vst [vmem:[%s1883 + $0x100] sm:$0xff] %v1667
          %1909 = vst [vmem:[%s1883 + $0x108] sm:$0xff] %v1668
          %1910 = vst [vmem:[%s1883 + $0x110] sm:$0xff] %v1669
          %1911 = vst [vmem:[%s1883 + $0x118] sm:$0xff] %v1670
          %1912 = vst [vmem:[%s1883 + $0x120] sm:$0xff] %v1671
          %1913 = vst [vmem:[%s1883 + $0x128] sm:$0xff] %v1672
          %1914 = vst [vmem:[%s1883 + $0x130] sm:$0xff] %v1673
          %1915 = vst [vmem:[%s1883 + $0x138] sm:$0xff] %v1674
          %v1916 = vrot.slane %v1643, 1
          %v1917 = vrot.slane %v1644, 1
          %v1918 = vrot.slane %v1645, 1
          %v1919 = vrot.slane %v1646, 1
          %v1920 = vrot.slane %v1647, 1
          %v1921 = vrot.slane %v1648, 1
          %v1922 = vrot.slane %v1649, 1
          %v1923 = vrot.slane %v1650, 1
          %v1924 = vrot.slane %v1651, 1
          %v1925 = vrot.slane %v1652, 1
          %v1926 = vrot.slane %v1653, 1
          %v1927 = vrot.slane %v1654, 1
          %v1928 = vrot.slane %v1655, 1
          %v1929 = vrot.slane %v1656, 1
          %v1930 = vrot.slane %v1657, 1
          %v1931 = vrot.slane %v1658, 1
          %v1932 = vrot.slane %v1659, 1
          %v1933 = vrot.slane %v1660, 1
          %v1934 = vrot.slane %v1661, 1
          %v1935 = vrot.slane %v1662, 1
          %v1936 = vrot.slane %v1663, 1
          %v1937 = vrot.slane %v1664, 1
          %v1938 = vrot.slane %v1665, 1
          %v1939 = vrot.slane %v1666, 1
          %v1940 = vrot.slane %v1667, 1
          %v1941 = vrot.slane %v1668, 1
          %v1942 = vrot.slane %v1669, 1
          %v1943 = vrot.slane %v1670, 1
          %v1944 = vrot.slane %v1671, 1
          %v1945 = vrot.slane %v1672, 1
          %v1946 = vrot.slane %v1673, 1
          %v1947 = vrot.slane %v1674, 1
          %v1948 = vadd.s32 %v1676, 1
          %vm1949 = vcmp.ge.s32.totalorder %v1948, 0
          %vm1950 = vcmp.lt.s32.totalorder %v1948, 8
          %vm1951 = vmand %vm1949, %vm1950
          %v1952 = vsel %vm1951, 1, 0
          %v1953 = vcvt.s32.f32 %v1952
          %v1954 = vmul.f32 %v1916, %v1953
          %v1955 = vmul.f32 %v1917, %v1953
          %v1956 = vmul.f32 %v1918, %v1953
          %v1957 = vmul.f32 %v1919, %v1953
          %v1958 = vmul.f32 %v1920, %v1953
          %v1959 = vmul.f32 %v1921, %v1953
          %v1960 = vmul.f32 %v1922, %v1953
          %v1961 = vmul.f32 %v1923, %v1953
          %v1962 = vmul.f32 %v1924, %v1953
          %v1963 = vmul.f32 %v1925, %v1953
          %v1964 = vmul.f32 %v1926, %v1953
          %v1965 = vmul.f32 %v1927, %v1953
          %v1966 = vmul.f32 %v1928, %v1953
          %v1967 = vmul.f32 %v1929, %v1953
          %v1968 = vmul.f32 %v1930, %v1953
          %v1969 = vmul.f32 %v1931, %v1953
          %v1970 = vmul.f32 %v1932, %v1953
          %v1971 = vmul.f32 %v1933, %v1953
          %v1972 = vmul.f32 %v1934, %v1953
          %v1973 = vmul.f32 %v1935, %v1953
          %v1974 = vmul.f32 %v1936, %v1953
          %v1975 = vmul.f32 %v1937, %v1953
          %v1976 = vmul.f32 %v1938, %v1953
          %v1977 = vmul.f32 %v1939, %v1953
          %v1978 = vmul.f32 %v1940, %v1953
          %v1979 = vmul.f32 %v1941, %v1953
          %v1980 = vmul.f32 %v1942, %v1953
          %v1981 = vmul.f32 %v1943, %v1953
          %v1982 = vmul.f32 %v1944, %v1953
          %v1983 = vmul.f32 %v1945, %v1953
          %v1984 = vmul.f32 %v1946, %v1953
          %v1985 = vmul.f32 %v1947, %v1953
          %s1986 = scalar_lea.vmem [#allocation2], 1184
          %1987 = vst [vmem:[%s1986] sm:$0xff] %v1954
          %1988 = vst [vmem:[%s1986 + $0x8] sm:$0xff] %v1955
          %1989 = vst [vmem:[%s1986 + $0x10] sm:$0xff] %v1956
          %1990 = vst [vmem:[%s1986 + $0x18] sm:$0xff] %v1957
          %1991 = vst [vmem:[%s1986 + $0x20] sm:$0xff] %v1958
          %1992 = vst [vmem:[%s1986 + $0x28] sm:$0xff] %v1959
          %1993 = vst [vmem:[%s1986 + $0x30] sm:$0xff] %v1960
          %1994 = vst [vmem:[%s1986 + $0x38] sm:$0xff] %v1961
          %1995 = vst [vmem:[%s1986 + $0x40] sm:$0xff] %v1962
          %1996 = vst [vmem:[%s1986 + $0x48] sm:$0xff] %v1963
          %1997 = vst [vmem:[%s1986 + $0x50] sm:$0xff] %v1964
          %1998 = vst [vmem:[%s1986 + $0x58] sm:$0xff] %v1965
          %1999 = vst [vmem:[%s1986 + $0x60] sm:$0xff] %v1966
          %2000 = vst [vmem:[%s1986 + $0x68] sm:$0xff] %v1967
          %2001 = vst [vmem:[%s1986 + $0x70] sm:$0xff] %v1968
          %2002 = vst [vmem:[%s1986 + $0x78] sm:$0xff] %v1969
          %2003 = vst [vmem:[%s1986 + $0xc0] sm:$0xff] %v1970
          %2004 = vst [vmem:[%s1986 + $0xc8] sm:$0xff] %v1971
          %2005 = vst [vmem:[%s1986 + $0xd0] sm:$0xff] %v1972
          %2006 = vst [vmem:[%s1986 + $0xd8] sm:$0xff] %v1973
          %2007 = vst [vmem:[%s1986 + $0xe0] sm:$0xff] %v1974
          %2008 = vst [vmem:[%s1986 + $0xe8] sm:$0xff] %v1975
          %2009 = vst [vmem:[%s1986 + $0xf0] sm:$0xff] %v1976
          %2010 = vst [vmem:[%s1986 + $0xf8] sm:$0xff] %v1977
          %2011 = vst [vmem:[%s1986 + $0x100] sm:$0xff] %v1978
          %2012 = vst [vmem:[%s1986 + $0x108] sm:$0xff] %v1979
          %2013 = vst [vmem:[%s1986 + $0x110] sm:$0xff] %v1980
          %2014 = vst [vmem:[%s1986 + $0x118] sm:$0xff] %v1981
          %2015 = vst [vmem:[%s1986 + $0x120] sm:$0xff] %v1982
          %2016 = vst [vmem:[%s1986 + $0x128] sm:$0xff] %v1983
          %2017 = vst [vmem:[%s1986 + $0x130] sm:$0xff] %v1984
          %2018 = vst [vmem:[%s1986 + $0x138] sm:$0xff] %v1985
          %v2019 = vrot.slane %v1643, 2
          %v2020 = vrot.slane %v1644, 2
          %v2021 = vrot.slane %v1645, 2
          %v2022 = vrot.slane %v1646, 2
          %v2023 = vrot.slane %v1647, 2
          %v2024 = vrot.slane %v1648, 2
          %v2025 = vrot.slane %v1649, 2
          %v2026 = vrot.slane %v1650, 2
          %v2027 = vrot.slane %v1651, 2
          %v2028 = vrot.slane %v1652, 2
          %v2029 = vrot.slane %v1653, 2
          %v2030 = vrot.slane %v1654, 2
          %v2031 = vrot.slane %v1655, 2
          %v2032 = vrot.slane %v1656, 2
          %v2033 = vrot.slane %v1657, 2
          %v2034 = vrot.slane %v1658, 2
          %v2035 = vrot.slane %v1659, 2
          %v2036 = vrot.slane %v1660, 2
          %v2037 = vrot.slane %v1661, 2
          %v2038 = vrot.slane %v1662, 2
          %v2039 = vrot.slane %v1663, 2
          %v2040 = vrot.slane %v1664, 2
          %v2041 = vrot.slane %v1665, 2
          %v2042 = vrot.slane %v1666, 2
          %v2043 = vrot.slane %v1667, 2
          %v2044 = vrot.slane %v1668, 2
          %v2045 = vrot.slane %v1669, 2
          %v2046 = vrot.slane %v1670, 2
          %v2047 = vrot.slane %v1671, 2
          %v2048 = vrot.slane %v1672, 2
          %v2049 = vrot.slane %v1673, 2
          %v2050 = vrot.slane %v1674, 2
          %v2051 = vadd.s32 %v1676, 2
          %vm2052 = vcmp.ge.s32.totalorder %v2051, 0
          %vm2053 = vcmp.lt.s32.totalorder %v2051, 8
          %vm2054 = vmand %vm2052, %vm2053
          %v2055 = vsel %vm2054, 1, 0
          %v2056 = vcvt.s32.f32 %v2055
          %v2057 = vmul.f32 %v2019, %v2056
          %v2058 = vmul.f32 %v2020, %v2056
          %v2059 = vmul.f32 %v2021, %v2056
          %v2060 = vmul.f32 %v2022, %v2056
          %v2061 = vmul.f32 %v2023, %v2056
          %v2062 = vmul.f32 %v2024, %v2056
          %v2063 = vmul.f32 %v2025, %v2056
          %v2064 = vmul.f32 %v2026, %v2056
          %v2065 = vmul.f32 %v2027, %v2056
          %v2066 = vmul.f32 %v2028, %v2056
          %v2067 = vmul.f32 %v2029, %v2056
          %v2068 = vmul.f32 %v2030, %v2056
          %v2069 = vmul.f32 %v2031, %v2056
          %v2070 = vmul.f32 %v2032, %v2056
          %v2071 = vmul.f32 %v2033, %v2056
          %v2072 = vmul.f32 %v2034, %v2056
          %v2073 = vmul.f32 %v2035, %v2056
          %v2074 = vmul.f32 %v2036, %v2056
          %v2075 = vmul.f32 %v2037, %v2056
          %v2076 = vmul.f32 %v2038, %v2056
          %v2077 = vmul.f32 %v2039, %v2056
          %v2078 = vmul.f32 %v2040, %v2056
          %v2079 = vmul.f32 %v2041, %v2056
          %v2080 = vmul.f32 %v2042, %v2056
          %v2081 = vmul.f32 %v2043, %v2056
          %v2082 = vmul.f32 %v2044, %v2056
          %v2083 = vmul.f32 %v2045, %v2056
          %v2084 = vmul.f32 %v2046, %v2056
          %v2085 = vmul.f32 %v2047, %v2056
          %v2086 = vmul.f32 %v2048, %v2056
          %v2087 = vmul.f32 %v2049, %v2056
          %v2088 = vmul.f32 %v2050, %v2056
          %s2089 = scalar_lea.vmem [#allocation2], 1568
          %2090 = vst [vmem:[%s2089] sm:$0xff] %v2057
          %2091 = vst [vmem:[%s2089 + $0x8] sm:$0xff] %v2058
          %2092 = vst [vmem:[%s2089 + $0x10] sm:$0xff] %v2059
          %2093 = vst [vmem:[%s2089 + $0x18] sm:$0xff] %v2060
          %2094 = vst [vmem:[%s2089 + $0x20] sm:$0xff] %v2061
          %2095 = vst [vmem:[%s2089 + $0x28] sm:$0xff] %v2062
          %2096 = vst [vmem:[%s2089 + $0x30] sm:$0xff] %v2063
          %2097 = vst [vmem:[%s2089 + $0x38] sm:$0xff] %v2064
          %2098 = vst [vmem:[%s2089 + $0x40] sm:$0xff] %v2065
          %2099 = vst [vmem:[%s2089 + $0x48] sm:$0xff] %v2066
          %2100 = vst [vmem:[%s2089 + $0x50] sm:$0xff] %v2067
          %2101 = vst [vmem:[%s2089 + $0x58] sm:$0xff] %v2068
          %2102 = vst [vmem:[%s2089 + $0x60] sm:$0xff] %v2069
          %2103 = vst [vmem:[%s2089 + $0x68] sm:$0xff] %v2070
          %2104 = vst [vmem:[%s2089 + $0x70] sm:$0xff] %v2071
          %2105 = vst [vmem:[%s2089 + $0x78] sm:$0xff] %v2072
          %2106 = vst [vmem:[%s2089 + $0xc0] sm:$0xff] %v2073
          %2107 = vst [vmem:[%s2089 + $0xc8] sm:$0xff] %v2074
          %2108 = vst [vmem:[%s2089 + $0xd0] sm:$0xff] %v2075
          %2109 = vst [vmem:[%s2089 + $0xd8] sm:$0xff] %v2076
          %2110 = vst [vmem:[%s2089 + $0xe0] sm:$0xff] %v2077
          %2111 = vst [vmem:[%s2089 + $0xe8] sm:$0xff] %v2078
          %2112 = vst [vmem:[%s2089 + $0xf0] sm:$0xff] %v2079
          %2113 = vst [vmem:[%s2089 + $0xf8] sm:$0xff] %v2080
          %2114 = vst [vmem:[%s2089 + $0x100] sm:$0xff] %v2081
          %2115 = vst [vmem:[%s2089 + $0x108] sm:$0xff] %v2082
          %2116 = vst [vmem:[%s2089 + $0x110] sm:$0xff] %v2083
          %2117 = vst [vmem:[%s2089 + $0x118] sm:$0xff] %v2084
          %2118 = vst [vmem:[%s2089 + $0x120] sm:$0xff] %v2085
          %2119 = vst [vmem:[%s2089 + $0x128] sm:$0xff] %v2086
          %2120 = vst [vmem:[%s2089 + $0x130] sm:$0xff] %v2087
          %2121 = vst [vmem:[%s2089 + $0x138] sm:$0xff] %v2088
        $region88: #{sequential_decision_tree_forward.1} parent=79 // pred_fallthru
          _
        %v2122 = vld [vmem:[%s795] ss:$8 sm:$0x3]
        %v2123 = vld [vmem:[#allocation2] sm:$0xff]
        %v2124 = vld [vmem:[#allocation2 + $0x8] sm:$0xff]
        %v2125 = vld [vmem:[#allocation2 + $0x10] sm:$0xff]
        %v2126 = vld [vmem:[#allocation2 + $0x18] sm:$0xff]
        %v2127 = vld [vmem:[#allocation2 + $0x20] sm:$0xff]
        %v2128 = vld [vmem:[#allocation2 + $0x28] sm:$0xff]
        %v2129 = vld [vmem:[#allocation2 + $0x30] sm:$0xff]
        %v2130 = vld [vmem:[#allocation2 + $0x38] sm:$0xff]
        %v2131 = vld [vmem:[#allocation2 + $0x40] sm:$0xff]
        %v2132 = vld [vmem:[#allocation2 + $0x48] sm:$0xff]
        %v2133 = vld [vmem:[#allocation2 + $0x50] sm:$0xff]
        %v2134 = vld [vmem:[#allocation2 + $0x58] sm:$0xff]
        %v2135 = vld [vmem:[#allocation2 + $0x60] sm:$0xff]
        %v2136 = vld [vmem:[#allocation2 + $0x68] sm:$0xff]
        %v2137 = vld [vmem:[#allocation2 + $0x70] sm:$0xff]
        %v2138 = vld [vmem:[#allocation2 + $0x78] sm:$0xff]
        %v2139 = vld [vmem:[#allocation2 + $0xc0] sm:$0xff]
        %v2140 = vld [vmem:[#allocation2 + $0xc8] sm:$0xff]
        %v2141 = vld [vmem:[#allocation2 + $0xd0] sm:$0xff]
        %v2142 = vld [vmem:[#allocation2 + $0xd8] sm:$0xff]
        %v2143 = vld [vmem:[#allocation2 + $0xe0] sm:$0xff]
        %v2144 = vld [vmem:[#allocation2 + $0xe8] sm:$0xff]
        %v2145 = vld [vmem:[#allocation2 + $0xf0] sm:$0xff]
        %v2146 = vld [vmem:[#allocation2 + $0xf8] sm:$0xff]
        %v2147 = vld [vmem:[#allocation2 + $0x100] sm:$0xff]
        %v2148 = vld [vmem:[#allocation2 + $0x108] sm:$0xff]
        %v2149 = vld [vmem:[#allocation2 + $0x110] sm:$0xff]
        %v2150 = vld [vmem:[#allocation2 + $0x118] sm:$0xff]
        %v2151 = vld [vmem:[#allocation2 + $0x120] sm:$0xff]
        %v2152 = vld [vmem:[#allocation2 + $0x128] sm:$0xff]
        %v2153 = vld [vmem:[#allocation2 + $0x130] sm:$0xff]
        %v2154 = vld [vmem:[#allocation2 + $0x138] sm:$0xff]
        %v2156 = vperm.slane %v2122, 0
        %v2157 = vperm.slane %v2122, 1
        %v2160 = vmul.f32 %v2123, %v2156
        %v2161 = vmul.f32 %v2124, %v2157
        %v2162 = vmul.f32 %v2125, %v2156
        %v2163 = vmul.f32 %v2126, %v2157
        %v2164 = vmul.f32 %v2127, %v2156
        %v2165 = vmul.f32 %v2128, %v2157
        %v2166 = vmul.f32 %v2129, %v2156
        %v2167 = vmul.f32 %v2130, %v2157
        %v2168 = vmul.f32 %v2131, %v2156
        %v2169 = vmul.f32 %v2132, %v2157
        %v2170 = vmul.f32 %v2133, %v2156
        %v2171 = vmul.f32 %v2134, %v2157
        %v2172 = vmul.f32 %v2135, %v2156
        %v2173 = vmul.f32 %v2136, %v2157
        %v2174 = vmul.f32 %v2137, %v2156
        %v2175 = vmul.f32 %v2138, %v2157
        %v2176 = vmul.f32 %v2139, %v2156
        %v2177 = vmul.f32 %v2140, %v2157
        %v2178 = vmul.f32 %v2141, %v2156
        %v2179 = vmul.f32 %v2142, %v2157
        %v2180 = vmul.f32 %v2143, %v2156
        %v2181 = vmul.f32 %v2144, %v2157
        %v2182 = vmul.f32 %v2145, %v2156
        %v2183 = vmul.f32 %v2146, %v2157
        %v2184 = vmul.f32 %v2147, %v2156
        %v2185 = vmul.f32 %v2148, %v2157
        %v2186 = vmul.f32 %v2149, %v2156
        %v2187 = vmul.f32 %v2150, %v2157
        %v2188 = vmul.f32 %v2151, %v2156
        %v2189 = vmul.f32 %v2152, %v2157
        %v2190 = vmul.f32 %v2153, %v2156
        %v2191 = vmul.f32 %v2154, %v2157
        %s2192 = scalar_lea.vmem %s795, 1
        %v2193 = vld [vmem:[%s2192] ss:$8 sm:$0x3]
        %s2194 = scalar_lea.vmem [#allocation2], 384
        %v2195 = vld [vmem:[%s2194] sm:$0xff]
        %v2196 = vld [vmem:[%s2194 + $0x8] sm:$0xff]
        %v2197 = vld [vmem:[%s2194 + $0x10] sm:$0xff]
        %v2198 = vld [vmem:[%s2194 + $0x18] sm:$0xff]
        %v2199 = vld [vmem:[%s2194 + $0x20] sm:$0xff]
        %v2200 = vld [vmem:[%s2194 + $0x28] sm:$0xff]
        %v2201 = vld [vmem:[%s2194 + $0x30] sm:$0xff]
        %v2202 = vld [vmem:[%s2194 + $0x38] sm:$0xff]
        %v2203 = vld [vmem:[%s2194 + $0x40] sm:$0xff]
        %v2204 = vld [vmem:[%s2194 + $0x48] sm:$0xff]
        %v2205 = vld [vmem:[%s2194 + $0x50] sm:$0xff]
        %v2206 = vld [vmem:[%s2194 + $0x58] sm:$0xff]
        %v2207 = vld [vmem:[%s2194 + $0x60] sm:$0xff]
        %v2208 = vld [vmem:[%s2194 + $0x68] sm:$0xff]
        %v2209 = vld [vmem:[%s2194 + $0x70] sm:$0xff]
        %v2210 = vld [vmem:[%s2194 + $0x78] sm:$0xff]
        %v2211 = vld [vmem:[%s2194 + $0xc0] sm:$0xff]
        %v2212 = vld [vmem:[%s2194 + $0xc8] sm:$0xff]
        %v2213 = vld [vmem:[%s2194 + $0xd0] sm:$0xff]
        %v2214 = vld [vmem:[%s2194 + $0xd8] sm:$0xff]
        %v2215 = vld [vmem:[%s2194 + $0xe0] sm:$0xff]
        %v2216 = vld [vmem:[%s2194 + $0xe8] sm:$0xff]
        %v2217 = vld [vmem:[%s2194 + $0xf0] sm:$0xff]
        %v2218 = vld [vmem:[%s2194 + $0xf8] sm:$0xff]
        %v2219 = vld [vmem:[%s2194 + $0x100] sm:$0xff]
        %v2220 = vld [vmem:[%s2194 + $0x108] sm:$0xff]
        %v2221 = vld [vmem:[%s2194 + $0x110] sm:$0xff]
        %v2222 = vld [vmem:[%s2194 + $0x118] sm:$0xff]
        %v2223 = vld [vmem:[%s2194 + $0x120] sm:$0xff]
        %v2224 = vld [vmem:[%s2194 + $0x128] sm:$0xff]
        %v2225 = vld [vmem:[%s2194 + $0x130] sm:$0xff]
        %v2226 = vld [vmem:[%s2194 + $0x138] sm:$0xff]
        %v2228 = vperm.slane %v2193, 0
        %v2229 = vperm.slane %v2193, 1
        %v2232 = vmul.f32 %v2195, %v2228
        %v2233 = vmul.f32 %v2196, %v2229
        %v2234 = vmul.f32 %v2197, %v2228
        %v2235 = vmul.f32 %v2198, %v2229
        %v2236 = vmul.f32 %v2199, %v2228
        %v2237 = vmul.f32 %v2200, %v2229
        %v2238 = vmul.f32 %v2201, %v2228
        %v2239 = vmul.f32 %v2202, %v2229
        %v2240 = vmul.f32 %v2203, %v2228
        %v2241 = vmul.f32 %v2204, %v2229
        %v2242 = vmul.f32 %v2205, %v2228
        %v2243 = vmul.f32 %v2206, %v2229
        %v2244 = vmul.f32 %v2207, %v2228
        %v2245 = vmul.f32 %v2208, %v2229
        %v2246 = vmul.f32 %v2209, %v2228
        %v2247 = vmul.f32 %v2210, %v2229
        %v2248 = vmul.f32 %v2211, %v2228
        %v2249 = vmul.f32 %v2212, %v2229
        %v2250 = vmul.f32 %v2213, %v2228
        %v2251 = vmul.f32 %v2214, %v2229
        %v2252 = vmul.f32 %v2215, %v2228
        %v2253 = vmul.f32 %v2216, %v2229
        %v2254 = vmul.f32 %v2217, %v2228
        %v2255 = vmul.f32 %v2218, %v2229
        %v2256 = vmul.f32 %v2219, %v2228
        %v2257 = vmul.f32 %v2220, %v2229
        %v2258 = vmul.f32 %v2221, %v2228
        %v2259 = vmul.f32 %v2222, %v2229
        %v2260 = vmul.f32 %v2223, %v2228
        %v2261 = vmul.f32 %v2224, %v2229
        %v2262 = vmul.f32 %v2225, %v2228
        %v2263 = vmul.f32 %v2226, %v2229
        %v2264 = vadd.f32 %v2160, %v2232
        %v2265 = vadd.f32 %v2161, %v2233
        %v2266 = vadd.f32 %v2162, %v2234
        %v2267 = vadd.f32 %v2163, %v2235
        %v2268 = vadd.f32 %v2164, %v2236
        %v2269 = vadd.f32 %v2165, %v2237
        %v2270 = vadd.f32 %v2166, %v2238
        %v2271 = vadd.f32 %v2167, %v2239
        %v2272 = vadd.f32 %v2168, %v2240
        %v2273 = vadd.f32 %v2169, %v2241
        %v2274 = vadd.f32 %v2170, %v2242
        %v2275 = vadd.f32 %v2171, %v2243
        %v2276 = vadd.f32 %v2172, %v2244
        %v2277 = vadd.f32 %v2173, %v2245
        %v2278 = vadd.f32 %v2174, %v2246
        %v2279 = vadd.f32 %v2175, %v2247
        %v2280 = vadd.f32 %v2176, %v2248
        %v2281 = vadd.f32 %v2177, %v2249
        %v2282 = vadd.f32 %v2178, %v2250
        %v2283 = vadd.f32 %v2179, %v2251
        %v2284 = vadd.f32 %v2180, %v2252
        %v2285 = vadd.f32 %v2181, %v2253
        %v2286 = vadd.f32 %v2182, %v2254
        %v2287 = vadd.f32 %v2183, %v2255
        %v2288 = vadd.f32 %v2184, %v2256
        %v2289 = vadd.f32 %v2185, %v2257
        %v2290 = vadd.f32 %v2186, %v2258
        %v2291 = vadd.f32 %v2187, %v2259
        %v2292 = vadd.f32 %v2188, %v2260
        %v2293 = vadd.f32 %v2189, %v2261
        %v2294 = vadd.f32 %v2190, %v2262
        %v2295 = vadd.f32 %v2191, %v2263
        %s2296 = scalar_lea.vmem %s795, 2
        %v2297 = vld [vmem:[%s2296] ss:$8 sm:$0x3]
        %s2298 = scalar_lea.vmem [#allocation2], 768
        %v2299 = vld [vmem:[%s2298] sm:$0xff]
        %v2300 = vld [vmem:[%s2298 + $0x8] sm:$0xff]
        %v2301 = vld [vmem:[%s2298 + $0x10] sm:$0xff]
        %v2302 = vld [vmem:[%s2298 + $0x18] sm:$0xff]
        %v2303 = vld [vmem:[%s2298 + $0x20] sm:$0xff]
        %v2304 = vld [vmem:[%s2298 + $0x28] sm:$0xff]
        %v2305 = vld [vmem:[%s2298 + $0x30] sm:$0xff]
        %v2306 = vld [vmem:[%s2298 + $0x38] sm:$0xff]
        %v2307 = vld [vmem:[%s2298 + $0x40] sm:$0xff]
        %v2308 = vld [vmem:[%s2298 + $0x48] sm:$0xff]
        %v2309 = vld [vmem:[%s2298 + $0x50] sm:$0xff]
        %v2310 = vld [vmem:[%s2298 + $0x58] sm:$0xff]
        %v2311 = vld [vmem:[%s2298 + $0x60] sm:$0xff]
        %v2312 = vld [vmem:[%s2298 + $0x68] sm:$0xff]
        %v2313 = vld [vmem:[%s2298 + $0x70] sm:$0xff]
        %v2314 = vld [vmem:[%s2298 + $0x78] sm:$0xff]
        %v2315 = vld [vmem:[%s2298 + $0xc0] sm:$0xff]
        %v2316 = vld [vmem:[%s2298 + $0xc8] sm:$0xff]
        %v2317 = vld [vmem:[%s2298 + $0xd0] sm:$0xff]
        %v2318 = vld [vmem:[%s2298 + $0xd8] sm:$0xff]
        %v2319 = vld [vmem:[%s2298 + $0xe0] sm:$0xff]
        %v2320 = vld [vmem:[%s2298 + $0xe8] sm:$0xff]
        %v2321 = vld [vmem:[%s2298 + $0xf0] sm:$0xff]
        %v2322 = vld [vmem:[%s2298 + $0xf8] sm:$0xff]
        %v2323 = vld [vmem:[%s2298 + $0x100] sm:$0xff]
        %v2324 = vld [vmem:[%s2298 + $0x108] sm:$0xff]
        %v2325 = vld [vmem:[%s2298 + $0x110] sm:$0xff]
        %v2326 = vld [vmem:[%s2298 + $0x118] sm:$0xff]
        %v2327 = vld [vmem:[%s2298 + $0x120] sm:$0xff]
        %v2328 = vld [vmem:[%s2298 + $0x128] sm:$0xff]
        %v2329 = vld [vmem:[%s2298 + $0x130] sm:$0xff]
        %v2330 = vld [vmem:[%s2298 + $0x138] sm:$0xff]
        %v2332 = vperm.slane %v2297, 0
        %v2333 = vperm.slane %v2297, 1
        %v2336 = vmul.f32 %v2299, %v2332
        %v2337 = vmul.f32 %v2300, %v2333
        %v2338 = vmul.f32 %v2301, %v2332
        %v2339 = vmul.f32 %v2302, %v2333
        %v2340 = vmul.f32 %v2303, %v2332
        %v2341 = vmul.f32 %v2304, %v2333
        %v2342 = vmul.f32 %v2305, %v2332
        %v2343 = vmul.f32 %v2306, %v2333
        %v2344 = vmul.f32 %v2307, %v2332
        %v2345 = vmul.f32 %v2308, %v2333
        %v2346 = vmul.f32 %v2309, %v2332
        %v2347 = vmul.f32 %v2310, %v2333
        %v2348 = vmul.f32 %v2311, %v2332
        %v2349 = vmul.f32 %v2312, %v2333
        %v2350 = vmul.f32 %v2313, %v2332
        %v2351 = vmul.f32 %v2314, %v2333
        %v2352 = vmul.f32 %v2315, %v2332
        %v2353 = vmul.f32 %v2316, %v2333
        %v2354 = vmul.f32 %v2317, %v2332
        %v2355 = vmul.f32 %v2318, %v2333
        %v2356 = vmul.f32 %v2319, %v2332
        %v2357 = vmul.f32 %v2320, %v2333
        %v2358 = vmul.f32 %v2321, %v2332
        %v2359 = vmul.f32 %v2322, %v2333
        %v2360 = vmul.f32 %v2323, %v2332
        %v2361 = vmul.f32 %v2324, %v2333
        %v2362 = vmul.f32 %v2325, %v2332
        %v2363 = vmul.f32 %v2326, %v2333
        %v2364 = vmul.f32 %v2327, %v2332
        %v2365 = vmul.f32 %v2328, %v2333
        %v2366 = vmul.f32 %v2329, %v2332
        %v2367 = vmul.f32 %v2330, %v2333
        %v2368 = vadd.f32 %v2264, %v2336
        %v2369 = vadd.f32 %v2265, %v2337
        %v2370 = vadd.f32 %v2266, %v2338
        %v2371 = vadd.f32 %v2267, %v2339
        %v2372 = vadd.f32 %v2268, %v2340
        %v2373 = vadd.f32 %v2269, %v2341
        %v2374 = vadd.f32 %v2270, %v2342
        %v2375 = vadd.f32 %v2271, %v2343
        %v2376 = vadd.f32 %v2272, %v2344
        %v2377 = vadd.f32 %v2273, %v2345
        %v2378 = vadd.f32 %v2274, %v2346
        %v2379 = vadd.f32 %v2275, %v2347
        %v2380 = vadd.f32 %v2276, %v2348
        %v2381 = vadd.f32 %v2277, %v2349
        %v2382 = vadd.f32 %v2278, %v2350
        %v2383 = vadd.f32 %v2279, %v2351
        %v2384 = vadd.f32 %v2280, %v2352
        %v2385 = vadd.f32 %v2281, %v2353
        %v2386 = vadd.f32 %v2282, %v2354
        %v2387 = vadd.f32 %v2283, %v2355
        %v2388 = vadd.f32 %v2284, %v2356
        %v2389 = vadd.f32 %v2285, %v2357
        %v2390 = vadd.f32 %v2286, %v2358
        %v2391 = vadd.f32 %v2287, %v2359
        %v2392 = vadd.f32 %v2288, %v2360
        %v2393 = vadd.f32 %v2289, %v2361
        %v2394 = vadd.f32 %v2290, %v2362
        %v2395 = vadd.f32 %v2291, %v2363
        %v2396 = vadd.f32 %v2292, %v2364
        %v2397 = vadd.f32 %v2293, %v2365
        %v2398 = vadd.f32 %v2294, %v2366
        %v2399 = vadd.f32 %v2295, %v2367
        %s2400 = scalar_lea.vmem %s795, 3
        %v2401 = vld [vmem:[%s2400] ss:$8 sm:$0x3]
        %s2402 = scalar_lea.vmem [#allocation2], 1152
        %v2403 = vld [vmem:[%s2402] sm:$0xff]
        %v2404 = vld [vmem:[%s2402 + $0x8] sm:$0xff]
        %v2405 = vld [vmem:[%s2402 + $0x10] sm:$0xff]
        %v2406 = vld [vmem:[%s2402 + $0x18] sm:$0xff]
        %v2407 = vld [vmem:[%s2402 + $0x20] sm:$0xff]
        %v2408 = vld [vmem:[%s2402 + $0x28] sm:$0xff]
        %v2409 = vld [vmem:[%s2402 + $0x30] sm:$0xff]
        %v2410 = vld [vmem:[%s2402 + $0x38] sm:$0xff]
        %v2411 = vld [vmem:[%s2402 + $0x40] sm:$0xff]
        %v2412 = vld [vmem:[%s2402 + $0x48] sm:$0xff]
        %v2413 = vld [vmem:[%s2402 + $0x50] sm:$0xff]
        %v2414 = vld [vmem:[%s2402 + $0x58] sm:$0xff]
        %v2415 = vld [vmem:[%s2402 + $0x60] sm:$0xff]
        %v2416 = vld [vmem:[%s2402 + $0x68] sm:$0xff]
        %v2417 = vld [vmem:[%s2402 + $0x70] sm:$0xff]
        %v2418 = vld [vmem:[%s2402 + $0x78] sm:$0xff]
        %v2419 = vld [vmem:[%s2402 + $0xc0] sm:$0xff]
        %v2420 = vld [vmem:[%s2402 + $0xc8] sm:$0xff]
        %v2421 = vld [vmem:[%s2402 + $0xd0] sm:$0xff]
        %v2422 = vld [vmem:[%s2402 + $0xd8] sm:$0xff]
        %v2423 = vld [vmem:[%s2402 + $0xe0] sm:$0xff]
        %v2424 = vld [vmem:[%s2402 + $0xe8] sm:$0xff]
        %v2425 = vld [vmem:[%s2402 + $0xf0] sm:$0xff]
        %v2426 = vld [vmem:[%s2402 + $0xf8] sm:$0xff]
        %v2427 = vld [vmem:[%s2402 + $0x100] sm:$0xff]
        %v2428 = vld [vmem:[%s2402 + $0x108] sm:$0xff]
        %v2429 = vld [vmem:[%s2402 + $0x110] sm:$0xff]
        %v2430 = vld [vmem:[%s2402 + $0x118] sm:$0xff]
        %v2431 = vld [vmem:[%s2402 + $0x120] sm:$0xff]
        %v2432 = vld [vmem:[%s2402 + $0x128] sm:$0xff]
        %v2433 = vld [vmem:[%s2402 + $0x130] sm:$0xff]
        %v2434 = vld [vmem:[%s2402 + $0x138] sm:$0xff]
        %v2436 = vperm.slane %v2401, 0
        %v2437 = vperm.slane %v2401, 1
        %v2440 = vmul.f32 %v2403, %v2436
        %v2441 = vmul.f32 %v2404, %v2437
        %v2442 = vmul.f32 %v2405, %v2436
        %v2443 = vmul.f32 %v2406, %v2437
        %v2444 = vmul.f32 %v2407, %v2436
        %v2445 = vmul.f32 %v2408, %v2437
        %v2446 = vmul.f32 %v2409, %v2436
        %v2447 = vmul.f32 %v2410, %v2437
        %v2448 = vmul.f32 %v2411, %v2436
        %v2449 = vmul.f32 %v2412, %v2437
        %v2450 = vmul.f32 %v2413, %v2436
        %v2451 = vmul.f32 %v2414, %v2437
        %v2452 = vmul.f32 %v2415, %v2436
        %v2453 = vmul.f32 %v2416, %v2437
        %v2454 = vmul.f32 %v2417, %v2436
        %v2455 = vmul.f32 %v2418, %v2437
        %v2456 = vmul.f32 %v2419, %v2436
        %v2457 = vmul.f32 %v2420, %v2437
        %v2458 = vmul.f32 %v2421, %v2436
        %v2459 = vmul.f32 %v2422, %v2437
        %v2460 = vmul.f32 %v2423, %v2436
        %v2461 = vmul.f32 %v2424, %v2437
        %v2462 = vmul.f32 %v2425, %v2436
        %v2463 = vmul.f32 %v2426, %v2437
        %v2464 = vmul.f32 %v2427, %v2436
        %v2465 = vmul.f32 %v2428, %v2437
        %v2466 = vmul.f32 %v2429, %v2436
        %v2467 = vmul.f32 %v2430, %v2437
        %v2468 = vmul.f32 %v2431, %v2436
        %v2469 = vmul.f32 %v2432, %v2437
        %v2470 = vmul.f32 %v2433, %v2436
        %v2471 = vmul.f32 %v2434, %v2437
        %v2472 = vadd.f32 %v2368, %v2440
        %v2473 = vadd.f32 %v2369, %v2441
        %v2474 = vadd.f32 %v2370, %v2442
        %v2475 = vadd.f32 %v2371, %v2443
        %v2476 = vadd.f32 %v2372, %v2444
        %v2477 = vadd.f32 %v2373, %v2445
        %v2478 = vadd.f32 %v2374, %v2446
        %v2479 = vadd.f32 %v2375, %v2447
        %v2480 = vadd.f32 %v2376, %v2448
        %v2481 = vadd.f32 %v2377, %v2449
        %v2482 = vadd.f32 %v2378, %v2450
        %v2483 = vadd.f32 %v2379, %v2451
        %v2484 = vadd.f32 %v2380, %v2452
        %v2485 = vadd.f32 %v2381, %v2453
        %v2486 = vadd.f32 %v2382, %v2454
        %v2487 = vadd.f32 %v2383, %v2455
        %v2488 = vadd.f32 %v2384, %v2456
        %v2489 = vadd.f32 %v2385, %v2457
        %v2490 = vadd.f32 %v2386, %v2458
        %v2491 = vadd.f32 %v2387, %v2459
        %v2492 = vadd.f32 %v2388, %v2460
        %v2493 = vadd.f32 %v2389, %v2461
        %v2494 = vadd.f32 %v2390, %v2462
        %v2495 = vadd.f32 %v2391, %v2463
        %v2496 = vadd.f32 %v2392, %v2464
        %v2497 = vadd.f32 %v2393, %v2465
        %v2498 = vadd.f32 %v2394, %v2466
        %v2499 = vadd.f32 %v2395, %v2467
        %v2500 = vadd.f32 %v2396, %v2468
        %v2501 = vadd.f32 %v2397, %v2469
        %v2502 = vadd.f32 %v2398, %v2470
        %v2503 = vadd.f32 %v2399, %v2471
        %s2504 = scalar_lea.vmem %s795, 4
        %v2505 = vld [vmem:[%s2504] ss:$8 sm:$0x3]
        %s2506 = scalar_lea.vmem [#allocation2], 1536
        %v2507 = vld [vmem:[%s2506] sm:$0xff]
        %v2508 = vld [vmem:[%s2506 + $0x8] sm:$0xff]
        %v2509 = vld [vmem:[%s2506 + $0x10] sm:$0xff]
        %v2510 = vld [vmem:[%s2506 + $0x18] sm:$0xff]
        %v2511 = vld [vmem:[%s2506 + $0x20] sm:$0xff]
        %v2512 = vld [vmem:[%s2506 + $0x28] sm:$0xff]
        %v2513 = vld [vmem:[%s2506 + $0x30] sm:$0xff]
        %v2514 = vld [vmem:[%s2506 + $0x38] sm:$0xff]
        %v2515 = vld [vmem:[%s2506 + $0x40] sm:$0xff]
        %v2516 = vld [vmem:[%s2506 + $0x48] sm:$0xff]
        %v2517 = vld [vmem:[%s2506 + $0x50] sm:$0xff]
        %v2518 = vld [vmem:[%s2506 + $0x58] sm:$0xff]
        %v2519 = vld [vmem:[%s2506 + $0x60] sm:$0xff]
        %v2520 = vld [vmem:[%s2506 + $0x68] sm:$0xff]
        %v2521 = vld [vmem:[%s2506 + $0x70] sm:$0xff]
        %v2522 = vld [vmem:[%s2506 + $0x78] sm:$0xff]
        %v2523 = vld [vmem:[%s2506 + $0xc0] sm:$0xff]
        %v2524 = vld [vmem:[%s2506 + $0xc8] sm:$0xff]
        %v2525 = vld [vmem:[%s2506 + $0xd0] sm:$0xff]
        %v2526 = vld [vmem:[%s2506 + $0xd8] sm:$0xff]
        %v2527 = vld [vmem:[%s2506 + $0xe0] sm:$0xff]
        %v2528 = vld [vmem:[%s2506 + $0xe8] sm:$0xff]
        %v2529 = vld [vmem:[%s2506 + $0xf0] sm:$0xff]
        %v2530 = vld [vmem:[%s2506 + $0xf8] sm:$0xff]
        %v2531 = vld [vmem:[%s2506 + $0x100] sm:$0xff]
        %v2532 = vld [vmem:[%s2506 + $0x108] sm:$0xff]
        %v2533 = vld [vmem:[%s2506 + $0x110] sm:$0xff]
        %v2534 = vld [vmem:[%s2506 + $0x118] sm:$0xff]
        %v2535 = vld [vmem:[%s2506 + $0x120] sm:$0xff]
        %v2536 = vld [vmem:[%s2506 + $0x128] sm:$0xff]
        %v2537 = vld [vmem:[%s2506 + $0x130] sm:$0xff]
        %v2538 = vld [vmem:[%s2506 + $0x138] sm:$0xff]
        %v2540 = vperm.slane %v2505, 0
        %v2541 = vperm.slane %v2505, 1
        %v2544 = vmul.f32 %v2507, %v2540
        %v2545 = vmul.f32 %v2508, %v2541
        %v2546 = vmul.f32 %v2509, %v2540
        %v2547 = vmul.f32 %v2510, %v2541
        %v2548 = vmul.f32 %v2511, %v2540
        %v2549 = vmul.f32 %v2512, %v2541
        %v2550 = vmul.f32 %v2513, %v2540
        %v2551 = vmul.f32 %v2514, %v2541
        %v2552 = vmul.f32 %v2515, %v2540
        %v2553 = vmul.f32 %v2516, %v2541
        %v2554 = vmul.f32 %v2517, %v2540
        %v2555 = vmul.f32 %v2518, %v2541
        %v2556 = vmul.f32 %v2519, %v2540
        %v2557 = vmul.f32 %v2520, %v2541
        %v2558 = vmul.f32 %v2521, %v2540
        %v2559 = vmul.f32 %v2522, %v2541
        %v2560 = vmul.f32 %v2523, %v2540
        %v2561 = vmul.f32 %v2524, %v2541
        %v2562 = vmul.f32 %v2525, %v2540
        %v2563 = vmul.f32 %v2526, %v2541
        %v2564 = vmul.f32 %v2527, %v2540
        %v2565 = vmul.f32 %v2528, %v2541
        %v2566 = vmul.f32 %v2529, %v2540
        %v2567 = vmul.f32 %v2530, %v2541
        %v2568 = vmul.f32 %v2531, %v2540
        %v2569 = vmul.f32 %v2532, %v2541
        %v2570 = vmul.f32 %v2533, %v2540
        %v2571 = vmul.f32 %v2534, %v2541
        %v2572 = vmul.f32 %v2535, %v2540
        %v2573 = vmul.f32 %v2536, %v2541
        %v2574 = vmul.f32 %v2537, %v2540
        %v2575 = vmul.f32 %v2538, %v2541
        %v2576 = vadd.f32 %v2472, %v2544
        %v2577 = vadd.f32 %v2473, %v2545
        %v2578 = vadd.f32 %v2474, %v2546
        %v2579 = vadd.f32 %v2475, %v2547
        %v2580 = vadd.f32 %v2476, %v2548
        %v2581 = vadd.f32 %v2477, %v2549
        %v2582 = vadd.f32 %v2478, %v2550
        %v2583 = vadd.f32 %v2479, %v2551
        %v2584 = vadd.f32 %v2480, %v2552
        %v2585 = vadd.f32 %v2481, %v2553
        %v2586 = vadd.f32 %v2482, %v2554
        %v2587 = vadd.f32 %v2483, %v2555
        %v2588 = vadd.f32 %v2484, %v2556
        %v2589 = vadd.f32 %v2485, %v2557
        %v2590 = vadd.f32 %v2486, %v2558
        %v2591 = vadd.f32 %v2487, %v2559
        %v2592 = vadd.f32 %v2488, %v2560
        %v2593 = vadd.f32 %v2489, %v2561
        %v2594 = vadd.f32 %v2490, %v2562
        %v2595 = vadd.f32 %v2491, %v2563
        %v2596 = vadd.f32 %v2492, %v2564
        %v2597 = vadd.f32 %v2493, %v2565
        %v2598 = vadd.f32 %v2494, %v2566
        %v2599 = vadd.f32 %v2495, %v2567
        %v2600 = vadd.f32 %v2496, %v2568
        %v2601 = vadd.f32 %v2497, %v2569
        %v2602 = vadd.f32 %v2498, %v2570
        %v2603 = vadd.f32 %v2499, %v2571
        %v2604 = vadd.f32 %v2500, %v2572
        %v2605 = vadd.f32 %v2501, %v2573
        %v2606 = vadd.f32 %v2502, %v2574
        %v2607 = vadd.f32 %v2503, %v2575
        %s2608 = scalar_lea.vmem %s795, 16
        %v2609 = vld [vmem:[%s2608] ss:$8 sm:$0x3]
        %s2610 = scalar_lea.vmem [#allocation2], 16
        %v2611 = vld [vmem:[%s2610] sm:$0xff]
        %v2612 = vld [vmem:[%s2610 + $0x8] sm:$0xff]
        %v2613 = vld [vmem:[%s2610 + $0x10] sm:$0xff]
        %v2614 = vld [vmem:[%s2610 + $0x18] sm:$0xff]
        %v2615 = vld [vmem:[%s2610 + $0x20] sm:$0xff]
        %v2616 = vld [vmem:[%s2610 + $0x28] sm:$0xff]
        %v2617 = vld [vmem:[%s2610 + $0x30] sm:$0xff]
        %v2618 = vld [vmem:[%s2610 + $0x38] sm:$0xff]
        %v2619 = vld [vmem:[%s2610 + $0x40] sm:$0xff]
        %v2620 = vld [vmem:[%s2610 + $0x48] sm:$0xff]
        %v2621 = vld [vmem:[%s2610 + $0x50] sm:$0xff]
        %v2622 = vld [vmem:[%s2610 + $0x58] sm:$0xff]
        %v2623 = vld [vmem:[%s2610 + $0x60] sm:$0xff]
        %v2624 = vld [vmem:[%s2610 + $0x68] sm:$0xff]
        %v2625 = vld [vmem:[%s2610 + $0x70] sm:$0xff]
        %v2626 = vld [vmem:[%s2610 + $0x78] sm:$0xff]
        %v2627 = vld [vmem:[%s2610 + $0xc0] sm:$0xff]
        %v2628 = vld [vmem:[%s2610 + $0xc8] sm:$0xff]
        %v2629 = vld [vmem:[%s2610 + $0xd0] sm:$0xff]
        %v2630 = vld [vmem:[%s2610 + $0xd8] sm:$0xff]
        %v2631 = vld [vmem:[%s2610 + $0xe0] sm:$0xff]
        %v2632 = vld [vmem:[%s2610 + $0xe8] sm:$0xff]
        %v2633 = vld [vmem:[%s2610 + $0xf0] sm:$0xff]
        %v2634 = vld [vmem:[%s2610 + $0xf8] sm:$0xff]
        %v2635 = vld [vmem:[%s2610 + $0x100] sm:$0xff]
        %v2636 = vld [vmem:[%s2610 + $0x108] sm:$0xff]
        %v2637 = vld [vmem:[%s2610 + $0x110] sm:$0xff]
        %v2638 = vld [vmem:[%s2610 + $0x118] sm:$0xff]
        %v2639 = vld [vmem:[%s2610 + $0x120] sm:$0xff]
        %v2640 = vld [vmem:[%s2610 + $0x128] sm:$0xff]
        %v2641 = vld [vmem:[%s2610 + $0x130] sm:$0xff]
        %v2642 = vld [vmem:[%s2610 + $0x138] sm:$0xff]
        %v2644 = vperm.slane %v2609, 0
        %v2645 = vperm.slane %v2609, 1
        %v2648 = vmul.f32 %v2611, %v2644
        %v2649 = vmul.f32 %v2612, %v2645
        %v2650 = vmul.f32 %v2613, %v2644
        %v2651 = vmul.f32 %v2614, %v2645
        %v2652 = vmul.f32 %v2615, %v2644
        %v2653 = vmul.f32 %v2616, %v2645
        %v2654 = vmul.f32 %v2617, %v2644
        %v2655 = vmul.f32 %v2618, %v2645
        %v2656 = vmul.f32 %v2619, %v2644
        %v2657 = vmul.f32 %v2620, %v2645
        %v2658 = vmul.f32 %v2621, %v2644
        %v2659 = vmul.f32 %v2622, %v2645
        %v2660 = vmul.f32 %v2623, %v2644
        %v2661 = vmul.f32 %v2624, %v2645
        %v2662 = vmul.f32 %v2625, %v2644
        %v2663 = vmul.f32 %v2626, %v2645
        %v2664 = vmul.f32 %v2627, %v2644
        %v2665 = vmul.f32 %v2628, %v2645
        %v2666 = vmul.f32 %v2629, %v2644
        %v2667 = vmul.f32 %v2630, %v2645
        %v2668 = vmul.f32 %v2631, %v2644
        %v2669 = vmul.f32 %v2632, %v2645
        %v2670 = vmul.f32 %v2633, %v2644
        %v2671 = vmul.f32 %v2634, %v2645
        %v2672 = vmul.f32 %v2635, %v2644
        %v2673 = vmul.f32 %v2636, %v2645
        %v2674 = vmul.f32 %v2637, %v2644
        %v2675 = vmul.f32 %v2638, %v2645
        %v2676 = vmul.f32 %v2639, %v2644
        %v2677 = vmul.f32 %v2640, %v2645
        %v2678 = vmul.f32 %v2641, %v2644
        %v2679 = vmul.f32 %v2642, %v2645
        %v2680 = vadd.f32 %v2576, %v2648
        %v2681 = vadd.f32 %v2577, %v2649
        %v2682 = vadd.f32 %v2578, %v2650
        %v2683 = vadd.f32 %v2579, %v2651
        %v2684 = vadd.f32 %v2580, %v2652
        %v2685 = vadd.f32 %v2581, %v2653
        %v2686 = vadd.f32 %v2582, %v2654
        %v2687 = vadd.f32 %v2583, %v2655
        %v2688 = vadd.f32 %v2584, %v2656
        %v2689 = vadd.f32 %v2585, %v2657
        %v2690 = vadd.f32 %v2586, %v2658
        %v2691 = vadd.f32 %v2587, %v2659
        %v2692 = vadd.f32 %v2588, %v2660
        %v2693 = vadd.f32 %v2589, %v2661
        %v2694 = vadd.f32 %v2590, %v2662
        %v2695 = vadd.f32 %v2591, %v2663
        %v2696 = vadd.f32 %v2592, %v2664
        %v2697 = vadd.f32 %v2593, %v2665
        %v2698 = vadd.f32 %v2594, %v2666
        %v2699 = vadd.f32 %v2595, %v2667
        %v2700 = vadd.f32 %v2596, %v2668
        %v2701 = vadd.f32 %v2597, %v2669
        %v2702 = vadd.f32 %v2598, %v2670
        %v2703 = vadd.f32 %v2599, %v2671
        %v2704 = vadd.f32 %v2600, %v2672
        %v2705 = vadd.f32 %v2601, %v2673
        %v2706 = vadd.f32 %v2602, %v2674
        %v2707 = vadd.f32 %v2603, %v2675
        %v2708 = vadd.f32 %v2604, %v2676
        %v2709 = vadd.f32 %v2605, %v2677
        %v2710 = vadd.f32 %v2606, %v2678
        %v2711 = vadd.f32 %v2607, %v2679
        %s2712 = scalar_lea.vmem %s2608, 1
        %v2713 = vld [vmem:[%s2712] ss:$8 sm:$0x3]
        %s2714 = scalar_lea.vmem [#allocation2], 400
        %v2715 = vld [vmem:[%s2714] sm:$0xff]
        %v2716 = vld [vmem:[%s2714 + $0x8] sm:$0xff]
        %v2717 = vld [vmem:[%s2714 + $0x10] sm:$0xff]
        %v2718 = vld [vmem:[%s2714 + $0x18] sm:$0xff]
        %v2719 = vld [vmem:[%s2714 + $0x20] sm:$0xff]
        %v2720 = vld [vmem:[%s2714 + $0x28] sm:$0xff]
        %v2721 = vld [vmem:[%s2714 + $0x30] sm:$0xff]
        %v2722 = vld [vmem:[%s2714 + $0x38] sm:$0xff]
        %v2723 = vld [vmem:[%s2714 + $0x40] sm:$0xff]
        %v2724 = vld [vmem:[%s2714 + $0x48] sm:$0xff]
        %v2725 = vld [vmem:[%s2714 + $0x50] sm:$0xff]
        %v2726 = vld [vmem:[%s2714 + $0x58] sm:$0xff]
        %v2727 = vld [vmem:[%s2714 + $0x60] sm:$0xff]
        %v2728 = vld [vmem:[%s2714 + $0x68] sm:$0xff]
        %v2729 = vld [vmem:[%s2714 + $0x70] sm:$0xff]
        %v2730 = vld [vmem:[%s2714 + $0x78] sm:$0xff]
        %v2731 = vld [vmem:[%s2714 + $0xc0] sm:$0xff]
        %v2732 = vld [vmem:[%s2714 + $0xc8] sm:$0xff]
        %v2733 = vld [vmem:[%s2714 + $0xd0] sm:$0xff]
        %v2734 = vld [vmem:[%s2714 + $0xd8] sm:$0xff]
        %v2735 = vld [vmem:[%s2714 + $0xe0] sm:$0xff]
        %v2736 = vld [vmem:[%s2714 + $0xe8] sm:$0xff]
        %v2737 = vld [vmem:[%s2714 + $0xf0] sm:$0xff]
        %v2738 = vld [vmem:[%s2714 + $0xf8] sm:$0xff]
        %v2739 = vld [vmem:[%s2714 + $0x100] sm:$0xff]
        %v2740 = vld [vmem:[%s2714 + $0x108] sm:$0xff]
        %v2741 = vld [vmem:[%s2714 + $0x110] sm:$0xff]
        %v2742 = vld [vmem:[%s2714 + $0x118] sm:$0xff]
        %v2743 = vld [vmem:[%s2714 + $0x120] sm:$0xff]
        %v2744 = vld [vmem:[%s2714 + $0x128] sm:$0xff]
        %v2745 = vld [vmem:[%s2714 + $0x130] sm:$0xff]
        %v2746 = vld [vmem:[%s2714 + $0x138] sm:$0xff]
        %v2748 = vperm.slane %v2713, 0
        %v2749 = vperm.slane %v2713, 1
        %v2752 = vmul.f32 %v2715, %v2748
        %v2753 = vmul.f32 %v2716, %v2749
        %v2754 = vmul.f32 %v2717, %v2748
        %v2755 = vmul.f32 %v2718, %v2749
        %v2756 = vmul.f32 %v2719, %v2748
        %v2757 = vmul.f32 %v2720, %v2749
        %v2758 = vmul.f32 %v2721, %v2748
        %v2759 = vmul.f32 %v2722, %v2749
        %v2760 = vmul.f32 %v2723, %v2748
        %v2761 = vmul.f32 %v2724, %v2749
        %v2762 = vmul.f32 %v2725, %v2748
        %v2763 = vmul.f32 %v2726, %v2749
        %v2764 = vmul.f32 %v2727, %v2748
        %v2765 = vmul.f32 %v2728, %v2749
        %v2766 = vmul.f32 %v2729, %v2748
        %v2767 = vmul.f32 %v2730, %v2749
        %v2768 = vmul.f32 %v2731, %v2748
        %v2769 = vmul.f32 %v2732, %v2749
        %v2770 = vmul.f32 %v2733, %v2748
        %v2771 = vmul.f32 %v2734, %v2749
        %v2772 = vmul.f32 %v2735, %v2748
        %v2773 = vmul.f32 %v2736, %v2749
        %v2774 = vmul.f32 %v2737, %v2748
        %v2775 = vmul.f32 %v2738, %v2749
        %v2776 = vmul.f32 %v2739, %v2748
        %v2777 = vmul.f32 %v2740, %v2749
        %v2778 = vmul.f32 %v2741, %v2748
        %v2779 = vmul.f32 %v2742, %v2749
        %v2780 = vmul.f32 %v2743, %v2748
        %v2781 = vmul.f32 %v2744, %v2749
        %v2782 = vmul.f32 %v2745, %v2748
        %v2783 = vmul.f32 %v2746, %v2749
        %v2784 = vadd.f32 %v2680, %v2752
        %v2785 = vadd.f32 %v2681, %v2753
        %v2786 = vadd.f32 %v2682, %v2754
        %v2787 = vadd.f32 %v2683, %v2755
        %v2788 = vadd.f32 %v2684, %v2756
        %v2789 = vadd.f32 %v2685, %v2757
        %v2790 = vadd.f32 %v2686, %v2758
        %v2791 = vadd.f32 %v2687, %v2759
        %v2792 = vadd.f32 %v2688, %v2760
        %v2793 = vadd.f32 %v2689, %v2761
        %v2794 = vadd.f32 %v2690, %v2762
        %v2795 = vadd.f32 %v2691, %v2763
        %v2796 = vadd.f32 %v2692, %v2764
        %v2797 = vadd.f32 %v2693, %v2765
        %v2798 = vadd.f32 %v2694, %v2766
        %v2799 = vadd.f32 %v2695, %v2767
        %v2800 = vadd.f32 %v2696, %v2768
        %v2801 = vadd.f32 %v2697, %v2769
        %v2802 = vadd.f32 %v2698, %v2770
        %v2803 = vadd.f32 %v2699, %v2771
        %v2804 = vadd.f32 %v2700, %v2772
        %v2805 = vadd.f32 %v2701, %v2773
        %v2806 = vadd.f32 %v2702, %v2774
        %v2807 = vadd.f32 %v2703, %v2775
        %v2808 = vadd.f32 %v2704, %v2776
        %v2809 = vadd.f32 %v2705, %v2777
        %v2810 = vadd.f32 %v2706, %v2778
        %v2811 = vadd.f32 %v2707, %v2779
        %v2812 = vadd.f32 %v2708, %v2780
        %v2813 = vadd.f32 %v2709, %v2781
        %v2814 = vadd.f32 %v2710, %v2782
        %v2815 = vadd.f32 %v2711, %v2783
        %s2816 = scalar_lea.vmem %s2608, 2
        %v2817 = vld [vmem:[%s2816] ss:$8 sm:$0x3]
        %s2818 = scalar_lea.vmem [#allocation2], 784
        %v2819 = vld [vmem:[%s2818] sm:$0xff]
        %v2820 = vld [vmem:[%s2818 + $0x8] sm:$0xff]
        %v2821 = vld [vmem:[%s2818 + $0x10] sm:$0xff]
        %v2822 = vld [vmem:[%s2818 + $0x18] sm:$0xff]
        %v2823 = vld [vmem:[%s2818 + $0x20] sm:$0xff]
        %v2824 = vld [vmem:[%s2818 + $0x28] sm:$0xff]
        %v2825 = vld [vmem:[%s2818 + $0x30] sm:$0xff]
        %v2826 = vld [vmem:[%s2818 + $0x38] sm:$0xff]
        %v2827 = vld [vmem:[%s2818 + $0x40] sm:$0xff]
        %v2828 = vld [vmem:[%s2818 + $0x48] sm:$0xff]
        %v2829 = vld [vmem:[%s2818 + $0x50] sm:$0xff]
        %v2830 = vld [vmem:[%s2818 + $0x58] sm:$0xff]
        %v2831 = vld [vmem:[%s2818 + $0x60] sm:$0xff]
        %v2832 = vld [vmem:[%s2818 + $0x68] sm:$0xff]
        %v2833 = vld [vmem:[%s2818 + $0x70] sm:$0xff]
        %v2834 = vld [vmem:[%s2818 + $0x78] sm:$0xff]
        %v2835 = vld [vmem:[%s2818 + $0xc0] sm:$0xff]
        %v2836 = vld [vmem:[%s2818 + $0xc8] sm:$0xff]
        %v2837 = vld [vmem:[%s2818 + $0xd0] sm:$0xff]
        %v2838 = vld [vmem:[%s2818 + $0xd8] sm:$0xff]
        %v2839 = vld [vmem:[%s2818 + $0xe0] sm:$0xff]
        %v2840 = vld [vmem:[%s2818 + $0xe8] sm:$0xff]
        %v2841 = vld [vmem:[%s2818 + $0xf0] sm:$0xff]
        %v2842 = vld [vmem:[%s2818 + $0xf8] sm:$0xff]
        %v2843 = vld [vmem:[%s2818 + $0x100] sm:$0xff]
        %v2844 = vld [vmem:[%s2818 + $0x108] sm:$0xff]
        %v2845 = vld [vmem:[%s2818 + $0x110] sm:$0xff]
        %v2846 = vld [vmem:[%s2818 + $0x118] sm:$0xff]
        %v2847 = vld [vmem:[%s2818 + $0x120] sm:$0xff]
        %v2848 = vld [vmem:[%s2818 + $0x128] sm:$0xff]
        %v2849 = vld [vmem:[%s2818 + $0x130] sm:$0xff]
        %v2850 = vld [vmem:[%s2818 + $0x138] sm:$0xff]
        %v2852 = vperm.slane %v2817, 0
        %v2853 = vperm.slane %v2817, 1
        %v2856 = vmul.f32 %v2819, %v2852
        %v2857 = vmul.f32 %v2820, %v2853
        %v2858 = vmul.f32 %v2821, %v2852
        %v2859 = vmul.f32 %v2822, %v2853
        %v2860 = vmul.f32 %v2823, %v2852
        %v2861 = vmul.f32 %v2824, %v2853
        %v2862 = vmul.f32 %v2825, %v2852
        %v2863 = vmul.f32 %v2826, %v2853
        %v2864 = vmul.f32 %v2827, %v2852
        %v2865 = vmul.f32 %v2828, %v2853
        %v2866 = vmul.f32 %v2829, %v2852
        %v2867 = vmul.f32 %v2830, %v2853
        %v2868 = vmul.f32 %v2831, %v2852
        %v2869 = vmul.f32 %v2832, %v2853
        %v2870 = vmul.f32 %v2833, %v2852
        %v2871 = vmul.f32 %v2834, %v2853
        %v2872 = vmul.f32 %v2835, %v2852
        %v2873 = vmul.f32 %v2836, %v2853
        %v2874 = vmul.f32 %v2837, %v2852
        %v2875 = vmul.f32 %v2838, %v2853
        %v2876 = vmul.f32 %v2839, %v2852
        %v2877 = vmul.f32 %v2840, %v2853
        %v2878 = vmul.f32 %v2841, %v2852
        %v2879 = vmul.f32 %v2842, %v2853
        %v2880 = vmul.f32 %v2843, %v2852
        %v2881 = vmul.f32 %v2844, %v2853
        %v2882 = vmul.f32 %v2845, %v2852
        %v2883 = vmul.f32 %v2846, %v2853
        %v2884 = vmul.f32 %v2847, %v2852
        %v2885 = vmul.f32 %v2848, %v2853
        %v2886 = vmul.f32 %v2849, %v2852
        %v2887 = vmul.f32 %v2850, %v2853
        %v2888 = vadd.f32 %v2784, %v2856
        %v2889 = vadd.f32 %v2785, %v2857
        %v2890 = vadd.f32 %v2786, %v2858
        %v2891 = vadd.f32 %v2787, %v2859
        %v2892 = vadd.f32 %v2788, %v2860
        %v2893 = vadd.f32 %v2789, %v2861
        %v2894 = vadd.f32 %v2790, %v2862
        %v2895 = vadd.f32 %v2791, %v2863
        %v2896 = vadd.f32 %v2792, %v2864
        %v2897 = vadd.f32 %v2793, %v2865
        %v2898 = vadd.f32 %v2794, %v2866
        %v2899 = vadd.f32 %v2795, %v2867
        %v2900 = vadd.f32 %v2796, %v2868
        %v2901 = vadd.f32 %v2797, %v2869
        %v2902 = vadd.f32 %v2798, %v2870
        %v2903 = vadd.f32 %v2799, %v2871
        %v2904 = vadd.f32 %v2800, %v2872
        %v2905 = vadd.f32 %v2801, %v2873
        %v2906 = vadd.f32 %v2802, %v2874
        %v2907 = vadd.f32 %v2803, %v2875
        %v2908 = vadd.f32 %v2804, %v2876
        %v2909 = vadd.f32 %v2805, %v2877
        %v2910 = vadd.f32 %v2806, %v2878
        %v2911 = vadd.f32 %v2807, %v2879
        %v2912 = vadd.f32 %v2808, %v2880
        %v2913 = vadd.f32 %v2809, %v2881
        %v2914 = vadd.f32 %v2810, %v2882
        %v2915 = vadd.f32 %v2811, %v2883
        %v2916 = vadd.f32 %v2812, %v2884
        %v2917 = vadd.f32 %v2813, %v2885
        %v2918 = vadd.f32 %v2814, %v2886
        %v2919 = vadd.f32 %v2815, %v2887
        %s2920 = scalar_lea.vmem %s2608, 3
        %v2921 = vld [vmem:[%s2920] ss:$8 sm:$0x3]
        %s2922 = scalar_lea.vmem [#allocation2], 1168
        %v2923 = vld [vmem:[%s2922] sm:$0xff]
        %v2924 = vld [vmem:[%s2922 + $0x8] sm:$0xff]
        %v2925 = vld [vmem:[%s2922 + $0x10] sm:$0xff]
        %v2926 = vld [vmem:[%s2922 + $0x18] sm:$0xff]
        %v2927 = vld [vmem:[%s2922 + $0x20] sm:$0xff]
        %v2928 = vld [vmem:[%s2922 + $0x28] sm:$0xff]
        %v2929 = vld [vmem:[%s2922 + $0x30] sm:$0xff]
        %v2930 = vld [vmem:[%s2922 + $0x38] sm:$0xff]
        %v2931 = vld [vmem:[%s2922 + $0x40] sm:$0xff]
        %v2932 = vld [vmem:[%s2922 + $0x48] sm:$0xff]
        %v2933 = vld [vmem:[%s2922 + $0x50] sm:$0xff]
        %v2934 = vld [vmem:[%s2922 + $0x58] sm:$0xff]
        %v2935 = vld [vmem:[%s2922 + $0x60] sm:$0xff]
        %v2936 = vld [vmem:[%s2922 + $0x68] sm:$0xff]
        %v2937 = vld [vmem:[%s2922 + $0x70] sm:$0xff]
        %v2938 = vld [vmem:[%s2922 + $0x78] sm:$0xff]
        %v2939 = vld [vmem:[%s2922 + $0xc0] sm:$0xff]
        %v2940 = vld [vmem:[%s2922 + $0xc8] sm:$0xff]
        %v2941 = vld [vmem:[%s2922 + $0xd0] sm:$0xff]
        %v2942 = vld [vmem:[%s2922 + $0xd8] sm:$0xff]
        %v2943 = vld [vmem:[%s2922 + $0xe0] sm:$0xff]
        %v2944 = vld [vmem:[%s2922 + $0xe8] sm:$0xff]
        %v2945 = vld [vmem:[%s2922 + $0xf0] sm:$0xff]
        %v2946 = vld [vmem:[%s2922 + $0xf8] sm:$0xff]
        %v2947 = vld [vmem:[%s2922 + $0x100] sm:$0xff]
        %v2948 = vld [vmem:[%s2922 + $0x108] sm:$0xff]
        %v2949 = vld [vmem:[%s2922 + $0x110] sm:$0xff]
        %v2950 = vld [vmem:[%s2922 + $0x118] sm:$0xff]
        %v2951 = vld [vmem:[%s2922 + $0x120] sm:$0xff]
        %v2952 = vld [vmem:[%s2922 + $0x128] sm:$0xff]
        %v2953 = vld [vmem:[%s2922 + $0x130] sm:$0xff]
        %v2954 = vld [vmem:[%s2922 + $0x138] sm:$0xff]
        %v2956 = vperm.slane %v2921, 0
        %v2957 = vperm.slane %v2921, 1
        %v2960 = vmul.f32 %v2923, %v2956
        %v2961 = vmul.f32 %v2924, %v2957
        %v2962 = vmul.f32 %v2925, %v2956
        %v2963 = vmul.f32 %v2926, %v2957
        %v2964 = vmul.f32 %v2927, %v2956
        %v2965 = vmul.f32 %v2928, %v2957
        %v2966 = vmul.f32 %v2929, %v2956
        %v2967 = vmul.f32 %v2930, %v2957
        %v2968 = vmul.f32 %v2931, %v2956
        %v2969 = vmul.f32 %v2932, %v2957
        %v2970 = vmul.f32 %v2933, %v2956
        %v2971 = vmul.f32 %v2934, %v2957
        %v2972 = vmul.f32 %v2935, %v2956
        %v2973 = vmul.f32 %v2936, %v2957
        %v2974 = vmul.f32 %v2937, %v2956
        %v2975 = vmul.f32 %v2938, %v2957
        %v2976 = vmul.f32 %v2939, %v2956
        %v2977 = vmul.f32 %v2940, %v2957
        %v2978 = vmul.f32 %v2941, %v2956
        %v2979 = vmul.f32 %v2942, %v2957
        %v2980 = vmul.f32 %v2943, %v2956
        %v2981 = vmul.f32 %v2944, %v2957
        %v2982 = vmul.f32 %v2945, %v2956
        %v2983 = vmul.f32 %v2946, %v2957
        %v2984 = vmul.f32 %v2947, %v2956
        %v2985 = vmul.f32 %v2948, %v2957
        %v2986 = vmul.f32 %v2949, %v2956
        %v2987 = vmul.f32 %v2950, %v2957
        %v2988 = vmul.f32 %v2951, %v2956
        %v2989 = vmul.f32 %v2952, %v2957
        %v2990 = vmul.f32 %v2953, %v2956
        %v2991 = vmul.f32 %v2954, %v2957
        %v2992 = vadd.f32 %v2888, %v2960
        %v2993 = vadd.f32 %v2889, %v2961
        %v2994 = vadd.f32 %v2890, %v2962
        %v2995 = vadd.f32 %v2891, %v2963
        %v2996 = vadd.f32 %v2892, %v2964
        %v2997 = vadd.f32 %v2893, %v2965
        %v2998 = vadd.f32 %v2894, %v2966
        %v2999 = vadd.f32 %v2895, %v2967
        %v3000 = vadd.f32 %v2896, %v2968
        %v3001 = vadd.f32 %v2897, %v2969
        %v3002 = vadd.f32 %v2898, %v2970
        %v3003 = vadd.f32 %v2899, %v2971
        %v3004 = vadd.f32 %v2900, %v2972
        %v3005 = vadd.f32 %v2901, %v2973
        %v3006 = vadd.f32 %v2902, %v2974
        %v3007 = vadd.f32 %v2903, %v2975
        %v3008 = vadd.f32 %v2904, %v2976
        %v3009 = vadd.f32 %v2905, %v2977
        %v3010 = vadd.f32 %v2906, %v2978
        %v3011 = vadd.f32 %v2907, %v2979
        %v3012 = vadd.f32 %v2908, %v2980
        %v3013 = vadd.f32 %v2909, %v2981
        %v3014 = vadd.f32 %v2910, %v2982
        %v3015 = vadd.f32 %v2911, %v2983
        %v3016 = vadd.f32 %v2912, %v2984
        %v3017 = vadd.f32 %v2913, %v2985
        %v3018 = vadd.f32 %v2914, %v2986
        %v3019 = vadd.f32 %v2915, %v2987
        %v3020 = vadd.f32 %v2916, %v2988
        %v3021 = vadd.f32 %v2917, %v2989
        %v3022 = vadd.f32 %v2918, %v2990
        %v3023 = vadd.f32 %v2919, %v2991
        %s3024 = scalar_lea.vmem %s2608, 4
        %v3025 = vld [vmem:[%s3024] ss:$8 sm:$0x3]
        %s3026 = scalar_lea.vmem [#allocation2], 1552
        %v3027 = vld [vmem:[%s3026] sm:$0xff]
        %v3028 = vld [vmem:[%s3026 + $0x8] sm:$0xff]
        %v3029 = vld [vmem:[%s3026 + $0x10] sm:$0xff]
        %v3030 = vld [vmem:[%s3026 + $0x18] sm:$0xff]
        %v3031 = vld [vmem:[%s3026 + $0x20] sm:$0xff]
        %v3032 = vld [vmem:[%s3026 + $0x28] sm:$0xff]
        %v3033 = vld [vmem:[%s3026 + $0x30] sm:$0xff]
        %v3034 = vld [vmem:[%s3026 + $0x38] sm:$0xff]
        %v3035 = vld [vmem:[%s3026 + $0x40] sm:$0xff]
        %v3036 = vld [vmem:[%s3026 + $0x48] sm:$0xff]
        %v3037 = vld [vmem:[%s3026 + $0x50] sm:$0xff]
        %v3038 = vld [vmem:[%s3026 + $0x58] sm:$0xff]
        %v3039 = vld [vmem:[%s3026 + $0x60] sm:$0xff]
        %v3040 = vld [vmem:[%s3026 + $0x68] sm:$0xff]
        %v3041 = vld [vmem:[%s3026 + $0x70] sm:$0xff]
        %v3042 = vld [vmem:[%s3026 + $0x78] sm:$0xff]
        %v3043 = vld [vmem:[%s3026 + $0xc0] sm:$0xff]
        %v3044 = vld [vmem:[%s3026 + $0xc8] sm:$0xff]
        %v3045 = vld [vmem:[%s3026 + $0xd0] sm:$0xff]
        %v3046 = vld [vmem:[%s3026 + $0xd8] sm:$0xff]
        %v3047 = vld [vmem:[%s3026 + $0xe0] sm:$0xff]
        %v3048 = vld [vmem:[%s3026 + $0xe8] sm:$0xff]
        %v3049 = vld [vmem:[%s3026 + $0xf0] sm:$0xff]
        %v3050 = vld [vmem:[%s3026 + $0xf8] sm:$0xff]
        %v3051 = vld [vmem:[%s3026 + $0x100] sm:$0xff]
        %v3052 = vld [vmem:[%s3026 + $0x108] sm:$0xff]
        %v3053 = vld [vmem:[%s3026 + $0x110] sm:$0xff]
        %v3054 = vld [vmem:[%s3026 + $0x118] sm:$0xff]
        %v3055 = vld [vmem:[%s3026 + $0x120] sm:$0xff]
        %v3056 = vld [vmem:[%s3026 + $0x128] sm:$0xff]
        %v3057 = vld [vmem:[%s3026 + $0x130] sm:$0xff]
        %v3058 = vld [vmem:[%s3026 + $0x138] sm:$0xff]
        %v3060 = vperm.slane %v3025, 0
        %v3061 = vperm.slane %v3025, 1
        %v3064 = vmul.f32 %v3027, %v3060
        %v3065 = vmul.f32 %v3028, %v3061
        %v3066 = vmul.f32 %v3029, %v3060
        %v3067 = vmul.f32 %v3030, %v3061
        %v3068 = vmul.f32 %v3031, %v3060
        %v3069 = vmul.f32 %v3032, %v3061
        %v3070 = vmul.f32 %v3033, %v3060
        %v3071 = vmul.f32 %v3034, %v3061
        %v3072 = vmul.f32 %v3035, %v3060
        %v3073 = vmul.f32 %v3036, %v3061
        %v3074 = vmul.f32 %v3037, %v3060
        %v3075 = vmul.f32 %v3038, %v3061
        %v3076 = vmul.f32 %v3039, %v3060
        %v3077 = vmul.f32 %v3040, %v3061
        %v3078 = vmul.f32 %v3041, %v3060
        %v3079 = vmul.f32 %v3042, %v3061
        %v3080 = vmul.f32 %v3043, %v3060
        %v3081 = vmul.f32 %v3044, %v3061
        %v3082 = vmul.f32 %v3045, %v3060
        %v3083 = vmul.f32 %v3046, %v3061
        %v3084 = vmul.f32 %v3047, %v3060
        %v3085 = vmul.f32 %v3048, %v3061
        %v3086 = vmul.f32 %v3049, %v3060
        %v3087 = vmul.f32 %v3050, %v3061
        %v3088 = vmul.f32 %v3051, %v3060
        %v3089 = vmul.f32 %v3052, %v3061
        %v3090 = vmul.f32 %v3053, %v3060
        %v3091 = vmul.f32 %v3054, %v3061
        %v3092 = vmul.f32 %v3055, %v3060
        %v3093 = vmul.f32 %v3056, %v3061
        %v3094 = vmul.f32 %v3057, %v3060
        %v3095 = vmul.f32 %v3058, %v3061
        %v3096 = vadd.f32 %v2992, %v3064
        %v3097 = vadd.f32 %v2993, %v3065
        %v3098 = vadd.f32 %v2994, %v3066
        %v3099 = vadd.f32 %v2995, %v3067
        %v3100 = vadd.f32 %v2996, %v3068
        %v3101 = vadd.f32 %v2997, %v3069
        %v3102 = vadd.f32 %v2998, %v3070
        %v3103 = vadd.f32 %v2999, %v3071
        %v3104 = vadd.f32 %v3000, %v3072
        %v3105 = vadd.f32 %v3001, %v3073
        %v3106 = vadd.f32 %v3002, %v3074
        %v3107 = vadd.f32 %v3003, %v3075
        %v3108 = vadd.f32 %v3004, %v3076
        %v3109 = vadd.f32 %v3005, %v3077
        %v3110 = vadd.f32 %v3006, %v3078
        %v3111 = vadd.f32 %v3007, %v3079
        %v3112 = vadd.f32 %v3008, %v3080
        %v3113 = vadd.f32 %v3009, %v3081
        %v3114 = vadd.f32 %v3010, %v3082
        %v3115 = vadd.f32 %v3011, %v3083
        %v3116 = vadd.f32 %v3012, %v3084
        %v3117 = vadd.f32 %v3013, %v3085
        %v3118 = vadd.f32 %v3014, %v3086
        %v3119 = vadd.f32 %v3015, %v3087
        %v3120 = vadd.f32 %v3016, %v3088
        %v3121 = vadd.f32 %v3017, %v3089
        %v3122 = vadd.f32 %v3018, %v3090
        %v3123 = vadd.f32 %v3019, %v3091
        %v3124 = vadd.f32 %v3020, %v3092
        %v3125 = vadd.f32 %v3021, %v3093
        %v3126 = vadd.f32 %v3022, %v3094
        %v3127 = vadd.f32 %v3023, %v3095
        %s3128 = scalar_lea.vmem %s795, 32
        %v3129 = vld [vmem:[%s3128] ss:$8 sm:$0x3]
        %s3130 = scalar_lea.vmem [#allocation2], 32
        %v3131 = vld [vmem:[%s3130] sm:$0xff]
        %v3132 = vld [vmem:[%s3130 + $0x8] sm:$0xff]
        %v3133 = vld [vmem:[%s3130 + $0x10] sm:$0xff]
        %v3134 = vld [vmem:[%s3130 + $0x18] sm:$0xff]
        %v3135 = vld [vmem:[%s3130 + $0x20] sm:$0xff]
        %v3136 = vld [vmem:[%s3130 + $0x28] sm:$0xff]
        %v3137 = vld [vmem:[%s3130 + $0x30] sm:$0xff]
        %v3138 = vld [vmem:[%s3130 + $0x38] sm:$0xff]
        %v3139 = vld [vmem:[%s3130 + $0x40] sm:$0xff]
        %v3140 = vld [vmem:[%s3130 + $0x48] sm:$0xff]
        %v3141 = vld [vmem:[%s3130 + $0x50] sm:$0xff]
        %v3142 = vld [vmem:[%s3130 + $0x58] sm:$0xff]
        %v3143 = vld [vmem:[%s3130 + $0x60] sm:$0xff]
        %v3144 = vld [vmem:[%s3130 + $0x68] sm:$0xff]
        %v3145 = vld [vmem:[%s3130 + $0x70] sm:$0xff]
        %v3146 = vld [vmem:[%s3130 + $0x78] sm:$0xff]
        %v3147 = vld [vmem:[%s3130 + $0xc0] sm:$0xff]
        %v3148 = vld [vmem:[%s3130 + $0xc8] sm:$0xff]
        %v3149 = vld [vmem:[%s3130 + $0xd0] sm:$0xff]
        %v3150 = vld [vmem:[%s3130 + $0xd8] sm:$0xff]
        %v3151 = vld [vmem:[%s3130 + $0xe0] sm:$0xff]
        %v3152 = vld [vmem:[%s3130 + $0xe8] sm:$0xff]
        %v3153 = vld [vmem:[%s3130 + $0xf0] sm:$0xff]
        %v3154 = vld [vmem:[%s3130 + $0xf8] sm:$0xff]
        %v3155 = vld [vmem:[%s3130 + $0x100] sm:$0xff]
        %v3156 = vld [vmem:[%s3130 + $0x108] sm:$0xff]
        %v3157 = vld [vmem:[%s3130 + $0x110] sm:$0xff]
        %v3158 = vld [vmem:[%s3130 + $0x118] sm:$0xff]
        %v3159 = vld [vmem:[%s3130 + $0x120] sm:$0xff]
        %v3160 = vld [vmem:[%s3130 + $0x128] sm:$0xff]
        %v3161 = vld [vmem:[%s3130 + $0x130] sm:$0xff]
        %v3162 = vld [vmem:[%s3130 + $0x138] sm:$0xff]
        %v3164 = vperm.slane %v3129, 0
        %v3165 = vperm.slane %v3129, 1
        %v3168 = vmul.f32 %v3131, %v3164
        %v3169 = vmul.f32 %v3132, %v3165
        %v3170 = vmul.f32 %v3133, %v3164
        %v3171 = vmul.f32 %v3134, %v3165
        %v3172 = vmul.f32 %v3135, %v3164
        %v3173 = vmul.f32 %v3136, %v3165
        %v3174 = vmul.f32 %v3137, %v3164
        %v3175 = vmul.f32 %v3138, %v3165
        %v3176 = vmul.f32 %v3139, %v3164
        %v3177 = vmul.f32 %v3140, %v3165
        %v3178 = vmul.f32 %v3141, %v3164
        %v3179 = vmul.f32 %v3142, %v3165
        %v3180 = vmul.f32 %v3143, %v3164
        %v3181 = vmul.f32 %v3144, %v3165
        %v3182 = vmul.f32 %v3145, %v3164
        %v3183 = vmul.f32 %v3146, %v3165
        %v3184 = vmul.f32 %v3147, %v3164
        %v3185 = vmul.f32 %v3148, %v3165
        %v3186 = vmul.f32 %v3149, %v3164
        %v3187 = vmul.f32 %v3150, %v3165
        %v3188 = vmul.f32 %v3151, %v3164
        %v3189 = vmul.f32 %v3152, %v3165
        %v3190 = vmul.f32 %v3153, %v3164
        %v3191 = vmul.f32 %v3154, %v3165
        %v3192 = vmul.f32 %v3155, %v3164
        %v3193 = vmul.f32 %v3156, %v3165
        %v3194 = vmul.f32 %v3157, %v3164
        %v3195 = vmul.f32 %v3158, %v3165
        %v3196 = vmul.f32 %v3159, %v3164
        %v3197 = vmul.f32 %v3160, %v3165
        %v3198 = vmul.f32 %v3161, %v3164
        %v3199 = vmul.f32 %v3162, %v3165
        %v3200 = vadd.f32 %v3096, %v3168
        %v3201 = vadd.f32 %v3097, %v3169
        %v3202 = vadd.f32 %v3098, %v3170
        %v3203 = vadd.f32 %v3099, %v3171
        %v3204 = vadd.f32 %v3100, %v3172
        %v3205 = vadd.f32 %v3101, %v3173
        %v3206 = vadd.f32 %v3102, %v3174
        %v3207 = vadd.f32 %v3103, %v3175
        %v3208 = vadd.f32 %v3104, %v3176
        %v3209 = vadd.f32 %v3105, %v3177
        %v3210 = vadd.f32 %v3106, %v3178
        %v3211 = vadd.f32 %v3107, %v3179
        %v3212 = vadd.f32 %v3108, %v3180
        %v3213 = vadd.f32 %v3109, %v3181
        %v3214 = vadd.f32 %v3110, %v3182
        %v3215 = vadd.f32 %v3111, %v3183
        %v3216 = vadd.f32 %v3112, %v3184
        %v3217 = vadd.f32 %v3113, %v3185
        %v3218 = vadd.f32 %v3114, %v3186
        %v3219 = vadd.f32 %v3115, %v3187
        %v3220 = vadd.f32 %v3116, %v3188
        %v3221 = vadd.f32 %v3117, %v3189
        %v3222 = vadd.f32 %v3118, %v3190
        %v3223 = vadd.f32 %v3119, %v3191
        %v3224 = vadd.f32 %v3120, %v3192
        %v3225 = vadd.f32 %v3121, %v3193
        %v3226 = vadd.f32 %v3122, %v3194
        %v3227 = vadd.f32 %v3123, %v3195
        %v3228 = vadd.f32 %v3124, %v3196
        %v3229 = vadd.f32 %v3125, %v3197
        %v3230 = vadd.f32 %v3126, %v3198
        %v3231 = vadd.f32 %v3127, %v3199
        %s3232 = scalar_lea.vmem %s3128, 1
        %v3233 = vld [vmem:[%s3232] ss:$8 sm:$0x3]
        %s3234 = scalar_lea.vmem [#allocation2], 416
        %v3235 = vld [vmem:[%s3234] sm:$0xff]
        %v3236 = vld [vmem:[%s3234 + $0x8] sm:$0xff]
        %v3237 = vld [vmem:[%s3234 + $0x10] sm:$0xff]
        %v3238 = vld [vmem:[%s3234 + $0x18] sm:$0xff]
        %v3239 = vld [vmem:[%s3234 + $0x20] sm:$0xff]
        %v3240 = vld [vmem:[%s3234 + $0x28] sm:$0xff]
        %v3241 = vld [vmem:[%s3234 + $0x30] sm:$0xff]
        %v3242 = vld [vmem:[%s3234 + $0x38] sm:$0xff]
        %v3243 = vld [vmem:[%s3234 + $0x40] sm:$0xff]
        %v3244 = vld [vmem:[%s3234 + $0x48] sm:$0xff]
        %v3245 = vld [vmem:[%s3234 + $0x50] sm:$0xff]
        %v3246 = vld [vmem:[%s3234 + $0x58] sm:$0xff]
        %v3247 = vld [vmem:[%s3234 + $0x60] sm:$0xff]
        %v3248 = vld [vmem:[%s3234 + $0x68] sm:$0xff]
        %v3249 = vld [vmem:[%s3234 + $0x70] sm:$0xff]
        %v3250 = vld [vmem:[%s3234 + $0x78] sm:$0xff]
        %v3251 = vld [vmem:[%s3234 + $0xc0] sm:$0xff]
        %v3252 = vld [vmem:[%s3234 + $0xc8] sm:$0xff]
        %v3253 = vld [vmem:[%s3234 + $0xd0] sm:$0xff]
        %v3254 = vld [vmem:[%s3234 + $0xd8] sm:$0xff]
        %v3255 = vld [vmem:[%s3234 + $0xe0] sm:$0xff]
        %v3256 = vld [vmem:[%s3234 + $0xe8] sm:$0xff]
        %v3257 = vld [vmem:[%s3234 + $0xf0] sm:$0xff]
        %v3258 = vld [vmem:[%s3234 + $0xf8] sm:$0xff]
        %v3259 = vld [vmem:[%s3234 + $0x100] sm:$0xff]
        %v3260 = vld [vmem:[%s3234 + $0x108] sm:$0xff]
        %v3261 = vld [vmem:[%s3234 + $0x110] sm:$0xff]
        %v3262 = vld [vmem:[%s3234 + $0x118] sm:$0xff]
        %v3263 = vld [vmem:[%s3234 + $0x120] sm:$0xff]
        %v3264 = vld [vmem:[%s3234 + $0x128] sm:$0xff]
        %v3265 = vld [vmem:[%s3234 + $0x130] sm:$0xff]
        %v3266 = vld [vmem:[%s3234 + $0x138] sm:$0xff]
        %v3268 = vperm.slane %v3233, 0
        %v3269 = vperm.slane %v3233, 1
        %v3272 = vmul.f32 %v3235, %v3268
        %v3273 = vmul.f32 %v3236, %v3269
        %v3274 = vmul.f32 %v3237, %v3268
        %v3275 = vmul.f32 %v3238, %v3269
        %v3276 = vmul.f32 %v3239, %v3268
        %v3277 = vmul.f32 %v3240, %v3269
        %v3278 = vmul.f32 %v3241, %v3268
        %v3279 = vmul.f32 %v3242, %v3269
        %v3280 = vmul.f32 %v3243, %v3268
        %v3281 = vmul.f32 %v3244, %v3269
        %v3282 = vmul.f32 %v3245, %v3268
        %v3283 = vmul.f32 %v3246, %v3269
        %v3284 = vmul.f32 %v3247, %v3268
        %v3285 = vmul.f32 %v3248, %v3269
        %v3286 = vmul.f32 %v3249, %v3268
        %v3287 = vmul.f32 %v3250, %v3269
        %v3288 = vmul.f32 %v3251, %v3268
        %v3289 = vmul.f32 %v3252, %v3269
        %v3290 = vmul.f32 %v3253, %v3268
        %v3291 = vmul.f32 %v3254, %v3269
        %v3292 = vmul.f32 %v3255, %v3268
        %v3293 = vmul.f32 %v3256, %v3269
        %v3294 = vmul.f32 %v3257, %v3268
        %v3295 = vmul.f32 %v3258, %v3269
        %v3296 = vmul.f32 %v3259, %v3268
        %v3297 = vmul.f32 %v3260, %v3269
        %v3298 = vmul.f32 %v3261, %v3268
        %v3299 = vmul.f32 %v3262, %v3269
        %v3300 = vmul.f32 %v3263, %v3268
        %v3301 = vmul.f32 %v3264, %v3269
        %v3302 = vmul.f32 %v3265, %v3268
        %v3303 = vmul.f32 %v3266, %v3269
        %v3304 = vadd.f32 %v3200, %v3272
        %v3305 = vadd.f32 %v3201, %v3273
        %v3306 = vadd.f32 %v3202, %v3274
        %v3307 = vadd.f32 %v3203, %v3275
        %v3308 = vadd.f32 %v3204, %v3276
        %v3309 = vadd.f32 %v3205, %v3277
        %v3310 = vadd.f32 %v3206, %v3278
        %v3311 = vadd.f32 %v3207, %v3279
        %v3312 = vadd.f32 %v3208, %v3280
        %v3313 = vadd.f32 %v3209, %v3281
        %v3314 = vadd.f32 %v3210, %v3282
        %v3315 = vadd.f32 %v3211, %v3283
        %v3316 = vadd.f32 %v3212, %v3284
        %v3317 = vadd.f32 %v3213, %v3285
        %v3318 = vadd.f32 %v3214, %v3286
        %v3319 = vadd.f32 %v3215, %v3287
        %v3320 = vadd.f32 %v3216, %v3288
        %v3321 = vadd.f32 %v3217, %v3289
        %v3322 = vadd.f32 %v3218, %v3290
        %v3323 = vadd.f32 %v3219, %v3291
        %v3324 = vadd.f32 %v3220, %v3292
        %v3325 = vadd.f32 %v3221, %v3293
        %v3326 = vadd.f32 %v3222, %v3294
        %v3327 = vadd.f32 %v3223, %v3295
        %v3328 = vadd.f32 %v3224, %v3296
        %v3329 = vadd.f32 %v3225, %v3297
        %v3330 = vadd.f32 %v3226, %v3298
        %v3331 = vadd.f32 %v3227, %v3299
        %v3332 = vadd.f32 %v3228, %v3300
        %v3333 = vadd.f32 %v3229, %v3301
        %v3334 = vadd.f32 %v3230, %v3302
        %v3335 = vadd.f32 %v3231, %v3303
        %s3336 = scalar_lea.vmem %s3128, 2
        %v3337 = vld [vmem:[%s3336] ss:$8 sm:$0x3]
        %s3338 = scalar_lea.vmem [#allocation2], 800
        %v3339 = vld [vmem:[%s3338] sm:$0xff]
        %v3340 = vld [vmem:[%s3338 + $0x8] sm:$0xff]
        %v3341 = vld [vmem:[%s3338 + $0x10] sm:$0xff]
        %v3342 = vld [vmem:[%s3338 + $0x18] sm:$0xff]
        %v3343 = vld [vmem:[%s3338 + $0x20] sm:$0xff]
        %v3344 = vld [vmem:[%s3338 + $0x28] sm:$0xff]
        %v3345 = vld [vmem:[%s3338 + $0x30] sm:$0xff]
        %v3346 = vld [vmem:[%s3338 + $0x38] sm:$0xff]
        %v3347 = vld [vmem:[%s3338 + $0x40] sm:$0xff]
        %v3348 = vld [vmem:[%s3338 + $0x48] sm:$0xff]
        %v3349 = vld [vmem:[%s3338 + $0x50] sm:$0xff]
        %v3350 = vld [vmem:[%s3338 + $0x58] sm:$0xff]
        %v3351 = vld [vmem:[%s3338 + $0x60] sm:$0xff]
        %v3352 = vld [vmem:[%s3338 + $0x68] sm:$0xff]
        %v3353 = vld [vmem:[%s3338 + $0x70] sm:$0xff]
        %v3354 = vld [vmem:[%s3338 + $0x78] sm:$0xff]
        %v3355 = vld [vmem:[%s3338 + $0xc0] sm:$0xff]
        %v3356 = vld [vmem:[%s3338 + $0xc8] sm:$0xff]
        %v3357 = vld [vmem:[%s3338 + $0xd0] sm:$0xff]
        %v3358 = vld [vmem:[%s3338 + $0xd8] sm:$0xff]
        %v3359 = vld [vmem:[%s3338 + $0xe0] sm:$0xff]
        %v3360 = vld [vmem:[%s3338 + $0xe8] sm:$0xff]
        %v3361 = vld [vmem:[%s3338 + $0xf0] sm:$0xff]
        %v3362 = vld [vmem:[%s3338 + $0xf8] sm:$0xff]
        %v3363 = vld [vmem:[%s3338 + $0x100] sm:$0xff]
        %v3364 = vld [vmem:[%s3338 + $0x108] sm:$0xff]
        %v3365 = vld [vmem:[%s3338 + $0x110] sm:$0xff]
        %v3366 = vld [vmem:[%s3338 + $0x118] sm:$0xff]
        %v3367 = vld [vmem:[%s3338 + $0x120] sm:$0xff]
        %v3368 = vld [vmem:[%s3338 + $0x128] sm:$0xff]
        %v3369 = vld [vmem:[%s3338 + $0x130] sm:$0xff]
        %v3370 = vld [vmem:[%s3338 + $0x138] sm:$0xff]
        %v3372 = vperm.slane %v3337, 0
        %v3373 = vperm.slane %v3337, 1
        %v3376 = vmul.f32 %v3339, %v3372
        %v3377 = vmul.f32 %v3340, %v3373
        %v3378 = vmul.f32 %v3341, %v3372
        %v3379 = vmul.f32 %v3342, %v3373
        %v3380 = vmul.f32 %v3343, %v3372
        %v3381 = vmul.f32 %v3344, %v3373
        %v3382 = vmul.f32 %v3345, %v3372
        %v3383 = vmul.f32 %v3346, %v3373
        %v3384 = vmul.f32 %v3347, %v3372
        %v3385 = vmul.f32 %v3348, %v3373
        %v3386 = vmul.f32 %v3349, %v3372
        %v3387 = vmul.f32 %v3350, %v3373
        %v3388 = vmul.f32 %v3351, %v3372
        %v3389 = vmul.f32 %v3352, %v3373
        %v3390 = vmul.f32 %v3353, %v3372
        %v3391 = vmul.f32 %v3354, %v3373
        %v3392 = vmul.f32 %v3355, %v3372
        %v3393 = vmul.f32 %v3356, %v3373
        %v3394 = vmul.f32 %v3357, %v3372
        %v3395 = vmul.f32 %v3358, %v3373
        %v3396 = vmul.f32 %v3359, %v3372
        %v3397 = vmul.f32 %v3360, %v3373
        %v3398 = vmul.f32 %v3361, %v3372
        %v3399 = vmul.f32 %v3362, %v3373
        %v3400 = vmul.f32 %v3363, %v3372
        %v3401 = vmul.f32 %v3364, %v3373
        %v3402 = vmul.f32 %v3365, %v3372
        %v3403 = vmul.f32 %v3366, %v3373
        %v3404 = vmul.f32 %v3367, %v3372
        %v3405 = vmul.f32 %v3368, %v3373
        %v3406 = vmul.f32 %v3369, %v3372
        %v3407 = vmul.f32 %v3370, %v3373
        %v3408 = vadd.f32 %v3304, %v3376
        %v3409 = vadd.f32 %v3305, %v3377
        %v3410 = vadd.f32 %v3306, %v3378
        %v3411 = vadd.f32 %v3307, %v3379
        %v3412 = vadd.f32 %v3308, %v3380
        %v3413 = vadd.f32 %v3309, %v3381
        %v3414 = vadd.f32 %v3310, %v3382
        %v3415 = vadd.f32 %v3311, %v3383
        %v3416 = vadd.f32 %v3312, %v3384
        %v3417 = vadd.f32 %v3313, %v3385
        %v3418 = vadd.f32 %v3314, %v3386
        %v3419 = vadd.f32 %v3315, %v3387
        %v3420 = vadd.f32 %v3316, %v3388
        %v3421 = vadd.f32 %v3317, %v3389
        %v3422 = vadd.f32 %v3318, %v3390
        %v3423 = vadd.f32 %v3319, %v3391
        %v3424 = vadd.f32 %v3320, %v3392
        %v3425 = vadd.f32 %v3321, %v3393
        %v3426 = vadd.f32 %v3322, %v3394
        %v3427 = vadd.f32 %v3323, %v3395
        %v3428 = vadd.f32 %v3324, %v3396
        %v3429 = vadd.f32 %v3325, %v3397
        %v3430 = vadd.f32 %v3326, %v3398
        %v3431 = vadd.f32 %v3327, %v3399
        %v3432 = vadd.f32 %v3328, %v3400
        %v3433 = vadd.f32 %v3329, %v3401
        %v3434 = vadd.f32 %v3330, %v3402
        %v3435 = vadd.f32 %v3331, %v3403
        %v3436 = vadd.f32 %v3332, %v3404
        %v3437 = vadd.f32 %v3333, %v3405
        %v3438 = vadd.f32 %v3334, %v3406
        %v3439 = vadd.f32 %v3335, %v3407
        %s3440 = scalar_lea.vmem %s3128, 3
        %v3441 = vld [vmem:[%s3440] ss:$8 sm:$0x3]
        %s3442 = scalar_lea.vmem [#allocation2], 1184
        %v3443 = vld [vmem:[%s3442] sm:$0xff]
        %v3444 = vld [vmem:[%s3442 + $0x8] sm:$0xff]
        %v3445 = vld [vmem:[%s3442 + $0x10] sm:$0xff]
        %v3446 = vld [vmem:[%s3442 + $0x18] sm:$0xff]
        %v3447 = vld [vmem:[%s3442 + $0x20] sm:$0xff]
        %v3448 = vld [vmem:[%s3442 + $0x28] sm:$0xff]
        %v3449 = vld [vmem:[%s3442 + $0x30] sm:$0xff]
        %v3450 = vld [vmem:[%s3442 + $0x38] sm:$0xff]
        %v3451 = vld [vmem:[%s3442 + $0x40] sm:$0xff]
        %v3452 = vld [vmem:[%s3442 + $0x48] sm:$0xff]
        %v3453 = vld [vmem:[%s3442 + $0x50] sm:$0xff]
        %v3454 = vld [vmem:[%s3442 + $0x58] sm:$0xff]
        %v3455 = vld [vmem:[%s3442 + $0x60] sm:$0xff]
        %v3456 = vld [vmem:[%s3442 + $0x68] sm:$0xff]
        %v3457 = vld [vmem:[%s3442 + $0x70] sm:$0xff]
        %v3458 = vld [vmem:[%s3442 + $0x78] sm:$0xff]
        %v3459 = vld [vmem:[%s3442 + $0xc0] sm:$0xff]
        %v3460 = vld [vmem:[%s3442 + $0xc8] sm:$0xff]
        %v3461 = vld [vmem:[%s3442 + $0xd0] sm:$0xff]
        %v3462 = vld [vmem:[%s3442 + $0xd8] sm:$0xff]
        %v3463 = vld [vmem:[%s3442 + $0xe0] sm:$0xff]
        %v3464 = vld [vmem:[%s3442 + $0xe8] sm:$0xff]
        %v3465 = vld [vmem:[%s3442 + $0xf0] sm:$0xff]
        %v3466 = vld [vmem:[%s3442 + $0xf8] sm:$0xff]
        %v3467 = vld [vmem:[%s3442 + $0x100] sm:$0xff]
        %v3468 = vld [vmem:[%s3442 + $0x108] sm:$0xff]
        %v3469 = vld [vmem:[%s3442 + $0x110] sm:$0xff]
        %v3470 = vld [vmem:[%s3442 + $0x118] sm:$0xff]
        %v3471 = vld [vmem:[%s3442 + $0x120] sm:$0xff]
        %v3472 = vld [vmem:[%s3442 + $0x128] sm:$0xff]
        %v3473 = vld [vmem:[%s3442 + $0x130] sm:$0xff]
        %v3474 = vld [vmem:[%s3442 + $0x138] sm:$0xff]
        %v3476 = vperm.slane %v3441, 0
        %v3477 = vperm.slane %v3441, 1
        %v3480 = vmul.f32 %v3443, %v3476
        %v3481 = vmul.f32 %v3444, %v3477
        %v3482 = vmul.f32 %v3445, %v3476
        %v3483 = vmul.f32 %v3446, %v3477
        %v3484 = vmul.f32 %v3447, %v3476
        %v3485 = vmul.f32 %v3448, %v3477
        %v3486 = vmul.f32 %v3449, %v3476
        %v3487 = vmul.f32 %v3450, %v3477
        %v3488 = vmul.f32 %v3451, %v3476
        %v3489 = vmul.f32 %v3452, %v3477
        %v3490 = vmul.f32 %v3453, %v3476
        %v3491 = vmul.f32 %v3454, %v3477
        %v3492 = vmul.f32 %v3455, %v3476
        %v3493 = vmul.f32 %v3456, %v3477
        %v3494 = vmul.f32 %v3457, %v3476
        %v3495 = vmul.f32 %v3458, %v3477
        %v3496 = vmul.f32 %v3459, %v3476
        %v3497 = vmul.f32 %v3460, %v3477
        %v3498 = vmul.f32 %v3461, %v3476
        %v3499 = vmul.f32 %v3462, %v3477
        %v3500 = vmul.f32 %v3463, %v3476
        %v3501 = vmul.f32 %v3464, %v3477
        %v3502 = vmul.f32 %v3465, %v3476
        %v3503 = vmul.f32 %v3466, %v3477
        %v3504 = vmul.f32 %v3467, %v3476
        %v3505 = vmul.f32 %v3468, %v3477
        %v3506 = vmul.f32 %v3469, %v3476
        %v3507 = vmul.f32 %v3470, %v3477
        %v3508 = vmul.f32 %v3471, %v3476
        %v3509 = vmul.f32 %v3472, %v3477
        %v3510 = vmul.f32 %v3473, %v3476
        %v3511 = vmul.f32 %v3474, %v3477
        %v3512 = vadd.f32 %v3408, %v3480
        %v3513 = vadd.f32 %v3409, %v3481
        %v3514 = vadd.f32 %v3410, %v3482
        %v3515 = vadd.f32 %v3411, %v3483
        %v3516 = vadd.f32 %v3412, %v3484
        %v3517 = vadd.f32 %v3413, %v3485
        %v3518 = vadd.f32 %v3414, %v3486
        %v3519 = vadd.f32 %v3415, %v3487
        %v3520 = vadd.f32 %v3416, %v3488
        %v3521 = vadd.f32 %v3417, %v3489
        %v3522 = vadd.f32 %v3418, %v3490
        %v3523 = vadd.f32 %v3419, %v3491
        %v3524 = vadd.f32 %v3420, %v3492
        %v3525 = vadd.f32 %v3421, %v3493
        %v3526 = vadd.f32 %v3422, %v3494
        %v3527 = vadd.f32 %v3423, %v3495
        %v3528 = vadd.f32 %v3424, %v3496
        %v3529 = vadd.f32 %v3425, %v3497
        %v3530 = vadd.f32 %v3426, %v3498
        %v3531 = vadd.f32 %v3427, %v3499
        %v3532 = vadd.f32 %v3428, %v3500
        %v3533 = vadd.f32 %v3429, %v3501
        %v3534 = vadd.f32 %v3430, %v3502
        %v3535 = vadd.f32 %v3431, %v3503
        %v3536 = vadd.f32 %v3432, %v3504
        %v3537 = vadd.f32 %v3433, %v3505
        %v3538 = vadd.f32 %v3434, %v3506
        %v3539 = vadd.f32 %v3435, %v3507
        %v3540 = vadd.f32 %v3436, %v3508
        %v3541 = vadd.f32 %v3437, %v3509
        %v3542 = vadd.f32 %v3438, %v3510
        %v3543 = vadd.f32 %v3439, %v3511
        %s3544 = scalar_lea.vmem %s3128, 4
        %v3545 = vld [vmem:[%s3544] ss:$8 sm:$0x3]
        %s3546 = scalar_lea.vmem [#allocation2], 1568
        %v3547 = vld [vmem:[%s3546] sm:$0xff]
        %v3548 = vld [vmem:[%s3546 + $0x8] sm:$0xff]
        %v3549 = vld [vmem:[%s3546 + $0x10] sm:$0xff]
        %v3550 = vld [vmem:[%s3546 + $0x18] sm:$0xff]
        %v3551 = vld [vmem:[%s3546 + $0x20] sm:$0xff]
        %v3552 = vld [vmem:[%s3546 + $0x28] sm:$0xff]
        %v3553 = vld [vmem:[%s3546 + $0x30] sm:$0xff]
        %v3554 = vld [vmem:[%s3546 + $0x38] sm:$0xff]
        %v3555 = vld [vmem:[%s3546 + $0x40] sm:$0xff]
        %v3556 = vld [vmem:[%s3546 + $0x48] sm:$0xff]
        %v3557 = vld [vmem:[%s3546 + $0x50] sm:$0xff]
        %v3558 = vld [vmem:[%s3546 + $0x58] sm:$0xff]
        %v3559 = vld [vmem:[%s3546 + $0x60] sm:$0xff]
        %v3560 = vld [vmem:[%s3546 + $0x68] sm:$0xff]
        %v3561 = vld [vmem:[%s3546 + $0x70] sm:$0xff]
        %v3562 = vld [vmem:[%s3546 + $0x78] sm:$0xff]
        %v3563 = vld [vmem:[%s3546 + $0xc0] sm:$0xff]
        %v3564 = vld [vmem:[%s3546 + $0xc8] sm:$0xff]
        %v3565 = vld [vmem:[%s3546 + $0xd0] sm:$0xff]
        %v3566 = vld [vmem:[%s3546 + $0xd8] sm:$0xff]
        %v3567 = vld [vmem:[%s3546 + $0xe0] sm:$0xff]
        %v3568 = vld [vmem:[%s3546 + $0xe8] sm:$0xff]
        %v3569 = vld [vmem:[%s3546 + $0xf0] sm:$0xff]
        %v3570 = vld [vmem:[%s3546 + $0xf8] sm:$0xff]
        %v3571 = vld [vmem:[%s3546 + $0x100] sm:$0xff]
        %v3572 = vld [vmem:[%s3546 + $0x108] sm:$0xff]
        %v3573 = vld [vmem:[%s3546 + $0x110] sm:$0xff]
        %v3574 = vld [vmem:[%s3546 + $0x118] sm:$0xff]
        %v3575 = vld [vmem:[%s3546 + $0x120] sm:$0xff]
        %v3576 = vld [vmem:[%s3546 + $0x128] sm:$0xff]
        %v3577 = vld [vmem:[%s3546 + $0x130] sm:$0xff]
        %v3578 = vld [vmem:[%s3546 + $0x138] sm:$0xff]
        %v3580 = vperm.slane %v3545, 0
        %v3581 = vperm.slane %v3545, 1
        %v3584 = vmul.f32 %v3547, %v3580
        %v3585 = vmul.f32 %v3548, %v3581
        %v3586 = vmul.f32 %v3549, %v3580
        %v3587 = vmul.f32 %v3550, %v3581
        %v3588 = vmul.f32 %v3551, %v3580
        %v3589 = vmul.f32 %v3552, %v3581
        %v3590 = vmul.f32 %v3553, %v3580
        %v3591 = vmul.f32 %v3554, %v3581
        %v3592 = vmul.f32 %v3555, %v3580
        %v3593 = vmul.f32 %v3556, %v3581
        %v3594 = vmul.f32 %v3557, %v3580
        %v3595 = vmul.f32 %v3558, %v3581
        %v3596 = vmul.f32 %v3559, %v3580
        %v3597 = vmul.f32 %v3560, %v3581
        %v3598 = vmul.f32 %v3561, %v3580
        %v3599 = vmul.f32 %v3562, %v3581
        %v3600 = vmul.f32 %v3563, %v3580
        %v3601 = vmul.f32 %v3564, %v3581
        %v3602 = vmul.f32 %v3565, %v3580
        %v3603 = vmul.f32 %v3566, %v3581
        %v3604 = vmul.f32 %v3567, %v3580
        %v3605 = vmul.f32 %v3568, %v3581
        %v3606 = vmul.f32 %v3569, %v3580
        %v3607 = vmul.f32 %v3570, %v3581
        %v3608 = vmul.f32 %v3571, %v3580
        %v3609 = vmul.f32 %v3572, %v3581
        %v3610 = vmul.f32 %v3573, %v3580
        %v3611 = vmul.f32 %v3574, %v3581
        %v3612 = vmul.f32 %v3575, %v3580
        %v3613 = vmul.f32 %v3576, %v3581
        %v3614 = vmul.f32 %v3577, %v3580
        %v3615 = vmul.f32 %v3578, %v3581
        %v3616 = vadd.f32 %v3512, %v3584
        %v3617 = vadd.f32 %v3513, %v3585
        %v3618 = vadd.f32 %v3514, %v3586
        %v3619 = vadd.f32 %v3515, %v3587
        %v3620 = vadd.f32 %v3516, %v3588
        %v3621 = vadd.f32 %v3517, %v3589
        %v3622 = vadd.f32 %v3518, %v3590
        %v3623 = vadd.f32 %v3519, %v3591
        %v3624 = vadd.f32 %v3520, %v3592
        %v3625 = vadd.f32 %v3521, %v3593
        %v3626 = vadd.f32 %v3522, %v3594
        %v3627 = vadd.f32 %v3523, %v3595
        %v3628 = vadd.f32 %v3524, %v3596
        %v3629 = vadd.f32 %v3525, %v3597
        %v3630 = vadd.f32 %v3526, %v3598
        %v3631 = vadd.f32 %v3527, %v3599
        %v3632 = vadd.f32 %v3528, %v3600
        %v3633 = vadd.f32 %v3529, %v3601
        %v3634 = vadd.f32 %v3530, %v3602
        %v3635 = vadd.f32 %v3531, %v3603
        %v3636 = vadd.f32 %v3532, %v3604
        %v3637 = vadd.f32 %v3533, %v3605
        %v3638 = vadd.f32 %v3534, %v3606
        %v3639 = vadd.f32 %v3535, %v3607
        %v3640 = vadd.f32 %v3536, %v3608
        %v3641 = vadd.f32 %v3537, %v3609
        %v3642 = vadd.f32 %v3538, %v3610
        %v3643 = vadd.f32 %v3539, %v3611
        %v3644 = vadd.f32 %v3540, %v3612
        %v3645 = vadd.f32 %v3541, %v3613
        %v3646 = vadd.f32 %v3542, %v3614
        %v3647 = vadd.f32 %v3543, %v3615
        %s3648 = scalar_lea.vmem %s795, 48
        %v3649 = vld [vmem:[%s3648] ss:$8 sm:$0x3]
        %s3650 = scalar_lea.vmem [#allocation2], 48
        %v3651 = vld [vmem:[%s3650] sm:$0xff]
        %v3652 = vld [vmem:[%s3650 + $0x8] sm:$0xff]
        %v3653 = vld [vmem:[%s3650 + $0x10] sm:$0xff]
        %v3654 = vld [vmem:[%s3650 + $0x18] sm:$0xff]
        %v3655 = vld [vmem:[%s3650 + $0x20] sm:$0xff]
        %v3656 = vld [vmem:[%s3650 + $0x28] sm:$0xff]
        %v3657 = vld [vmem:[%s3650 + $0x30] sm:$0xff]
        %v3658 = vld [vmem:[%s3650 + $0x38] sm:$0xff]
        %v3659 = vld [vmem:[%s3650 + $0x40] sm:$0xff]
        %v3660 = vld [vmem:[%s3650 + $0x48] sm:$0xff]
        %v3661 = vld [vmem:[%s3650 + $0x50] sm:$0xff]
        %v3662 = vld [vmem:[%s3650 + $0x58] sm:$0xff]
        %v3663 = vld [vmem:[%s3650 + $0x60] sm:$0xff]
        %v3664 = vld [vmem:[%s3650 + $0x68] sm:$0xff]
        %v3665 = vld [vmem:[%s3650 + $0x70] sm:$0xff]
        %v3666 = vld [vmem:[%s3650 + $0x78] sm:$0xff]
        %v3667 = vld [vmem:[%s3650 + $0xc0] sm:$0xff]
        %v3668 = vld [vmem:[%s3650 + $0xc8] sm:$0xff]
        %v3669 = vld [vmem:[%s3650 + $0xd0] sm:$0xff]
        %v3670 = vld [vmem:[%s3650 + $0xd8] sm:$0xff]
        %v3671 = vld [vmem:[%s3650 + $0xe0] sm:$0xff]
        %v3672 = vld [vmem:[%s3650 + $0xe8] sm:$0xff]
        %v3673 = vld [vmem:[%s3650 + $0xf0] sm:$0xff]
        %v3674 = vld [vmem:[%s3650 + $0xf8] sm:$0xff]
        %v3675 = vld [vmem:[%s3650 + $0x100] sm:$0xff]
        %v3676 = vld [vmem:[%s3650 + $0x108] sm:$0xff]
        %v3677 = vld [vmem:[%s3650 + $0x110] sm:$0xff]
        %v3678 = vld [vmem:[%s3650 + $0x118] sm:$0xff]
        %v3679 = vld [vmem:[%s3650 + $0x120] sm:$0xff]
        %v3680 = vld [vmem:[%s3650 + $0x128] sm:$0xff]
        %v3681 = vld [vmem:[%s3650 + $0x130] sm:$0xff]
        %v3682 = vld [vmem:[%s3650 + $0x138] sm:$0xff]
        %v3684 = vperm.slane %v3649, 0
        %v3685 = vperm.slane %v3649, 1
        %v3688 = vmul.f32 %v3651, %v3684
        %v3689 = vmul.f32 %v3652, %v3685
        %v3690 = vmul.f32 %v3653, %v3684
        %v3691 = vmul.f32 %v3654, %v3685
        %v3692 = vmul.f32 %v3655, %v3684
        %v3693 = vmul.f32 %v3656, %v3685
        %v3694 = vmul.f32 %v3657, %v3684
        %v3695 = vmul.f32 %v3658, %v3685
        %v3696 = vmul.f32 %v3659, %v3684
        %v3697 = vmul.f32 %v3660, %v3685
        %v3698 = vmul.f32 %v3661, %v3684
        %v3699 = vmul.f32 %v3662, %v3685
        %v3700 = vmul.f32 %v3663, %v3684
        %v3701 = vmul.f32 %v3664, %v3685
        %v3702 = vmul.f32 %v3665, %v3684
        %v3703 = vmul.f32 %v3666, %v3685
        %v3704 = vmul.f32 %v3667, %v3684
        %v3705 = vmul.f32 %v3668, %v3685
        %v3706 = vmul.f32 %v3669, %v3684
        %v3707 = vmul.f32 %v3670, %v3685
        %v3708 = vmul.f32 %v3671, %v3684
        %v3709 = vmul.f32 %v3672, %v3685
        %v3710 = vmul.f32 %v3673, %v3684
        %v3711 = vmul.f32 %v3674, %v3685
        %v3712 = vmul.f32 %v3675, %v3684
        %v3713 = vmul.f32 %v3676, %v3685
        %v3714 = vmul.f32 %v3677, %v3684
        %v3715 = vmul.f32 %v3678, %v3685
        %v3716 = vmul.f32 %v3679, %v3684
        %v3717 = vmul.f32 %v3680, %v3685
        %v3718 = vmul.f32 %v3681, %v3684
        %v3719 = vmul.f32 %v3682, %v3685
        %v3720 = vadd.f32 %v3616, %v3688
        %v3721 = vadd.f32 %v3617, %v3689
        %v3722 = vadd.f32 %v3618, %v3690
        %v3723 = vadd.f32 %v3619, %v3691
        %v3724 = vadd.f32 %v3620, %v3692
        %v3725 = vadd.f32 %v3621, %v3693
        %v3726 = vadd.f32 %v3622, %v3694
        %v3727 = vadd.f32 %v3623, %v3695
        %v3728 = vadd.f32 %v3624, %v3696
        %v3729 = vadd.f32 %v3625, %v3697
        %v3730 = vadd.f32 %v3626, %v3698
        %v3731 = vadd.f32 %v3627, %v3699
        %v3732 = vadd.f32 %v3628, %v3700
        %v3733 = vadd.f32 %v3629, %v3701
        %v3734 = vadd.f32 %v3630, %v3702
        %v3735 = vadd.f32 %v3631, %v3703
        %v3736 = vadd.f32 %v3632, %v3704
        %v3737 = vadd.f32 %v3633, %v3705
        %v3738 = vadd.f32 %v3634, %v3706
        %v3739 = vadd.f32 %v3635, %v3707
        %v3740 = vadd.f32 %v3636, %v3708
        %v3741 = vadd.f32 %v3637, %v3709
        %v3742 = vadd.f32 %v3638, %v3710
        %v3743 = vadd.f32 %v3639, %v3711
        %v3744 = vadd.f32 %v3640, %v3712
        %v3745 = vadd.f32 %v3641, %v3713
        %v3746 = vadd.f32 %v3642, %v3714
        %v3747 = vadd.f32 %v3643, %v3715
        %v3748 = vadd.f32 %v3644, %v3716
        %v3749 = vadd.f32 %v3645, %v3717
        %v3750 = vadd.f32 %v3646, %v3718
        %v3751 = vadd.f32 %v3647, %v3719
        %s3752 = scalar_lea.vmem %s3648, 1
        %v3753 = vld [vmem:[%s3752] ss:$8 sm:$0x3]
        %s3754 = scalar_lea.vmem [#allocation2], 432
        %v3755 = vld [vmem:[%s3754] sm:$0xff]
        %v3756 = vld [vmem:[%s3754 + $0x8] sm:$0xff]
        %v3757 = vld [vmem:[%s3754 + $0x10] sm:$0xff]
        %v3758 = vld [vmem:[%s3754 + $0x18] sm:$0xff]
        %v3759 = vld [vmem:[%s3754 + $0x20] sm:$0xff]
        %v3760 = vld [vmem:[%s3754 + $0x28] sm:$0xff]
        %v3761 = vld [vmem:[%s3754 + $0x30] sm:$0xff]
        %v3762 = vld [vmem:[%s3754 + $0x38] sm:$0xff]
        %v3763 = vld [vmem:[%s3754 + $0x40] sm:$0xff]
        %v3764 = vld [vmem:[%s3754 + $0x48] sm:$0xff]
        %v3765 = vld [vmem:[%s3754 + $0x50] sm:$0xff]
        %v3766 = vld [vmem:[%s3754 + $0x58] sm:$0xff]
        %v3767 = vld [vmem:[%s3754 + $0x60] sm:$0xff]
        %v3768 = vld [vmem:[%s3754 + $0x68] sm:$0xff]
        %v3769 = vld [vmem:[%s3754 + $0x70] sm:$0xff]
        %v3770 = vld [vmem:[%s3754 + $0x78] sm:$0xff]
        %v3771 = vld [vmem:[%s3754 + $0xc0] sm:$0xff]
        %v3772 = vld [vmem:[%s3754 + $0xc8] sm:$0xff]
        %v3773 = vld [vmem:[%s3754 + $0xd0] sm:$0xff]
        %v3774 = vld [vmem:[%s3754 + $0xd8] sm:$0xff]
        %v3775 = vld [vmem:[%s3754 + $0xe0] sm:$0xff]
        %v3776 = vld [vmem:[%s3754 + $0xe8] sm:$0xff]
        %v3777 = vld [vmem:[%s3754 + $0xf0] sm:$0xff]
        %v3778 = vld [vmem:[%s3754 + $0xf8] sm:$0xff]
        %v3779 = vld [vmem:[%s3754 + $0x100] sm:$0xff]
        %v3780 = vld [vmem:[%s3754 + $0x108] sm:$0xff]
        %v3781 = vld [vmem:[%s3754 + $0x110] sm:$0xff]
        %v3782 = vld [vmem:[%s3754 + $0x118] sm:$0xff]
        %v3783 = vld [vmem:[%s3754 + $0x120] sm:$0xff]
        %v3784 = vld [vmem:[%s3754 + $0x128] sm:$0xff]
        %v3785 = vld [vmem:[%s3754 + $0x130] sm:$0xff]
        %v3786 = vld [vmem:[%s3754 + $0x138] sm:$0xff]
        %v3788 = vperm.slane %v3753, 0
        %v3789 = vperm.slane %v3753, 1
        %v3792 = vmul.f32 %v3755, %v3788
        %v3793 = vmul.f32 %v3756, %v3789
        %v3794 = vmul.f32 %v3757, %v3788
        %v3795 = vmul.f32 %v3758, %v3789
        %v3796 = vmul.f32 %v3759, %v3788
        %v3797 = vmul.f32 %v3760, %v3789
        %v3798 = vmul.f32 %v3761, %v3788
        %v3799 = vmul.f32 %v3762, %v3789
        %v3800 = vmul.f32 %v3763, %v3788
        %v3801 = vmul.f32 %v3764, %v3789
        %v3802 = vmul.f32 %v3765, %v3788
        %v3803 = vmul.f32 %v3766, %v3789
        %v3804 = vmul.f32 %v3767, %v3788
        %v3805 = vmul.f32 %v3768, %v3789
        %v3806 = vmul.f32 %v3769, %v3788
        %v3807 = vmul.f32 %v3770, %v3789
        %v3808 = vmul.f32 %v3771, %v3788
        %v3809 = vmul.f32 %v3772, %v3789
        %v3810 = vmul.f32 %v3773, %v3788
        %v3811 = vmul.f32 %v3774, %v3789
        %v3812 = vmul.f32 %v3775, %v3788
        %v3813 = vmul.f32 %v3776, %v3789
        %v3814 = vmul.f32 %v3777, %v3788
        %v3815 = vmul.f32 %v3778, %v3789
        %v3816 = vmul.f32 %v3779, %v3788
        %v3817 = vmul.f32 %v3780, %v3789
        %v3818 = vmul.f32 %v3781, %v3788
        %v3819 = vmul.f32 %v3782, %v3789
        %v3820 = vmul.f32 %v3783, %v3788
        %v3821 = vmul.f32 %v3784, %v3789
        %v3822 = vmul.f32 %v3785, %v3788
        %v3823 = vmul.f32 %v3786, %v3789
        %v3824 = vadd.f32 %v3720, %v3792
        %v3825 = vadd.f32 %v3721, %v3793
        %v3826 = vadd.f32 %v3722, %v3794
        %v3827 = vadd.f32 %v3723, %v3795
        %v3828 = vadd.f32 %v3724, %v3796
        %v3829 = vadd.f32 %v3725, %v3797
        %v3830 = vadd.f32 %v3726, %v3798
        %v3831 = vadd.f32 %v3727, %v3799
        %v3832 = vadd.f32 %v3728, %v3800
        %v3833 = vadd.f32 %v3729, %v3801
        %v3834 = vadd.f32 %v3730, %v3802
        %v3835 = vadd.f32 %v3731, %v3803
        %v3836 = vadd.f32 %v3732, %v3804
        %v3837 = vadd.f32 %v3733, %v3805
        %v3838 = vadd.f32 %v3734, %v3806
        %v3839 = vadd.f32 %v3735, %v3807
        %v3840 = vadd.f32 %v3736, %v3808
        %v3841 = vadd.f32 %v3737, %v3809
        %v3842 = vadd.f32 %v3738, %v3810
        %v3843 = vadd.f32 %v3739, %v3811
        %v3844 = vadd.f32 %v3740, %v3812
        %v3845 = vadd.f32 %v3741, %v3813
        %v3846 = vadd.f32 %v3742, %v3814
        %v3847 = vadd.f32 %v3743, %v3815
        %v3848 = vadd.f32 %v3744, %v3816
        %v3849 = vadd.f32 %v3745, %v3817
        %v3850 = vadd.f32 %v3746, %v3818
        %v3851 = vadd.f32 %v3747, %v3819
        %v3852 = vadd.f32 %v3748, %v3820
        %v3853 = vadd.f32 %v3749, %v3821
        %v3854 = vadd.f32 %v3750, %v3822
        %v3855 = vadd.f32 %v3751, %v3823
        %s3856 = scalar_lea.vmem %s3648, 2
        %v3857 = vld [vmem:[%s3856] ss:$8 sm:$0x3]
        %s3858 = scalar_lea.vmem [#allocation2], 816
        %v3859 = vld [vmem:[%s3858] sm:$0xff]
        %v3860 = vld [vmem:[%s3858 + $0x8] sm:$0xff]
        %v3861 = vld [vmem:[%s3858 + $0x10] sm:$0xff]
        %v3862 = vld [vmem:[%s3858 + $0x18] sm:$0xff]
        %v3863 = vld [vmem:[%s3858 + $0x20] sm:$0xff]
        %v3864 = vld [vmem:[%s3858 + $0x28] sm:$0xff]
        %v3865 = vld [vmem:[%s3858 + $0x30] sm:$0xff]
        %v3866 = vld [vmem:[%s3858 + $0x38] sm:$0xff]
        %v3867 = vld [vmem:[%s3858 + $0x40] sm:$0xff]
        %v3868 = vld [vmem:[%s3858 + $0x48] sm:$0xff]
        %v3869 = vld [vmem:[%s3858 + $0x50] sm:$0xff]
        %v3870 = vld [vmem:[%s3858 + $0x58] sm:$0xff]
        %v3871 = vld [vmem:[%s3858 + $0x60] sm:$0xff]
        %v3872 = vld [vmem:[%s3858 + $0x68] sm:$0xff]
        %v3873 = vld [vmem:[%s3858 + $0x70] sm:$0xff]
        %v3874 = vld [vmem:[%s3858 + $0x78] sm:$0xff]
        %v3875 = vld [vmem:[%s3858 + $0xc0] sm:$0xff]
        %v3876 = vld [vmem:[%s3858 + $0xc8] sm:$0xff]
        %v3877 = vld [vmem:[%s3858 + $0xd0] sm:$0xff]
        %v3878 = vld [vmem:[%s3858 + $0xd8] sm:$0xff]
        %v3879 = vld [vmem:[%s3858 + $0xe0] sm:$0xff]
        %v3880 = vld [vmem:[%s3858 + $0xe8] sm:$0xff]
        %v3881 = vld [vmem:[%s3858 + $0xf0] sm:$0xff]
        %v3882 = vld [vmem:[%s3858 + $0xf8] sm:$0xff]
        %v3883 = vld [vmem:[%s3858 + $0x100] sm:$0xff]
        %v3884 = vld [vmem:[%s3858 + $0x108] sm:$0xff]
        %v3885 = vld [vmem:[%s3858 + $0x110] sm:$0xff]
        %v3886 = vld [vmem:[%s3858 + $0x118] sm:$0xff]
        %v3887 = vld [vmem:[%s3858 + $0x120] sm:$0xff]
        %v3888 = vld [vmem:[%s3858 + $0x128] sm:$0xff]
        %v3889 = vld [vmem:[%s3858 + $0x130] sm:$0xff]
        %v3890 = vld [vmem:[%s3858 + $0x138] sm:$0xff]
        %v3892 = vperm.slane %v3857, 0
        %v3893 = vperm.slane %v3857, 1
        %v3896 = vmul.f32 %v3859, %v3892
        %v3897 = vmul.f32 %v3860, %v3893
        %v3898 = vmul.f32 %v3861, %v3892
        %v3899 = vmul.f32 %v3862, %v3893
        %v3900 = vmul.f32 %v3863, %v3892
        %v3901 = vmul.f32 %v3864, %v3893
        %v3902 = vmul.f32 %v3865, %v3892
        %v3903 = vmul.f32 %v3866, %v3893
        %v3904 = vmul.f32 %v3867, %v3892
        %v3905 = vmul.f32 %v3868, %v3893
        %v3906 = vmul.f32 %v3869, %v3892
        %v3907 = vmul.f32 %v3870, %v3893
        %v3908 = vmul.f32 %v3871, %v3892
        %v3909 = vmul.f32 %v3872, %v3893
        %v3910 = vmul.f32 %v3873, %v3892
        %v3911 = vmul.f32 %v3874, %v3893
        %v3912 = vmul.f32 %v3875, %v3892
        %v3913 = vmul.f32 %v3876, %v3893
        %v3914 = vmul.f32 %v3877, %v3892
        %v3915 = vmul.f32 %v3878, %v3893
        %v3916 = vmul.f32 %v3879, %v3892
        %v3917 = vmul.f32 %v3880, %v3893
        %v3918 = vmul.f32 %v3881, %v3892
        %v3919 = vmul.f32 %v3882, %v3893
        %v3920 = vmul.f32 %v3883, %v3892
        %v3921 = vmul.f32 %v3884, %v3893
        %v3922 = vmul.f32 %v3885, %v3892
        %v3923 = vmul.f32 %v3886, %v3893
        %v3924 = vmul.f32 %v3887, %v3892
        %v3925 = vmul.f32 %v3888, %v3893
        %v3926 = vmul.f32 %v3889, %v3892
        %v3927 = vmul.f32 %v3890, %v3893
        %v3928 = vadd.f32 %v3824, %v3896
        %v3929 = vadd.f32 %v3825, %v3897
        %v3930 = vadd.f32 %v3826, %v3898
        %v3931 = vadd.f32 %v3827, %v3899
        %v3932 = vadd.f32 %v3828, %v3900
        %v3933 = vadd.f32 %v3829, %v3901
        %v3934 = vadd.f32 %v3830, %v3902
        %v3935 = vadd.f32 %v3831, %v3903
        %v3936 = vadd.f32 %v3832, %v3904
        %v3937 = vadd.f32 %v3833, %v3905
        %v3938 = vadd.f32 %v3834, %v3906
        %v3939 = vadd.f32 %v3835, %v3907
        %v3940 = vadd.f32 %v3836, %v3908
        %v3941 = vadd.f32 %v3837, %v3909
        %v3942 = vadd.f32 %v3838, %v3910
        %v3943 = vadd.f32 %v3839, %v3911
        %v3944 = vadd.f32 %v3840, %v3912
        %v3945 = vadd.f32 %v3841, %v3913
        %v3946 = vadd.f32 %v3842, %v3914
        %v3947 = vadd.f32 %v3843, %v3915
        %v3948 = vadd.f32 %v3844, %v3916
        %v3949 = vadd.f32 %v3845, %v3917
        %v3950 = vadd.f32 %v3846, %v3918
        %v3951 = vadd.f32 %v3847, %v3919
        %v3952 = vadd.f32 %v3848, %v3920
        %v3953 = vadd.f32 %v3849, %v3921
        %v3954 = vadd.f32 %v3850, %v3922
        %v3955 = vadd.f32 %v3851, %v3923
        %v3956 = vadd.f32 %v3852, %v3924
        %v3957 = vadd.f32 %v3853, %v3925
        %v3958 = vadd.f32 %v3854, %v3926
        %v3959 = vadd.f32 %v3855, %v3927
        %s3960 = scalar_lea.vmem %s3648, 3
        %v3961 = vld [vmem:[%s3960] ss:$8 sm:$0x3]
        %s3962 = scalar_lea.vmem [#allocation2], 1200
        %v3963 = vld [vmem:[%s3962] sm:$0xff]
        %v3964 = vld [vmem:[%s3962 + $0x8] sm:$0xff]
        %v3965 = vld [vmem:[%s3962 + $0x10] sm:$0xff]
        %v3966 = vld [vmem:[%s3962 + $0x18] sm:$0xff]
        %v3967 = vld [vmem:[%s3962 + $0x20] sm:$0xff]
        %v3968 = vld [vmem:[%s3962 + $0x28] sm:$0xff]
        %v3969 = vld [vmem:[%s3962 + $0x30] sm:$0xff]
        %v3970 = vld [vmem:[%s3962 + $0x38] sm:$0xff]
        %v3971 = vld [vmem:[%s3962 + $0x40] sm:$0xff]
        %v3972 = vld [vmem:[%s3962 + $0x48] sm:$0xff]
        %v3973 = vld [vmem:[%s3962 + $0x50] sm:$0xff]
        %v3974 = vld [vmem:[%s3962 + $0x58] sm:$0xff]
        %v3975 = vld [vmem:[%s3962 + $0x60] sm:$0xff]
        %v3976 = vld [vmem:[%s3962 + $0x68] sm:$0xff]
        %v3977 = vld [vmem:[%s3962 + $0x70] sm:$0xff]
        %v3978 = vld [vmem:[%s3962 + $0x78] sm:$0xff]
        %v3979 = vld [vmem:[%s3962 + $0xc0] sm:$0xff]
        %v3980 = vld [vmem:[%s3962 + $0xc8] sm:$0xff]
        %v3981 = vld [vmem:[%s3962 + $0xd0] sm:$0xff]
        %v3982 = vld [vmem:[%s3962 + $0xd8] sm:$0xff]
        %v3983 = vld [vmem:[%s3962 + $0xe0] sm:$0xff]
        %v3984 = vld [vmem:[%s3962 + $0xe8] sm:$0xff]
        %v3985 = vld [vmem:[%s3962 + $0xf0] sm:$0xff]
        %v3986 = vld [vmem:[%s3962 + $0xf8] sm:$0xff]
        %v3987 = vld [vmem:[%s3962 + $0x100] sm:$0xff]
        %v3988 = vld [vmem:[%s3962 + $0x108] sm:$0xff]
        %v3989 = vld [vmem:[%s3962 + $0x110] sm:$0xff]
        %v3990 = vld [vmem:[%s3962 + $0x118] sm:$0xff]
        %v3991 = vld [vmem:[%s3962 + $0x120] sm:$0xff]
        %v3992 = vld [vmem:[%s3962 + $0x128] sm:$0xff]
        %v3993 = vld [vmem:[%s3962 + $0x130] sm:$0xff]
        %v3994 = vld [vmem:[%s3962 + $0x138] sm:$0xff]
        %v3996 = vperm.slane %v3961, 0
        %v3997 = vperm.slane %v3961, 1
        %v4000 = vmul.f32 %v3963, %v3996
        %v4001 = vmul.f32 %v3964, %v3997
        %v4002 = vmul.f32 %v3965, %v3996
        %v4003 = vmul.f32 %v3966, %v3997
        %v4004 = vmul.f32 %v3967, %v3996
        %v4005 = vmul.f32 %v3968, %v3997
        %v4006 = vmul.f32 %v3969, %v3996
        %v4007 = vmul.f32 %v3970, %v3997
        %v4008 = vmul.f32 %v3971, %v3996
        %v4009 = vmul.f32 %v3972, %v3997
        %v4010 = vmul.f32 %v3973, %v3996
        %v4011 = vmul.f32 %v3974, %v3997
        %v4012 = vmul.f32 %v3975, %v3996
        %v4013 = vmul.f32 %v3976, %v3997
        %v4014 = vmul.f32 %v3977, %v3996
        %v4015 = vmul.f32 %v3978, %v3997
        %v4016 = vmul.f32 %v3979, %v3996
        %v4017 = vmul.f32 %v3980, %v3997
        %v4018 = vmul.f32 %v3981, %v3996
        %v4019 = vmul.f32 %v3982, %v3997
        %v4020 = vmul.f32 %v3983, %v3996
        %v4021 = vmul.f32 %v3984, %v3997
        %v4022 = vmul.f32 %v3985, %v3996
        %v4023 = vmul.f32 %v3986, %v3997
        %v4024 = vmul.f32 %v3987, %v3996
        %v4025 = vmul.f32 %v3988, %v3997
        %v4026 = vmul.f32 %v3989, %v3996
        %v4027 = vmul.f32 %v3990, %v3997
        %v4028 = vmul.f32 %v3991, %v3996
        %v4029 = vmul.f32 %v3992, %v3997
        %v4030 = vmul.f32 %v3993, %v3996
        %v4031 = vmul.f32 %v3994, %v3997
        %v4032 = vadd.f32 %v3928, %v4000
        %v4033 = vadd.f32 %v3929, %v4001
        %v4034 = vadd.f32 %v3930, %v4002
        %v4035 = vadd.f32 %v3931, %v4003
        %v4036 = vadd.f32 %v3932, %v4004
        %v4037 = vadd.f32 %v3933, %v4005
        %v4038 = vadd.f32 %v3934, %v4006
        %v4039 = vadd.f32 %v3935, %v4007
        %v4040 = vadd.f32 %v3936, %v4008
        %v4041 = vadd.f32 %v3937, %v4009
        %v4042 = vadd.f32 %v3938, %v4010
        %v4043 = vadd.f32 %v3939, %v4011
        %v4044 = vadd.f32 %v3940, %v4012
        %v4045 = vadd.f32 %v3941, %v4013
        %v4046 = vadd.f32 %v3942, %v4014
        %v4047 = vadd.f32 %v3943, %v4015
        %v4048 = vadd.f32 %v3944, %v4016
        %v4049 = vadd.f32 %v3945, %v4017
        %v4050 = vadd.f32 %v3946, %v4018
        %v4051 = vadd.f32 %v3947, %v4019
        %v4052 = vadd.f32 %v3948, %v4020
        %v4053 = vadd.f32 %v3949, %v4021
        %v4054 = vadd.f32 %v3950, %v4022
        %v4055 = vadd.f32 %v3951, %v4023
        %v4056 = vadd.f32 %v3952, %v4024
        %v4057 = vadd.f32 %v3953, %v4025
        %v4058 = vadd.f32 %v3954, %v4026
        %v4059 = vadd.f32 %v3955, %v4027
        %v4060 = vadd.f32 %v3956, %v4028
        %v4061 = vadd.f32 %v3957, %v4029
        %v4062 = vadd.f32 %v3958, %v4030
        %v4063 = vadd.f32 %v3959, %v4031
        %s4064 = scalar_lea.vmem %s3648, 4
        %v4065 = vld [vmem:[%s4064] ss:$8 sm:$0x3]
        %s4066 = scalar_lea.vmem [#allocation2], 1584
        %v4067 = vld [vmem:[%s4066] sm:$0xff]
        %v4068 = vld [vmem:[%s4066 + $0x8] sm:$0xff]
        %v4069 = vld [vmem:[%s4066 + $0x10] sm:$0xff]
        %v4070 = vld [vmem:[%s4066 + $0x18] sm:$0xff]
        %v4071 = vld [vmem:[%s4066 + $0x20] sm:$0xff]
        %v4072 = vld [vmem:[%s4066 + $0x28] sm:$0xff]
        %v4073 = vld [vmem:[%s4066 + $0x30] sm:$0xff]
        %v4074 = vld [vmem:[%s4066 + $0x38] sm:$0xff]
        %v4075 = vld [vmem:[%s4066 + $0x40] sm:$0xff]
        %v4076 = vld [vmem:[%s4066 + $0x48] sm:$0xff]
        %v4077 = vld [vmem:[%s4066 + $0x50] sm:$0xff]
        %v4078 = vld [vmem:[%s4066 + $0x58] sm:$0xff]
        %v4079 = vld [vmem:[%s4066 + $0x60] sm:$0xff]
        %v4080 = vld [vmem:[%s4066 + $0x68] sm:$0xff]
        %v4081 = vld [vmem:[%s4066 + $0x70] sm:$0xff]
        %v4082 = vld [vmem:[%s4066 + $0x78] sm:$0xff]
        %v4083 = vld [vmem:[%s4066 + $0xc0] sm:$0xff]
        %v4084 = vld [vmem:[%s4066 + $0xc8] sm:$0xff]
        %v4085 = vld [vmem:[%s4066 + $0xd0] sm:$0xff]
        %v4086 = vld [vmem:[%s4066 + $0xd8] sm:$0xff]
        %v4087 = vld [vmem:[%s4066 + $0xe0] sm:$0xff]
        %v4088 = vld [vmem:[%s4066 + $0xe8] sm:$0xff]
        %v4089 = vld [vmem:[%s4066 + $0xf0] sm:$0xff]
        %v4090 = vld [vmem:[%s4066 + $0xf8] sm:$0xff]
        %v4091 = vld [vmem:[%s4066 + $0x100] sm:$0xff]
        %v4092 = vld [vmem:[%s4066 + $0x108] sm:$0xff]
        %v4093 = vld [vmem:[%s4066 + $0x110] sm:$0xff]
        %v4094 = vld [vmem:[%s4066 + $0x118] sm:$0xff]
        %v4095 = vld [vmem:[%s4066 + $0x120] sm:$0xff]
        %v4096 = vld [vmem:[%s4066 + $0x128] sm:$0xff]
        %v4097 = vld [vmem:[%s4066 + $0x130] sm:$0xff]
        %v4098 = vld [vmem:[%s4066 + $0x138] sm:$0xff]
        %v4100 = vperm.slane %v4065, 0
        %v4101 = vperm.slane %v4065, 1
        %v4104 = vmul.f32 %v4067, %v4100
        %v4105 = vmul.f32 %v4068, %v4101
        %v4106 = vmul.f32 %v4069, %v4100
        %v4107 = vmul.f32 %v4070, %v4101
        %v4108 = vmul.f32 %v4071, %v4100
        %v4109 = vmul.f32 %v4072, %v4101
        %v4110 = vmul.f32 %v4073, %v4100
        %v4111 = vmul.f32 %v4074, %v4101
        %v4112 = vmul.f32 %v4075, %v4100
        %v4113 = vmul.f32 %v4076, %v4101
        %v4114 = vmul.f32 %v4077, %v4100
        %v4115 = vmul.f32 %v4078, %v4101
        %v4116 = vmul.f32 %v4079, %v4100
        %v4117 = vmul.f32 %v4080, %v4101
        %v4118 = vmul.f32 %v4081, %v4100
        %v4119 = vmul.f32 %v4082, %v4101
        %v4120 = vmul.f32 %v4083, %v4100
        %v4121 = vmul.f32 %v4084, %v4101
        %v4122 = vmul.f32 %v4085, %v4100
        %v4123 = vmul.f32 %v4086, %v4101
        %v4124 = vmul.f32 %v4087, %v4100
        %v4125 = vmul.f32 %v4088, %v4101
        %v4126 = vmul.f32 %v4089, %v4100
        %v4127 = vmul.f32 %v4090, %v4101
        %v4128 = vmul.f32 %v4091, %v4100
        %v4129 = vmul.f32 %v4092, %v4101
        %v4130 = vmul.f32 %v4093, %v4100
        %v4131 = vmul.f32 %v4094, %v4101
        %v4132 = vmul.f32 %v4095, %v4100
        %v4133 = vmul.f32 %v4096, %v4101
        %v4134 = vmul.f32 %v4097, %v4100
        %v4135 = vmul.f32 %v4098, %v4101
        %v4136 = vadd.f32 %v4032, %v4104
        %v4137 = vadd.f32 %v4033, %v4105
        %v4138 = vadd.f32 %v4034, %v4106
        %v4139 = vadd.f32 %v4035, %v4107
        %v4140 = vadd.f32 %v4036, %v4108
        %v4141 = vadd.f32 %v4037, %v4109
        %v4142 = vadd.f32 %v4038, %v4110
        %v4143 = vadd.f32 %v4039, %v4111
        %v4144 = vadd.f32 %v4040, %v4112
        %v4145 = vadd.f32 %v4041, %v4113
        %v4146 = vadd.f32 %v4042, %v4114
        %v4147 = vadd.f32 %v4043, %v4115
        %v4148 = vadd.f32 %v4044, %v4116
        %v4149 = vadd.f32 %v4045, %v4117
        %v4150 = vadd.f32 %v4046, %v4118
        %v4151 = vadd.f32 %v4047, %v4119
        %v4152 = vadd.f32 %v4048, %v4120
        %v4153 = vadd.f32 %v4049, %v4121
        %v4154 = vadd.f32 %v4050, %v4122
        %v4155 = vadd.f32 %v4051, %v4123
        %v4156 = vadd.f32 %v4052, %v4124
        %v4157 = vadd.f32 %v4053, %v4125
        %v4158 = vadd.f32 %v4054, %v4126
        %v4159 = vadd.f32 %v4055, %v4127
        %v4160 = vadd.f32 %v4056, %v4128
        %v4161 = vadd.f32 %v4057, %v4129
        %v4162 = vadd.f32 %v4058, %v4130
        %v4163 = vadd.f32 %v4059, %v4131
        %v4164 = vadd.f32 %v4060, %v4132
        %v4165 = vadd.f32 %v4061, %v4133
        %v4166 = vadd.f32 %v4062, %v4134
        %v4167 = vadd.f32 %v4063, %v4135
        %s4168 = scalar_lea.vmem %s795, 64
        %v4169 = vld [vmem:[%s4168] ss:$8 sm:$0x3]
        %s4170 = scalar_lea.vmem [#allocation2], 64
        %v4171 = vld [vmem:[%s4170] sm:$0xff]
        %v4172 = vld [vmem:[%s4170 + $0x8] sm:$0xff]
        %v4173 = vld [vmem:[%s4170 + $0x10] sm:$0xff]
        %v4174 = vld [vmem:[%s4170 + $0x18] sm:$0xff]
        %v4175 = vld [vmem:[%s4170 + $0x20] sm:$0xff]
        %v4176 = vld [vmem:[%s4170 + $0x28] sm:$0xff]
        %v4177 = vld [vmem:[%s4170 + $0x30] sm:$0xff]
        %v4178 = vld [vmem:[%s4170 + $0x38] sm:$0xff]
        %v4179 = vld [vmem:[%s4170 + $0x40] sm:$0xff]
        %v4180 = vld [vmem:[%s4170 + $0x48] sm:$0xff]
        %v4181 = vld [vmem:[%s4170 + $0x50] sm:$0xff]
        %v4182 = vld [vmem:[%s4170 + $0x58] sm:$0xff]
        %v4183 = vld [vmem:[%s4170 + $0x60] sm:$0xff]
        %v4184 = vld [vmem:[%s4170 + $0x68] sm:$0xff]
        %v4185 = vld [vmem:[%s4170 + $0x70] sm:$0xff]
        %v4186 = vld [vmem:[%s4170 + $0x78] sm:$0xff]
        %v4187 = vld [vmem:[%s4170 + $0xc0] sm:$0xff]
        %v4188 = vld [vmem:[%s4170 + $0xc8] sm:$0xff]
        %v4189 = vld [vmem:[%s4170 + $0xd0] sm:$0xff]
        %v4190 = vld [vmem:[%s4170 + $0xd8] sm:$0xff]
        %v4191 = vld [vmem:[%s4170 + $0xe0] sm:$0xff]
        %v4192 = vld [vmem:[%s4170 + $0xe8] sm:$0xff]
        %v4193 = vld [vmem:[%s4170 + $0xf0] sm:$0xff]
        %v4194 = vld [vmem:[%s4170 + $0xf8] sm:$0xff]
        %v4195 = vld [vmem:[%s4170 + $0x100] sm:$0xff]
        %v4196 = vld [vmem:[%s4170 + $0x108] sm:$0xff]
        %v4197 = vld [vmem:[%s4170 + $0x110] sm:$0xff]
        %v4198 = vld [vmem:[%s4170 + $0x118] sm:$0xff]
        %v4199 = vld [vmem:[%s4170 + $0x120] sm:$0xff]
        %v4200 = vld [vmem:[%s4170 + $0x128] sm:$0xff]
        %v4201 = vld [vmem:[%s4170 + $0x130] sm:$0xff]
        %v4202 = vld [vmem:[%s4170 + $0x138] sm:$0xff]
        %v4204 = vperm.slane %v4169, 0
        %v4205 = vperm.slane %v4169, 1
        %v4208 = vmul.f32 %v4171, %v4204
        %v4209 = vmul.f32 %v4172, %v4205
        %v4210 = vmul.f32 %v4173, %v4204
        %v4211 = vmul.f32 %v4174, %v4205
        %v4212 = vmul.f32 %v4175, %v4204
        %v4213 = vmul.f32 %v4176, %v4205
        %v4214 = vmul.f32 %v4177, %v4204
        %v4215 = vmul.f32 %v4178, %v4205
        %v4216 = vmul.f32 %v4179, %v4204
        %v4217 = vmul.f32 %v4180, %v4205
        %v4218 = vmul.f32 %v4181, %v4204
        %v4219 = vmul.f32 %v4182, %v4205
        %v4220 = vmul.f32 %v4183, %v4204
        %v4221 = vmul.f32 %v4184, %v4205
        %v4222 = vmul.f32 %v4185, %v4204
        %v4223 = vmul.f32 %v4186, %v4205
        %v4224 = vmul.f32 %v4187, %v4204
        %v4225 = vmul.f32 %v4188, %v4205
        %v4226 = vmul.f32 %v4189, %v4204
        %v4227 = vmul.f32 %v4190, %v4205
        %v4228 = vmul.f32 %v4191, %v4204
        %v4229 = vmul.f32 %v4192, %v4205
        %v4230 = vmul.f32 %v4193, %v4204
        %v4231 = vmul.f32 %v4194, %v4205
        %v4232 = vmul.f32 %v4195, %v4204
        %v4233 = vmul.f32 %v4196, %v4205
        %v4234 = vmul.f32 %v4197, %v4204
        %v4235 = vmul.f32 %v4198, %v4205
        %v4236 = vmul.f32 %v4199, %v4204
        %v4237 = vmul.f32 %v4200, %v4205
        %v4238 = vmul.f32 %v4201, %v4204
        %v4239 = vmul.f32 %v4202, %v4205
        %v4240 = vadd.f32 %v4136, %v4208
        %v4241 = vadd.f32 %v4137, %v4209
        %v4242 = vadd.f32 %v4138, %v4210
        %v4243 = vadd.f32 %v4139, %v4211
        %v4244 = vadd.f32 %v4140, %v4212
        %v4245 = vadd.f32 %v4141, %v4213
        %v4246 = vadd.f32 %v4142, %v4214
        %v4247 = vadd.f32 %v4143, %v4215
        %v4248 = vadd.f32 %v4144, %v4216
        %v4249 = vadd.f32 %v4145, %v4217
        %v4250 = vadd.f32 %v4146, %v4218
        %v4251 = vadd.f32 %v4147, %v4219
        %v4252 = vadd.f32 %v4148, %v4220
        %v4253 = vadd.f32 %v4149, %v4221
        %v4254 = vadd.f32 %v4150, %v4222
        %v4255 = vadd.f32 %v4151, %v4223
        %v4256 = vadd.f32 %v4152, %v4224
        %v4257 = vadd.f32 %v4153, %v4225
        %v4258 = vadd.f32 %v4154, %v4226
        %v4259 = vadd.f32 %v4155, %v4227
        %v4260 = vadd.f32 %v4156, %v4228
        %v4261 = vadd.f32 %v4157, %v4229
        %v4262 = vadd.f32 %v4158, %v4230
        %v4263 = vadd.f32 %v4159, %v4231
        %v4264 = vadd.f32 %v4160, %v4232
        %v4265 = vadd.f32 %v4161, %v4233
        %v4266 = vadd.f32 %v4162, %v4234
        %v4267 = vadd.f32 %v4163, %v4235
        %v4268 = vadd.f32 %v4164, %v4236
        %v4269 = vadd.f32 %v4165, %v4237
        %v4270 = vadd.f32 %v4166, %v4238
        %v4271 = vadd.f32 %v4167, %v4239
        %s4272 = scalar_lea.vmem %s4168, 1
        %v4273 = vld [vmem:[%s4272] ss:$8 sm:$0x3]
        %s4274 = scalar_lea.vmem [#allocation2], 448
        %v4275 = vld [vmem:[%s4274] sm:$0xff]
        %v4276 = vld [vmem:[%s4274 + $0x8] sm:$0xff]
        %v4277 = vld [vmem:[%s4274 + $0x10] sm:$0xff]
        %v4278 = vld [vmem:[%s4274 + $0x18] sm:$0xff]
        %v4279 = vld [vmem:[%s4274 + $0x20] sm:$0xff]
        %v4280 = vld [vmem:[%s4274 + $0x28] sm:$0xff]
        %v4281 = vld [vmem:[%s4274 + $0x30] sm:$0xff]
        %v4282 = vld [vmem:[%s4274 + $0x38] sm:$0xff]
        %v4283 = vld [vmem:[%s4274 + $0x40] sm:$0xff]
        %v4284 = vld [vmem:[%s4274 + $0x48] sm:$0xff]
        %v4285 = vld [vmem:[%s4274 + $0x50] sm:$0xff]
        %v4286 = vld [vmem:[%s4274 + $0x58] sm:$0xff]
        %v4287 = vld [vmem:[%s4274 + $0x60] sm:$0xff]
        %v4288 = vld [vmem:[%s4274 + $0x68] sm:$0xff]
        %v4289 = vld [vmem:[%s4274 + $0x70] sm:$0xff]
        %v4290 = vld [vmem:[%s4274 + $0x78] sm:$0xff]
        %v4291 = vld [vmem:[%s4274 + $0xc0] sm:$0xff]
        %v4292 = vld [vmem:[%s4274 + $0xc8] sm:$0xff]
        %v4293 = vld [vmem:[%s4274 + $0xd0] sm:$0xff]
        %v4294 = vld [vmem:[%s4274 + $0xd8] sm:$0xff]
        %v4295 = vld [vmem:[%s4274 + $0xe0] sm:$0xff]
        %v4296 = vld [vmem:[%s4274 + $0xe8] sm:$0xff]
        %v4297 = vld [vmem:[%s4274 + $0xf0] sm:$0xff]
        %v4298 = vld [vmem:[%s4274 + $0xf8] sm:$0xff]
        %v4299 = vld [vmem:[%s4274 + $0x100] sm:$0xff]
        %v4300 = vld [vmem:[%s4274 + $0x108] sm:$0xff]
        %v4301 = vld [vmem:[%s4274 + $0x110] sm:$0xff]
        %v4302 = vld [vmem:[%s4274 + $0x118] sm:$0xff]
        %v4303 = vld [vmem:[%s4274 + $0x120] sm:$0xff]
        %v4304 = vld [vmem:[%s4274 + $0x128] sm:$0xff]
        %v4305 = vld [vmem:[%s4274 + $0x130] sm:$0xff]
        %v4306 = vld [vmem:[%s4274 + $0x138] sm:$0xff]
        %v4308 = vperm.slane %v4273, 0
        %v4309 = vperm.slane %v4273, 1
        %v4312 = vmul.f32 %v4275, %v4308
        %v4313 = vmul.f32 %v4276, %v4309
        %v4314 = vmul.f32 %v4277, %v4308
        %v4315 = vmul.f32 %v4278, %v4309
        %v4316 = vmul.f32 %v4279, %v4308
        %v4317 = vmul.f32 %v4280, %v4309
        %v4318 = vmul.f32 %v4281, %v4308
        %v4319 = vmul.f32 %v4282, %v4309
        %v4320 = vmul.f32 %v4283, %v4308
        %v4321 = vmul.f32 %v4284, %v4309
        %v4322 = vmul.f32 %v4285, %v4308
        %v4323 = vmul.f32 %v4286, %v4309
        %v4324 = vmul.f32 %v4287, %v4308
        %v4325 = vmul.f32 %v4288, %v4309
        %v4326 = vmul.f32 %v4289, %v4308
        %v4327 = vmul.f32 %v4290, %v4309
        %v4328 = vmul.f32 %v4291, %v4308
        %v4329 = vmul.f32 %v4292, %v4309
        %v4330 = vmul.f32 %v4293, %v4308
        %v4331 = vmul.f32 %v4294, %v4309
        %v4332 = vmul.f32 %v4295, %v4308
        %v4333 = vmul.f32 %v4296, %v4309
        %v4334 = vmul.f32 %v4297, %v4308
        %v4335 = vmul.f32 %v4298, %v4309
        %v4336 = vmul.f32 %v4299, %v4308
        %v4337 = vmul.f32 %v4300, %v4309
        %v4338 = vmul.f32 %v4301, %v4308
        %v4339 = vmul.f32 %v4302, %v4309
        %v4340 = vmul.f32 %v4303, %v4308
        %v4341 = vmul.f32 %v4304, %v4309
        %v4342 = vmul.f32 %v4305, %v4308
        %v4343 = vmul.f32 %v4306, %v4309
        %v4344 = vadd.f32 %v4240, %v4312
        %v4345 = vadd.f32 %v4241, %v4313
        %v4346 = vadd.f32 %v4242, %v4314
        %v4347 = vadd.f32 %v4243, %v4315
        %v4348 = vadd.f32 %v4244, %v4316
        %v4349 = vadd.f32 %v4245, %v4317
        %v4350 = vadd.f32 %v4246, %v4318
        %v4351 = vadd.f32 %v4247, %v4319
        %v4352 = vadd.f32 %v4248, %v4320
        %v4353 = vadd.f32 %v4249, %v4321
        %v4354 = vadd.f32 %v4250, %v4322
        %v4355 = vadd.f32 %v4251, %v4323
        %v4356 = vadd.f32 %v4252, %v4324
        %v4357 = vadd.f32 %v4253, %v4325
        %v4358 = vadd.f32 %v4254, %v4326
        %v4359 = vadd.f32 %v4255, %v4327
        %v4360 = vadd.f32 %v4256, %v4328
        %v4361 = vadd.f32 %v4257, %v4329
        %v4362 = vadd.f32 %v4258, %v4330
        %v4363 = vadd.f32 %v4259, %v4331
        %v4364 = vadd.f32 %v4260, %v4332
        %v4365 = vadd.f32 %v4261, %v4333
        %v4366 = vadd.f32 %v4262, %v4334
        %v4367 = vadd.f32 %v4263, %v4335
        %v4368 = vadd.f32 %v4264, %v4336
        %v4369 = vadd.f32 %v4265, %v4337
        %v4370 = vadd.f32 %v4266, %v4338
        %v4371 = vadd.f32 %v4267, %v4339
        %v4372 = vadd.f32 %v4268, %v4340
        %v4373 = vadd.f32 %v4269, %v4341
        %v4374 = vadd.f32 %v4270, %v4342
        %v4375 = vadd.f32 %v4271, %v4343
        %s4376 = scalar_lea.vmem %s4168, 2
        %v4377 = vld [vmem:[%s4376] ss:$8 sm:$0x3]
        %s4378 = scalar_lea.vmem [#allocation2], 832
        %v4379 = vld [vmem:[%s4378] sm:$0xff]
        %v4380 = vld [vmem:[%s4378 + $0x8] sm:$0xff]
        %v4381 = vld [vmem:[%s4378 + $0x10] sm:$0xff]
        %v4382 = vld [vmem:[%s4378 + $0x18] sm:$0xff]
        %v4383 = vld [vmem:[%s4378 + $0x20] sm:$0xff]
        %v4384 = vld [vmem:[%s4378 + $0x28] sm:$0xff]
        %v4385 = vld [vmem:[%s4378 + $0x30] sm:$0xff]
        %v4386 = vld [vmem:[%s4378 + $0x38] sm:$0xff]
        %v4387 = vld [vmem:[%s4378 + $0x40] sm:$0xff]
        %v4388 = vld [vmem:[%s4378 + $0x48] sm:$0xff]
        %v4389 = vld [vmem:[%s4378 + $0x50] sm:$0xff]
        %v4390 = vld [vmem:[%s4378 + $0x58] sm:$0xff]
        %v4391 = vld [vmem:[%s4378 + $0x60] sm:$0xff]
        %v4392 = vld [vmem:[%s4378 + $0x68] sm:$0xff]
        %v4393 = vld [vmem:[%s4378 + $0x70] sm:$0xff]
        %v4394 = vld [vmem:[%s4378 + $0x78] sm:$0xff]
        %v4395 = vld [vmem:[%s4378 + $0xc0] sm:$0xff]
        %v4396 = vld [vmem:[%s4378 + $0xc8] sm:$0xff]
        %v4397 = vld [vmem:[%s4378 + $0xd0] sm:$0xff]
        %v4398 = vld [vmem:[%s4378 + $0xd8] sm:$0xff]
        %v4399 = vld [vmem:[%s4378 + $0xe0] sm:$0xff]
        %v4400 = vld [vmem:[%s4378 + $0xe8] sm:$0xff]
        %v4401 = vld [vmem:[%s4378 + $0xf0] sm:$0xff]
        %v4402 = vld [vmem:[%s4378 + $0xf8] sm:$0xff]
        %v4403 = vld [vmem:[%s4378 + $0x100] sm:$0xff]
        %v4404 = vld [vmem:[%s4378 + $0x108] sm:$0xff]
        %v4405 = vld [vmem:[%s4378 + $0x110] sm:$0xff]
        %v4406 = vld [vmem:[%s4378 + $0x118] sm:$0xff]
        %v4407 = vld [vmem:[%s4378 + $0x120] sm:$0xff]
        %v4408 = vld [vmem:[%s4378 + $0x128] sm:$0xff]
        %v4409 = vld [vmem:[%s4378 + $0x130] sm:$0xff]
        %v4410 = vld [vmem:[%s4378 + $0x138] sm:$0xff]
        %v4412 = vperm.slane %v4377, 0
        %v4413 = vperm.slane %v4377, 1
        %v4416 = vmul.f32 %v4379, %v4412
        %v4417 = vmul.f32 %v4380, %v4413
        %v4418 = vmul.f32 %v4381, %v4412
        %v4419 = vmul.f32 %v4382, %v4413
        %v4420 = vmul.f32 %v4383, %v4412
        %v4421 = vmul.f32 %v4384, %v4413
        %v4422 = vmul.f32 %v4385, %v4412
        %v4423 = vmul.f32 %v4386, %v4413
        %v4424 = vmul.f32 %v4387, %v4412
        %v4425 = vmul.f32 %v4388, %v4413
        %v4426 = vmul.f32 %v4389, %v4412
        %v4427 = vmul.f32 %v4390, %v4413
        %v4428 = vmul.f32 %v4391, %v4412
        %v4429 = vmul.f32 %v4392, %v4413
        %v4430 = vmul.f32 %v4393, %v4412
        %v4431 = vmul.f32 %v4394, %v4413
        %v4432 = vmul.f32 %v4395, %v4412
        %v4433 = vmul.f32 %v4396, %v4413
        %v4434 = vmul.f32 %v4397, %v4412
        %v4435 = vmul.f32 %v4398, %v4413
        %v4436 = vmul.f32 %v4399, %v4412
        %v4437 = vmul.f32 %v4400, %v4413
        %v4438 = vmul.f32 %v4401, %v4412
        %v4439 = vmul.f32 %v4402, %v4413
        %v4440 = vmul.f32 %v4403, %v4412
        %v4441 = vmul.f32 %v4404, %v4413
        %v4442 = vmul.f32 %v4405, %v4412
        %v4443 = vmul.f32 %v4406, %v4413
        %v4444 = vmul.f32 %v4407, %v4412
        %v4445 = vmul.f32 %v4408, %v4413
        %v4446 = vmul.f32 %v4409, %v4412
        %v4447 = vmul.f32 %v4410, %v4413
        %v4448 = vadd.f32 %v4344, %v4416
        %v4449 = vadd.f32 %v4345, %v4417
        %v4450 = vadd.f32 %v4346, %v4418
        %v4451 = vadd.f32 %v4347, %v4419
        %v4452 = vadd.f32 %v4348, %v4420
        %v4453 = vadd.f32 %v4349, %v4421
        %v4454 = vadd.f32 %v4350, %v4422
        %v4455 = vadd.f32 %v4351, %v4423
        %v4456 = vadd.f32 %v4352, %v4424
        %v4457 = vadd.f32 %v4353, %v4425
        %v4458 = vadd.f32 %v4354, %v4426
        %v4459 = vadd.f32 %v4355, %v4427
        %v4460 = vadd.f32 %v4356, %v4428
        %v4461 = vadd.f32 %v4357, %v4429
        %v4462 = vadd.f32 %v4358, %v4430
        %v4463 = vadd.f32 %v4359, %v4431
        %v4464 = vadd.f32 %v4360, %v4432
        %v4465 = vadd.f32 %v4361, %v4433
        %v4466 = vadd.f32 %v4362, %v4434
        %v4467 = vadd.f32 %v4363, %v4435
        %v4468 = vadd.f32 %v4364, %v4436
        %v4469 = vadd.f32 %v4365, %v4437
        %v4470 = vadd.f32 %v4366, %v4438
        %v4471 = vadd.f32 %v4367, %v4439
        %v4472 = vadd.f32 %v4368, %v4440
        %v4473 = vadd.f32 %v4369, %v4441
        %v4474 = vadd.f32 %v4370, %v4442
        %v4475 = vadd.f32 %v4371, %v4443
        %v4476 = vadd.f32 %v4372, %v4444
        %v4477 = vadd.f32 %v4373, %v4445
        %v4478 = vadd.f32 %v4374, %v4446
        %v4479 = vadd.f32 %v4375, %v4447
        %s4480 = scalar_lea.vmem %s4168, 3
        %v4481 = vld [vmem:[%s4480] ss:$8 sm:$0x3]
        %s4482 = scalar_lea.vmem [#allocation2], 1216
        %v4483 = vld [vmem:[%s4482] sm:$0xff]
        %v4484 = vld [vmem:[%s4482 + $0x8] sm:$0xff]
        %v4485 = vld [vmem:[%s4482 + $0x10] sm:$0xff]
        %v4486 = vld [vmem:[%s4482 + $0x18] sm:$0xff]
        %v4487 = vld [vmem:[%s4482 + $0x20] sm:$0xff]
        %v4488 = vld [vmem:[%s4482 + $0x28] sm:$0xff]
        %v4489 = vld [vmem:[%s4482 + $0x30] sm:$0xff]
        %v4490 = vld [vmem:[%s4482 + $0x38] sm:$0xff]
        %v4491 = vld [vmem:[%s4482 + $0x40] sm:$0xff]
        %v4492 = vld [vmem:[%s4482 + $0x48] sm:$0xff]
        %v4493 = vld [vmem:[%s4482 + $0x50] sm:$0xff]
        %v4494 = vld [vmem:[%s4482 + $0x58] sm:$0xff]
        %v4495 = vld [vmem:[%s4482 + $0x60] sm:$0xff]
        %v4496 = vld [vmem:[%s4482 + $0x68] sm:$0xff]
        %v4497 = vld [vmem:[%s4482 + $0x70] sm:$0xff]
        %v4498 = vld [vmem:[%s4482 + $0x78] sm:$0xff]
        %v4499 = vld [vmem:[%s4482 + $0xc0] sm:$0xff]
        %v4500 = vld [vmem:[%s4482 + $0xc8] sm:$0xff]
        %v4501 = vld [vmem:[%s4482 + $0xd0] sm:$0xff]
        %v4502 = vld [vmem:[%s4482 + $0xd8] sm:$0xff]
        %v4503 = vld [vmem:[%s4482 + $0xe0] sm:$0xff]
        %v4504 = vld [vmem:[%s4482 + $0xe8] sm:$0xff]
        %v4505 = vld [vmem:[%s4482 + $0xf0] sm:$0xff]
        %v4506 = vld [vmem:[%s4482 + $0xf8] sm:$0xff]
        %v4507 = vld [vmem:[%s4482 + $0x100] sm:$0xff]
        %v4508 = vld [vmem:[%s4482 + $0x108] sm:$0xff]
        %v4509 = vld [vmem:[%s4482 + $0x110] sm:$0xff]
        %v4510 = vld [vmem:[%s4482 + $0x118] sm:$0xff]
        %v4511 = vld [vmem:[%s4482 + $0x120] sm:$0xff]
        %v4512 = vld [vmem:[%s4482 + $0x128] sm:$0xff]
        %v4513 = vld [vmem:[%s4482 + $0x130] sm:$0xff]
        %v4514 = vld [vmem:[%s4482 + $0x138] sm:$0xff]
        %v4516 = vperm.slane %v4481, 0
        %v4517 = vperm.slane %v4481, 1
        %v4520 = vmul.f32 %v4483, %v4516
        %v4521 = vmul.f32 %v4484, %v4517
        %v4522 = vmul.f32 %v4485, %v4516
        %v4523 = vmul.f32 %v4486, %v4517
        %v4524 = vmul.f32 %v4487, %v4516
        %v4525 = vmul.f32 %v4488, %v4517
        %v4526 = vmul.f32 %v4489, %v4516
        %v4527 = vmul.f32 %v4490, %v4517
        %v4528 = vmul.f32 %v4491, %v4516
        %v4529 = vmul.f32 %v4492, %v4517
        %v4530 = vmul.f32 %v4493, %v4516
        %v4531 = vmul.f32 %v4494, %v4517
        %v4532 = vmul.f32 %v4495, %v4516
        %v4533 = vmul.f32 %v4496, %v4517
        %v4534 = vmul.f32 %v4497, %v4516
        %v4535 = vmul.f32 %v4498, %v4517
        %v4536 = vmul.f32 %v4499, %v4516
        %v4537 = vmul.f32 %v4500, %v4517
        %v4538 = vmul.f32 %v4501, %v4516
        %v4539 = vmul.f32 %v4502, %v4517
        %v4540 = vmul.f32 %v4503, %v4516
        %v4541 = vmul.f32 %v4504, %v4517
        %v4542 = vmul.f32 %v4505, %v4516
        %v4543 = vmul.f32 %v4506, %v4517
        %v4544 = vmul.f32 %v4507, %v4516
        %v4545 = vmul.f32 %v4508, %v4517
        %v4546 = vmul.f32 %v4509, %v4516
        %v4547 = vmul.f32 %v4510, %v4517
        %v4548 = vmul.f32 %v4511, %v4516
        %v4549 = vmul.f32 %v4512, %v4517
        %v4550 = vmul.f32 %v4513, %v4516
        %v4551 = vmul.f32 %v4514, %v4517
        %v4552 = vadd.f32 %v4448, %v4520
        %v4553 = vadd.f32 %v4449, %v4521
        %v4554 = vadd.f32 %v4450, %v4522
        %v4555 = vadd.f32 %v4451, %v4523
        %v4556 = vadd.f32 %v4452, %v4524
        %v4557 = vadd.f32 %v4453, %v4525
        %v4558 = vadd.f32 %v4454, %v4526
        %v4559 = vadd.f32 %v4455, %v4527
        %v4560 = vadd.f32 %v4456, %v4528
        %v4561 = vadd.f32 %v4457, %v4529
        %v4562 = vadd.f32 %v4458, %v4530
        %v4563 = vadd.f32 %v4459, %v4531
        %v4564 = vadd.f32 %v4460, %v4532
        %v4565 = vadd.f32 %v4461, %v4533
        %v4566 = vadd.f32 %v4462, %v4534
        %v4567 = vadd.f32 %v4463, %v4535
        %v4568 = vadd.f32 %v4464, %v4536
        %v4569 = vadd.f32 %v4465, %v4537
        %v4570 = vadd.f32 %v4466, %v4538
        %v4571 = vadd.f32 %v4467, %v4539
        %v4572 = vadd.f32 %v4468, %v4540
        %v4573 = vadd.f32 %v4469, %v4541
        %v4574 = vadd.f32 %v4470, %v4542
        %v4575 = vadd.f32 %v4471, %v4543
        %v4576 = vadd.f32 %v4472, %v4544
        %v4577 = vadd.f32 %v4473, %v4545
        %v4578 = vadd.f32 %v4474, %v4546
        %v4579 = vadd.f32 %v4475, %v4547
        %v4580 = vadd.f32 %v4476, %v4548
        %v4581 = vadd.f32 %v4477, %v4549
        %v4582 = vadd.f32 %v4478, %v4550
        %v4583 = vadd.f32 %v4479, %v4551
        %s4584 = scalar_lea.vmem %s4168, 4
        %v4585 = vld [vmem:[%s4584] ss:$8 sm:$0x3]
        %s4586 = scalar_lea.vmem [#allocation2], 1600
        %v4587 = vld [vmem:[%s4586] sm:$0xff]
        %v4588 = vld [vmem:[%s4586 + $0x8] sm:$0xff]
        %v4589 = vld [vmem:[%s4586 + $0x10] sm:$0xff]
        %v4590 = vld [vmem:[%s4586 + $0x18] sm:$0xff]
        %v4591 = vld [vmem:[%s4586 + $0x20] sm:$0xff]
        %v4592 = vld [vmem:[%s4586 + $0x28] sm:$0xff]
        %v4593 = vld [vmem:[%s4586 + $0x30] sm:$0xff]
        %v4594 = vld [vmem:[%s4586 + $0x38] sm:$0xff]
        %v4595 = vld [vmem:[%s4586 + $0x40] sm:$0xff]
        %v4596 = vld [vmem:[%s4586 + $0x48] sm:$0xff]
        %v4597 = vld [vmem:[%s4586 + $0x50] sm:$0xff]
        %v4598 = vld [vmem:[%s4586 + $0x58] sm:$0xff]
        %v4599 = vld [vmem:[%s4586 + $0x60] sm:$0xff]
        %v4600 = vld [vmem:[%s4586 + $0x68] sm:$0xff]
        %v4601 = vld [vmem:[%s4586 + $0x70] sm:$0xff]
        %v4602 = vld [vmem:[%s4586 + $0x78] sm:$0xff]
        %v4603 = vld [vmem:[%s4586 + $0xc0] sm:$0xff]
        %v4604 = vld [vmem:[%s4586 + $0xc8] sm:$0xff]
        %v4605 = vld [vmem:[%s4586 + $0xd0] sm:$0xff]
        %v4606 = vld [vmem:[%s4586 + $0xd8] sm:$0xff]
        %v4607 = vld [vmem:[%s4586 + $0xe0] sm:$0xff]
        %v4608 = vld [vmem:[%s4586 + $0xe8] sm:$0xff]
        %v4609 = vld [vmem:[%s4586 + $0xf0] sm:$0xff]
        %v4610 = vld [vmem:[%s4586 + $0xf8] sm:$0xff]
        %v4611 = vld [vmem:[%s4586 + $0x100] sm:$0xff]
        %v4612 = vld [vmem:[%s4586 + $0x108] sm:$0xff]
        %v4613 = vld [vmem:[%s4586 + $0x110] sm:$0xff]
        %v4614 = vld [vmem:[%s4586 + $0x118] sm:$0xff]
        %v4615 = vld [vmem:[%s4586 + $0x120] sm:$0xff]
        %v4616 = vld [vmem:[%s4586 + $0x128] sm:$0xff]
        %v4617 = vld [vmem:[%s4586 + $0x130] sm:$0xff]
        %v4618 = vld [vmem:[%s4586 + $0x138] sm:$0xff]
        %v4620 = vperm.slane %v4585, 0
        %v4621 = vperm.slane %v4585, 1
        %v4624 = vmul.f32 %v4587, %v4620
        %v4625 = vmul.f32 %v4588, %v4621
        %v4626 = vmul.f32 %v4589, %v4620
        %v4627 = vmul.f32 %v4590, %v4621
        %v4628 = vmul.f32 %v4591, %v4620
        %v4629 = vmul.f32 %v4592, %v4621
        %v4630 = vmul.f32 %v4593, %v4620
        %v4631 = vmul.f32 %v4594, %v4621
        %v4632 = vmul.f32 %v4595, %v4620
        %v4633 = vmul.f32 %v4596, %v4621
        %v4634 = vmul.f32 %v4597, %v4620
        %v4635 = vmul.f32 %v4598, %v4621
        %v4636 = vmul.f32 %v4599, %v4620
        %v4637 = vmul.f32 %v4600, %v4621
        %v4638 = vmul.f32 %v4601, %v4620
        %v4639 = vmul.f32 %v4602, %v4621
        %v4640 = vmul.f32 %v4603, %v4620
        %v4641 = vmul.f32 %v4604, %v4621
        %v4642 = vmul.f32 %v4605, %v4620
        %v4643 = vmul.f32 %v4606, %v4621
        %v4644 = vmul.f32 %v4607, %v4620
        %v4645 = vmul.f32 %v4608, %v4621
        %v4646 = vmul.f32 %v4609, %v4620
        %v4647 = vmul.f32 %v4610, %v4621
        %v4648 = vmul.f32 %v4611, %v4620
        %v4649 = vmul.f32 %v4612, %v4621
        %v4650 = vmul.f32 %v4613, %v4620
        %v4651 = vmul.f32 %v4614, %v4621
        %v4652 = vmul.f32 %v4615, %v4620
        %v4653 = vmul.f32 %v4616, %v4621
        %v4654 = vmul.f32 %v4617, %v4620
        %v4655 = vmul.f32 %v4618, %v4621
        %v4656 = vadd.f32 %v4552, %v4624
        %v4657 = vadd.f32 %v4553, %v4625
        %v4658 = vadd.f32 %v4554, %v4626
        %v4659 = vadd.f32 %v4555, %v4627
        %v4660 = vadd.f32 %v4556, %v4628
        %v4661 = vadd.f32 %v4557, %v4629
        %v4662 = vadd.f32 %v4558, %v4630
        %v4663 = vadd.f32 %v4559, %v4631
        %v4664 = vadd.f32 %v4560, %v4632
        %v4665 = vadd.f32 %v4561, %v4633
        %v4666 = vadd.f32 %v4562, %v4634
        %v4667 = vadd.f32 %v4563, %v4635
        %v4668 = vadd.f32 %v4564, %v4636
        %v4669 = vadd.f32 %v4565, %v4637
        %v4670 = vadd.f32 %v4566, %v4638
        %v4671 = vadd.f32 %v4567, %v4639
        %v4672 = vadd.f32 %v4568, %v4640
        %v4673 = vadd.f32 %v4569, %v4641
        %v4674 = vadd.f32 %v4570, %v4642
        %v4675 = vadd.f32 %v4571, %v4643
        %v4676 = vadd.f32 %v4572, %v4644
        %v4677 = vadd.f32 %v4573, %v4645
        %v4678 = vadd.f32 %v4574, %v4646
        %v4679 = vadd.f32 %v4575, %v4647
        %v4680 = vadd.f32 %v4576, %v4648
        %v4681 = vadd.f32 %v4577, %v4649
        %v4682 = vadd.f32 %v4578, %v4650
        %v4683 = vadd.f32 %v4579, %v4651
        %v4684 = vadd.f32 %v4580, %v4652
        %v4685 = vadd.f32 %v4581, %v4653
        %v4686 = vadd.f32 %v4582, %v4654
        %v4687 = vadd.f32 %v4583, %v4655
        %v4688 = vld [vmem:[%s803] sm:$0x3]
        %v4690 = vperm.slane %v4688, 0
        %v4691 = vperm.slane %v4688, 1
        %v4694 = vadd.f32 %v4656, %v4690
        %v4695 = vadd.f32 %v4657, %v4691
        %v4696 = vadd.f32 %v4658, %v4690
        %v4697 = vadd.f32 %v4659, %v4691
        %v4698 = vadd.f32 %v4660, %v4690
        %v4699 = vadd.f32 %v4661, %v4691
        %v4700 = vadd.f32 %v4662, %v4690
        %v4701 = vadd.f32 %v4663, %v4691
        %v4702 = vadd.f32 %v4664, %v4690
        %v4703 = vadd.f32 %v4665, %v4691
        %v4704 = vadd.f32 %v4666, %v4690
        %v4705 = vadd.f32 %v4667, %v4691
        %v4706 = vadd.f32 %v4668, %v4690
        %v4707 = vadd.f32 %v4669, %v4691
        %v4708 = vadd.f32 %v4670, %v4690
        %v4709 = vadd.f32 %v4671, %v4691
        %v4710 = vadd.f32 %v4672, %v4690
        %v4711 = vadd.f32 %v4673, %v4691
        %v4712 = vadd.f32 %v4674, %v4690
        %v4713 = vadd.f32 %v4675, %v4691
        %v4714 = vadd.f32 %v4676, %v4690
        %v4715 = vadd.f32 %v4677, %v4691
        %v4716 = vadd.f32 %v4678, %v4690
        %v4717 = vadd.f32 %v4679, %v4691
        %v4718 = vadd.f32 %v4680, %v4690
        %v4719 = vadd.f32 %v4681, %v4691
        %v4720 = vadd.f32 %v4682, %v4690
        %v4721 = vadd.f32 %v4683, %v4691
        %v4722 = vadd.f32 %v4684, %v4690
        %v4723 = vadd.f32 %v4685, %v4691
        %v4724 = vadd.f32 %v4686, %v4690
        %v4725 = vadd.f32 %v4687, %v4691
        %v4726 = vmul.f32 %v4694, 0.5
        %v4727 = vmul.f32 %v4695, 0.5
        %v4728 = vmul.f32 %v4696, 0.5
        %v4729 = vmul.f32 %v4697, 0.5
        %v4730 = vmul.f32 %v4698, 0.5
        %v4731 = vmul.f32 %v4699, 0.5
        %v4732 = vmul.f32 %v4700, 0.5
        %v4733 = vmul.f32 %v4701, 0.5
        %v4734 = vmul.f32 %v4702, 0.5
        %v4735 = vmul.f32 %v4703, 0.5
        %v4736 = vmul.f32 %v4704, 0.5
        %v4737 = vmul.f32 %v4705, 0.5
        %v4738 = vmul.f32 %v4706, 0.5
        %v4739 = vmul.f32 %v4707, 0.5
        %v4740 = vmul.f32 %v4708, 0.5
        %v4741 = vmul.f32 %v4709, 0.5
        %v4742 = vmul.f32 %v4710, 0.5
        %v4743 = vmul.f32 %v4711, 0.5
        %v4744 = vmul.f32 %v4712, 0.5
        %v4745 = vmul.f32 %v4713, 0.5
        %v4746 = vmul.f32 %v4714, 0.5
        %v4747 = vmul.f32 %v4715, 0.5
        %v4748 = vmul.f32 %v4716, 0.5
        %v4749 = vmul.f32 %v4717, 0.5
        %v4750 = vmul.f32 %v4718, 0.5
        %v4751 = vmul.f32 %v4719, 0.5
        %v4752 = vmul.f32 %v4720, 0.5
        %v4753 = vmul.f32 %v4721, 0.5
        %v4754 = vmul.f32 %v4722, 0.5
        %v4755 = vmul.f32 %v4723, 0.5
        %v4756 = vmul.f32 %v4724, 0.5
        %v4757 = vmul.f32 %v4725, 0.5
        %v4758 = vmul.f32 %v4694, %v4694
        %v4759 = vmul.f32 %v4695, %v4695
        %v4760 = vmul.f32 %v4696, %v4696
        %v4761 = vmul.f32 %v4697, %v4697
        %v4762 = vmul.f32 %v4698, %v4698
        %v4763 = vmul.f32 %v4699, %v4699
        %v4764 = vmul.f32 %v4700, %v4700
        %v4765 = vmul.f32 %v4701, %v4701
        %v4766 = vmul.f32 %v4702, %v4702
        %v4767 = vmul.f32 %v4703, %v4703
        %v4768 = vmul.f32 %v4704, %v4704
        %v4769 = vmul.f32 %v4705, %v4705
        %v4770 = vmul.f32 %v4706, %v4706
        %v4771 = vmul.f32 %v4707, %v4707
        %v4772 = vmul.f32 %v4708, %v4708
        %v4773 = vmul.f32 %v4709, %v4709
        %v4774 = vmul.f32 %v4710, %v4710
        %v4775 = vmul.f32 %v4711, %v4711
        %v4776 = vmul.f32 %v4712, %v4712
        %v4777 = vmul.f32 %v4713, %v4713
        %v4778 = vmul.f32 %v4714, %v4714
        %v4779 = vmul.f32 %v4715, %v4715
        %v4780 = vmul.f32 %v4716, %v4716
        %v4781 = vmul.f32 %v4717, %v4717
        %v4782 = vmul.f32 %v4718, %v4718
        %v4783 = vmul.f32 %v4719, %v4719
        %v4784 = vmul.f32 %v4720, %v4720
        %v4785 = vmul.f32 %v4721, %v4721
        %v4786 = vmul.f32 %v4722, %v4722
        %v4787 = vmul.f32 %v4723, %v4723
        %v4788 = vmul.f32 %v4724, %v4724
        %v4789 = vmul.f32 %v4725, %v4725
        %v4790 = vmul.f32 %v4758, %v4694
        %v4791 = vmul.f32 %v4759, %v4695
        %v4792 = vmul.f32 %v4760, %v4696
        %v4793 = vmul.f32 %v4761, %v4697
        %v4794 = vmul.f32 %v4762, %v4698
        %v4795 = vmul.f32 %v4763, %v4699
        %v4796 = vmul.f32 %v4764, %v4700
        %v4797 = vmul.f32 %v4765, %v4701
        %v4798 = vmul.f32 %v4766, %v4702
        %v4799 = vmul.f32 %v4767, %v4703
        %v4800 = vmul.f32 %v4768, %v4704
        %v4801 = vmul.f32 %v4769, %v4705
        %v4802 = vmul.f32 %v4770, %v4706
        %v4803 = vmul.f32 %v4771, %v4707
        %v4804 = vmul.f32 %v4772, %v4708
        %v4805 = vmul.f32 %v4773, %v4709
        %v4806 = vmul.f32 %v4774, %v4710
        %v4807 = vmul.f32 %v4775, %v4711
        %v4808 = vmul.f32 %v4776, %v4712
        %v4809 = vmul.f32 %v4777, %v4713
        %v4810 = vmul.f32 %v4778, %v4714
        %v4811 = vmul.f32 %v4779, %v4715
        %v4812 = vmul.f32 %v4780, %v4716
        %v4813 = vmul.f32 %v4781, %v4717
        %v4814 = vmul.f32 %v4782, %v4718
        %v4815 = vmul.f32 %v4783, %v4719
        %v4816 = vmul.f32 %v4784, %v4720
        %v4817 = vmul.f32 %v4785, %v4721
        %v4818 = vmul.f32 %v4786, %v4722
        %v4819 = vmul.f32 %v4787, %v4723
        %v4820 = vmul.f32 %v4788, %v4724
        %v4821 = vmul.f32 %v4789, %v4725
        %v4822 = vmul.f32 %v4790, 0.044715
        %v4823 = vmul.f32 %v4791, 0.044715
        %v4824 = vmul.f32 %v4792, 0.044715
        %v4825 = vmul.f32 %v4793, 0.044715
        %v4826 = vmul.f32 %v4794, 0.044715
        %v4827 = vmul.f32 %v4795, 0.044715
        %v4828 = vmul.f32 %v4796, 0.044715
        %v4829 = vmul.f32 %v4797, 0.044715
        %v4830 = vmul.f32 %v4798, 0.044715
        %v4831 = vmul.f32 %v4799, 0.044715
        %v4832 = vmul.f32 %v4800, 0.044715
        %v4833 = vmul.f32 %v4801, 0.044715
        %v4834 = vmul.f32 %v4802, 0.044715
        %v4835 = vmul.f32 %v4803, 0.044715
        %v4836 = vmul.f32 %v4804, 0.044715
        %v4837 = vmul.f32 %v4805, 0.044715
        %v4838 = vmul.f32 %v4806, 0.044715
        %v4839 = vmul.f32 %v4807, 0.044715
        %v4840 = vmul.f32 %v4808, 0.044715
        %v4841 = vmul.f32 %v4809, 0.044715
        %v4842 = vmul.f32 %v4810, 0.044715
        %v4843 = vmul.f32 %v4811, 0.044715
        %v4844 = vmul.f32 %v4812, 0.044715
        %v4845 = vmul.f32 %v4813, 0.044715
        %v4846 = vmul.f32 %v4814, 0.044715
        %v4847 = vmul.f32 %v4815, 0.044715
        %v4848 = vmul.f32 %v4816, 0.044715
        %v4849 = vmul.f32 %v4817, 0.044715
        %v4850 = vmul.f32 %v4818, 0.044715
        %v4851 = vmul.f32 %v4819, 0.044715
        %v4852 = vmul.f32 %v4820, 0.044715
        %v4853 = vmul.f32 %v4821, 0.044715
        %v4854 = vadd.f32 %v4694, %v4822
        %v4855 = vadd.f32 %v4695, %v4823
        %v4856 = vadd.f32 %v4696, %v4824
        %v4857 = vadd.f32 %v4697, %v4825
        %v4858 = vadd.f32 %v4698, %v4826
        %v4859 = vadd.f32 %v4699, %v4827
        %v4860 = vadd.f32 %v4700, %v4828
        %v4861 = vadd.f32 %v4701, %v4829
        %v4862 = vadd.f32 %v4702, %v4830
        %v4863 = vadd.f32 %v4703, %v4831
        %v4864 = vadd.f32 %v4704, %v4832
        %v4865 = vadd.f32 %v4705, %v4833
        %v4866 = vadd.f32 %v4706, %v4834
        %v4867 = vadd.f32 %v4707, %v4835
        %v4868 = vadd.f32 %v4708, %v4836
        %v4869 = vadd.f32 %v4709, %v4837
        %v4870 = vadd.f32 %v4710, %v4838
        %v4871 = vadd.f32 %v4711, %v4839
        %v4872 = vadd.f32 %v4712, %v4840
        %v4873 = vadd.f32 %v4713, %v4841
        %v4874 = vadd.f32 %v4714, %v4842
        %v4875 = vadd.f32 %v4715, %v4843
        %v4876 = vadd.f32 %v4716, %v4844
        %v4877 = vadd.f32 %v4717, %v4845
        %v4878 = vadd.f32 %v4718, %v4846
        %v4879 = vadd.f32 %v4719, %v4847
        %v4880 = vadd.f32 %v4720, %v4848
        %v4881 = vadd.f32 %v4721, %v4849
        %v4882 = vadd.f32 %v4722, %v4850
        %v4883 = vadd.f32 %v4723, %v4851
        %v4884 = vadd.f32 %v4724, %v4852
        %v4885 = vadd.f32 %v4725, %v4853
        %v4886 = vmul.f32 %v4854, 0.7978846
        %v4887 = vmul.f32 %v4855, 0.7978846
        %v4888 = vmul.f32 %v4856, 0.7978846
        %v4889 = vmul.f32 %v4857, 0.7978846
        %v4890 = vmul.f32 %v4858, 0.7978846
        %v4891 = vmul.f32 %v4859, 0.7978846
        %v4892 = vmul.f32 %v4860, 0.7978846
        %v4893 = vmul.f32 %v4861, 0.7978846
        %v4894 = vmul.f32 %v4862, 0.7978846
        %v4895 = vmul.f32 %v4863, 0.7978846
        %v4896 = vmul.f32 %v4864, 0.7978846
        %v4897 = vmul.f32 %v4865, 0.7978846
        %v4898 = vmul.f32 %v4866, 0.7978846
        %v4899 = vmul.f32 %v4867, 0.7978846
        %v4900 = vmul.f32 %v4868, 0.7978846
        %v4901 = vmul.f32 %v4869, 0.7978846
        %v4902 = vmul.f32 %v4870, 0.7978846
        %v4903 = vmul.f32 %v4871, 0.7978846
        %v4904 = vmul.f32 %v4872, 0.7978846
        %v4905 = vmul.f32 %v4873, 0.7978846
        %v4906 = vmul.f32 %v4874, 0.7978846
        %v4907 = vmul.f32 %v4875, 0.7978846
        %v4908 = vmul.f32 %v4876, 0.7978846
        %v4909 = vmul.f32 %v4877, 0.7978846
        %v4910 = vmul.f32 %v4878, 0.7978846
        %v4911 = vmul.f32 %v4879, 0.7978846
        %v4912 = vmul.f32 %v4880, 0.7978846
        %v4913 = vmul.f32 %v4881, 0.7978846
        %v4914 = vmul.f32 %v4882, 0.7978846
        %v4915 = vmul.f32 %v4883, 0.7978846
        %v4916 = vmul.f32 %v4884, 0.7978846
        %v4917 = vmul.f32 %v4885, 0.7978846
        %v4918 = vtanh.pop %v4886
        %v4919 = vtanh.pop %v4887
        %v4920 = vtanh.pop %v4888
        %v4921 = vtanh.pop %v4889
        %v4922 = vtanh.pop %v4890
        %v4923 = vtanh.pop %v4891
        %v4924 = vtanh.pop %v4892
        %v4925 = vtanh.pop %v4893
        %v4926 = vtanh.pop %v4894
        %v4927 = vtanh.pop %v4895
        %v4928 = vtanh.pop %v4896
        %v4929 = vtanh.pop %v4897
        %v4930 = vtanh.pop %v4898
        %v4931 = vtanh.pop %v4899
        %v4932 = vtanh.pop %v4900
        %v4933 = vtanh.pop %v4901
        %v4934 = vtanh.pop %v4902
        %v4935 = vtanh.pop %v4903
        %v4936 = vtanh.pop %v4904
        %v4937 = vtanh.pop %v4905
        %v4938 = vtanh.pop %v4906
        %v4939 = vtanh.pop %v4907
        %v4940 = vtanh.pop %v4908
        %v4941 = vtanh.pop %v4909
        %v4942 = vtanh.pop %v4910
        %v4943 = vtanh.pop %v4911
        %v4944 = vtanh.pop %v4912
        %v4945 = vtanh.pop %v4913
        %v4946 = vtanh.pop %v4914
        %v4947 = vtanh.pop %v4915
        %v4948 = vtanh.pop %v4916
        %v4949 = vtanh.pop %v4917
        %v4950 = vadd.f32 %v4918, 1.0
        %v4951 = vadd.f32 %v4919, 1.0
        %v4952 = vadd.f32 %v4920, 1.0
        %v4953 = vadd.f32 %v4921, 1.0
        %v4954 = vadd.f32 %v4922, 1.0
        %v4955 = vadd.f32 %v4923, 1.0
        %v4956 = vadd.f32 %v4924, 1.0
        %v4957 = vadd.f32 %v4925, 1.0
        %v4958 = vadd.f32 %v4926, 1.0
        %v4959 = vadd.f32 %v4927, 1.0
        %v4960 = vadd.f32 %v4928, 1.0
        %v4961 = vadd.f32 %v4929, 1.0
        %v4962 = vadd.f32 %v4930, 1.0
        %v4963 = vadd.f32 %v4931, 1.0
        %v4964 = vadd.f32 %v4932, 1.0
        %v4965 = vadd.f32 %v4933, 1.0
        %v4966 = vadd.f32 %v4934, 1.0
        %v4967 = vadd.f32 %v4935, 1.0
        %v4968 = vadd.f32 %v4936, 1.0
        %v4969 = vadd.f32 %v4937, 1.0
        %v4970 = vadd.f32 %v4938, 1.0
        %v4971 = vadd.f32 %v4939, 1.0
        %v4972 = vadd.f32 %v4940, 1.0
        %v4973 = vadd.f32 %v4941, 1.0
        %v4974 = vadd.f32 %v4942, 1.0
        %v4975 = vadd.f32 %v4943, 1.0
        %v4976 = vadd.f32 %v4944, 1.0
        %v4977 = vadd.f32 %v4945, 1.0
        %v4978 = vadd.f32 %v4946, 1.0
        %v4979 = vadd.f32 %v4947, 1.0
        %v4980 = vadd.f32 %v4948, 1.0
        %v4981 = vadd.f32 %v4949, 1.0
        %v4982 = vmul.f32 %v4726, %v4950
        %v4983 = vmul.f32 %v4727, %v4951
        %v4984 = vmul.f32 %v4728, %v4952
        %v4985 = vmul.f32 %v4729, %v4953
        %v4986 = vmul.f32 %v4730, %v4954
        %v4987 = vmul.f32 %v4731, %v4955
        %v4988 = vmul.f32 %v4732, %v4956
        %v4989 = vmul.f32 %v4733, %v4957
        %v4990 = vmul.f32 %v4734, %v4958
        %v4991 = vmul.f32 %v4735, %v4959
        %v4992 = vmul.f32 %v4736, %v4960
        %v4993 = vmul.f32 %v4737, %v4961
        %v4994 = vmul.f32 %v4738, %v4962
        %v4995 = vmul.f32 %v4739, %v4963
        %v4996 = vmul.f32 %v4740, %v4964
        %v4997 = vmul.f32 %v4741, %v4965
        %v4998 = vmul.f32 %v4742, %v4966
        %v4999 = vmul.f32 %v4743, %v4967
        %v5000 = vmul.f32 %v4744, %v4968
        %v5001 = vmul.f32 %v4745, %v4969
        %v5002 = vmul.f32 %v4746, %v4970
        %v5003 = vmul.f32 %v4747, %v4971
        %v5004 = vmul.f32 %v4748, %v4972
        %v5005 = vmul.f32 %v4749, %v4973
        %v5006 = vmul.f32 %v4750, %v4974
        %v5007 = vmul.f32 %v4751, %v4975
        %v5008 = vmul.f32 %v4752, %v4976
        %v5009 = vmul.f32 %v4753, %v4977
        %v5010 = vmul.f32 %v4754, %v4978
        %v5011 = vmul.f32 %v4755, %v4979
        %v5012 = vmul.f32 %v4756, %v4980
        %v5013 = vmul.f32 %v4757, %v4981
        %v5014 = vld [vmem:[%s811] sm:$0x3]
        %v5016 = vperm.slane %v5014, 0
        %v5017 = vperm.slane %v5014, 1
        %v5020 = vmul.f32 %v4982, %v5016
        %v5021 = vmul.f32 %v4983, %v5017
        %v5022 = vmul.f32 %v4984, %v5016
        %v5023 = vmul.f32 %v4985, %v5017
        %v5024 = vmul.f32 %v4986, %v5016
        %v5025 = vmul.f32 %v4987, %v5017
        %v5026 = vmul.f32 %v4988, %v5016
        %v5027 = vmul.f32 %v4989, %v5017
        %v5028 = vmul.f32 %v4990, %v5016
        %v5029 = vmul.f32 %v4991, %v5017
        %v5030 = vmul.f32 %v4992, %v5016
        %v5031 = vmul.f32 %v4993, %v5017
        %v5032 = vmul.f32 %v4994, %v5016
        %v5033 = vmul.f32 %v4995, %v5017
        %v5034 = vmul.f32 %v4996, %v5016
        %v5035 = vmul.f32 %v4997, %v5017
        %v5036 = vmul.f32 %v4998, %v5016
        %v5037 = vmul.f32 %v4999, %v5017
        %v5038 = vmul.f32 %v5000, %v5016
        %v5039 = vmul.f32 %v5001, %v5017
        %v5040 = vmul.f32 %v5002, %v5016
        %v5041 = vmul.f32 %v5003, %v5017
        %v5042 = vmul.f32 %v5004, %v5016
        %v5043 = vmul.f32 %v5005, %v5017
        %v5044 = vmul.f32 %v5006, %v5016
        %v5045 = vmul.f32 %v5007, %v5017
        %v5046 = vmul.f32 %v5008, %v5016
        %v5047 = vmul.f32 %v5009, %v5017
        %v5048 = vmul.f32 %v5010, %v5016
        %v5049 = vmul.f32 %v5011, %v5017
        %v5050 = vmul.f32 %v5012, %v5016
        %v5051 = vmul.f32 %v5013, %v5017
        %v5052 = vld [vmem:[%s819] sm:$0x3]
        %v5054 = vperm.slane %v5052, 0
        %v5055 = vperm.slane %v5052, 1
        %v5058 = vadd.f32 %v5020, %v5054
        %v5059 = vadd.f32 %v5021, %v5055
        %v5060 = vadd.f32 %v5022, %v5054
        %v5061 = vadd.f32 %v5023, %v5055
        %v5062 = vadd.f32 %v5024, %v5054
        %v5063 = vadd.f32 %v5025, %v5055
        %v5064 = vadd.f32 %v5026, %v5054
        %v5065 = vadd.f32 %v5027, %v5055
        %v5066 = vadd.f32 %v5028, %v5054
        %v5067 = vadd.f32 %v5029, %v5055
        %v5068 = vadd.f32 %v5030, %v5054
        %v5069 = vadd.f32 %v5031, %v5055
        %v5070 = vadd.f32 %v5032, %v5054
        %v5071 = vadd.f32 %v5033, %v5055
        %v5072 = vadd.f32 %v5034, %v5054
        %v5073 = vadd.f32 %v5035, %v5055
        %v5074 = vadd.f32 %v5036, %v5054
        %v5075 = vadd.f32 %v5037, %v5055
        %v5076 = vadd.f32 %v5038, %v5054
        %v5077 = vadd.f32 %v5039, %v5055
        %v5078 = vadd.f32 %v5040, %v5054
        %v5079 = vadd.f32 %v5041, %v5055
        %v5080 = vadd.f32 %v5042, %v5054
        %v5081 = vadd.f32 %v5043, %v5055
        %v5082 = vadd.f32 %v5044, %v5054
        %v5083 = vadd.f32 %v5045, %v5055
        %v5084 = vadd.f32 %v5046, %v5054
        %v5085 = vadd.f32 %v5047, %v5055
        %v5086 = vadd.f32 %v5048, %v5054
        %v5087 = vadd.f32 %v5049, %v5055
        %v5088 = vadd.f32 %v5050, %v5054
        %v5089 = vadd.f32 %v5051, %v5055
        %v5090 = vadd.f32 %v3339, %v5058
        %v5091 = vadd.f32 %v3340, %v5059
        %v5092 = vadd.f32 %v3341, %v5060
        %v5093 = vadd.f32 %v3342, %v5061
        %v5094 = vadd.f32 %v3343, %v5062
        %v5095 = vadd.f32 %v3344, %v5063
        %v5096 = vadd.f32 %v3345, %v5064
        %v5097 = vadd.f32 %v3346, %v5065
        %v5098 = vadd.f32 %v3347, %v5066
        %v5099 = vadd.f32 %v3348, %v5067
        %v5100 = vadd.f32 %v3349, %v5068
        %v5101 = vadd.f32 %v3350, %v5069
        %v5102 = vadd.f32 %v3351, %v5070
        %v5103 = vadd.f32 %v3352, %v5071
        %v5104 = vadd.f32 %v3353, %v5072
        %v5105 = vadd.f32 %v3354, %v5073
        %v5106 = vadd.f32 %v3355, %v5074
        %v5107 = vadd.f32 %v3356, %v5075
        %v5108 = vadd.f32 %v3357, %v5076
        %v5109 = vadd.f32 %v3358, %v5077
        %v5110 = vadd.f32 %v3359, %v5078
        %v5111 = vadd.f32 %v3360, %v5079
        %v5112 = vadd.f32 %v3361, %v5080
        %v5113 = vadd.f32 %v3362, %v5081
        %v5114 = vadd.f32 %v3363, %v5082
        %v5115 = vadd.f32 %v3364, %v5083
        %v5116 = vadd.f32 %v3365, %v5084
        %v5117 = vadd.f32 %v3366, %v5085
        %v5118 = vadd.f32 %v3367, %v5086
        %v5119 = vadd.f32 %v3368, %v5087
        %v5120 = vadd.f32 %v3369, %v5088
        %v5121 = vadd.f32 %v3370, %v5089
        %v5122 = vpack.c.bf16 %v5092, %v5090
        %v5123 = vpack.c.bf16 %v5093, %v5091
        %v5124 = vpack.c.bf16 %v5096, %v5094
        %v5125 = vpack.c.bf16 %v5097, %v5095
        %v5126 = vpack.c.bf16 %v5100, %v5098
        %v5127 = vpack.c.bf16 %v5101, %v5099
        %v5128 = vpack.c.bf16 %v5104, %v5102
        %v5129 = vpack.c.bf16 %v5105, %v5103
        %v5130 = vpack.c.bf16 %v5108, %v5106
        %v5131 = vpack.c.bf16 %v5109, %v5107
        %v5132 = vpack.c.bf16 %v5112, %v5110
        %v5133 = vpack.c.bf16 %v5113, %v5111
        %v5134 = vpack.c.bf16 %v5116, %v5114
        %v5135 = vpack.c.bf16 %v5117, %v5115
        %v5136 = vpack.c.bf16 %v5120, %v5118
        %v5137 = vpack.c.bf16 %v5121, %v5119
        %v5138 = vld [vmem:[%s641] sm:$0xff]
        %v5139 = vld [vmem:[%s641 + $0x8] sm:$0xff]
        %v5140 = vld [vmem:[%s641 + $0x10] sm:$0xff]
        %v5141 = vld [vmem:[%s641 + $0x18] sm:$0xff]
        %v5142 = vld [vmem:[%s641 + $0x20] sm:$0xff]
        %v5143 = vld [vmem:[%s641 + $0x28] sm:$0xff]
        %v5144 = vld [vmem:[%s641 + $0x30] sm:$0xff]
        %v5145 = vld [vmem:[%s641 + $0x38] sm:$0xff]
        %v5146 = vld [vmem:[%s641 + $0x40] sm:$0xff]
        %v5147 = vld [vmem:[%s641 + $0x48] sm:$0xff]
        %v5148 = vld [vmem:[%s641 + $0x50] sm:$0xff]
        %v5149 = vld [vmem:[%s641 + $0x58] sm:$0xff]
        %v5150 = vld [vmem:[%s641 + $0x60] sm:$0xff]
        %v5151 = vld [vmem:[%s641 + $0x68] sm:$0xff]
        %v5152 = vld [vmem:[%s641 + $0x70] sm:$0xff]
        %v5153 = vld [vmem:[%s641 + $0x78] sm:$0xff]
        %v5154 = vld [vmem:[%s641 + $0x80] sm:$0xff]
        %v5155 = vld [vmem:[%s641 + $0x88] sm:$0xff]
        %v5156 = vld [vmem:[%s641 + $0x90] sm:$0xff]
        %v5157 = vld [vmem:[%s641 + $0x98] sm:$0xff]
        %v5158 = vld [vmem:[%s641 + $0xa0] sm:$0xff]
        %v5159 = vld [vmem:[%s641 + $0xa8] sm:$0xff]
        %v5160 = vld [vmem:[%s641 + $0xb0] sm:$0xff]
        %v5161 = vld [vmem:[%s641 + $0xb8] sm:$0xff]
        %v5162 = vld [vmem:[%s641 + $0xc0] sm:$0xff]
        %v5163 = vld [vmem:[%s641 + $0xc8] sm:$0xff]
        %v5164 = vld [vmem:[%s641 + $0xd0] sm:$0xff]
        %v5165 = vld [vmem:[%s641 + $0xd8] sm:$0xff]
        %v5166 = vld [vmem:[%s641 + $0xe0] sm:$0xff]
        %v5167 = vld [vmem:[%s641 + $0xe8] sm:$0xff]
        %v5168 = vld [vmem:[%s641 + $0xf0] sm:$0xff]
        %v5169 = vld [vmem:[%s641 + $0xf8] sm:$0xff]
        %v5170 = vld [vmem:[%s827] sm:$0x3]
        %v5172 = vperm.slane %v5170, 0
        %v5173 = vperm.slane %v5170, 1
        %v5208 = vunpack.c.l.b16 %v5138
        %v5209 = vunpack.c.h.b16 %v5138
        %v5210 = vunpack.c.l.b16 %v5139
        %v5211 = vunpack.c.h.b16 %v5139
        %v5212 = vunpack.c.l.b16 %v5140
        %v5213 = vunpack.c.h.b16 %v5140
        %v5214 = vunpack.c.l.b16 %v5141
        %v5215 = vunpack.c.h.b16 %v5141
        %v5216 = vunpack.c.l.b16 %v5142
        %v5217 = vunpack.c.h.b16 %v5142
        %v5218 = vunpack.c.l.b16 %v5143
        %v5219 = vunpack.c.h.b16 %v5143
        %v5220 = vunpack.c.l.b16 %v5144
        %v5221 = vunpack.c.h.b16 %v5144
        %v5222 = vunpack.c.l.b16 %v5145
        %v5223 = vunpack.c.h.b16 %v5145
        %v5224 = vunpack.c.l.b16 %v5146
        %v5225 = vunpack.c.h.b16 %v5146
        %v5226 = vunpack.c.l.b16 %v5147
        %v5227 = vunpack.c.h.b16 %v5147
        %v5228 = vunpack.c.l.b16 %v5148
        %v5229 = vunpack.c.h.b16 %v5148
        %v5230 = vunpack.c.l.b16 %v5149
        %v5231 = vunpack.c.h.b16 %v5149
        %v5232 = vunpack.c.l.b16 %v5150
        %v5233 = vunpack.c.h.b16 %v5150
        %v5234 = vunpack.c.l.b16 %v5151
        %v5235 = vunpack.c.h.b16 %v5151
        %v5236 = vunpack.c.l.b16 %v5152
        %v5237 = vunpack.c.h.b16 %v5152
        %v5238 = vunpack.c.l.b16 %v5153
        %v5239 = vunpack.c.h.b16 %v5153
        %v5240 = vunpack.c.l.b16 %v5154
        %v5241 = vunpack.c.h.b16 %v5154
        %v5242 = vunpack.c.l.b16 %v5155
        %v5243 = vunpack.c.h.b16 %v5155
        %v5244 = vunpack.c.l.b16 %v5156
        %v5245 = vunpack.c.h.b16 %v5156
        %v5246 = vunpack.c.l.b16 %v5157
        %v5247 = vunpack.c.h.b16 %v5157
        %v5248 = vunpack.c.l.b16 %v5158
        %v5249 = vunpack.c.h.b16 %v5158
        %v5250 = vunpack.c.l.b16 %v5159
        %v5251 = vunpack.c.h.b16 %v5159
        %v5252 = vunpack.c.l.b16 %v5160
        %v5253 = vunpack.c.h.b16 %v5160
        %v5254 = vunpack.c.l.b16 %v5161
        %v5255 = vunpack.c.h.b16 %v5161
        %v5256 = vunpack.c.l.b16 %v5162
        %v5257 = vunpack.c.h.b16 %v5162
        %v5258 = vunpack.c.l.b16 %v5163
        %v5259 = vunpack.c.h.b16 %v5163
        %v5260 = vunpack.c.l.b16 %v5164
        %v5261 = vunpack.c.h.b16 %v5164
        %v5262 = vunpack.c.l.b16 %v5165
        %v5263 = vunpack.c.h.b16 %v5165
        %v5264 = vunpack.c.l.b16 %v5166
        %v5265 = vunpack.c.h.b16 %v5166
        %v5266 = vunpack.c.l.b16 %v5167
        %v5267 = vunpack.c.h.b16 %v5167
        %v5268 = vunpack.c.l.b16 %v5168
        %v5269 = vunpack.c.h.b16 %v5168
        %v5270 = vunpack.c.l.b16 %v5169
        %v5271 = vunpack.c.h.b16 %v5169
        %v5272 = vpack.c.b16 %v5210, %v5208
        %v5273 = vpack.c.b16 %v5211, %v5209
        %v5274 = vpack.c.b16 %v5214, %v5212
        %v5275 = vpack.c.b16 %v5215, %v5213
        %v5276 = vpack.c.b16 %v5218, %v5216
        %v5277 = vpack.c.b16 %v5219, %v5217
        %v5278 = vpack.c.b16 %v5222, %v5220
        %v5279 = vpack.c.b16 %v5223, %v5221
        %v5280 = vpack.c.b16 %v5226, %v5224
        %v5281 = vpack.c.b16 %v5227, %v5225
        %v5282 = vpack.c.b16 %v5230, %v5228
        %v5283 = vpack.c.b16 %v5231, %v5229
        %v5284 = vpack.c.b16 %v5234, %v5232
        %v5285 = vpack.c.b16 %v5235, %v5233
        %v5286 = vpack.c.b16 %v5238, %v5236
        %v5287 = vpack.c.b16 %v5239, %v5237
        %v5288 = vpack.c.b16 %v5242, %v5240
        %v5289 = vpack.c.b16 %v5243, %v5241
        %v5290 = vpack.c.b16 %v5246, %v5244
        %v5291 = vpack.c.b16 %v5247, %v5245
        %v5292 = vpack.c.b16 %v5250, %v5248
        %v5293 = vpack.c.b16 %v5251, %v5249
        %v5294 = vpack.c.b16 %v5254, %v5252
        %v5295 = vpack.c.b16 %v5255, %v5253
        %v5296 = vpack.c.b16 %v5258, %v5256
        %v5297 = vpack.c.b16 %v5259, %v5257
        %v5298 = vpack.c.b16 %v5262, %v5260
        %v5299 = vpack.c.b16 %v5263, %v5261
        %v5300 = vpack.c.b16 %v5266, %v5264
        %v5301 = vpack.c.b16 %v5267, %v5265
        %v5302 = vpack.c.b16 %v5270, %v5268
        %v5303 = vpack.c.b16 %v5271, %v5269
        %5336 = vmatpush.bf16.msra.mxu0 %v5286
        %5337 = vmatpush.bf16.msra.mxu0 %v5284
        %5338 = vmatpush.bf16.msra.mxu0 %v5282
        %5339 = vmatpush.bf16.msra.mxu0 %v5280
        %5340 = vmatpush.bf16.msra.mxu0 %v5278
        %5341 = vmatpush.bf16.msra.mxu0 %v5276
        %5342 = vmatpush.bf16.msra.mxu0 %v5274
        %5343 = vmatpush.bf16.msra.mxu0 %v5272
        %5344 = vmatmul.bf16.gmra.mxu0 %v5122
        %v5345 = vpop.f32.mrf.mxu0
        %v5346 = vadd.f32 %v5172, %v5345
        %v5347 = vpop.f32.mrf.mxu0
        %v5348 = vadd.f32 %v5172, %v5347
        %5349 = vmatmul.bf16.gmra.mxu0 %v5124
        %v5350 = vpop.f32.mrf.mxu0
        %v5351 = vadd.f32 %v5172, %v5350
        %v5352 = vpop.f32.mrf.mxu0
        %v5353 = vadd.f32 %v5172, %v5352
        %5354 = vmatmul.bf16.gmra.mxu0 %v5126
        %v5355 = vpop.f32.mrf.mxu0
        %v5356 = vadd.f32 %v5172, %v5355
        %v5357 = vpop.f32.mrf.mxu0
        %v5358 = vadd.f32 %v5172, %v5357
        %5359 = vmatmul.bf16.gmra.mxu0 %v5128
        %v5360 = vpop.f32.mrf.mxu0
        %v5361 = vadd.f32 %v5172, %v5360
        %v5362 = vpop.f32.mrf.mxu0
        %v5363 = vadd.f32 %v5172, %v5362
        %5364 = vmatmul.bf16.gmra.mxu0 %v5130
        %v5365 = vpop.f32.mrf.mxu0
        %v5366 = vadd.f32 %v5172, %v5365
        %v5367 = vpop.f32.mrf.mxu0
        %v5368 = vadd.f32 %v5172, %v5367
        %5369 = vmatmul.bf16.gmra.mxu0 %v5132
        %v5370 = vpop.f32.mrf.mxu0
        %v5371 = vadd.f32 %v5172, %v5370
        %v5372 = vpop.f32.mrf.mxu0
        %v5373 = vadd.f32 %v5172, %v5372
        %5374 = vmatmul.bf16.gmra.mxu0 %v5134
        %v5375 = vpop.f32.mrf.mxu0
        %v5376 = vadd.f32 %v5172, %v5375
        %v5377 = vpop.f32.mrf.mxu0
        %v5378 = vadd.f32 %v5172, %v5377
        %5379 = vmatmul.bf16.gmra.mxu0 %v5136
        %v5380 = vpop.f32.mrf.mxu0
        %v5381 = vadd.f32 %v5172, %v5380
        %v5382 = vpop.f32.mrf.mxu0
        %v5383 = vadd.f32 %v5172, %v5382
        %5384 = vdwg.mxu0
        %5385 = vmatpush.bf16.msra.mxu0 %v5302
        %5386 = vmatpush.bf16.msra.mxu0 %v5300
        %5387 = vmatpush.bf16.msra.mxu0 %v5298
        %5388 = vmatpush.bf16.msra.mxu0 %v5296
        %5389 = vmatpush.bf16.msra.mxu0 %v5294
        %5390 = vmatpush.bf16.msra.mxu0 %v5292
        %5391 = vmatpush.bf16.msra.mxu0 %v5290
        %5392 = vmatpush.bf16.msra.mxu0 %v5288
        %5393 = vmatmul.bf16.gmra.mxu0 %v5123
        %v5394 = vpop.f32.mrf.mxu0
        %v5395 = vadd.f32 %v5346, %v5394
        %v5396 = vpop.f32.mrf.mxu0
        %v5397 = vadd.f32 %v5348, %v5396
        %5398 = vmatmul.bf16.gmra.mxu0 %v5125
        %v5399 = vpop.f32.mrf.mxu0
        %v5400 = vadd.f32 %v5351, %v5399
        %v5401 = vpop.f32.mrf.mxu0
        %v5402 = vadd.f32 %v5353, %v5401
        %5403 = vmatmul.bf16.gmra.mxu0 %v5127
        %v5404 = vpop.f32.mrf.mxu0
        %v5405 = vadd.f32 %v5356, %v5404
        %v5406 = vpop.f32.mrf.mxu0
        %v5407 = vadd.f32 %v5358, %v5406
        %5408 = vmatmul.bf16.gmra.mxu0 %v5129
        %v5409 = vpop.f32.mrf.mxu0
        %v5410 = vadd.f32 %v5361, %v5409
        %v5411 = vpop.f32.mrf.mxu0
        %v5412 = vadd.f32 %v5363, %v5411
        %5413 = vmatmul.bf16.gmra.mxu0 %v5131
        %v5414 = vpop.f32.mrf.mxu0
        %v5415 = vadd.f32 %v5366, %v5414
        %v5416 = vpop.f32.mrf.mxu0
        %v5417 = vadd.f32 %v5368, %v5416
        %5418 = vmatmul.bf16.gmra.mxu0 %v5133
        %v5419 = vpop.f32.mrf.mxu0
        %v5420 = vadd.f32 %v5371, %v5419
        %v5421 = vpop.f32.mrf.mxu0
        %v5422 = vadd.f32 %v5373, %v5421
        %5423 = vmatmul.bf16.gmra.mxu0 %v5135
        %v5424 = vpop.f32.mrf.mxu0
        %v5425 = vadd.f32 %v5376, %v5424
        %v5426 = vpop.f32.mrf.mxu0
        %v5427 = vadd.f32 %v5378, %v5426
        %5428 = vmatmul.bf16.gmra.mxu0 %v5137
        %v5429 = vpop.f32.mrf.mxu0
        %v5430 = vadd.f32 %v5381, %v5429
        %v5431 = vpop.f32.mrf.mxu0
        %v5432 = vadd.f32 %v5383, %v5431
        %5433 = vdwg.mxu0
        %5434 = vmatpush.bf16.msra.mxu0 %v5287
        %5435 = vmatpush.bf16.msra.mxu0 %v5285
        %5436 = vmatpush.bf16.msra.mxu0 %v5283
        %5437 = vmatpush.bf16.msra.mxu0 %v5281
        %5438 = vmatpush.bf16.msra.mxu0 %v5279
        %5439 = vmatpush.bf16.msra.mxu0 %v5277
        %5440 = vmatpush.bf16.msra.mxu0 %v5275
        %5441 = vmatpush.bf16.msra.mxu0 %v5273
        %5442 = vmatmul.bf16.gmra.mxu0 %v5122
        %v5443 = vpop.f32.mrf.mxu0
        %v5444 = vadd.f32 %v5173, %v5443
        %v5445 = vpop.f32.mrf.mxu0
        %v5446 = vadd.f32 %v5173, %v5445
        %5447 = vmatmul.bf16.gmra.mxu0 %v5124
        %v5448 = vpop.f32.mrf.mxu0
        %v5449 = vadd.f32 %v5173, %v5448
        %v5450 = vpop.f32.mrf.mxu0
        %v5451 = vadd.f32 %v5173, %v5450
        %5452 = vmatmul.bf16.gmra.mxu0 %v5126
        %v5453 = vpop.f32.mrf.mxu0
        %v5454 = vadd.f32 %v5173, %v5453
        %v5455 = vpop.f32.mrf.mxu0
        %v5456 = vadd.f32 %v5173, %v5455
        %5457 = vmatmul.bf16.gmra.mxu0 %v5128
        %v5458 = vpop.f32.mrf.mxu0
        %v5459 = vadd.f32 %v5173, %v5458
        %v5460 = vpop.f32.mrf.mxu0
        %v5461 = vadd.f32 %v5173, %v5460
        %5462 = vmatmul.bf16.gmra.mxu0 %v5130
        %v5463 = vpop.f32.mrf.mxu0
        %v5464 = vadd.f32 %v5173, %v5463
        %v5465 = vpop.f32.mrf.mxu0
        %v5466 = vadd.f32 %v5173, %v5465
        %5467 = vmatmul.bf16.gmra.mxu0 %v5132
        %v5468 = vpop.f32.mrf.mxu0
        %v5469 = vadd.f32 %v5173, %v5468
        %v5470 = vpop.f32.mrf.mxu0
        %v5471 = vadd.f32 %v5173, %v5470
        %5472 = vmatmul.bf16.gmra.mxu0 %v5134
        %v5473 = vpop.f32.mrf.mxu0
        %v5474 = vadd.f32 %v5173, %v5473
        %v5475 = vpop.f32.mrf.mxu0
        %v5476 = vadd.f32 %v5173, %v5475
        %5477 = vmatmul.bf16.gmra.mxu0 %v5136
        %v5478 = vpop.f32.mrf.mxu0
        %v5479 = vadd.f32 %v5173, %v5478
        %v5480 = vpop.f32.mrf.mxu0
        %v5481 = vadd.f32 %v5173, %v5480
        %5482 = vdwg.mxu0
        %5483 = vmatpush.bf16.msra.mxu0 %v5303
        %5484 = vmatpush.bf16.msra.mxu0 %v5301
        %5485 = vmatpush.bf16.msra.mxu0 %v5299
        %5486 = vmatpush.bf16.msra.mxu0 %v5297
        %5487 = vmatpush.bf16.msra.mxu0 %v5295
        %5488 = vmatpush.bf16.msra.mxu0 %v5293
        %5489 = vmatpush.bf16.msra.mxu0 %v5291
        %5490 = vmatpush.bf16.msra.mxu0 %v5289
        %5491 = vmatmul.bf16.gmra.mxu0 %v5123
        %v5492 = vpop.f32.mrf.mxu0
        %v5493 = vadd.f32 %v5444, %v5492
        %v5494 = vpop.f32.mrf.mxu0
        %v5495 = vadd.f32 %v5446, %v5494
        %5496 = vmatmul.bf16.gmra.mxu0 %v5125
        %v5497 = vpop.f32.mrf.mxu0
        %v5498 = vadd.f32 %v5449, %v5497
        %v5499 = vpop.f32.mrf.mxu0
        %v5500 = vadd.f32 %v5451, %v5499
        %5501 = vmatmul.bf16.gmra.mxu0 %v5127
        %v5502 = vpop.f32.mrf.mxu0
        %v5503 = vadd.f32 %v5454, %v5502
        %v5504 = vpop.f32.mrf.mxu0
        %v5505 = vadd.f32 %v5456, %v5504
        %5506 = vmatmul.bf16.gmra.mxu0 %v5129
        %v5507 = vpop.f32.mrf.mxu0
        %v5508 = vadd.f32 %v5459, %v5507
        %v5509 = vpop.f32.mrf.mxu0
        %v5510 = vadd.f32 %v5461, %v5509
        %5511 = vmatmul.bf16.gmra.mxu0 %v5131
        %v5512 = vpop.f32.mrf.mxu0
        %v5513 = vadd.f32 %v5464, %v5512
        %v5514 = vpop.f32.mrf.mxu0
        %v5515 = vadd.f32 %v5466, %v5514
        %5516 = vmatmul.bf16.gmra.mxu0 %v5133
        %v5517 = vpop.f32.mrf.mxu0
        %v5518 = vadd.f32 %v5469, %v5517
        %v5519 = vpop.f32.mrf.mxu0
        %v5520 = vadd.f32 %v5471, %v5519
        %5521 = vmatmul.bf16.gmra.mxu0 %v5135
        %v5522 = vpop.f32.mrf.mxu0
        %v5523 = vadd.f32 %v5474, %v5522
        %v5524 = vpop.f32.mrf.mxu0
        %v5525 = vadd.f32 %v5476, %v5524
        %5526 = vmatmul.bf16.gmra.mxu0 %v5137
        %v5527 = vpop.f32.mrf.mxu0
        %v5528 = vadd.f32 %v5479, %v5527
        %v5529 = vpop.f32.mrf.mxu0
        %v5530 = vadd.f32 %v5481, %v5529
        %5531 = vdwg.mxu0
        %v5532 = vmul.f32 %v5395, 0.5
        %v5533 = vmul.f32 %v5493, 0.5
        %v5534 = vmul.f32 %v5397, 0.5
        %v5535 = vmul.f32 %v5495, 0.5
        %v5536 = vmul.f32 %v5400, 0.5
        %v5537 = vmul.f32 %v5498, 0.5
        %v5538 = vmul.f32 %v5402, 0.5
        %v5539 = vmul.f32 %v5500, 0.5
        %v5540 = vmul.f32 %v5405, 0.5
        %v5541 = vmul.f32 %v5503, 0.5
        %v5542 = vmul.f32 %v5407, 0.5
        %v5543 = vmul.f32 %v5505, 0.5
        %v5544 = vmul.f32 %v5410, 0.5
        %v5545 = vmul.f32 %v5508, 0.5
        %v5546 = vmul.f32 %v5412, 0.5
        %v5547 = vmul.f32 %v5510, 0.5
        %v5548 = vmul.f32 %v5415, 0.5
        %v5549 = vmul.f32 %v5513, 0.5
        %v5550 = vmul.f32 %v5417, 0.5
        %v5551 = vmul.f32 %v5515, 0.5
        %v5552 = vmul.f32 %v5420, 0.5
        %v5553 = vmul.f32 %v5518, 0.5
        %v5554 = vmul.f32 %v5422, 0.5
        %v5555 = vmul.f32 %v5520, 0.5
        %v5556 = vmul.f32 %v5425, 0.5
        %v5557 = vmul.f32 %v5523, 0.5
        %v5558 = vmul.f32 %v5427, 0.5
        %v5559 = vmul.f32 %v5525, 0.5
        %v5560 = vmul.f32 %v5430, 0.5
        %v5561 = vmul.f32 %v5528, 0.5
        %v5562 = vmul.f32 %v5432, 0.5
        %v5563 = vmul.f32 %v5530, 0.5
        %v5564 = vmul.f32 %v5395, %v5395
        %v5565 = vmul.f32 %v5493, %v5493
        %v5566 = vmul.f32 %v5397, %v5397
        %v5567 = vmul.f32 %v5495, %v5495
        %v5568 = vmul.f32 %v5400, %v5400
        %v5569 = vmul.f32 %v5498, %v5498
        %v5570 = vmul.f32 %v5402, %v5402
        %v5571 = vmul.f32 %v5500, %v5500
        %v5572 = vmul.f32 %v5405, %v5405
        %v5573 = vmul.f32 %v5503, %v5503
        %v5574 = vmul.f32 %v5407, %v5407
        %v5575 = vmul.f32 %v5505, %v5505
        %v5576 = vmul.f32 %v5410, %v5410
        %v5577 = vmul.f32 %v5508, %v5508
        %v5578 = vmul.f32 %v5412, %v5412
        %v5579 = vmul.f32 %v5510, %v5510
        %v5580 = vmul.f32 %v5415, %v5415
        %v5581 = vmul.f32 %v5513, %v5513
        %v5582 = vmul.f32 %v5417, %v5417
        %v5583 = vmul.f32 %v5515, %v5515
        %v5584 = vmul.f32 %v5420, %v5420
        %v5585 = vmul.f32 %v5518, %v5518
        %v5586 = vmul.f32 %v5422, %v5422
        %v5587 = vmul.f32 %v5520, %v5520
        %v5588 = vmul.f32 %v5425, %v5425
        %v5589 = vmul.f32 %v5523, %v5523
        %v5590 = vmul.f32 %v5427, %v5427
        %v5591 = vmul.f32 %v5525, %v5525
        %v5592 = vmul.f32 %v5430, %v5430
        %v5593 = vmul.f32 %v5528, %v5528
        %v5594 = vmul.f32 %v5432, %v5432
        %v5595 = vmul.f32 %v5530, %v5530
        %v5596 = vmul.f32 %v5564, %v5395
        %v5597 = vmul.f32 %v5565, %v5493
        %v5598 = vmul.f32 %v5566, %v5397
        %v5599 = vmul.f32 %v5567, %v5495
        %v5600 = vmul.f32 %v5568, %v5400
        %v5601 = vmul.f32 %v5569, %v5498
        %v5602 = vmul.f32 %v5570, %v5402
        %v5603 = vmul.f32 %v5571, %v5500
        %v5604 = vmul.f32 %v5572, %v5405
        %v5605 = vmul.f32 %v5573, %v5503
        %v5606 = vmul.f32 %v5574, %v5407
        %v5607 = vmul.f32 %v5575, %v5505
        %v5608 = vmul.f32 %v5576, %v5410
        %v5609 = vmul.f32 %v5577, %v5508
        %v5610 = vmul.f32 %v5578, %v5412
        %v5611 = vmul.f32 %v5579, %v5510
        %v5612 = vmul.f32 %v5580, %v5415
        %v5613 = vmul.f32 %v5581, %v5513
        %v5614 = vmul.f32 %v5582, %v5417
        %v5615 = vmul.f32 %v5583, %v5515
        %v5616 = vmul.f32 %v5584, %v5420
        %v5617 = vmul.f32 %v5585, %v5518
        %v5618 = vmul.f32 %v5586, %v5422
        %v5619 = vmul.f32 %v5587, %v5520
        %v5620 = vmul.f32 %v5588, %v5425
        %v5621 = vmul.f32 %v5589, %v5523
        %v5622 = vmul.f32 %v5590, %v5427
        %v5623 = vmul.f32 %v5591, %v5525
        %v5624 = vmul.f32 %v5592, %v5430
        %v5625 = vmul.f32 %v5593, %v5528
        %v5626 = vmul.f32 %v5594, %v5432
        %v5627 = vmul.f32 %v5595, %v5530
        %v5628 = vmul.f32 %v5596, 0.044715
        %v5629 = vmul.f32 %v5597, 0.044715
        %v5630 = vmul.f32 %v5598, 0.044715
        %v5631 = vmul.f32 %v5599, 0.044715
        %v5632 = vmul.f32 %v5600, 0.044715
        %v5633 = vmul.f32 %v5601, 0.044715
        %v5634 = vmul.f32 %v5602, 0.044715
        %v5635 = vmul.f32 %v5603, 0.044715
        %v5636 = vmul.f32 %v5604, 0.044715
        %v5637 = vmul.f32 %v5605, 0.044715
        %v5638 = vmul.f32 %v5606, 0.044715
        %v5639 = vmul.f32 %v5607, 0.044715
        %v5640 = vmul.f32 %v5608, 0.044715
        %v5641 = vmul.f32 %v5609, 0.044715
        %v5642 = vmul.f32 %v5610, 0.044715
        %v5643 = vmul.f32 %v5611, 0.044715
        %v5644 = vmul.f32 %v5612, 0.044715
        %v5645 = vmul.f32 %v5613, 0.044715
        %v5646 = vmul.f32 %v5614, 0.044715
        %v5647 = vmul.f32 %v5615, 0.044715
        %v5648 = vmul.f32 %v5616, 0.044715
        %v5649 = vmul.f32 %v5617, 0.044715
        %v5650 = vmul.f32 %v5618, 0.044715
        %v5651 = vmul.f32 %v5619, 0.044715
        %v5652 = vmul.f32 %v5620, 0.044715
        %v5653 = vmul.f32 %v5621, 0.044715
        %v5654 = vmul.f32 %v5622, 0.044715
        %v5655 = vmul.f32 %v5623, 0.044715
        %v5656 = vmul.f32 %v5624, 0.044715
        %v5657 = vmul.f32 %v5625, 0.044715
        %v5658 = vmul.f32 %v5626, 0.044715
        %v5659 = vmul.f32 %v5627, 0.044715
        %v5660 = vadd.f32 %v5395, %v5628
        %v5661 = vadd.f32 %v5493, %v5629
        %v5662 = vadd.f32 %v5397, %v5630
        %v5663 = vadd.f32 %v5495, %v5631
        %v5664 = vadd.f32 %v5400, %v5632
        %v5665 = vadd.f32 %v5498, %v5633
        %v5666 = vadd.f32 %v5402, %v5634
        %v5667 = vadd.f32 %v5500, %v5635
        %v5668 = vadd.f32 %v5405, %v5636
        %v5669 = vadd.f32 %v5503, %v5637
        %v5670 = vadd.f32 %v5407, %v5638
        %v5671 = vadd.f32 %v5505, %v5639
        %v5672 = vadd.f32 %v5410, %v5640
        %v5673 = vadd.f32 %v5508, %v5641
        %v5674 = vadd.f32 %v5412, %v5642
        %v5675 = vadd.f32 %v5510, %v5643
        %v5676 = vadd.f32 %v5415, %v5644
        %v5677 = vadd.f32 %v5513, %v5645
        %v5678 = vadd.f32 %v5417, %v5646
        %v5679 = vadd.f32 %v5515, %v5647
        %v5680 = vadd.f32 %v5420, %v5648
        %v5681 = vadd.f32 %v5518, %v5649
        %v5682 = vadd.f32 %v5422, %v5650
        %v5683 = vadd.f32 %v5520, %v5651
        %v5684 = vadd.f32 %v5425, %v5652
        %v5685 = vadd.f32 %v5523, %v5653
        %v5686 = vadd.f32 %v5427, %v5654
        %v5687 = vadd.f32 %v5525, %v5655
        %v5688 = vadd.f32 %v5430, %v5656
        %v5689 = vadd.f32 %v5528, %v5657
        %v5690 = vadd.f32 %v5432, %v5658
        %v5691 = vadd.f32 %v5530, %v5659
        %v5692 = vmul.f32 %v5660, 0.7978846
        %v5693 = vmul.f32 %v5661, 0.7978846
        %v5694 = vmul.f32 %v5662, 0.7978846
        %v5695 = vmul.f32 %v5663, 0.7978846
        %v5696 = vmul.f32 %v5664, 0.7978846
        %v5697 = vmul.f32 %v5665, 0.7978846
        %v5698 = vmul.f32 %v5666, 0.7978846
        %v5699 = vmul.f32 %v5667, 0.7978846
        %v5700 = vmul.f32 %v5668, 0.7978846
        %v5701 = vmul.f32 %v5669, 0.7978846
        %v5702 = vmul.f32 %v5670, 0.7978846
        %v5703 = vmul.f32 %v5671, 0.7978846
        %v5704 = vmul.f32 %v5672, 0.7978846
        %v5705 = vmul.f32 %v5673, 0.7978846
        %v5706 = vmul.f32 %v5674, 0.7978846
        %v5707 = vmul.f32 %v5675, 0.7978846
        %v5708 = vmul.f32 %v5676, 0.7978846
        %v5709 = vmul.f32 %v5677, 0.7978846
        %v5710 = vmul.f32 %v5678, 0.7978846
        %v5711 = vmul.f32 %v5679, 0.7978846
        %v5712 = vmul.f32 %v5680, 0.7978846
        %v5713 = vmul.f32 %v5681, 0.7978846
        %v5714 = vmul.f32 %v5682, 0.7978846
        %v5715 = vmul.f32 %v5683, 0.7978846
        %v5716 = vmul.f32 %v5684, 0.7978846
        %v5717 = vmul.f32 %v5685, 0.7978846
        %v5718 = vmul.f32 %v5686, 0.7978846
        %v5719 = vmul.f32 %v5687, 0.7978846
        %v5720 = vmul.f32 %v5688, 0.7978846
        %v5721 = vmul.f32 %v5689, 0.7978846
        %v5722 = vmul.f32 %v5690, 0.7978846
        %v5723 = vmul.f32 %v5691, 0.7978846
        %v5724 = vtanh.pop %v5692
        %v5725 = vtanh.pop %v5693
        %v5726 = vtanh.pop %v5694
        %v5727 = vtanh.pop %v5695
        %v5728 = vtanh.pop %v5696
        %v5729 = vtanh.pop %v5697
        %v5730 = vtanh.pop %v5698
        %v5731 = vtanh.pop %v5699
        %v5732 = vtanh.pop %v5700
        %v5733 = vtanh.pop %v5701
        %v5734 = vtanh.pop %v5702
        %v5735 = vtanh.pop %v5703
        %v5736 = vtanh.pop %v5704
        %v5737 = vtanh.pop %v5705
        %v5738 = vtanh.pop %v5706
        %v5739 = vtanh.pop %v5707
        %v5740 = vtanh.pop %v5708
        %v5741 = vtanh.pop %v5709
        %v5742 = vtanh.pop %v5710
        %v5743 = vtanh.pop %v5711
        %v5744 = vtanh.pop %v5712
        %v5745 = vtanh.pop %v5713
        %v5746 = vtanh.pop %v5714
        %v5747 = vtanh.pop %v5715
        %v5748 = vtanh.pop %v5716
        %v5749 = vtanh.pop %v5717
        %v5750 = vtanh.pop %v5718
        %v5751 = vtanh.pop %v5719
        %v5752 = vtanh.pop %v5720
        %v5753 = vtanh.pop %v5721
        %v5754 = vtanh.pop %v5722
        %v5755 = vtanh.pop %v5723
        %v5756 = vadd.f32 %v5724, 1.0
        %v5757 = vadd.f32 %v5725, 1.0
        %v5758 = vadd.f32 %v5726, 1.0
        %v5759 = vadd.f32 %v5727, 1.0
        %v5760 = vadd.f32 %v5728, 1.0
        %v5761 = vadd.f32 %v5729, 1.0
        %v5762 = vadd.f32 %v5730, 1.0
        %v5763 = vadd.f32 %v5731, 1.0
        %v5764 = vadd.f32 %v5732, 1.0
        %v5765 = vadd.f32 %v5733, 1.0
        %v5766 = vadd.f32 %v5734, 1.0
        %v5767 = vadd.f32 %v5735, 1.0
        %v5768 = vadd.f32 %v5736, 1.0
        %v5769 = vadd.f32 %v5737, 1.0
        %v5770 = vadd.f32 %v5738, 1.0
        %v5771 = vadd.f32 %v5739, 1.0
        %v5772 = vadd.f32 %v5740, 1.0
        %v5773 = vadd.f32 %v5741, 1.0
        %v5774 = vadd.f32 %v5742, 1.0
        %v5775 = vadd.f32 %v5743, 1.0
        %v5776 = vadd.f32 %v5744, 1.0
        %v5777 = vadd.f32 %v5745, 1.0
        %v5778 = vadd.f32 %v5746, 1.0
        %v5779 = vadd.f32 %v5747, 1.0
        %v5780 = vadd.f32 %v5748, 1.0
        %v5781 = vadd.f32 %v5749, 1.0
        %v5782 = vadd.f32 %v5750, 1.0
        %v5783 = vadd.f32 %v5751, 1.0
        %v5784 = vadd.f32 %v5752, 1.0
        %v5785 = vadd.f32 %v5753, 1.0
        %v5786 = vadd.f32 %v5754, 1.0
        %v5787 = vadd.f32 %v5755, 1.0
        %v5788 = vmul.f32 %v5532, %v5756
        %v5789 = vmul.f32 %v5533, %v5757
        %v5790 = vmul.f32 %v5534, %v5758
        %v5791 = vmul.f32 %v5535, %v5759
        %v5792 = vmul.f32 %v5536, %v5760
        %v5793 = vmul.f32 %v5537, %v5761
        %v5794 = vmul.f32 %v5538, %v5762
        %v5795 = vmul.f32 %v5539, %v5763
        %v5796 = vmul.f32 %v5540, %v5764
        %v5797 = vmul.f32 %v5541, %v5765
        %v5798 = vmul.f32 %v5542, %v5766
        %v5799 = vmul.f32 %v5543, %v5767
        %v5800 = vmul.f32 %v5544, %v5768
        %v5801 = vmul.f32 %v5545, %v5769
        %v5802 = vmul.f32 %v5546, %v5770
        %v5803 = vmul.f32 %v5547, %v5771
        %v5804 = vmul.f32 %v5548, %v5772
        %v5805 = vmul.f32 %v5549, %v5773
        %v5806 = vmul.f32 %v5550, %v5774
        %v5807 = vmul.f32 %v5551, %v5775
        %v5808 = vmul.f32 %v5552, %v5776
        %v5809 = vmul.f32 %v5553, %v5777
        %v5810 = vmul.f32 %v5554, %v5778
        %v5811 = vmul.f32 %v5555, %v5779
        %v5812 = vmul.f32 %v5556, %v5780
        %v5813 = vmul.f32 %v5557, %v5781
        %v5814 = vmul.f32 %v5558, %v5782
        %v5815 = vmul.f32 %v5559, %v5783
        %v5816 = vmul.f32 %v5560, %v5784
        %v5817 = vmul.f32 %v5561, %v5785
        %v5818 = vmul.f32 %v5562, %v5786
        %v5819 = vmul.f32 %v5563, %v5787
        %v5820 = vld [vmem:[%s835] sm:$0x3]
        %v5822 = vperm.slane %v5820, 0
        %v5823 = vperm.slane %v5820, 1
        %v5826 = vmul.f32 %v5788, %v5822
        %v5827 = vmul.f32 %v5789, %v5823
        %v5828 = vmul.f32 %v5790, %v5822
        %v5829 = vmul.f32 %v5791, %v5823
        %v5830 = vmul.f32 %v5792, %v5822
        %v5831 = vmul.f32 %v5793, %v5823
        %v5832 = vmul.f32 %v5794, %v5822
        %v5833 = vmul.f32 %v5795, %v5823
        %v5834 = vmul.f32 %v5796, %v5822
        %v5835 = vmul.f32 %v5797, %v5823
        %v5836 = vmul.f32 %v5798, %v5822
        %v5837 = vmul.f32 %v5799, %v5823
        %v5838 = vmul.f32 %v5800, %v5822
        %v5839 = vmul.f32 %v5801, %v5823
        %v5840 = vmul.f32 %v5802, %v5822
        %v5841 = vmul.f32 %v5803, %v5823
        %v5842 = vmul.f32 %v5804, %v5822
        %v5843 = vmul.f32 %v5805, %v5823
        %v5844 = vmul.f32 %v5806, %v5822
        %v5845 = vmul.f32 %v5807, %v5823
        %v5846 = vmul.f32 %v5808, %v5822
        %v5847 = vmul.f32 %v5809, %v5823
        %v5848 = vmul.f32 %v5810, %v5822
        %v5849 = vmul.f32 %v5811, %v5823
        %v5850 = vmul.f32 %v5812, %v5822
        %v5851 = vmul.f32 %v5813, %v5823
        %v5852 = vmul.f32 %v5814, %v5822
        %v5853 = vmul.f32 %v5815, %v5823
        %v5854 = vmul.f32 %v5816, %v5822
        %v5855 = vmul.f32 %v5817, %v5823
        %v5856 = vmul.f32 %v5818, %v5822
        %v5857 = vmul.f32 %v5819, %v5823
        %v5858 = vld [vmem:[%s843] sm:$0x3]
        %v5860 = vperm.slane %v5858, 0
        %v5861 = vperm.slane %v5858, 1
        %v5864 = vadd.f32 %v5826, %v5860
        %v5865 = vadd.f32 %v5827, %v5861
        %v5866 = vadd.f32 %v5828, %v5860
        %v5867 = vadd.f32 %v5829, %v5861
        %v5868 = vadd.f32 %v5830, %v5860
        %v5869 = vadd.f32 %v5831, %v5861
        %v5870 = vadd.f32 %v5832, %v5860
        %v5871 = vadd.f32 %v5833, %v5861
        %v5872 = vadd.f32 %v5834, %v5860
        %v5873 = vadd.f32 %v5835, %v5861
        %v5874 = vadd.f32 %v5836, %v5860
        %v5875 = vadd.f32 %v5837, %v5861
        %v5876 = vadd.f32 %v5838, %v5860
        %v5877 = vadd.f32 %v5839, %v5861
        %v5878 = vadd.f32 %v5840, %v5860
        %v5879 = vadd.f32 %v5841, %v5861
        %v5880 = vadd.f32 %v5842, %v5860
        %v5881 = vadd.f32 %v5843, %v5861
        %v5882 = vadd.f32 %v5844, %v5860
        %v5883 = vadd.f32 %v5845, %v5861
        %v5884 = vadd.f32 %v5846, %v5860
        %v5885 = vadd.f32 %v5847, %v5861
        %v5886 = vadd.f32 %v5848, %v5860
        %v5887 = vadd.f32 %v5849, %v5861
        %v5888 = vadd.f32 %v5850, %v5860
        %v5889 = vadd.f32 %v5851, %v5861
        %v5890 = vadd.f32 %v5852, %v5860
        %v5891 = vadd.f32 %v5853, %v5861
        %v5892 = vadd.f32 %v5854, %v5860
        %v5893 = vadd.f32 %v5855, %v5861
        %v5894 = vadd.f32 %v5856, %v5860
        %v5895 = vadd.f32 %v5857, %v5861
        %s5896 = sadd.s32 %s34, 1
        %p5897 = scmp.lt.s32.totalorder %s5896, 8
        // Predicated region
        $region89: #{sequential_decision_tree_forward.1} parent=79 // pred_check
          %p5898 = pneg %p5897
        $region90: #{sequential_decision_tree_forward.1} parent=79 // pred_check_branch
          %5900 = sbr.rel (%p5898) target = $region92
        $region91: #{sequential_decision_tree_forward.1} parent=79 // pred_region
          %v5901 = vlaneseq
          %v5902 = vshrl.u32 %v5901, 7
          %v5903 = vrot.slane %v5864, 6
          %v5904 = vrot.slane %v5865, 6
          %v5905 = vrot.slane %v5866, 6
          %v5906 = vrot.slane %v5867, 6
          %v5907 = vrot.slane %v5868, 6
          %v5908 = vrot.slane %v5869, 6
          %v5909 = vrot.slane %v5870, 6
          %v5910 = vrot.slane %v5871, 6
          %v5911 = vrot.slane %v5872, 6
          %v5912 = vrot.slane %v5873, 6
          %v5913 = vrot.slane %v5874, 6
          %v5914 = vrot.slane %v5875, 6
          %v5915 = vrot.slane %v5876, 6
          %v5916 = vrot.slane %v5877, 6
          %v5917 = vrot.slane %v5878, 6
          %v5918 = vrot.slane %v5879, 6
          %v5919 = vrot.slane %v5880, 6
          %v5920 = vrot.slane %v5881, 6
          %v5921 = vrot.slane %v5882, 6
          %v5922 = vrot.slane %v5883, 6
          %v5923 = vrot.slane %v5884, 6
          %v5924 = vrot.slane %v5885, 6
          %v5925 = vrot.slane %v5886, 6
          %v5926 = vrot.slane %v5887, 6
          %v5927 = vrot.slane %v5888, 6
          %v5928 = vrot.slane %v5889, 6
          %v5929 = vrot.slane %v5890, 6
          %v5930 = vrot.slane %v5891, 6
          %v5931 = vrot.slane %v5892, 6
          %v5932 = vrot.slane %v5893, 6
          %v5933 = vrot.slane %v5894, 6
          %v5934 = vrot.slane %v5895, 6
          %v5935 = vadd.s32 %v5902, 4294967294
          %vm5936 = vcmp.ge.s32.totalorder %v5935, 0
          %vm5937 = vcmp.lt.s32.totalorder %v5935, 8
          %vm5938 = vmand %vm5936, %vm5937
          %v5939 = vsel %vm5938, 1, 0
          %v5940 = vcvt.s32.f32 %v5939
          %v5941 = vmul.f32 %v5903, %v5940
          %v5942 = vmul.f32 %v5904, %v5940
          %v5943 = vmul.f32 %v5905, %v5940
          %v5944 = vmul.f32 %v5906, %v5940
          %v5945 = vmul.f32 %v5907, %v5940
          %v5946 = vmul.f32 %v5908, %v5940
          %v5947 = vmul.f32 %v5909, %v5940
          %v5948 = vmul.f32 %v5910, %v5940
          %v5949 = vmul.f32 %v5911, %v5940
          %v5950 = vmul.f32 %v5912, %v5940
          %v5951 = vmul.f32 %v5913, %v5940
          %v5952 = vmul.f32 %v5914, %v5940
          %v5953 = vmul.f32 %v5915, %v5940
          %v5954 = vmul.f32 %v5916, %v5940
          %v5955 = vmul.f32 %v5917, %v5940
          %v5956 = vmul.f32 %v5918, %v5940
          %v5957 = vmul.f32 %v5919, %v5940
          %v5958 = vmul.f32 %v5920, %v5940
          %v5959 = vmul.f32 %v5921, %v5940
          %v5960 = vmul.f32 %v5922, %v5940
          %v5961 = vmul.f32 %v5923, %v5940
          %v5962 = vmul.f32 %v5924, %v5940
          %v5963 = vmul.f32 %v5925, %v5940
          %v5964 = vmul.f32 %v5926, %v5940
          %v5965 = vmul.f32 %v5927, %v5940
          %v5966 = vmul.f32 %v5928, %v5940
          %v5967 = vmul.f32 %v5929, %v5940
          %v5968 = vmul.f32 %v5930, %v5940
          %v5969 = vmul.f32 %v5931, %v5940
          %v5970 = vmul.f32 %v5932, %v5940
          %v5971 = vmul.f32 %v5933, %v5940
          %v5972 = vmul.f32 %v5934, %v5940
          %5973 = vst [vmem:[%s3130] sm:$0xff] %v5941
          %5974 = vst [vmem:[%s3130 + $0x8] sm:$0xff] %v5942
          %5975 = vst [vmem:[%s3130 + $0x10] sm:$0xff] %v5943
          %5976 = vst [vmem:[%s3130 + $0x18] sm:$0xff] %v5944
          %5977 = vst [vmem:[%s3130 + $0x20] sm:$0xff] %v5945
          %5978 = vst [vmem:[%s3130 + $0x28] sm:$0xff] %v5946
          %5979 = vst [vmem:[%s3130 + $0x30] sm:$0xff] %v5947
          %5980 = vst [vmem:[%s3130 + $0x38] sm:$0xff] %v5948
          %5981 = vst [vmem:[%s3130 + $0x40] sm:$0xff] %v5949
          %5982 = vst [vmem:[%s3130 + $0x48] sm:$0xff] %v5950
          %5983 = vst [vmem:[%s3130 + $0x50] sm:$0xff] %v5951
          %5984 = vst [vmem:[%s3130 + $0x58] sm:$0xff] %v5952
          %5985 = vst [vmem:[%s3130 + $0x60] sm:$0xff] %v5953
          %5986 = vst [vmem:[%s3130 + $0x68] sm:$0xff] %v5954
          %5987 = vst [vmem:[%s3130 + $0x70] sm:$0xff] %v5955
          %5988 = vst [vmem:[%s3130 + $0x78] sm:$0xff] %v5956
          %5989 = vst [vmem:[%s3130 + $0xc0] sm:$0xff] %v5957
          %5990 = vst [vmem:[%s3130 + $0xc8] sm:$0xff] %v5958
          %5991 = vst [vmem:[%s3130 + $0xd0] sm:$0xff] %v5959
          %5992 = vst [vmem:[%s3130 + $0xd8] sm:$0xff] %v5960
          %5993 = vst [vmem:[%s3130 + $0xe0] sm:$0xff] %v5961
          %5994 = vst [vmem:[%s3130 + $0xe8] sm:$0xff] %v5962
          %5995 = vst [vmem:[%s3130 + $0xf0] sm:$0xff] %v5963
          %5996 = vst [vmem:[%s3130 + $0xf8] sm:$0xff] %v5964
          %5997 = vst [vmem:[%s3130 + $0x100] sm:$0xff] %v5965
          %5998 = vst [vmem:[%s3130 + $0x108] sm:$0xff] %v5966
          %5999 = vst [vmem:[%s3130 + $0x110] sm:$0xff] %v5967
          %6000 = vst [vmem:[%s3130 + $0x118] sm:$0xff] %v5968
          %6001 = vst [vmem:[%s3130 + $0x120] sm:$0xff] %v5969
          %6002 = vst [vmem:[%s3130 + $0x128] sm:$0xff] %v5970
          %6003 = vst [vmem:[%s3130 + $0x130] sm:$0xff] %v5971
          %6004 = vst [vmem:[%s3130 + $0x138] sm:$0xff] %v5972
          %v6005 = vrot.slane %v5864, 7
          %v6006 = vrot.slane %v5865, 7
          %v6007 = vrot.slane %v5866, 7
          %v6008 = vrot.slane %v5867, 7
          %v6009 = vrot.slane %v5868, 7
          %v6010 = vrot.slane %v5869, 7
          %v6011 = vrot.slane %v5870, 7
          %v6012 = vrot.slane %v5871, 7
          %v6013 = vrot.slane %v5872, 7
          %v6014 = vrot.slane %v5873, 7
          %v6015 = vrot.slane %v5874, 7
          %v6016 = vrot.slane %v5875, 7
          %v6017 = vrot.slane %v5876, 7
          %v6018 = vrot.slane %v5877, 7
          %v6019 = vrot.slane %v5878, 7
          %v6020 = vrot.slane %v5879, 7
          %v6021 = vrot.slane %v5880, 7
          %v6022 = vrot.slane %v5881, 7
          %v6023 = vrot.slane %v5882, 7
          %v6024 = vrot.slane %v5883, 7
          %v6025 = vrot.slane %v5884, 7
          %v6026 = vrot.slane %v5885, 7
          %v6027 = vrot.slane %v5886, 7
          %v6028 = vrot.slane %v5887, 7
          %v6029 = vrot.slane %v5888, 7
          %v6030 = vrot.slane %v5889, 7
          %v6031 = vrot.slane %v5890, 7
          %v6032 = vrot.slane %v5891, 7
          %v6033 = vrot.slane %v5892, 7
          %v6034 = vrot.slane %v5893, 7
          %v6035 = vrot.slane %v5894, 7
          %v6036 = vrot.slane %v5895, 7
          %v6037 = vadd.s32 %v5902, 4294967295
          %vm6038 = vcmp.ge.s32.totalorder %v6037, 0
          %vm6039 = vcmp.lt.s32.totalorder %v6037, 8
          %vm6040 = vmand %vm6038, %vm6039
          %v6041 = vsel %vm6040, 1, 0
          %v6042 = vcvt.s32.f32 %v6041
          %v6043 = vmul.f32 %v6005, %v6042
          %v6044 = vmul.f32 %v6006, %v6042
          %v6045 = vmul.f32 %v6007, %v6042
          %v6046 = vmul.f32 %v6008, %v6042
          %v6047 = vmul.f32 %v6009, %v6042
          %v6048 = vmul.f32 %v6010, %v6042
          %v6049 = vmul.f32 %v6011, %v6042
          %v6050 = vmul.f32 %v6012, %v6042
          %v6051 = vmul.f32 %v6013, %v6042
          %v6052 = vmul.f32 %v6014, %v6042
          %v6053 = vmul.f32 %v6015, %v6042
          %v6054 = vmul.f32 %v6016, %v6042
          %v6055 = vmul.f32 %v6017, %v6042
          %v6056 = vmul.f32 %v6018, %v6042
          %v6057 = vmul.f32 %v6019, %v6042
          %v6058 = vmul.f32 %v6020, %v6042
          %v6059 = vmul.f32 %v6021, %v6042
          %v6060 = vmul.f32 %v6022, %v6042
          %v6061 = vmul.f32 %v6023, %v6042
          %v6062 = vmul.f32 %v6024, %v6042
          %v6063 = vmul.f32 %v6025, %v6042
          %v6064 = vmul.f32 %v6026, %v6042
          %v6065 = vmul.f32 %v6027, %v6042
          %v6066 = vmul.f32 %v6028, %v6042
          %v6067 = vmul.f32 %v6029, %v6042
          %v6068 = vmul.f32 %v6030, %v6042
          %v6069 = vmul.f32 %v6031, %v6042
          %v6070 = vmul.f32 %v6032, %v6042
          %v6071 = vmul.f32 %v6033, %v6042
          %v6072 = vmul.f32 %v6034, %v6042
          %v6073 = vmul.f32 %v6035, %v6042
          %v6074 = vmul.f32 %v6036, %v6042
          %6075 = vst [vmem:[%s3234] sm:$0xff] %v6043
          %6076 = vst [vmem:[%s3234 + $0x8] sm:$0xff] %v6044
          %6077 = vst [vmem:[%s3234 + $0x10] sm:$0xff] %v6045
          %6078 = vst [vmem:[%s3234 + $0x18] sm:$0xff] %v6046
          %6079 = vst [vmem:[%s3234 + $0x20] sm:$0xff] %v6047
          %6080 = vst [vmem:[%s3234 + $0x28] sm:$0xff] %v6048
          %6081 = vst [vmem:[%s3234 + $0x30] sm:$0xff] %v6049
          %6082 = vst [vmem:[%s3234 + $0x38] sm:$0xff] %v6050
          %6083 = vst [vmem:[%s3234 + $0x40] sm:$0xff] %v6051
          %6084 = vst [vmem:[%s3234 + $0x48] sm:$0xff] %v6052
          %6085 = vst [vmem:[%s3234 + $0x50] sm:$0xff] %v6053
          %6086 = vst [vmem:[%s3234 + $0x58] sm:$0xff] %v6054
          %6087 = vst [vmem:[%s3234 + $0x60] sm:$0xff] %v6055
          %6088 = vst [vmem:[%s3234 + $0x68] sm:$0xff] %v6056
          %6089 = vst [vmem:[%s3234 + $0x70] sm:$0xff] %v6057
          %6090 = vst [vmem:[%s3234 + $0x78] sm:$0xff] %v6058
          %6091 = vst [vmem:[%s3234 + $0xc0] sm:$0xff] %v6059
          %6092 = vst [vmem:[%s3234 + $0xc8] sm:$0xff] %v6060
          %6093 = vst [vmem:[%s3234 + $0xd0] sm:$0xff] %v6061
          %6094 = vst [vmem:[%s3234 + $0xd8] sm:$0xff] %v6062
          %6095 = vst [vmem:[%s3234 + $0xe0] sm:$0xff] %v6063
          %6096 = vst [vmem:[%s3234 + $0xe8] sm:$0xff] %v6064
          %6097 = vst [vmem:[%s3234 + $0xf0] sm:$0xff] %v6065
          %6098 = vst [vmem:[%s3234 + $0xf8] sm:$0xff] %v6066
          %6099 = vst [vmem:[%s3234 + $0x100] sm:$0xff] %v6067
          %6100 = vst [vmem:[%s3234 + $0x108] sm:$0xff] %v6068
          %6101 = vst [vmem:[%s3234 + $0x110] sm:$0xff] %v6069
          %6102 = vst [vmem:[%s3234 + $0x118] sm:$0xff] %v6070
          %6103 = vst [vmem:[%s3234 + $0x120] sm:$0xff] %v6071
          %6104 = vst [vmem:[%s3234 + $0x128] sm:$0xff] %v6072
          %6105 = vst [vmem:[%s3234 + $0x130] sm:$0xff] %v6073
          %6106 = vst [vmem:[%s3234 + $0x138] sm:$0xff] %v6074
          %6107 = vst [vmem:[%s3338] sm:$0xff] %v5864
          %6108 = vst [vmem:[%s3338 + $0x8] sm:$0xff] %v5865
          %6109 = vst [vmem:[%s3338 + $0x10] sm:$0xff] %v5866
          %6110 = vst [vmem:[%s3338 + $0x18] sm:$0xff] %v5867
          %6111 = vst [vmem:[%s3338 + $0x20] sm:$0xff] %v5868
          %6112 = vst [vmem:[%s3338 + $0x28] sm:$0xff] %v5869
          %6113 = vst [vmem:[%s3338 + $0x30] sm:$0xff] %v5870
          %6114 = vst [vmem:[%s3338 + $0x38] sm:$0xff] %v5871
          %6115 = vst [vmem:[%s3338 + $0x40] sm:$0xff] %v5872
          %6116 = vst [vmem:[%s3338 + $0x48] sm:$0xff] %v5873
          %6117 = vst [vmem:[%s3338 + $0x50] sm:$0xff] %v5874
          %6118 = vst [vmem:[%s3338 + $0x58] sm:$0xff] %v5875
          %6119 = vst [vmem:[%s3338 + $0x60] sm:$0xff] %v5876
          %6120 = vst [vmem:[%s3338 + $0x68] sm:$0xff] %v5877
          %6121 = vst [vmem:[%s3338 + $0x70] sm:$0xff] %v5878
          %6122 = vst [vmem:[%s3338 + $0x78] sm:$0xff] %v5879
          %6123 = vst [vmem:[%s3338 + $0xc0] sm:$0xff] %v5880
          %6124 = vst [vmem:[%s3338 + $0xc8] sm:$0xff] %v5881
          %6125 = vst [vmem:[%s3338 + $0xd0] sm:$0xff] %v5882
          %6126 = vst [vmem:[%s3338 + $0xd8] sm:$0xff] %v5883
          %6127 = vst [vmem:[%s3338 + $0xe0] sm:$0xff] %v5884
          %6128 = vst [vmem:[%s3338 + $0xe8] sm:$0xff] %v5885
          %6129 = vst [vmem:[%s3338 + $0xf0] sm:$0xff] %v5886
          %6130 = vst [vmem:[%s3338 + $0xf8] sm:$0xff] %v5887
          %6131 = vst [vmem:[%s3338 + $0x100] sm:$0xff] %v5888
          %6132 = vst [vmem:[%s3338 + $0x108] sm:$0xff] %v5889
          %6133 = vst [vmem:[%s3338 + $0x110] sm:$0xff] %v5890
          %6134 = vst [vmem:[%s3338 + $0x118] sm:$0xff] %v5891
          %6135 = vst [vmem:[%s3338 + $0x120] sm:$0xff] %v5892
          %6136 = vst [vmem:[%s3338 + $0x128] sm:$0xff] %v5893
          %6137 = vst [vmem:[%s3338 + $0x130] sm:$0xff] %v5894
          %6138 = vst [vmem:[%s3338 + $0x138] sm:$0xff] %v5895
          %v6139 = vrot.slane %v5864, 1
          %v6140 = vrot.slane %v5865, 1
          %v6141 = vrot.slane %v5866, 1
          %v6142 = vrot.slane %v5867, 1
          %v6143 = vrot.slane %v5868, 1
          %v6144 = vrot.slane %v5869, 1
          %v6145 = vrot.slane %v5870, 1
          %v6146 = vrot.slane %v5871, 1
          %v6147 = vrot.slane %v5872, 1
          %v6148 = vrot.slane %v5873, 1
          %v6149 = vrot.slane %v5874, 1
          %v6150 = vrot.slane %v5875, 1
          %v6151 = vrot.slane %v5876, 1
          %v6152 = vrot.slane %v5877, 1
          %v6153 = vrot.slane %v5878, 1
          %v6154 = vrot.slane %v5879, 1
          %v6155 = vrot.slane %v5880, 1
          %v6156 = vrot.slane %v5881, 1
          %v6157 = vrot.slane %v5882, 1
          %v6158 = vrot.slane %v5883, 1
          %v6159 = vrot.slane %v5884, 1
          %v6160 = vrot.slane %v5885, 1
          %v6161 = vrot.slane %v5886, 1
          %v6162 = vrot.slane %v5887, 1
          %v6163 = vrot.slane %v5888, 1
          %v6164 = vrot.slane %v5889, 1
          %v6165 = vrot.slane %v5890, 1
          %v6166 = vrot.slane %v5891, 1
          %v6167 = vrot.slane %v5892, 1
          %v6168 = vrot.slane %v5893, 1
          %v6169 = vrot.slane %v5894, 1
          %v6170 = vrot.slane %v5895, 1
          %v6171 = vadd.s32 %v5902, 1
          %vm6172 = vcmp.ge.s32.totalorder %v6171, 0
          %vm6173 = vcmp.lt.s32.totalorder %v6171, 8
          %vm6174 = vmand %vm6172, %vm6173
          %v6175 = vsel %vm6174, 1, 0
          %v6176 = vcvt.s32.f32 %v6175
          %v6177 = vmul.f32 %v6139, %v6176
          %v6178 = vmul.f32 %v6140, %v6176
          %v6179 = vmul.f32 %v6141, %v6176
          %v6180 = vmul.f32 %v6142, %v6176
          %v6181 = vmul.f32 %v6143, %v6176
          %v6182 = vmul.f32 %v6144, %v6176
          %v6183 = vmul.f32 %v6145, %v6176
          %v6184 = vmul.f32 %v6146, %v6176
          %v6185 = vmul.f32 %v6147, %v6176
          %v6186 = vmul.f32 %v6148, %v6176
          %v6187 = vmul.f32 %v6149, %v6176
          %v6188 = vmul.f32 %v6150, %v6176
          %v6189 = vmul.f32 %v6151, %v6176
          %v6190 = vmul.f32 %v6152, %v6176
          %v6191 = vmul.f32 %v6153, %v6176
          %v6192 = vmul.f32 %v6154, %v6176
          %v6193 = vmul.f32 %v6155, %v6176
          %v6194 = vmul.f32 %v6156, %v6176
          %v6195 = vmul.f32 %v6157, %v6176
          %v6196 = vmul.f32 %v6158, %v6176
          %v6197 = vmul.f32 %v6159, %v6176
          %v6198 = vmul.f32 %v6160, %v6176
          %v6199 = vmul.f32 %v6161, %v6176
          %v6200 = vmul.f32 %v6162, %v6176
          %v6201 = vmul.f32 %v6163, %v6176
          %v6202 = vmul.f32 %v6164, %v6176
          %v6203 = vmul.f32 %v6165, %v6176
          %v6204 = vmul.f32 %v6166, %v6176
          %v6205 = vmul.f32 %v6167, %v6176
          %v6206 = vmul.f32 %v6168, %v6176
          %v6207 = vmul.f32 %v6169, %v6176
          %v6208 = vmul.f32 %v6170, %v6176
          %6209 = vst [vmem:[%s3442] sm:$0xff] %v6177
          %6210 = vst [vmem:[%s3442 + $0x8] sm:$0xff] %v6178
          %6211 = vst [vmem:[%s3442 + $0x10] sm:$0xff] %v6179
          %6212 = vst [vmem:[%s3442 + $0x18] sm:$0xff] %v6180
          %6213 = vst [vmem:[%s3442 + $0x20] sm:$0xff] %v6181
          %6214 = vst [vmem:[%s3442 + $0x28] sm:$0xff] %v6182
          %6215 = vst [vmem:[%s3442 + $0x30] sm:$0xff] %v6183
          %6216 = vst [vmem:[%s3442 + $0x38] sm:$0xff] %v6184
          %6217 = vst [vmem:[%s3442 + $0x40] sm:$0xff] %v6185
          %6218 = vst [vmem:[%s3442 + $0x48] sm:$0xff] %v6186
          %6219 = vst [vmem:[%s3442 + $0x50] sm:$0xff] %v6187
          %6220 = vst [vmem:[%s3442 + $0x58] sm:$0xff] %v6188
          %6221 = vst [vmem:[%s3442 + $0x60] sm:$0xff] %v6189
          %6222 = vst [vmem:[%s3442 + $0x68] sm:$0xff] %v6190
          %6223 = vst [vmem:[%s3442 + $0x70] sm:$0xff] %v6191
          %6224 = vst [vmem:[%s3442 + $0x78] sm:$0xff] %v6192
          %6225 = vst [vmem:[%s3442 + $0xc0] sm:$0xff] %v6193
          %6226 = vst [vmem:[%s3442 + $0xc8] sm:$0xff] %v6194
          %6227 = vst [vmem:[%s3442 + $0xd0] sm:$0xff] %v6195
          %6228 = vst [vmem:[%s3442 + $0xd8] sm:$0xff] %v6196
          %6229 = vst [vmem:[%s3442 + $0xe0] sm:$0xff] %v6197
          %6230 = vst [vmem:[%s3442 + $0xe8] sm:$0xff] %v6198
          %6231 = vst [vmem:[%s3442 + $0xf0] sm:$0xff] %v6199
          %6232 = vst [vmem:[%s3442 + $0xf8] sm:$0xff] %v6200
          %6233 = vst [vmem:[%s3442 + $0x100] sm:$0xff] %v6201
          %6234 = vst [vmem:[%s3442 + $0x108] sm:$0xff] %v6202
          %6235 = vst [vmem:[%s3442 + $0x110] sm:$0xff] %v6203
          %6236 = vst [vmem:[%s3442 + $0x118] sm:$0xff] %v6204
          %6237 = vst [vmem:[%s3442 + $0x120] sm:$0xff] %v6205
          %6238 = vst [vmem:[%s3442 + $0x128] sm:$0xff] %v6206
          %6239 = vst [vmem:[%s3442 + $0x130] sm:$0xff] %v6207
          %6240 = vst [vmem:[%s3442 + $0x138] sm:$0xff] %v6208
          %v6241 = vrot.slane %v5864, 2
          %v6242 = vrot.slane %v5865, 2
          %v6243 = vrot.slane %v5866, 2
          %v6244 = vrot.slane %v5867, 2
          %v6245 = vrot.slane %v5868, 2
          %v6246 = vrot.slane %v5869, 2
          %v6247 = vrot.slane %v5870, 2
          %v6248 = vrot.slane %v5871, 2
          %v6249 = vrot.slane %v5872, 2
          %v6250 = vrot.slane %v5873, 2
          %v6251 = vrot.slane %v5874, 2
          %v6252 = vrot.slane %v5875, 2
          %v6253 = vrot.slane %v5876, 2
          %v6254 = vrot.slane %v5877, 2
          %v6255 = vrot.slane %v5878, 2
          %v6256 = vrot.slane %v5879, 2
          %v6257 = vrot.slane %v5880, 2
          %v6258 = vrot.slane %v5881, 2
          %v6259 = vrot.slane %v5882, 2
          %v6260 = vrot.slane %v5883, 2
          %v6261 = vrot.slane %v5884, 2
          %v6262 = vrot.slane %v5885, 2
          %v6263 = vrot.slane %v5886, 2
          %v6264 = vrot.slane %v5887, 2
          %v6265 = vrot.slane %v5888, 2
          %v6266 = vrot.slane %v5889, 2
          %v6267 = vrot.slane %v5890, 2
          %v6268 = vrot.slane %v5891, 2
          %v6269 = vrot.slane %v5892, 2
          %v6270 = vrot.slane %v5893, 2
          %v6271 = vrot.slane %v5894, 2
          %v6272 = vrot.slane %v5895, 2
          %v6273 = vadd.s32 %v5902, 2
          %vm6274 = vcmp.ge.s32.totalorder %v6273, 0
          %vm6275 = vcmp.lt.s32.totalorder %v6273, 8
          %vm6276 = vmand %vm6274, %vm6275
          %v6277 = vsel %vm6276, 1, 0
          %v6278 = vcvt.s32.f32 %v6277
          %v6279 = vmul.f32 %v6241, %v6278
          %v6280 = vmul.f32 %v6242, %v6278
          %v6281 = vmul.f32 %v6243, %v6278
          %v6282 = vmul.f32 %v6244, %v6278
          %v6283 = vmul.f32 %v6245, %v6278
          %v6284 = vmul.f32 %v6246, %v6278
          %v6285 = vmul.f32 %v6247, %v6278
          %v6286 = vmul.f32 %v6248, %v6278
          %v6287 = vmul.f32 %v6249, %v6278
          %v6288 = vmul.f32 %v6250, %v6278
          %v6289 = vmul.f32 %v6251, %v6278
          %v6290 = vmul.f32 %v6252, %v6278
          %v6291 = vmul.f32 %v6253, %v6278
          %v6292 = vmul.f32 %v6254, %v6278
          %v6293 = vmul.f32 %v6255, %v6278
          %v6294 = vmul.f32 %v6256, %v6278
          %v6295 = vmul.f32 %v6257, %v6278
          %v6296 = vmul.f32 %v6258, %v6278
          %v6297 = vmul.f32 %v6259, %v6278
          %v6298 = vmul.f32 %v6260, %v6278
          %v6299 = vmul.f32 %v6261, %v6278
          %v6300 = vmul.f32 %v6262, %v6278
          %v6301 = vmul.f32 %v6263, %v6278
          %v6302 = vmul.f32 %v6264, %v6278
          %v6303 = vmul.f32 %v6265, %v6278
          %v6304 = vmul.f32 %v6266, %v6278
          %v6305 = vmul.f32 %v6267, %v6278
          %v6306 = vmul.f32 %v6268, %v6278
          %v6307 = vmul.f32 %v6269, %v6278
          %v6308 = vmul.f32 %v6270, %v6278
          %v6309 = vmul.f32 %v6271, %v6278
          %v6310 = vmul.f32 %v6272, %v6278
          %6311 = vst [vmem:[%s3546] sm:$0xff] %v6279
          %6312 = vst [vmem:[%s3546 + $0x8] sm:$0xff] %v6280
          %6313 = vst [vmem:[%s3546 + $0x10] sm:$0xff] %v6281
          %6314 = vst [vmem:[%s3546 + $0x18] sm:$0xff] %v6282
          %6315 = vst [vmem:[%s3546 + $0x20] sm:$0xff] %v6283
          %6316 = vst [vmem:[%s3546 + $0x28] sm:$0xff] %v6284
          %6317 = vst [vmem:[%s3546 + $0x30] sm:$0xff] %v6285
          %6318 = vst [vmem:[%s3546 + $0x38] sm:$0xff] %v6286
          %6319 = vst [vmem:[%s3546 + $0x40] sm:$0xff] %v6287
          %6320 = vst [vmem:[%s3546 + $0x48] sm:$0xff] %v6288
          %6321 = vst [vmem:[%s3546 + $0x50] sm:$0xff] %v6289
          %6322 = vst [vmem:[%s3546 + $0x58] sm:$0xff] %v6290
          %6323 = vst [vmem:[%s3546 + $0x60] sm:$0xff] %v6291
          %6324 = vst [vmem:[%s3546 + $0x68] sm:$0xff] %v6292
          %6325 = vst [vmem:[%s3546 + $0x70] sm:$0xff] %v6293
          %6326 = vst [vmem:[%s3546 + $0x78] sm:$0xff] %v6294
          %6327 = vst [vmem:[%s3546 + $0xc0] sm:$0xff] %v6295
          %6328 = vst [vmem:[%s3546 + $0xc8] sm:$0xff] %v6296
          %6329 = vst [vmem:[%s3546 + $0xd0] sm:$0xff] %v6297
          %6330 = vst [vmem:[%s3546 + $0xd8] sm:$0xff] %v6298
          %6331 = vst [vmem:[%s3546 + $0xe0] sm:$0xff] %v6299
          %6332 = vst [vmem:[%s3546 + $0xe8] sm:$0xff] %v6300
          %6333 = vst [vmem:[%s3546 + $0xf0] sm:$0xff] %v6301
          %6334 = vst [vmem:[%s3546 + $0xf8] sm:$0xff] %v6302
          %6335 = vst [vmem:[%s3546 + $0x100] sm:$0xff] %v6303
          %6336 = vst [vmem:[%s3546 + $0x108] sm:$0xff] %v6304
          %6337 = vst [vmem:[%s3546 + $0x110] sm:$0xff] %v6305
          %6338 = vst [vmem:[%s3546 + $0x118] sm:$0xff] %v6306
          %6339 = vst [vmem:[%s3546 + $0x120] sm:$0xff] %v6307
          %6340 = vst [vmem:[%s3546 + $0x128] sm:$0xff] %v6308
          %6341 = vst [vmem:[%s3546 + $0x130] sm:$0xff] %v6309
          %6342 = vst [vmem:[%s3546 + $0x138] sm:$0xff] %v6310
        $region92: #{sequential_decision_tree_forward.1} parent=79 // pred_fallthru
          _
        %p6343 = scmp.eq.s32.totalorder %s34, 7
        // Predicated region
        $region93: #{sequential_decision_tree_forward.1} parent=79 // pred_check
          %p6344 = pneg %p6343
        $region94: #{sequential_decision_tree_forward.1} parent=79 // pred_check_branch
          %6346 = sbr.rel (%p6344) target = $region96
        $region95: #{sequential_decision_tree_forward.1} parent=79 // pred_region
          %v6347 = vadd.f32 %v5864, %v5866
          %v6348 = vadd.f32 %v6347, %v5868
          %v6349 = vadd.f32 %v6348, %v5870
          %v6350 = vadd.f32 %v6349, %v5872
          %v6351 = vadd.f32 %v6350, %v5874
          %v6352 = vadd.f32 %v6351, %v5876
          %v6353 = vadd.f32 %v6352, %v5878
          %v6354 = vrot.slane %v6353, 4
          %v6355 = vadd.f32 %v6353, %v6354
          %v6356 = vrot.slane %v6355, 2
          %v6357 = vadd.f32 %v6355, %v6356
          %v6358 = vrot.slane %v6357, 1
          %v6359 = vadd.f32 %v6357, %v6358
          %v6360 = vadd.f32 %v5865, %v5867
          %v6361 = vadd.f32 %v6360, %v5869
          %v6362 = vadd.f32 %v6361, %v5871
          %v6363 = vadd.f32 %v6362, %v5873
          %v6364 = vadd.f32 %v6363, %v5875
          %v6365 = vadd.f32 %v6364, %v5877
          %v6366 = vadd.f32 %v6365, %v5879
          %v6367 = vrot.slane %v6366, 4
          %v6368 = vadd.f32 %v6366, %v6367
          %v6369 = vrot.slane %v6368, 2
          %v6370 = vadd.f32 %v6368, %v6369
          %v6371 = vrot.slane %v6370, 1
          %v6372 = vadd.f32 %v6370, %v6371
          %v6373 = vadd.f32 %v5880, %v5882
          %v6374 = vadd.f32 %v6373, %v5884
          %v6375 = vadd.f32 %v6374, %v5886
          %v6376 = vadd.f32 %v6375, %v5888
          %v6377 = vadd.f32 %v6376, %v5890
          %v6378 = vadd.f32 %v6377, %v5892
          %v6379 = vadd.f32 %v6378, %v5894
          %v6380 = vrot.slane %v6379, 4
          %v6381 = vadd.f32 %v6379, %v6380
          %v6382 = vrot.slane %v6381, 2
          %v6383 = vadd.f32 %v6381, %v6382
          %v6384 = vrot.slane %v6383, 1
          %v6385 = vadd.f32 %v6383, %v6384
          %v6386 = vadd.f32 %v5881, %v5883
          %v6387 = vadd.f32 %v6386, %v5885
          %v6388 = vadd.f32 %v6387, %v5887
          %v6389 = vadd.f32 %v6388, %v5889
          %v6390 = vadd.f32 %v6389, %v5891
          %v6391 = vadd.f32 %v6390, %v5893
          %v6392 = vadd.f32 %v6391, %v5895
          %v6393 = vrot.slane %v6392, 4
          %v6394 = vadd.f32 %v6392, %v6393
          %v6395 = vrot.slane %v6394, 2
          %v6396 = vadd.f32 %v6394, %v6395
          %v6397 = vrot.slane %v6396, 1
          %v6398 = vadd.f32 %v6396, %v6397
          %v6399 = vrcp.pop 64.0
          %v6400 = vmul.f32 64.0, %v6399
          %v6401 = vsub.f32 1.0, %v6400
          %v6402 = vmul.f32 %v6399, %v6401
          %v6403 = vadd.f32 %v6399, %v6402
          %vm6404 = vweird.f32 %v6399
          %v6405 = vsel %vm6404, %v6399, %v6403
          %v6406 = vmul.f32 %v6359, %v6405
          %v6407 = vmul.f32 %v6372, %v6405
          %v6408 = vmul.f32 %v6385, %v6405
          %v6409 = vmul.f32 %v6398, %v6405
          %v6410 = vpack.c.bf16 %v6406, %v6406
          %v6411 = vpack.c.bf16 %v6407, %v6407
          %v6412 = vpack.c.bf16 %v6408, %v6408
          %v6413 = vpack.c.bf16 %v6409, %v6409
          %v6414 = vld [vmem:[%s848] sm:$0xf]
          %v6415 = vld [vmem:[%s848 + $0x4] sm:$0xf]
          %v6416 = vld [vmem:[%s848 + $0x8] sm:$0xf]
          %v6417 = vld [vmem:[%s848 + $0xc] sm:$0xf]
          %v6418 = vld [vmem:[%s848 + $0x10] sm:$0xf]
          %v6419 = vld [vmem:[%s848 + $0x14] sm:$0xf]
          %v6420 = vld [vmem:[%s848 + $0x18] sm:$0xf]
          %v6421 = vld [vmem:[%s848 + $0x1c] sm:$0xf]
          %v6422 = vld [vmem:[%s848 + $0x20] sm:$0xf]
          %v6423 = vld [vmem:[%s848 + $0x24] sm:$0xf]
          %v6424 = vld [vmem:[%s848 + $0x28] sm:$0xf]
          %v6425 = vld [vmem:[%s848 + $0x2c] sm:$0xf]
          %v6426 = vld [vmem:[%s848 + $0x30] sm:$0xf]
          %v6427 = vld [vmem:[%s848 + $0x34] sm:$0xf]
          %v6428 = vld [vmem:[%s848 + $0x38] sm:$0xf]
          %v6429 = vld [vmem:[%s848 + $0x3c] sm:$0xf]
          %v6430 = vld [vmem:[%s848 + $0x40] sm:$0xf]
          %v6431 = vld [vmem:[%s848 + $0x44] sm:$0xf]
          %v6432 = vld [vmem:[%s848 + $0x48] sm:$0xf]
          %v6433 = vld [vmem:[%s848 + $0x4c] sm:$0xf]
          %v6434 = vld [vmem:[%s848 + $0x50] sm:$0xf]
          %v6435 = vld [vmem:[%s848 + $0x54] sm:$0xf]
          %v6436 = vld [vmem:[%s848 + $0x58] sm:$0xf]
          %v6437 = vld [vmem:[%s848 + $0x5c] sm:$0xf]
          %v6438 = vld [vmem:[%s848 + $0x60] sm:$0xf]
          %v6439 = vld [vmem:[%s848 + $0x64] sm:$0xf]
          %v6440 = vld [vmem:[%s848 + $0x68] sm:$0xf]
          %v6441 = vld [vmem:[%s848 + $0x6c] sm:$0xf]
          %v6442 = vld [vmem:[%s848 + $0x70] sm:$0xf]
          %v6443 = vld [vmem:[%s848 + $0x74] sm:$0xf]
          %v6444 = vld [vmem:[%s848 + $0x78] sm:$0xf]
          %v6445 = vld [vmem:[%s848 + $0x7c] sm:$0xf]
          %v6446 = vld [vmem:[%s851] sm:$0x1]
          %v6448 = vperm.slane %v6446, 0
          %v6454 = vunpack.c.l.b16 %v6410
          %v6455 = vunpack.c.l.b16 %v6411
          %v6456 = vunpack.c.l.b16 %v6412
          %v6457 = vunpack.c.l.b16 %v6413
          %vm6458 = vcmask 1041409
          %v6459 = vsel %vm6458, %v6456, %v6454
          %v6460 = vsel %vm6458, %v6457, %v6455
          %v6461 = vpack.c.b16 %v6459, %v6459
          %v6462 = vpack.c.b16 %v6460, %v6460
          %v6497 = vunpack.c.l.b16 %v6414
          %v6498 = vunpack.c.l.b16 %v6415
          %v6499 = vunpack.c.l.b16 %v6416
          %v6500 = vunpack.c.l.b16 %v6417
          %v6501 = vunpack.c.l.b16 %v6418
          %v6502 = vunpack.c.l.b16 %v6419
          %v6503 = vunpack.c.l.b16 %v6420
          %v6504 = vunpack.c.l.b16 %v6421
          %v6505 = vunpack.c.l.b16 %v6422
          %v6506 = vunpack.c.l.b16 %v6423
          %v6507 = vunpack.c.l.b16 %v6424
          %v6508 = vunpack.c.l.b16 %v6425
          %v6509 = vunpack.c.l.b16 %v6426
          %v6510 = vunpack.c.l.b16 %v6427
          %v6511 = vunpack.c.l.b16 %v6428
          %v6512 = vunpack.c.l.b16 %v6429
          %v6513 = vunpack.c.l.b16 %v6430
          %v6514 = vunpack.c.l.b16 %v6431
          %v6515 = vunpack.c.l.b16 %v6432
          %v6516 = vunpack.c.l.b16 %v6433
          %v6517 = vunpack.c.l.b16 %v6434
          %v6518 = vunpack.c.l.b16 %v6435
          %v6519 = vunpack.c.l.b16 %v6436
          %v6520 = vunpack.c.l.b16 %v6437
          %v6521 = vunpack.c.l.b16 %v6438
          %v6522 = vunpack.c.l.b16 %v6439
          %v6523 = vunpack.c.l.b16 %v6440
          %v6524 = vunpack.c.l.b16 %v6441
          %v6525 = vunpack.c.l.b16 %v6442
          %v6526 = vunpack.c.l.b16 %v6443
          %v6527 = vunpack.c.l.b16 %v6444
          %v6528 = vunpack.c.l.b16 %v6445
          %v6529 = vpack.c.b16 %v6498, %v6497
          %v6530 = vpack.c.b16 %v6500, %v6499
          %v6531 = vpack.c.b16 %v6502, %v6501
          %v6532 = vpack.c.b16 %v6504, %v6503
          %v6533 = vpack.c.b16 %v6506, %v6505
          %v6534 = vpack.c.b16 %v6508, %v6507
          %v6535 = vpack.c.b16 %v6510, %v6509
          %v6536 = vpack.c.b16 %v6512, %v6511
          %v6537 = vpack.c.b16 %v6514, %v6513
          %v6538 = vpack.c.b16 %v6516, %v6515
          %v6539 = vpack.c.b16 %v6518, %v6517
          %v6540 = vpack.c.b16 %v6520, %v6519
          %v6541 = vpack.c.b16 %v6522, %v6521
          %v6542 = vpack.c.b16 %v6524, %v6523
          %v6543 = vpack.c.b16 %v6526, %v6525
          %v6544 = vpack.c.b16 %v6528, %v6527
          %6561 = vmatpush.bf16.msra.mxu0 %v6536
          %6562 = vmatpush.bf16.msra.mxu0 %v6535
          %6563 = vmatpush.bf16.msra.mxu0 %v6534
          %6564 = vmatpush.bf16.msra.mxu0 %v6533
          %6565 = vmatpush.bf16.msra.mxu0 %v6532
          %6566 = vmatpush.bf16.msra.mxu0 %v6531
          %6567 = vmatpush.bf16.msra.mxu0 %v6530
          %6568 = vmatpush.bf16.msra.mxu0 %v6529
          %6569 = vmatmul.bf16.gmra.mxu0 %v6461
          %v6570 = vpop.f32.mrf.mxu0
          %v6571 = vadd.f32 %v6448, %v6570
          %v6572 = vpop.f32.mrf.mxu0
          %6573 = vdwg.mxu0
          %6574 = vmatpush.bf16.msra.mxu0 %v6544
          %6575 = vmatpush.bf16.msra.mxu0 %v6543
          %6576 = vmatpush.bf16.msra.mxu0 %v6542
          %6577 = vmatpush.bf16.msra.mxu0 %v6541
          %6578 = vmatpush.bf16.msra.mxu0 %v6540
          %6579 = vmatpush.bf16.msra.mxu0 %v6539
          %6580 = vmatpush.bf16.msra.mxu0 %v6538
          %6581 = vmatpush.bf16.msra.mxu0 %v6537
          %6582 = vmatmul.bf16.gmra.mxu0 %v6462
          %v6583 = vpop.f32.mrf.mxu0
          %v6584 = vadd.f32 %v6571, %v6583
          %v6585 = vpop.f32.mrf.mxu0
          %6586 = vdwg.mxu0
          %v6587 = vxor.u32 %v6584, 2147483648
          %v6588 = vmul.f32 %v6587, 1.442695
          %v6589 = vpow.pop %v6588
          %v6590 = vadd.f32 %v6589, 1.0
          %v6591 = vrcp.pop %v6590
          %v6592 = vmul.f32 %v6590, %v6591
          %v6593 = vsub.f32 1.0, %v6592
          %v6594 = vmul.f32 %v6591, %v6593
          %v6595 = vadd.f32 %v6591, %v6594
          %vm6596 = vweird.f32 %v6590
          %vm6597 = vweird.f32 %v6591
          %vm6598 = vmor %vm6596, %vm6597
          %v6599 = vsel %vm6598, %v6591, %v6595
          %v6600 = vand.u32 2147483647, %v6590
          %vm6601 = vcmp.eq.f32.partialorder %v6600, 8.507059e+37
          %v6602 = vand.u32 %v6590, 2147483648
          %v6603 = vor.u32 1.1754944e-38, %v6602
          %v6604 = vsel %vm6601, %v6603, %v6599
          %v6605 = vmul.f32 1.0, %v6604
          %vm6606 = vcmask 25600
          %6607 = vst.msk [vmem:[%s855] sm:$0x3] %vm6606, %v6605
        $region96: #{sequential_decision_tree_forward.1} parent=79 // pred_fallthru
          _
        %p6608 = scmp.lt.s32.totalorder %s33, 7
        %s6609 = scalar_select %p6608, %s33, 7
        %s6610 = smul.addr %s6609, 2
        %s6611 = scalar_lea.vmem %s15, %s6610
        // Predicated region
        $region97: #{sequential_decision_tree_forward.1} parent=79 // pred_check
          %p6612 = pneg %p460
        $region98: #{sequential_decision_tree_forward.1} parent=79 // pred_check_branch
          %6614 = sbr.rel (%p6612) target = $region100
        $region99: #{sequential_decision_tree_forward.1} parent=79 // pred_region
          _
        $region100: #{sequential_decision_tree_forward.1} parent=79 // pred_fallthru
          _
      $region80: #{sequential_decision_tree_forward.1} parent=5 // pred_fallthru
        _
      %p6615 = scmp.le.s32.totalorder 2, %s24
      // Predicated region
      $region101: #{sequential_decision_tree_forward.1} parent=5 // pred_check
        %p6616 = pneg %p6615
      $region102: #{sequential_decision_tree_forward.1} parent=5 // pred_check_branch
        %6618 = sbr.rel (%p6616) target = $region104
      $region103: #{sequential_decision_tree_forward.1} parent=5 // pred_region
        %s6619 = ssub.s32 %s24, 2
        // Predicated region
        $region105: #{sequential_decision_tree_forward.1} parent=103 // pred_check
          %p6620 = pneg %p466
        $region106: #{sequential_decision_tree_forward.1} parent=103 // pred_check_branch
          %6622 = sbr.rel (%p6620) target = $region108
        $region107: #{sequential_decision_tree_forward.1} parent=103 // pred_region
          %p6623 = scmp.lt.s32.totalorder %s35, 7
          %s6624 = scalar_select %p6623, %s35, 7
          %s6625 = smul.addr %s6624, 2
          %s6626 = scalar_lea.vmem %s15, %s6625
        $region108: #{sequential_decision_tree_forward.1} parent=103 // pred_fallthru
          _
      $region104: #{sequential_decision_tree_forward.1} parent=5 // pred_fallthru
        _
    $region6: #{sequential_decision_tree_forward.1} parent=1 // loop_footer
      %s28 = sadd.s32 1, %s24
    $region7: #{sequential_decision_tree_forward.1} parent=1 // loop_footer_branch
      %23 = sbr.rel target = $region3
    $region8: #{sequential_decision_tree_forward.1} parent=1 // loop_exit
      _
    %6627 = vsyncpa [#allocation4], 1
    %s6628 = scalar_lea.sflag [#allocation4], 1
    %6629 = vsyncpa %s6628, 1

</llo_original>
